<compile_context>
chip_gen: v7x
topology: tpu7x:2x2x1
jax: 0.10.0
libtpu: 0.0.40
codegen_flags: <defaults>
</compile_context>

<pallas_src>
import functools

import numpy as np
import jax
import jax.numpy as jnp
from jax.experimental import pallas as pl
from jax.experimental.pallas import tpu as pltpu

_BN_EPS = 1e-5
_LANES = 128


def _round_up(n, m=_LANES):
    return ((n + m - 1) // m) * m


# ---------------------------------------------------------------------------
# Weight preprocessing (plain JAX / numpy; run once per weight update)
# ---------------------------------------------------------------------------
def _tconv_toeplitz_matrix(w, stride, padding, H, W):
    """Dense matrix T of the ConvTranspose2d linear map.

    flat_out = flat_in @ T, with flat_in indexed (ci, ih, iw) row-major and
    flat_out indexed (co, oh, ow) row-major (torch NCHW flattening).
    Torch semantics: out[co, oh, ow] += x[ci, ih, iw] * w[ci, co, kh, kw]
    whenever oh = ih*stride - padding + kh and ow = iw*stride - padding + kw.
    """
    Cin, Cout, K, _ = w.shape
    OH = (H - 1) * stride - 2 * padding + K
    OW = (W - 1) * stride - 2 * padding + K
    Rh = np.zeros((K, H, OH), np.float32)
    Rw = np.zeros((K, W, OW), np.float32)
    for k in range(K):
        for i in range(H):
            o = i * stride - padding + k
            if 0 <= o < OH:
                Rh[k, i, o] = 1.0
        for i in range(W):
            o = i * stride - padding + k
            if 0 <= o < OW:
                Rw[k, i, o] = 1.0
    T = jnp.einsum("cdkl,kho,lwv->chwdov", w.astype(jnp.float32), Rh, Rw)
    return T.reshape(Cin * H * W, Cout * OH * OW), (Cout, OH, OW)


def _bn_selection_ops(C, HW, Np, compute_dtype):
    """0/1 channel-chunk selection matrices: s[c*HW + r, c] = 1 (rows past
    C*HW are zero so padded lanes never contribute to BN statistics)."""
    sel = np.kron(np.eye(C, dtype=np.float32), np.ones((HW, 1), np.float32))
    sel = np.pad(sel, ((0, Np - C * HW), (0, 0)))
    return (jnp.asarray(sel, dtype=compute_dtype),       # s  : (Np, C)
            jnp.asarray(sel.T, dtype=compute_dtype))     # st : (C, Np)


def precompute_kernel_operands(params, compute_dtype=jnp.bfloat16):
    """Build the VMEM-resident operands of the fused kernel.  Run once (or
    whenever the weights change); the per-forward cost is one pallas_call."""
    H = W = 7
    c0 = params["starter_channels"]
    lin_t = jnp.asarray(params["linear_w"]).astype(jnp.float32).T   # (Z, c0*49)
    prev_n = c0 * H * W
    prev_np = prev_n
    blocks, hw_list = [], []
    first = True
    for blk in params["blocks"]:
        T, (C, OH, OW) = _tconv_toeplitz_matrix(blk["w"], blk["stride"],
                                                blk["padding"], H, W)
        n = C * OH * OW
        npad = _round_up(n)
        T = jnp.pad(T, ((0, prev_np - prev_n), (0, npad - n)))
        if first:
            # Exact fold of the (bias-free) Linear into the first ConvTranspose:
            # removes ~40% of weight bytes and one serial MXU matmul.
            T = lin_t @ T
            first = False
        s, st = _bn_selection_ops(C, OH * OW, npad, compute_dtype)
        blocks.append(dict(
            t=T.astype(compute_dtype),
            s=s, st=st,
            g=jnp.asarray(blk["gamma"]).reshape(1, -1).astype(jnp.float32),
            b=jnp.asarray(blk["beta"]).reshape(1, -1).astype(jnp.float32)))
        hw_list.append(OH * OW)
        H, W = OH, OW
        prev_n, prev_np = n, npad

    T, (Cout, OH, OW) = _tconv_toeplitz_matrix(params["final_w"], 2, 1, H, W)
    n = Cout * OH * OW
    npad = _round_up(n)
    T = jnp.pad(T, ((0, prev_np - prev_n), (0, npad - n)))
    bias = jnp.repeat(jnp.asarray(params["final_b"]).astype(jnp.float32), OH * OW)
    bias = jnp.pad(bias.reshape(1, -1), ((0, 0), (0, npad - n)))
    return dict(blocks=blocks,
                t_final=T.astype(compute_dtype),
                b_final=bias,
                out_chw=(Cout, OH, OW),
                hw_list=tuple(hw_list))


# ---------------------------------------------------------------------------
# Fused Pallas kernel
# ---------------------------------------------------------------------------
def _make_generator_kernel(n_blocks, batch, hw_list, compute_dtype, eps):
    """Ref order (all 2-D, VMEM, single full block):
       x, [t, s, st, gamma, beta] * n_blocks, t_final, bias, out
    """
    f32 = jnp.float32

    def kernel(*refs):
        x_ref = refs[0]
        t_final_ref, bias_ref, o_ref = refs[-3], refs[-2], refs[-1]

        # (2,1) row mask used to stack two (1, N) rows without a concatenate.
        row2 = jax.lax.broadcasted_iota(jnp.int32, (2, 1), 0) == 0

        # Linear layer is folded into blocks[0].t -> feed noise straight in.
        a = x_ref[...].astype(compute_dtype)

        for i in range(n_blocks):
            t_ref, s_ref, st_ref, g_ref, b_ref = refs[1 + 5 * i: 6 + 5 * i]

            # ConvTranspose2d as a dense Toeplitz matmul (bf16 operands, f32 acc).
            a = jnp.dot(a, t_ref[...], preferred_element_type=f32)

            # Training-mode BatchNorm2d (biased var over N,H,W) + ReLU on the
            # lane-dense (B, C*HW) layout.  Exactly 2 MXU ops per block.
            inv_n = 1.0 / (batch * hw_list[i])
            sb = jnp.sum(a, axis=0, keepdims=True)            # (1, Np) f32
            sq = jnp.sum(a * a, axis=0, keepdims=True)        # (1, Np) f32
            r = jnp.where(row2, sb, sq)                       # (2, Np) stacked
            stats = jnp.dot(r, s_ref[...].astype(f32),
                            preferred_element_type=f32)       # (2, C): [sum, sumsq]
            mean_c = stats[0:1] * inv_n                       # (1, C)
            var_c = stats[1:2] * inv_n - mean_c * mean_c      # one-pass variance
            scale_c = g_ref[...] * jax.lax.rsqrt(var_c + eps)
            offset_c = b_ref[...] - mean_c * scale_c
            so = jnp.where(row2, scale_c, offset_c)           # (2, C) stacked
            bc = jnp.dot(so, st_ref[...].astype(f32),
                         preferred_element_type=f32)          # (2, Np): [scale, offset]
            a = jnp.maximum(a * bc[0:1] + bc[1:2], 0.0).astype(compute_dtype)

        # Final ConvTranspose2d + bias + tanh.
        a = jnp.dot(a, t_final_ref[...], preferred_element_type=f32)
        o_ref[...] = jnp.tanh(a + bias_ref[...]).astype(o_ref.dtype)

    return kernel


def _full_spec(arr):
    ndim = arr.ndim
    return pl.BlockSpec(tuple(arr.shape), lambda i, _n=ndim: (0,) * _n)


@functools.partial(jax.jit, static_argnames=("out_chw", "hw_list"))
def _generator_pallas_forward(x, block_ops, t_final, b_final, *, out_chw, hw_list):
    B = x.shape[0]
    n_blocks = len(block_ops)
    compute_dtype = block_ops[0]["t"].dtype
    out_pad = t_final.shape[1]

    inputs = [x]
    for blk in block_ops:
        inputs += [blk["t"], blk["s"], blk["st"], blk["g"], blk["b"]]
    inputs += [t_final, b_final]

    # Advisory cost estimate: helps XLA overlap surrounding graph work with
    # this latency-bound custom call.
    flops = 2 * B * t_final.shape[0] * t_final.shape[1]
    transcendentals = B * out_pad                       # tanh
    for blk in block_ops:
        kdim, ndim = blk["t"].shape
        c = blk["g"].shape[1]
        flops += 2 * B * kdim * ndim                    # Toeplitz conv matmul
        flops += 2 * 2 * ndim * c                       # BN reduction matmul
        flops += 2 * 2 * c * ndim                       # BN broadcast matmul
        flops += 6 * B * ndim                           # elementwise epilogue
        transcendentals += c                            # rsqrt per channel
    bytes_accessed = sum(int(np.prod(a.shape)) * a.dtype.itemsize for a in inputs)
    bytes_accessed += B * out_pad * 4
    cost = pl.CostEstimate(flops=int(flops),
                           transcendentals=int(transcendentals),
                           bytes_accessed=int(bytes_accessed))

    out = pl.pallas_call(
        _make_generator_kernel(n_blocks, B, hw_list, compute_dtype, _BN_EPS),
        out_shape=jax.ShapeDtypeStruct((B, out_pad), jnp.float32),
        grid=(1,),
        in_specs=[_full_spec(a) for a in inputs],
        out_specs=pl.BlockSpec((B, out_pad), lambda i: (0, 0)),
        compiler_params=pltpu.CompilerParams(
            dimension_semantics=("arbitrary",),
            vmem_limit_bytes=32 * 1024 * 1024,          # safe on v5e/v6e/v7x
        ),
        cost_estimate=cost,
    )(*inputs)

    out_len = int(np.prod(out_chw))
    return out[:, :out_len].reshape(B, *out_chw)        # NCHW (B, 1, 28, 28)


def generator_forward(ops, x):
    """x: (B, input_size) noise -> NCHW (B, 1, 28, 28), tanh-activated."""
    return _generator_pallas_forward(
        x, ops["blocks"], ops["t_final"], ops["b_final"],
        out_chw=ops["out_chw"], hw_list=ops["hw_list"])


# ---------------------------------------------------------------------------
# Parameters (mirrors the torch module construction) + pure-JAX f32 reference
# ---------------------------------------------------------------------------
def init_generator_params(key, input_size=32, starter_channels=16, additional_blocks=1):
    c = starter_channels
    params = {"starter_channels": c, "blocks": []}
    key, k = jax.random.split(key)
    # torch nn.Linear weight layout (out_features, in_features), bias=False.
    params["linear_w"] = 0.05 * jax.random.normal(k, (c * 7 * 7, input_size), jnp.float32)

    def tconv_block(k, in_ch, out_ch, K, stride, padding):
        return dict(
            w=0.05 * jax.random.normal(k, (in_ch, out_ch, K, K), jnp.float32),
            stride=stride, padding=padding,
            gamma=jnp.ones((out_ch,), jnp.float32),     # torch BN affine defaults
            beta=jnp.zeros((out_ch,), jnp.float32),
        )

    in_ch, size, target = c, 7, 28
    while size < target // 2:                           # stride-2 upsampling blocks
        key, k = jax.random.split(key)
        params["blocks"].append(tconv_block(k, in_ch, in_ch // 2, 4, 2, 1))
        in_ch //= 2
        size *= 2
    for _ in range(additional_blocks):                  # K=3, stride-1 blocks
        key, k = jax.random.split(key)
        params["blocks"].append(tconv_block(k, in_ch, in_ch // 2, 3, 1, 1))
        in_ch //= 2
    key, kw, kb = jax.random.split(key, 3)
    # Final ConvTranspose2d(in_ch, 1, 4, 2, 1) has bias=True in torch.
    params["final_w"] = 0.05 * jax.random.normal(kw, (in_ch, 1, 4, 4), jnp.float32)
    bound = 1.0 / np.sqrt(in_ch * 4 * 4)
    params["final_b"] = jax.random.uniform(kb, (1,), jnp.float32, -bound, bound)
    return params


def _conv_transpose2d_ref(x, w, stride, padding):
    """torch.nn.functional.conv_transpose2d (no bias) in plain JAX, NCHW."""
    K = w.shape[2]
    kernel = jnp.transpose(w[:, :, ::-1, ::-1], (1, 0, 2, 3))   # OIHW, flipped
    p = K - 1 - padding
    return jax.lax.conv_general_dilated(
        x, kernel, window_strides=(1, 1), padding=((p, p), (p, p)),
        lhs_dilation=(stride, stride),
        dimension_numbers=("NCHW", "OIHW", "NCHW"))


def generator_reference(params, x):
    """Pure-JAX f32 reference with the torch forward semantics."""
    B = x.shape[0]
    c0 = params["starter_channels"]
    feat = (x @ params["linear_w"].T).reshape(B, c0, 7, 7)
    for blk in params["blocks"]:
        feat = _conv_transpose2d_ref(feat, blk["w"], blk["stride"], blk["padding"])
        mean = feat.mean(axis=(0, 2, 3), keepdims=True)
        var = ((feat - mean) ** 2).mean(axis=(0, 2, 3), keepdims=True)
        feat = (feat - mean) * jax.lax.rsqrt(var + _BN_EPS)
        feat = feat * blk["gamma"].reshape(1, -1, 1, 1) + blk["beta"].reshape(1, -1, 1, 1)
        feat = jnp.maximum(feat, 0.0)
    feat = _conv_transpose2d_ref(feat, params["final_w"], 2, 1)
    feat = feat + params["final_b"].reshape(1, -1, 1, 1)
    return jnp.tanh(feat)


# ---------------------------------------------------------------------------
if __name__ == "__main__":
    key = jax.random.PRNGKey(0)
    pkey, xkey = jax.random.split(key)

    # Small-but-faithful config: noise dim 32, starter_channels 16, batch 2.
    batch, input_size, starter_channels = 2, 32, 16
    params = init_generator_params(pkey, input_size=input_size,
                                   starter_channels=starter_channels,
                                   additional_blocks=1)
    x = jax.random.normal(xkey, (batch, input_size), jnp.float32)

    # Weight preprocessing (once), then a single fused pallas_call per forward.
    ops = precompute_kernel_operands(params, compute_dtype=jnp.bfloat16)
    out = jax.block_until_ready(generator_forward(ops, x))

    assert out.shape == (batch, 1, 28, 28), out.shape
    assert bool(jnp.all(jnp.isfinite(out)))
    assert bool(jnp.all(jnp.abs(out) <= 1.0 + 1e-6))   # tanh range

    # Validate against the pure-JAX f32 reference (bf16 MXU operands -> loose tol).
    ref = jax.block_until_ready(generator_reference(params, x))
    max_err = float(jnp.max(jnp.abs(out - ref)))
    assert max_err < 5e-2, f"max abs error vs reference: {max_err}"

    print("KERNEL_OK")
</pallas_src>

<mosaic_0001>
module attributes {stable_mosaic.version = 11 : i64} {
  func.func @kernel(%arg0: i32, %arg1: memref<2x32xf32, #tpu.memory_space<vmem>>, %arg2: memref<32x1664xbf16, #tpu.memory_space<vmem>>, %arg3: memref<1664x8xbf16, #tpu.memory_space<vmem>>, %arg4: memref<8x1664xbf16, #tpu.memory_space<vmem>>, %arg5: memref<1x8xf32, #tpu.memory_space<vmem>>, %arg6: memref<1x8xf32, #tpu.memory_space<vmem>>, %arg7: memref<1664x896xbf16, #tpu.memory_space<vmem>>, %arg8: memref<896x4xbf16, #tpu.memory_space<vmem>>, %arg9: memref<4x896xbf16, #tpu.memory_space<vmem>>, %arg10: memref<1x4xf32, #tpu.memory_space<vmem>>, %arg11: memref<1x4xf32, #tpu.memory_space<vmem>>, %arg12: memref<896x896xbf16, #tpu.memory_space<vmem>>, %arg13: memref<1x896xf32, #tpu.memory_space<vmem>>, %arg14: memref<2x896xf32, #tpu.memory_space<vmem>>) attributes {dimension_semantics = [#tpu.dimension_semantics<arbitrary>], iteration_bounds = array<i64: 1>, scalar_prefetch = 0 : i64, scratch_operands = 0 : i64, tpu.core_type = #tpu.core_type<tc>, window_params = [{pipeline_mode = #tpu.pipeline_mode<synchronous>, transform_indices = @transform_0, window_bounds = array<i64: 2, 32>}, {pipeline_mode = #tpu.pipeline_mode<synchronous>, transform_indices = @transform_1, window_bounds = array<i64: 32, 1664>}, {pipeline_mode = #tpu.pipeline_mode<synchronous>, transform_indices = @transform_2, window_bounds = array<i64: 1664, 8>}, {pipeline_mode = #tpu.pipeline_mode<synchronous>, transform_indices = @transform_3, window_bounds = array<i64: 8, 1664>}, {pipeline_mode = #tpu.pipeline_mode<synchronous>, transform_indices = @transform_4, window_bounds = array<i64: 1, 8>}, {pipeline_mode = #tpu.pipeline_mode<synchronous>, transform_indices = @transform_5, window_bounds = array<i64: 1, 8>}, {pipeline_mode = #tpu.pipeline_mode<synchronous>, transform_indices = @transform_6, window_bounds = array<i64: 1664, 896>}, {pipeline_mode = #tpu.pipeline_mode<synchronous>, transform_indices = @transform_7, window_bounds = array<i64: 896, 4>}, {pipeline_mode = #tpu.pipeline_mode<synchronous>, transform_indices = @transform_8, window_bounds = array<i64: 4, 896>}, {pipeline_mode = #tpu.pipeline_mode<synchronous>, transform_indices = @transform_9, window_bounds = array<i64: 1, 4>}, {pipeline_mode = #tpu.pipeline_mode<synchronous>, transform_indices = @transform_10, window_bounds = array<i64: 1, 4>}, {pipeline_mode = #tpu.pipeline_mode<synchronous>, transform_indices = @transform_11, window_bounds = array<i64: 896, 896>}, {pipeline_mode = #tpu.pipeline_mode<synchronous>, transform_indices = @transform_12, window_bounds = array<i64: 1, 896>}, {pipeline_mode = #tpu.pipeline_mode<synchronous>, transform_indices = @transform_13, window_bounds = array<i64: 2, 896>}]} {
    %0 = tpu.iota {dimensions = array<i32: 0>} : vector<2x1xi32>
    %c0_i32 = arith.constant 0 : i32
    %1 = vector.broadcast %c0_i32 : i32 to vector<2x1xi32>
    %2 = arith.cmpi eq, %0, %1 : vector<2x1xi32>
    %c0 = arith.constant 0 : index
    %c0_0 = arith.constant 0 : index
    %3 = vector.load %arg1[%c0, %c0_0] : memref<2x32xf32, #tpu.memory_space<vmem>>, vector<2x32xf32>
    %4 = arith.truncf %3 : vector<2x32xf32> to vector<2x32xbf16>
    %c0_1 = arith.constant 0 : index
    %c0_2 = arith.constant 0 : index
    %5 = vector.load %arg2[%c0_1, %c0_2] : memref<32x1664xbf16, #tpu.memory_space<vmem>>, vector<32x1664xbf16>
    %cst = arith.constant dense<0.000000e+00> : vector<2x1664xf32>
    %6 = tpu.matmul %4, %5, %cst {dimension_numbers = #tpu.dot_dimension_numbers<[1], [0], [0], [1], [0, 0, 1, 1], [], []>} : vector<2x32xbf16>, vector<32x1664xbf16>, vector<2x1664xf32> -> vector<2x1664xf32>
    %cst_3 = arith.constant dense<0.000000e+00> : vector<1664xf32>
    %7 = vector.multi_reduction <add>, %6, %cst_3 [0] : vector<2x1664xf32> to vector<1664xf32>
    %8 = vector.shape_cast %7 : vector<1664xf32> to vector<1x1664xf32>
    %9 = arith.mulf %6, %6 : vector<2x1664xf32>
    %cst_4 = arith.constant dense<0.000000e+00> : vector<1664xf32>
    %10 = vector.multi_reduction <add>, %9, %cst_4 [0] : vector<2x1664xf32> to vector<1664xf32>
    %11 = vector.shape_cast %10 : vector<1664xf32> to vector<1x1664xf32>
    %12 = vector.shape_cast %2 : vector<2x1xi1> to vector<2x1xi1>
    %13 = vector.broadcast %12 : vector<2x1xi1> to vector<2x1664xi1>
    %14 = vector.shape_cast %8 : vector<1x1664xf32> to vector<1x1664xf32>
    %15 = vector.broadcast %14 : vector<1x1664xf32> to vector<2x1664xf32>
    %16 = vector.shape_cast %11 : vector<1x1664xf32> to vector<1x1664xf32>
    %17 = vector.broadcast %16 : vector<1x1664xf32> to vector<2x1664xf32>
    %18 = arith.select %13, %15, %17 : vector<2x1664xi1>, vector<2x1664xf32>
    %c0_5 = arith.constant 0 : index
    %c0_6 = arith.constant 0 : index
    %19 = vector.load %arg3[%c0_5, %c0_6] : memref<1664x8xbf16, #tpu.memory_space<vmem>>, vector<1664x8xbf16>
    %20 = arith.extf %19 : vector<1664x8xbf16> to vector<1664x8xf32>
    %cst_7 = arith.constant dense<0.000000e+00> : vector<2x8xf32>
    %21 = tpu.matmul %18, %20, %cst_7 {dimension_numbers = #tpu.dot_dimension_numbers<[1], [0], [0], [1], [0, 0, 1, 1], [], []>} : vector<2x1664xf32>, vector<1664x8xf32>, vector<2x8xf32> -> vector<2x8xf32>
    %22 = vector.extract_strided_slice %21 {offsets = [0, 0], sizes = [1, 8], strides = [1, 1]} : vector<2x8xf32> to vector<1x8xf32>
    %cst_8 = arith.constant 0.00255102036 : f32
    %23 = vector.broadcast %cst_8 : f32 to vector<1x8xf32>
    %24 = arith.mulf %22, %23 : vector<1x8xf32>
    %25 = vector.extract_strided_slice %21 {offsets = [1, 0], sizes = [1, 8], strides = [1, 1]} : vector<2x8xf32> to vector<1x8xf32>
    %cst_9 = arith.constant 0.00255102036 : f32
    %26 = vector.broadcast %cst_9 : f32 to vector<1x8xf32>
    %27 = arith.mulf %25, %26 : vector<1x8xf32>
    %28 = arith.mulf %24, %24 : vector<1x8xf32>
    %29 = arith.subf %27, %28 : vector<1x8xf32>
    %c0_10 = arith.constant 0 : index
    %c0_11 = arith.constant 0 : index
    %30 = vector.load %arg5[%c0_10, %c0_11] : memref<1x8xf32, #tpu.memory_space<vmem>>, vector<1x8xf32>
    %cst_12 = arith.constant 9.99999974E-6 : f32
    %31 = vector.broadcast %cst_12 : f32 to vector<1x8xf32>
    %32 = arith.addf %29, %31 : vector<1x8xf32>
    %33 = math.rsqrt %32 : vector<1x8xf32>
    %34 = arith.mulf %30, %33 : vector<1x8xf32>
    %c0_13 = arith.constant 0 : index
    %c0_14 = arith.constant 0 : index
    %35 = vector.load %arg6[%c0_13, %c0_14] : memref<1x8xf32, #tpu.memory_space<vmem>>, vector<1x8xf32>
    %36 = arith.mulf %24, %34 : vector<1x8xf32>
    %37 = arith.subf %35, %36 : vector<1x8xf32>
    %38 = vector.shape_cast %2 : vector<2x1xi1> to vector<2x1xi1>
    %39 = vector.broadcast %38 : vector<2x1xi1> to vector<2x8xi1>
    %40 = vector.shape_cast %34 : vector<1x8xf32> to vector<1x8xf32>
    %41 = vector.broadcast %40 : vector<1x8xf32> to vector<2x8xf32>
    %42 = vector.shape_cast %37 : vector<1x8xf32> to vector<1x8xf32>
    %43 = vector.broadcast %42 : vector<1x8xf32> to vector<2x8xf32>
    %44 = arith.select %39, %41, %43 : vector<2x8xi1>, vector<2x8xf32>
    %c0_15 = arith.constant 0 : index
    %c0_16 = arith.constant 0 : index
    %45 = vector.load %arg4[%c0_15, %c0_16] : memref<8x1664xbf16, #tpu.memory_space<vmem>>, vector<8x1664xbf16>
    %46 = arith.extf %45 : vector<8x1664xbf16> to vector<8x1664xf32>
    %cst_17 = arith.constant dense<0.000000e+00> : vector<2x1664xf32>
    %47 = tpu.matmul %44, %46, %cst_17 {dimension_numbers = #tpu.dot_dimension_numbers<[1], [0], [0], [1], [0, 0, 1, 1], [], []>} : vector<2x8xf32>, vector<8x1664xf32>, vector<2x1664xf32> -> vector<2x1664xf32>
    %48 = vector.extract_strided_slice %47 {offsets = [0, 0], sizes = [1, 1664], strides = [1, 1]} : vector<2x1664xf32> to vector<1x1664xf32>
    %49 = vector.broadcast %48 : vector<1x1664xf32> to vector<2x1664xf32>
    %50 = arith.mulf %6, %49 : vector<2x1664xf32>
    %51 = vector.extract_strided_slice %47 {offsets = [1, 0], sizes = [1, 1664], strides = [1, 1]} : vector<2x1664xf32> to vector<1x1664xf32>
    %52 = vector.broadcast %51 : vector<1x1664xf32> to vector<2x1664xf32>
    %53 = arith.addf %50, %52 : vector<2x1664xf32>
    %cst_18 = arith.constant 0.000000e+00 : f32
    %54 = vector.broadcast %cst_18 : f32 to vector<2x1664xf32>
    %55 = arith.maximumf %53, %54 : vector<2x1664xf32>
    %56 = arith.truncf %55 : vector<2x1664xf32> to vector<2x1664xbf16>
    %c0_19 = arith.constant 0 : index
    %c0_20 = arith.constant 0 : index
    %57 = vector.load %arg7[%c0_19, %c0_20] : memref<1664x896xbf16, #tpu.memory_space<vmem>>, vector<1664x896xbf16>
    %cst_21 = arith.constant dense<0.000000e+00> : vector<2x896xf32>
    %58 = tpu.matmul %56, %57, %cst_21 {dimension_numbers = #tpu.dot_dimension_numbers<[1], [0], [0], [1], [0, 0, 1, 1], [], []>} : vector<2x1664xbf16>, vector<1664x896xbf16>, vector<2x896xf32> -> vector<2x896xf32>
    %cst_22 = arith.constant dense<0.000000e+00> : vector<896xf32>
    %59 = vector.multi_reduction <add>, %58, %cst_22 [0] : vector<2x896xf32> to vector<896xf32>
    %60 = vector.shape_cast %59 : vector<896xf32> to vector<1x896xf32>
    %61 = arith.mulf %58, %58 : vector<2x896xf32>
    %cst_23 = arith.constant dense<0.000000e+00> : vector<896xf32>
    %62 = vector.multi_reduction <add>, %61, %cst_23 [0] : vector<2x896xf32> to vector<896xf32>
    %63 = vector.shape_cast %62 : vector<896xf32> to vector<1x896xf32>
    %64 = vector.shape_cast %2 : vector<2x1xi1> to vector<2x1xi1>
    %65 = vector.broadcast %64 : vector<2x1xi1> to vector<2x896xi1>
    %66 = vector.shape_cast %60 : vector<1x896xf32> to vector<1x896xf32>
    %67 = vector.broadcast %66 : vector<1x896xf32> to vector<2x896xf32>
    %68 = vector.shape_cast %63 : vector<1x896xf32> to vector<1x896xf32>
    %69 = vector.broadcast %68 : vector<1x896xf32> to vector<2x896xf32>
    %70 = arith.select %65, %67, %69 : vector<2x896xi1>, vector<2x896xf32>
    %c0_24 = arith.constant 0 : index
    %c0_25 = arith.constant 0 : index
    %71 = vector.load %arg8[%c0_24, %c0_25] : memref<896x4xbf16, #tpu.memory_space<vmem>>, vector<896x4xbf16>
    %72 = arith.extf %71 : vector<896x4xbf16> to vector<896x4xf32>
    %cst_26 = arith.constant dense<0.000000e+00> : vector<2x4xf32>
    %73 = tpu.matmul %70, %72, %cst_26 {dimension_numbers = #tpu.dot_dimension_numbers<[1], [0], [0], [1], [0, 0, 1, 1], [], []>} : vector<2x896xf32>, vector<896x4xf32>, vector<2x4xf32> -> vector<2x4xf32>
    %74 = vector.extract_strided_slice %73 {offsets = [0, 0], sizes = [1, 4], strides = [1, 1]} : vector<2x4xf32> to vector<1x4xf32>
    %cst_27 = arith.constant 0.00255102036 : f32
    %75 = vector.broadcast %cst_27 : f32 to vector<1x4xf32>
    %76 = arith.mulf %74, %75 : vector<1x4xf32>
    %77 = vector.extract_strided_slice %73 {offsets = [1, 0], sizes = [1, 4], strides = [1, 1]} : vector<2x4xf32> to vector<1x4xf32>
    %cst_28 = arith.constant 0.00255102036 : f32
    %78 = vector.broadcast %cst_28 : f32 to vector<1x4xf32>
    %79 = arith.mulf %77, %78 : vector<1x4xf32>
    %80 = arith.mulf %76, %76 : vector<1x4xf32>
    %81 = arith.subf %79, %80 : vector<1x4xf32>
    %c0_29 = arith.constant 0 : index
    %c0_30 = arith.constant 0 : index
    %82 = vector.load %arg10[%c0_29, %c0_30] : memref<1x4xf32, #tpu.memory_space<vmem>>, vector<1x4xf32>
    %cst_31 = arith.constant 9.99999974E-6 : f32
    %83 = vector.broadcast %cst_31 : f32 to vector<1x4xf32>
    %84 = arith.addf %81, %83 : vector<1x4xf32>
    %85 = math.rsqrt %84 : vector<1x4xf32>
    %86 = arith.mulf %82, %85 : vector<1x4xf32>
    %c0_32 = arith.constant 0 : index
    %c0_33 = arith.constant 0 : index
    %87 = vector.load %arg11[%c0_32, %c0_33] : memref<1x4xf32, #tpu.memory_space<vmem>>, vector<1x4xf32>
    %88 = arith.mulf %76, %86 : vector<1x4xf32>
    %89 = arith.subf %87, %88 : vector<1x4xf32>
    %90 = vector.shape_cast %2 : vector<2x1xi1> to vector<2x1xi1>
    %91 = vector.broadcast %90 : vector<2x1xi1> to vector<2x4xi1>
    %92 = vector.shape_cast %86 : vector<1x4xf32> to vector<1x4xf32>
    %93 = vector.broadcast %92 : vector<1x4xf32> to vector<2x4xf32>
    %94 = vector.shape_cast %89 : vector<1x4xf32> to vector<1x4xf32>
    %95 = vector.broadcast %94 : vector<1x4xf32> to vector<2x4xf32>
    %96 = arith.select %91, %93, %95 : vector<2x4xi1>, vector<2x4xf32>
    %c0_34 = arith.constant 0 : index
    %c0_35 = arith.constant 0 : index
    %97 = vector.load %arg9[%c0_34, %c0_35] : memref<4x896xbf16, #tpu.memory_space<vmem>>, vector<4x896xbf16>
    %98 = arith.extf %97 : vector<4x896xbf16> to vector<4x896xf32>
    %cst_36 = arith.constant dense<0.000000e+00> : vector<2x896xf32>
    %99 = tpu.matmul %96, %98, %cst_36 {dimension_numbers = #tpu.dot_dimension_numbers<[1], [0], [0], [1], [0, 0, 1, 1], [], []>} : vector<2x4xf32>, vector<4x896xf32>, vector<2x896xf32> -> vector<2x896xf32>
    %100 = vector.extract_strided_slice %99 {offsets = [0, 0], sizes = [1, 896], strides = [1, 1]} : vector<2x896xf32> to vector<1x896xf32>
    %101 = vector.broadcast %100 : vector<1x896xf32> to vector<2x896xf32>
    %102 = arith.mulf %58, %101 : vector<2x896xf32>
    %103 = vector.extract_strided_slice %99 {offsets = [1, 0], sizes = [1, 896], strides = [1, 1]} : vector<2x896xf32> to vector<1x896xf32>
    %104 = vector.broadcast %103 : vector<1x896xf32> to vector<2x896xf32>
    %105 = arith.addf %102, %104 : vector<2x896xf32>
    %cst_37 = arith.constant 0.000000e+00 : f32
    %106 = vector.broadcast %cst_37 : f32 to vector<2x896xf32>
    %107 = arith.maximumf %105, %106 : vector<2x896xf32>
    %108 = arith.truncf %107 : vector<2x896xf32> to vector<2x896xbf16>
    %c0_38 = arith.constant 0 : index
    %c0_39 = arith.constant 0 : index
    %109 = vector.load %arg12[%c0_38, %c0_39] : memref<896x896xbf16, #tpu.memory_space<vmem>>, vector<896x896xbf16>
    %cst_40 = arith.constant dense<0.000000e+00> : vector<2x896xf32>
    %110 = tpu.matmul %108, %109, %cst_40 {dimension_numbers = #tpu.dot_dimension_numbers<[1], [0], [0], [1], [0, 0, 1, 1], [], []>} : vector<2x896xbf16>, vector<896x896xbf16>, vector<2x896xf32> -> vector<2x896xf32>
    %c0_41 = arith.constant 0 : index
    %c0_42 = arith.constant 0 : index
    %111 = vector.load %arg13[%c0_41, %c0_42] : memref<1x896xf32, #tpu.memory_space<vmem>>, vector<1x896xf32>
    %112 = vector.broadcast %111 : vector<1x896xf32> to vector<2x896xf32>
    %113 = arith.addf %110, %112 : vector<2x896xf32>
    %114 = math.tanh %113 : vector<2x896xf32>
    %c0_43 = arith.constant 0 : index
    %c0_44 = arith.constant 0 : index
    %115 = vector.load %arg14[%c0_43, %c0_44] : memref<2x896xf32, #tpu.memory_space<vmem>>, vector<2x896xf32>
    tpu.vector_store %arg14[%c0_43, %c0_44], %114 {strides = array<i32>} : memref<2x896xf32, #tpu.memory_space<vmem>>, vector<2x896xf32>,
    return
  }
  func.func @transform_0(%arg0: i32) -> (i32, i32) {
    %c0_i32 = arith.constant 0 : i32
    %c0_i32_0 = arith.constant 0 : i32
    %c0_i32_1 = arith.constant 0 : i32
    return %c0_i32, %c0_i32_0 : i32, i32
  }
  func.func @transform_1(%arg0: i32) -> (i32, i32) {
    %c0_i32 = arith.constant 0 : i32
    %c0_i32_0 = arith.constant 0 : i32
    %c0_i32_1 = arith.constant 0 : i32
    return %c0_i32, %c0_i32_0 : i32, i32
  }
  func.func @transform_2(%arg0: i32) -> (i32, i32) {
    %c0_i32 = arith.constant 0 : i32
    %c0_i32_0 = arith.constant 0 : i32
    %c0_i32_1 = arith.constant 0 : i32
    return %c0_i32, %c0_i32_0 : i32, i32
  }
  func.func @transform_3(%arg0: i32) -> (i32, i32) {
    %c0_i32 = arith.constant 0 : i32
    %c0_i32_0 = arith.constant 0 : i32
    %c0_i32_1 = arith.constant 0 : i32
    return %c0_i32, %c0_i32_0 : i32, i32
  }
  func.func @transform_4(%arg0: i32) -> (i32, i32) {
    %c0_i32 = arith.constant 0 : i32
    %c0_i32_0 = arith.constant 0 : i32
    %c0_i32_1 = arith.constant 0 : i32
    return %c0_i32, %c0_i32_0 : i32, i32
  }
  func.func @transform_5(%arg0: i32) -> (i32, i32) {
    %c0_i32 = arith.constant 0 : i32
    %c0_i32_0 = arith.constant 0 : i32
    %c0_i32_1 = arith.constant 0 : i32
    return %c0_i32, %c0_i32_0 : i32, i32
  }
  func.func @transform_6(%arg0: i32) -> (i32, i32) {
    %c0_i32 = arith.constant 0 : i32
    %c0_i32_0 = arith.constant 0 : i32
    %c0_i32_1 = arith.constant 0 : i32
    return %c0_i32, %c0_i32_0 : i32, i32
  }
  func.func @transform_7(%arg0: i32) -> (i32, i32) {
    %c0_i32 = arith.constant 0 : i32
    %c0_i32_0 = arith.constant 0 : i32
    %c0_i32_1 = arith.constant 0 : i32
    return %c0_i32, %c0_i32_0 : i32, i32
  }
  func.func @transform_8(%arg0: i32) -> (i32, i32) {
    %c0_i32 = arith.constant 0 : i32
    %c0_i32_0 = arith.constant 0 : i32
    %c0_i32_1 = arith.constant 0 : i32
    return %c0_i32, %c0_i32_0 : i32, i32
  }
  func.func @transform_9(%arg0: i32) -> (i32, i32) {
    %c0_i32 = arith.constant 0 : i32
    %c0_i32_0 = arith.constant 0 : i32
    %c0_i32_1 = arith.constant 0 : i32
    return %c0_i32, %c0_i32_0 : i32, i32
  }
  func.func @transform_10(%arg0: i32) -> (i32, i32) {
    %c0_i32 = arith.constant 0 : i32
    %c0_i32_0 = arith.constant 0 : i32
    %c0_i32_1 = arith.constant 0 : i32
    return %c0_i32, %c0_i32_0 : i32, i32
  }
  func.func @transform_11(%arg0: i32) -> (i32, i32) {
    %c0_i32 = arith.constant 0 : i32
    %c0_i32_0 = arith.constant 0 : i32
    %c0_i32_1 = arith.constant 0 : i32
    return %c0_i32, %c0_i32_0 : i32, i32
  }
  func.func @transform_12(%arg0: i32) -> (i32, i32) {
    %c0_i32 = arith.constant 0 : i32
    %c0_i32_0 = arith.constant 0 : i32
    %c0_i32_1 = arith.constant 0 : i32
    return %c0_i32, %c0_i32_0 : i32, i32
  }
  func.func @transform_13(%arg0: i32) -> (i32, i32) {
    %c0_i32 = arith.constant 0 : i32
    %c0_i32_0 = arith.constant 0 : i32
    %c0_i32_1 = arith.constant 0 : i32
    return %c0_i32, %c0_i32_0 : i32, i32
  }
}

</mosaic_0001>

<llo_original>
// kernel: _generator_pallas_forward.1
$region0: #{_generator_pallas_forward.1}
  #allocation0 [shape = 'u32[]', space=smem, size = 0x4, offset = 0x4, fixed_abs, tag = 'smem constant byte address 0x4 - core index']
  #allocation1 [shape = 'u32[144,128]{1,0:T(1,128)}', space=vmem, size = 0x12000, scoped, tag = 'internal scratch']
  %s0 = inlined_call_operand.hbm [shape: f32[2,32], index: 0, kind: input, shape index: {}]
  %s1 = inlined_call_operand.hbm [shape: bf16[32,1664], index: 1, kind: input, shape index: {}]
  %s2 = inlined_call_operand.vmem [shape: bf16[1664,8], index: 2, kind: input, shape index: {}]
  %s3 = inlined_call_operand.hbm [shape: bf16[8,1664], index: 3, kind: input, shape index: {}]
  %s4 = inlined_call_operand.hbm [shape: f32[1,8], index: 4, kind: input, shape index: {}]
  %s5 = inlined_call_operand.hbm [shape: f32[1,8], index: 5, kind: input, shape index: {}]
  %s6 = inlined_call_operand.hbm [shape: bf16[1664,896], index: 6, kind: input, shape index: {}]
  %s7 = inlined_call_operand.vmem [shape: bf16[896,4], index: 7, kind: input, shape index: {}]
  %s8 = inlined_call_operand.hbm [shape: bf16[4,896], index: 8, kind: input, shape index: {}]
  %s9 = inlined_call_operand.hbm [shape: f32[1,4], index: 9, kind: input, shape index: {}]
  %s10 = inlined_call_operand.hbm [shape: f32[1,4], index: 10, kind: input, shape index: {}]
  %s11 = inlined_call_operand.hbm [shape: bf16[896,896], index: 11, kind: input, shape index: {}]
  %s12 = inlined_call_operand.hbm [shape: f32[1,896], index: 12, kind: input, shape index: {}]
  %s13 = inlined_call_operand.vmem [shape: f32[2,896], index: 13, kind: output, shape index: {}]
  %s14 = sld [smem:[#allocation0]]
  $region106: #{_generator_pallas_forward.1} parent=0
    _
  %s16 = ssub.s32 1, %s14
  %s17 = scalar_select 0, %s16, %s14
  $region1: #{_generator_pallas_forward.1} parent=0
    #allocation2 [shape = 'u8[1024]{0}', space=vmem, size = 0x400, scoped, tag = 'input window, operand 0, single buffered']
    #allocation3 [shape = 's32[1]{0}', space=sflag, size = 0x4, scoped, tag = 'scoped memory for _generator_pallas_forward.1']
    #allocation4 [shape = 'u8[106496]{0}', space=vmem, size = 0x1a000, scoped, tag = 'input window, operand 1, single buffered']
    #allocation5 [shape = 's32[1]{0}', space=sflag, size = 0x4, scoped, tag = 'scoped memory for _generator_pallas_forward.1']
    #allocation6 [shape = 'u8[26624]{0}', space=vmem, size = 0x6800, scoped, tag = 'input window, operand 3, single buffered']
    #allocation7 [shape = 'u8[512]{0}', space=vmem, size = 0x400, scoped, tag = 'input window, operand 4, single buffered']
    #allocation8 [shape = 's32[1]{0}', space=sflag, size = 0x4, scoped, tag = 'scoped memory for _generator_pallas_forward.1']
    #allocation9 [shape = 'u8[512]{0}', space=vmem, size = 0x400, scoped, tag = 'input window, operand 5, single buffered']
    #allocation10 [shape = 'u8[2981888]{0}', space=vmem, size = 0x2d8000, scoped, tag = 'input window, operand 6, single buffered']
    #allocation11 [shape = 's32[1]{0}', space=sflag, size = 0x4, scoped, tag = 'scoped memory for _generator_pallas_forward.1']
    #allocation12 [shape = 'u8[7168]{0}', space=vmem, size = 0x1c00, scoped, tag = 'input window, operand 8, single buffered']
    #allocation13 [shape = 'u8[512]{0}', space=vmem, size = 0x400, scoped, tag = 'input window, operand 9, single buffered']
    #allocation14 [shape = 's32[1]{0}', space=sflag, size = 0x4, scoped, tag = 'scoped memory for _generator_pallas_forward.1']
    #allocation15 [shape = 'u8[512]{0}', space=vmem, size = 0x400, scoped, tag = 'input window, operand 10, single buffered']
    #allocation16 [shape = 'u8[1605632]{0}', space=vmem, size = 0x188000, scoped, tag = 'input window, operand 11, single buffered']
    #allocation17 [shape = 's32[1]{0}', space=sflag, size = 0x4, scoped, tag = 'scoped memory for _generator_pallas_forward.1']
    #allocation18 [shape = 'u8[3584]{0}', space=vmem, size = 0x1000, scoped, tag = 'input window, operand 12, single buffered']
    %18 = vsyncpa [#allocation3], 0
    %19 = vsyncpa [#allocation5], 0
    %20 = vsyncpa [#allocation8], 0
    %21 = vsyncpa [#allocation11], 0
    %22 = vsyncpa [#allocation14], 0
    %23 = vsyncpa [#allocation17], 0
    // Predicated region
    $region2: #{_generator_pallas_forward.1} parent=1 // pred_check
      _
    $region3: #{_generator_pallas_forward.1} parent=1 // pred_check_branch
      %25 = sbr.rel (0) target = $region5
    $region4: #{_generator_pallas_forward.1} parent=1 // pred_region
      %s27 = ssub.s32 32, 32
      %28 = vsyncadd [#allocation3], %s27
      %s30 = sshll.u32 [#allocation2], 4
      %s31 = int_to_ptr.vmem [resolvable:$true] %s30
      %33 = dma.hbm_to_vmem [thread:$0]  %s0, 32, %s31, [#allocation3]
    $region5: #{_generator_pallas_forward.1} parent=1 // pred_fallthru
      _
    // Predicated region
    $region6: #{_generator_pallas_forward.1} parent=1 // pred_check
      _
    $region7: #{_generator_pallas_forward.1} parent=1 // pred_check_branch
      %35 = sbr.rel (0) target = $region9
    $region8: #{_generator_pallas_forward.1} parent=1 // pred_region
      %s37 = ssub.s32 3328, 3328
      %38 = vsyncadd [#allocation5], %s37
      %s39 = sshll.u32 [#allocation4], 4
      %s40 = int_to_ptr.vmem [resolvable:$true] %s39
      %45 = dma.hbm_to_vmem [thread:$0]  %s1, 3328, %s40, [#allocation5], 832, 832, 52
    $region9: #{_generator_pallas_forward.1} parent=1 // pred_fallthru
      _
    // Predicated region
    $region10: #{_generator_pallas_forward.1} parent=1 // pred_check
      _
    $region11: #{_generator_pallas_forward.1} parent=1 // pred_check_branch
      %47 = sbr.rel (0) target = $region13
    $region12: #{_generator_pallas_forward.1} parent=1 // pred_region
      _
    $region13: #{_generator_pallas_forward.1} parent=1 // pred_fallthru
      _
    // Predicated region
    $region14: #{_generator_pallas_forward.1} parent=1 // pred_check
      _
    $region15: #{_generator_pallas_forward.1} parent=1 // pred_check_branch
      %49 = sbr.rel (0) target = $region17
    $region16: #{_generator_pallas_forward.1} parent=1 // pred_region
      %s51 = ssub.s32 832, 832
      %52 = vsyncadd [#allocation5], %s51
      %s54 = sshll.u32 [#allocation6], 4
      %s55 = int_to_ptr.vmem [resolvable:$true] %s54
      %57 = dma.hbm_to_vmem [thread:$0]  %s3, 832, %s55, [#allocation5]
    $region17: #{_generator_pallas_forward.1} parent=1 // pred_fallthru
      _
    // Predicated region
    $region18: #{_generator_pallas_forward.1} parent=1 // pred_check
      _
    $region19: #{_generator_pallas_forward.1} parent=1 // pred_check_branch
      %59 = sbr.rel (0) target = $region21
    $region20: #{_generator_pallas_forward.1} parent=1 // pred_region
      %s61 = ssub.s32 16, 16
      %62 = vsyncadd [#allocation8], %s61
      %s64 = sshll.u32 [#allocation7], 4
      %s65 = int_to_ptr.vmem [resolvable:$true] %s64
      %67 = dma.hbm_to_vmem [thread:$0]  %s4, 16, %s65, [#allocation8]
    $region21: #{_generator_pallas_forward.1} parent=1 // pred_fallthru
      _
    // Predicated region
    $region22: #{_generator_pallas_forward.1} parent=1 // pred_check
      _
    $region23: #{_generator_pallas_forward.1} parent=1 // pred_check_branch
      %69 = sbr.rel (0) target = $region25
    $region24: #{_generator_pallas_forward.1} parent=1 // pred_region
      %s71 = ssub.s32 16, 16
      %72 = vsyncadd [#allocation8], %s71
      %s74 = sshll.u32 [#allocation9], 4
      %s75 = int_to_ptr.vmem [resolvable:$true] %s74
      %77 = dma.hbm_to_vmem [thread:$0]  %s5, 16, %s75, [#allocation8]
    $region25: #{_generator_pallas_forward.1} parent=1 // pred_fallthru
      _
    // Predicated region
    $region26: #{_generator_pallas_forward.1} parent=1 // pred_check
      _
    $region27: #{_generator_pallas_forward.1} parent=1 // pred_check_branch
      %79 = sbr.rel (0) target = $region29
    $region28: #{_generator_pallas_forward.1} parent=1 // pred_region
      %s81 = ssub.s32 93184, 93184
      %82 = vsyncadd [#allocation11], %s81
      %s83 = sshll.u32 [#allocation10], 4
      %s84 = int_to_ptr.vmem [resolvable:$true] %s83
      %89 = dma.hbm_to_vmem [thread:$0]  %s6, 93184, %s84, [#allocation11], 448, 448, 28
    $region29: #{_generator_pallas_forward.1} parent=1 // pred_fallthru
      _
    // Predicated region
    $region30: #{_generator_pallas_forward.1} parent=1 // pred_check
      _
    $region31: #{_generator_pallas_forward.1} parent=1 // pred_check_branch
      %91 = sbr.rel (0) target = $region33
    $region32: #{_generator_pallas_forward.1} parent=1 // pred_region
      _
    $region33: #{_generator_pallas_forward.1} parent=1 // pred_fallthru
      _
    // Predicated region
    $region34: #{_generator_pallas_forward.1} parent=1 // pred_check
      _
    $region35: #{_generator_pallas_forward.1} parent=1 // pred_check_branch
      %93 = sbr.rel (0) target = $region37
    $region36: #{_generator_pallas_forward.1} parent=1 // pred_region
      %s95 = ssub.s32 224, 224
      %96 = vsyncadd [#allocation11], %s95
      %s98 = sshll.u32 [#allocation12], 4
      %s99 = int_to_ptr.vmem [resolvable:$true] %s98
      %101 = dma.hbm_to_vmem [thread:$0]  %s8, 224, %s99, [#allocation11]
    $region37: #{_generator_pallas_forward.1} parent=1 // pred_fallthru
      _
    // Predicated region
    $region38: #{_generator_pallas_forward.1} parent=1 // pred_check
      _
    $region39: #{_generator_pallas_forward.1} parent=1 // pred_check_branch
      %103 = sbr.rel (0) target = $region41
    $region40: #{_generator_pallas_forward.1} parent=1 // pred_region
      %s105 = ssub.s32 16, 16
      %106 = vsyncadd [#allocation14], %s105
      %s108 = sshll.u32 [#allocation13], 4
      %s109 = int_to_ptr.vmem [resolvable:$true] %s108
      %111 = dma.hbm_to_vmem [thread:$0]  %s9, 16, %s109, [#allocation14]
    $region41: #{_generator_pallas_forward.1} parent=1 // pred_fallthru
      _
    // Predicated region
    $region42: #{_generator_pallas_forward.1} parent=1 // pred_check
      _
    $region43: #{_generator_pallas_forward.1} parent=1 // pred_check_branch
      %113 = sbr.rel (0) target = $region45
    $region44: #{_generator_pallas_forward.1} parent=1 // pred_region
      %s115 = ssub.s32 16, 16
      %116 = vsyncadd [#allocation14], %s115
      %s118 = sshll.u32 [#allocation15], 4
      %s119 = int_to_ptr.vmem [resolvable:$true] %s118
      %121 = dma.hbm_to_vmem [thread:$0]  %s10, 16, %s119, [#allocation14]
    $region45: #{_generator_pallas_forward.1} parent=1 // pred_fallthru
      _
    // Predicated region
    $region46: #{_generator_pallas_forward.1} parent=1 // pred_check
      _
    $region47: #{_generator_pallas_forward.1} parent=1 // pred_check_branch
      %123 = sbr.rel (0) target = $region49
    $region48: #{_generator_pallas_forward.1} parent=1 // pred_region
      %s125 = ssub.s32 50176, 50176
      %126 = vsyncadd [#allocation17], %s125
      %s127 = sshll.u32 [#allocation16], 4
      %s128 = int_to_ptr.vmem [resolvable:$true] %s127
      %133 = dma.hbm_to_vmem [thread:$0]  %s11, 50176, %s128, [#allocation17], 448, 448, 28
    $region49: #{_generator_pallas_forward.1} parent=1 // pred_fallthru
      _
    // Predicated region
    $region50: #{_generator_pallas_forward.1} parent=1 // pred_check
      _
    $region51: #{_generator_pallas_forward.1} parent=1 // pred_check_branch
      %135 = sbr.rel (0) target = $region53
    $region52: #{_generator_pallas_forward.1} parent=1 // pred_region
      %s137 = ssub.s32 112, 112
      %138 = vsyncadd [#allocation17], %s137
      %s140 = sshll.u32 [#allocation18], 4
      %s141 = int_to_ptr.vmem [resolvable:$true] %s140
      %143 = dma.hbm_to_vmem [thread:$0]  %s12, 112, %s141, [#allocation17]
    $region53: #{_generator_pallas_forward.1} parent=1 // pred_fallthru
      _
    // Predicated region
    $region54: #{_generator_pallas_forward.1} parent=1 // pred_check
      _
    $region55: #{_generator_pallas_forward.1} parent=1 // pred_check_branch
      %145 = sbr.rel (0) target = $region57
    $region56: #{_generator_pallas_forward.1} parent=1 // pred_region
      %146 = dma.done [#allocation3], 32
    $region57: #{_generator_pallas_forward.1} parent=1 // pred_fallthru
      _
    // Predicated region
    $region58: #{_generator_pallas_forward.1} parent=1 // pred_check
      _
    $region59: #{_generator_pallas_forward.1} parent=1 // pred_check_branch
      %148 = sbr.rel (0) target = $region61
    $region60: #{_generator_pallas_forward.1} parent=1 // pred_region
      %149 = dma.done [#allocation5], 3328
    $region61: #{_generator_pallas_forward.1} parent=1 // pred_fallthru
      _
    // Predicated region
    $region62: #{_generator_pallas_forward.1} parent=1 // pred_check
      _
    $region63: #{_generator_pallas_forward.1} parent=1 // pred_check_branch
      %151 = sbr.rel (0) target = $region65
    $region64: #{_generator_pallas_forward.1} parent=1 // pred_region
      %152 = dma.done [#allocation5], 832
    $region65: #{_generator_pallas_forward.1} parent=1 // pred_fallthru
      _
    // Predicated region
    $region66: #{_generator_pallas_forward.1} parent=1 // pred_check
      _
    $region67: #{_generator_pallas_forward.1} parent=1 // pred_check_branch
      %154 = sbr.rel (0) target = $region69
    $region68: #{_generator_pallas_forward.1} parent=1 // pred_region
      %155 = dma.done [#allocation8], 16
    $region69: #{_generator_pallas_forward.1} parent=1 // pred_fallthru
      _
    // Predicated region
    $region70: #{_generator_pallas_forward.1} parent=1 // pred_check
      _
    $region71: #{_generator_pallas_forward.1} parent=1 // pred_check_branch
      %157 = sbr.rel (0) target = $region73
    $region72: #{_generator_pallas_forward.1} parent=1 // pred_region
      %158 = dma.done [#allocation8], 16
    $region73: #{_generator_pallas_forward.1} parent=1 // pred_fallthru
      _
    // Predicated region
    $region74: #{_generator_pallas_forward.1} parent=1 // pred_check
      _
    $region75: #{_generator_pallas_forward.1} parent=1 // pred_check_branch
      %160 = sbr.rel (0) target = $region77
    $region76: #{_generator_pallas_forward.1} parent=1 // pred_region
      %161 = dma.done [#allocation11], 93184
    $region77: #{_generator_pallas_forward.1} parent=1 // pred_fallthru
      _
    // Predicated region
    $region78: #{_generator_pallas_forward.1} parent=1 // pred_check
      _
    $region79: #{_generator_pallas_forward.1} parent=1 // pred_check_branch
      %163 = sbr.rel (0) target = $region81
    $region80: #{_generator_pallas_forward.1} parent=1 // pred_region
      %164 = dma.done [#allocation11], 224
    $region81: #{_generator_pallas_forward.1} parent=1 // pred_fallthru
      _
    // Predicated region
    $region82: #{_generator_pallas_forward.1} parent=1 // pred_check
      _
    $region83: #{_generator_pallas_forward.1} parent=1 // pred_check_branch
      %166 = sbr.rel (0) target = $region85
    $region84: #{_generator_pallas_forward.1} parent=1 // pred_region
      %167 = dma.done [#allocation14], 16
    $region85: #{_generator_pallas_forward.1} parent=1 // pred_fallthru
      _
    // Predicated region
    $region86: #{_generator_pallas_forward.1} parent=1 // pred_check
      _
    $region87: #{_generator_pallas_forward.1} parent=1 // pred_check_branch
      %169 = sbr.rel (0) target = $region89
    $region88: #{_generator_pallas_forward.1} parent=1 // pred_region
      %170 = dma.done [#allocation14], 16
    $region89: #{_generator_pallas_forward.1} parent=1 // pred_fallthru
      _
    // Predicated region
    $region90: #{_generator_pallas_forward.1} parent=1 // pred_check
      _
    $region91: #{_generator_pallas_forward.1} parent=1 // pred_check_branch
      %172 = sbr.rel (0) target = $region93
    $region92: #{_generator_pallas_forward.1} parent=1 // pred_region
      %173 = dma.done [#allocation17], 50176
    $region93: #{_generator_pallas_forward.1} parent=1 // pred_fallthru
      _
    // Predicated region
    $region94: #{_generator_pallas_forward.1} parent=1 // pred_check
      _
    $region95: #{_generator_pallas_forward.1} parent=1 // pred_check_branch
      %175 = sbr.rel (0) target = $region97
    $region96: #{_generator_pallas_forward.1} parent=1 // pred_region
      %176 = dma.done [#allocation17], 112
    $region97: #{_generator_pallas_forward.1} parent=1 // pred_fallthru
      _
    %v178 = vlaneseq
    %v179 = vshrl.u32 %v178, 7
    %vm180 = vcmp.eq.s32.totalorder %v179, 0
    %v181 = vld [vmem:[#allocation2] sm:$0x3]
    %v182 = vpack.c.bf16 %v181, %v181
    %v183 = vld [vmem:[#allocation4] sm:$0xff]
    %v184 = vld [vmem:[#allocation4 + $0x8] sm:$0xff]
    %v185 = vld [vmem:[#allocation4 + $0x10] sm:$0xff]
    %v186 = vld [vmem:[#allocation4 + $0x18] sm:$0xff]
    %v187 = vld [vmem:[#allocation4 + $0x20] sm:$0xff]
    %v188 = vld [vmem:[#allocation4 + $0x28] sm:$0xff]
    %v189 = vld [vmem:[#allocation4 + $0x30] sm:$0xf]
    %v190 = vld [vmem:[#allocation4 + $0x34] sm:$0xff]
    %v191 = vld [vmem:[#allocation4 + $0x3c] sm:$0xff]
    %v192 = vld [vmem:[#allocation4 + $0x44] sm:$0xff]
    %v193 = vld [vmem:[#allocation4 + $0x4c] sm:$0xff]
    %v194 = vld [vmem:[#allocation4 + $0x54] sm:$0xff]
    %v195 = vld [vmem:[#allocation4 + $0x5c] sm:$0xff]
    %v196 = vld [vmem:[#allocation4 + $0x64] sm:$0xf]
    %v197 = vld [vmem:[#allocation4 + $0x68] sm:$0xff]
    %v198 = vld [vmem:[#allocation4 + $0x70] sm:$0xff]
    %v199 = vld [vmem:[#allocation4 + $0x78] sm:$0xff]
    %v200 = vld [vmem:[#allocation4 + $0x80] sm:$0xff]
    %v201 = vld [vmem:[#allocation4 + $0x88] sm:$0xff]
    %v202 = vld [vmem:[#allocation4 + $0x90] sm:$0xff]
    %v203 = vld [vmem:[#allocation4 + $0x98] sm:$0xf]
    %v204 = vld [vmem:[#allocation4 + $0x9c] sm:$0xff]
    %v205 = vld [vmem:[#allocation4 + $0xa4] sm:$0xff]
    %v206 = vld [vmem:[#allocation4 + $0xac] sm:$0xff]
    %v207 = vld [vmem:[#allocation4 + $0xb4] sm:$0xff]
    %v208 = vld [vmem:[#allocation4 + $0xbc] sm:$0xff]
    %v209 = vld [vmem:[#allocation4 + $0xc4] sm:$0xff]
    %v210 = vld [vmem:[#allocation4 + $0xcc] sm:$0xf]
    %v239 = vunpack.c.l.b16 %v183
    %v240 = vunpack.c.h.b16 %v183
    %v241 = vunpack.c.l.b16 %v184
    %v242 = vunpack.c.h.b16 %v184
    %v243 = vunpack.c.l.b16 %v185
    %v244 = vunpack.c.h.b16 %v185
    %v245 = vunpack.c.l.b16 %v186
    %v246 = vunpack.c.h.b16 %v186
    %v247 = vunpack.c.l.b16 %v187
    %v248 = vunpack.c.h.b16 %v187
    %v249 = vunpack.c.l.b16 %v188
    %v250 = vunpack.c.h.b16 %v188
    %v251 = vunpack.c.l.b16 %v189
    %v252 = vunpack.c.l.b16 %v190
    %v253 = vunpack.c.h.b16 %v190
    %v254 = vunpack.c.l.b16 %v191
    %v255 = vunpack.c.h.b16 %v191
    %v256 = vunpack.c.l.b16 %v192
    %v257 = vunpack.c.h.b16 %v192
    %v258 = vunpack.c.l.b16 %v193
    %v259 = vunpack.c.h.b16 %v193
    %v260 = vunpack.c.l.b16 %v194
    %v261 = vunpack.c.h.b16 %v194
    %v262 = vunpack.c.l.b16 %v195
    %v263 = vunpack.c.h.b16 %v195
    %v264 = vunpack.c.l.b16 %v196
    %v265 = vunpack.c.l.b16 %v197
    %v266 = vunpack.c.h.b16 %v197
    %v267 = vunpack.c.l.b16 %v198
    %v268 = vunpack.c.h.b16 %v198
    %v269 = vunpack.c.l.b16 %v199
    %v270 = vunpack.c.h.b16 %v199
    %v271 = vunpack.c.l.b16 %v200
    %v272 = vunpack.c.h.b16 %v200
    %v273 = vunpack.c.l.b16 %v201
    %v274 = vunpack.c.h.b16 %v201
    %v275 = vunpack.c.l.b16 %v202
    %v276 = vunpack.c.h.b16 %v202
    %v277 = vunpack.c.l.b16 %v203
    %v278 = vunpack.c.l.b16 %v204
    %v279 = vunpack.c.h.b16 %v204
    %v280 = vunpack.c.l.b16 %v205
    %v281 = vunpack.c.h.b16 %v205
    %v282 = vunpack.c.l.b16 %v206
    %v283 = vunpack.c.h.b16 %v206
    %v284 = vunpack.c.l.b16 %v207
    %v285 = vunpack.c.h.b16 %v207
    %v286 = vunpack.c.l.b16 %v208
    %v287 = vunpack.c.h.b16 %v208
    %v288 = vunpack.c.l.b16 %v209
    %v289 = vunpack.c.h.b16 %v209
    %v290 = vunpack.c.l.b16 %v210
    %v291 = vpack.c.b16 %v252, %v239
    %v292 = vpack.c.b16 %v253, %v240
    %v293 = vpack.c.b16 %v254, %v241
    %v294 = vpack.c.b16 %v255, %v242
    %v295 = vpack.c.b16 %v256, %v243
    %v296 = vpack.c.b16 %v257, %v244
    %v297 = vpack.c.b16 %v258, %v245
    %v298 = vpack.c.b16 %v259, %v246
    %v299 = vpack.c.b16 %v260, %v247
    %v300 = vpack.c.b16 %v261, %v248
    %v301 = vpack.c.b16 %v262, %v249
    %v302 = vpack.c.b16 %v263, %v250
    %v303 = vpack.c.b16 %v264, %v251
    %v304 = vpack.c.b16 %v278, %v265
    %v305 = vpack.c.b16 %v279, %v266
    %v306 = vpack.c.b16 %v280, %v267
    %v307 = vpack.c.b16 %v281, %v268
    %v308 = vpack.c.b16 %v282, %v269
    %v309 = vpack.c.b16 %v283, %v270
    %v310 = vpack.c.b16 %v284, %v271
    %v311 = vpack.c.b16 %v285, %v272
    %v312 = vpack.c.b16 %v286, %v273
    %v313 = vpack.c.b16 %v287, %v274
    %v314 = vpack.c.b16 %v288, %v275
    %v315 = vpack.c.b16 %v289, %v276
    %v316 = vpack.c.b16 %v290, %v277
    %vm343 = vcmask 261120
    %v345 = vsel %vm343, %v182, 0
    %347 = vmatprep.subr.bf16.mxu0 %v292
    %348 = vmatpush1.bf16.msra.mxu0 %v291
    %349 = vmatprep.subr.bf16.mxu0 %v305
    %350 = vmatpush1.bf16.msra.mxu0 %v304
    %351 = vmatprep.subr.bf16.mxu0 0
    %352 = vmatpush1.bf16.msra.mxu0 0
    %353 = vmatprep.subr.bf16.mxu0 0
    %354 = vmatpush1.bf16.msra.mxu0 0
    %355 = vmatprep.subr.bf16.mxu0 0
    %356 = vmatpush1.bf16.msra.mxu0 0
    %357 = vmatprep.subr.bf16.mxu0 0
    %358 = vmatpush1.bf16.msra.mxu0 0
    %359 = vmatprep.subr.bf16.mxu0 0
    %360 = vmatpush1.bf16.msra.mxu0 0
    %361 = vmatprep.subr.bf16.mxu0 0
    %362 = vmatpush1.bf16.msra.mxu0 0
    %363 = vmatprep.subr.bf16.mxu0 0
    %364 = vmatpush1.bf16.msra.mxu0 0
    %365 = vmatprep.subr.bf16.mxu0 0
    %366 = vmatpush1.bf16.msra.mxu0 0
    %367 = vmatprep.subr.bf16.mxu0 0
    %368 = vmatpush1.bf16.msra.mxu0 0
    %369 = vmatprep.subr.bf16.mxu0 0
    %370 = vmatpush1.bf16.msra.mxu0 0
    %371 = vmatprep.subr.bf16.mxu0 0
    %372 = vmatpush1.bf16.msra.mxu0 0
    %373 = vmatprep.subr.bf16.mxu0 0
    %374 = vmatpush1.bf16.msra.mxu0 0
    %375 = vmatprep.subr.bf16.mxu0 0
    %376 = vmatpush1.bf16.msra.mxu0 0
    %377 = vmatprep.subr.bf16.mxu0 0
    %378 = vmatpush1.bf16.msra.mxu0 0
    %379 = vmatprep.mubr.bf16.mxu0 0
    %380 = vmatmul.mubr.bf16.gmra.mrb[0].mxu0 %v345
    %v381 = vpop.f32.mrb[0].mxu0
    %v382 = vadd.f32 0.0, %v381
    %v383 = vpop.f32.mrb[0].mxu0
    %v384 = vadd.f32 0.0, %v383
    %v385 = vpop.f32.mrb[0].mxu0
    %v386 = vpop.f32.mrb[0].mxu0
    %387 = vdwg.mxu0
    %388 = vmatprep.subr.bf16.mxu0 %v294
    %389 = vmatpush1.bf16.msra.mxu0 %v293
    %390 = vmatprep.subr.bf16.mxu0 %v307
    %391 = vmatpush1.bf16.msra.mxu0 %v306
    %392 = vmatprep.subr.bf16.mxu0 0
    %393 = vmatpush1.bf16.msra.mxu0 0
    %394 = vmatprep.subr.bf16.mxu0 0
    %395 = vmatpush1.bf16.msra.mxu0 0
    %396 = vmatprep.subr.bf16.mxu0 0
    %397 = vmatpush1.bf16.msra.mxu0 0
    %398 = vmatprep.subr.bf16.mxu0 0
    %399 = vmatpush1.bf16.msra.mxu0 0
    %400 = vmatprep.subr.bf16.mxu0 0
    %401 = vmatpush1.bf16.msra.mxu0 0
    %402 = vmatprep.subr.bf16.mxu0 0
    %403 = vmatpush1.bf16.msra.mxu0 0
    %404 = vmatprep.subr.bf16.mxu0 0
    %405 = vmatpush1.bf16.msra.mxu0 0
    %406 = vmatprep.subr.bf16.mxu0 0
    %407 = vmatpush1.bf16.msra.mxu0 0
    %408 = vmatprep.subr.bf16.mxu0 0
    %409 = vmatpush1.bf16.msra.mxu0 0
    %410 = vmatprep.subr.bf16.mxu0 0
    %411 = vmatpush1.bf16.msra.mxu0 0
    %412 = vmatprep.subr.bf16.mxu0 0
    %413 = vmatpush1.bf16.msra.mxu0 0
    %414 = vmatprep.subr.bf16.mxu0 0
    %415 = vmatpush1.bf16.msra.mxu0 0
    %416 = vmatprep.subr.bf16.mxu0 0
    %417 = vmatpush1.bf16.msra.mxu0 0
    %418 = vmatprep.subr.bf16.mxu0 0
    %419 = vmatpush1.bf16.msra.mxu0 0
    %420 = vmatprep.mubr.bf16.mxu0 0
    %421 = vmatmul.mubr.bf16.gmra.mrb[0].mxu0 %v345
    %v422 = vpop.f32.mrb[0].mxu0
    %v423 = vadd.f32 0.0, %v422
    %v424 = vpop.f32.mrb[0].mxu0
    %v425 = vadd.f32 0.0, %v424
    %v426 = vpop.f32.mrb[0].mxu0
    %v427 = vpop.f32.mrb[0].mxu0
    %428 = vdwg.mxu0
    %429 = vmatprep.subr.bf16.mxu0 %v296
    %430 = vmatpush1.bf16.msra.mxu0 %v295
    %431 = vmatprep.subr.bf16.mxu0 %v309
    %432 = vmatpush1.bf16.msra.mxu0 %v308
    %433 = vmatprep.subr.bf16.mxu0 0
    %434 = vmatpush1.bf16.msra.mxu0 0
    %435 = vmatprep.subr.bf16.mxu0 0
    %436 = vmatpush1.bf16.msra.mxu0 0
    %437 = vmatprep.subr.bf16.mxu0 0
    %438 = vmatpush1.bf16.msra.mxu0 0
    %439 = vmatprep.subr.bf16.mxu0 0
    %440 = vmatpush1.bf16.msra.mxu0 0
    %441 = vmatprep.subr.bf16.mxu0 0
    %442 = vmatpush1.bf16.msra.mxu0 0
    %443 = vmatprep.subr.bf16.mxu0 0
    %444 = vmatpush1.bf16.msra.mxu0 0
    %445 = vmatprep.subr.bf16.mxu0 0
    %446 = vmatpush1.bf16.msra.mxu0 0
    %447 = vmatprep.subr.bf16.mxu0 0
    %448 = vmatpush1.bf16.msra.mxu0 0
    %449 = vmatprep.subr.bf16.mxu0 0
    %450 = vmatpush1.bf16.msra.mxu0 0
    %451 = vmatprep.subr.bf16.mxu0 0
    %452 = vmatpush1.bf16.msra.mxu0 0
    %453 = vmatprep.subr.bf16.mxu0 0
    %454 = vmatpush1.bf16.msra.mxu0 0
    %455 = vmatprep.subr.bf16.mxu0 0
    %456 = vmatpush1.bf16.msra.mxu0 0
    %457 = vmatprep.subr.bf16.mxu0 0
    %458 = vmatpush1.bf16.msra.mxu0 0
    %459 = vmatprep.subr.bf16.mxu0 0
    %460 = vmatpush1.bf16.msra.mxu0 0
    %461 = vmatprep.mubr.bf16.mxu0 0
    %462 = vmatmul.mubr.bf16.gmra.mrb[0].mxu0 %v345
    %v463 = vpop.f32.mrb[0].mxu0
    %v464 = vadd.f32 0.0, %v463
    %v465 = vpop.f32.mrb[0].mxu0
    %v466 = vadd.f32 0.0, %v465
    %v467 = vpop.f32.mrb[0].mxu0
    %v468 = vpop.f32.mrb[0].mxu0
    %469 = vdwg.mxu0
    %470 = vmatprep.subr.bf16.mxu0 %v298
    %471 = vmatpush1.bf16.msra.mxu0 %v297
    %472 = vmatprep.subr.bf16.mxu0 %v311
    %473 = vmatpush1.bf16.msra.mxu0 %v310
    %474 = vmatprep.subr.bf16.mxu0 0
    %475 = vmatpush1.bf16.msra.mxu0 0
    %476 = vmatprep.subr.bf16.mxu0 0
    %477 = vmatpush1.bf16.msra.mxu0 0
    %478 = vmatprep.subr.bf16.mxu0 0
    %479 = vmatpush1.bf16.msra.mxu0 0
    %480 = vmatprep.subr.bf16.mxu0 0
    %481 = vmatpush1.bf16.msra.mxu0 0
    %482 = vmatprep.subr.bf16.mxu0 0
    %483 = vmatpush1.bf16.msra.mxu0 0
    %484 = vmatprep.subr.bf16.mxu0 0
    %485 = vmatpush1.bf16.msra.mxu0 0
    %486 = vmatprep.subr.bf16.mxu0 0
    %487 = vmatpush1.bf16.msra.mxu0 0
    %488 = vmatprep.subr.bf16.mxu0 0
    %489 = vmatpush1.bf16.msra.mxu0 0
    %490 = vmatprep.subr.bf16.mxu0 0
    %491 = vmatpush1.bf16.msra.mxu0 0
    %492 = vmatprep.subr.bf16.mxu0 0
    %493 = vmatpush1.bf16.msra.mxu0 0
    %494 = vmatprep.subr.bf16.mxu0 0
    %495 = vmatpush1.bf16.msra.mxu0 0
    %496 = vmatprep.subr.bf16.mxu0 0
    %497 = vmatpush1.bf16.msra.mxu0 0
    %498 = vmatprep.subr.bf16.mxu0 0
    %499 = vmatpush1.bf16.msra.mxu0 0
    %500 = vmatprep.subr.bf16.mxu0 0
    %501 = vmatpush1.bf16.msra.mxu0 0
    %502 = vmatprep.mubr.bf16.mxu0 0
    %503 = vmatmul.mubr.bf16.gmra.mrb[0].mxu0 %v345
    %v504 = vpop.f32.mrb[0].mxu0
    %v505 = vadd.f32 0.0, %v504
    %v506 = vpop.f32.mrb[0].mxu0
    %v507 = vadd.f32 0.0, %v506
    %v508 = vpop.f32.mrb[0].mxu0
    %v509 = vpop.f32.mrb[0].mxu0
    %510 = vdwg.mxu0
    %511 = vmatprep.subr.bf16.mxu0 %v300
    %512 = vmatpush1.bf16.msra.mxu0 %v299
    %513 = vmatprep.subr.bf16.mxu0 %v313
    %514 = vmatpush1.bf16.msra.mxu0 %v312
    %515 = vmatprep.subr.bf16.mxu0 0
    %516 = vmatpush1.bf16.msra.mxu0 0
    %517 = vmatprep.subr.bf16.mxu0 0
    %518 = vmatpush1.bf16.msra.mxu0 0
    %519 = vmatprep.subr.bf16.mxu0 0
    %520 = vmatpush1.bf16.msra.mxu0 0
    %521 = vmatprep.subr.bf16.mxu0 0
    %522 = vmatpush1.bf16.msra.mxu0 0
    %523 = vmatprep.subr.bf16.mxu0 0
    %524 = vmatpush1.bf16.msra.mxu0 0
    %525 = vmatprep.subr.bf16.mxu0 0
    %526 = vmatpush1.bf16.msra.mxu0 0
    %527 = vmatprep.subr.bf16.mxu0 0
    %528 = vmatpush1.bf16.msra.mxu0 0
    %529 = vmatprep.subr.bf16.mxu0 0
    %530 = vmatpush1.bf16.msra.mxu0 0
    %531 = vmatprep.subr.bf16.mxu0 0
    %532 = vmatpush1.bf16.msra.mxu0 0
    %533 = vmatprep.subr.bf16.mxu0 0
    %534 = vmatpush1.bf16.msra.mxu0 0
    %535 = vmatprep.subr.bf16.mxu0 0
    %536 = vmatpush1.bf16.msra.mxu0 0
    %537 = vmatprep.subr.bf16.mxu0 0
    %538 = vmatpush1.bf16.msra.mxu0 0
    %539 = vmatprep.subr.bf16.mxu0 0
    %540 = vmatpush1.bf16.msra.mxu0 0
    %541 = vmatprep.subr.bf16.mxu0 0
    %542 = vmatpush1.bf16.msra.mxu0 0
    %543 = vmatprep.mubr.bf16.mxu0 0
    %544 = vmatmul.mubr.bf16.gmra.mrb[0].mxu0 %v345
    %v545 = vpop.f32.mrb[0].mxu0
    %v546 = vadd.f32 0.0, %v545
    %v547 = vpop.f32.mrb[0].mxu0
    %v548 = vadd.f32 0.0, %v547
    %v549 = vpop.f32.mrb[0].mxu0
    %v550 = vpop.f32.mrb[0].mxu0
    %551 = vdwg.mxu0
    %552 = vmatprep.subr.bf16.mxu0 %v302
    %553 = vmatpush1.bf16.msra.mxu0 %v301
    %554 = vmatprep.subr.bf16.mxu0 %v315
    %555 = vmatpush1.bf16.msra.mxu0 %v314
    %556 = vmatprep.subr.bf16.mxu0 0
    %557 = vmatpush1.bf16.msra.mxu0 0
    %558 = vmatprep.subr.bf16.mxu0 0
    %559 = vmatpush1.bf16.msra.mxu0 0
    %560 = vmatprep.subr.bf16.mxu0 0
    %561 = vmatpush1.bf16.msra.mxu0 0
    %562 = vmatprep.subr.bf16.mxu0 0
    %563 = vmatpush1.bf16.msra.mxu0 0
    %564 = vmatprep.subr.bf16.mxu0 0
    %565 = vmatpush1.bf16.msra.mxu0 0
    %566 = vmatprep.subr.bf16.mxu0 0
    %567 = vmatpush1.bf16.msra.mxu0 0
    %568 = vmatprep.subr.bf16.mxu0 0
    %569 = vmatpush1.bf16.msra.mxu0 0
    %570 = vmatprep.subr.bf16.mxu0 0
    %571 = vmatpush1.bf16.msra.mxu0 0
    %572 = vmatprep.subr.bf16.mxu0 0
    %573 = vmatpush1.bf16.msra.mxu0 0
    %574 = vmatprep.subr.bf16.mxu0 0
    %575 = vmatpush1.bf16.msra.mxu0 0
    %576 = vmatprep.subr.bf16.mxu0 0
    %577 = vmatpush1.bf16.msra.mxu0 0
    %578 = vmatprep.subr.bf16.mxu0 0
    %579 = vmatpush1.bf16.msra.mxu0 0
    %580 = vmatprep.subr.bf16.mxu0 0
    %581 = vmatpush1.bf16.msra.mxu0 0
    %582 = vmatprep.subr.bf16.mxu0 0
    %583 = vmatpush1.bf16.msra.mxu0 0
    %584 = vmatprep.mubr.bf16.mxu0 0
    %585 = vmatmul.mubr.bf16.gmra.mrb[0].mxu0 %v345
    %v586 = vpop.f32.mrb[0].mxu0
    %v587 = vadd.f32 0.0, %v586
    %v588 = vpop.f32.mrb[0].mxu0
    %v589 = vadd.f32 0.0, %v588
    %v590 = vpop.f32.mrb[0].mxu0
    %v591 = vpop.f32.mrb[0].mxu0
    %592 = vdwg.mxu0
    %593 = vmatprep.subr.bf16.mxu0 0
    %594 = vmatpush1.bf16.msra.mxu0 %v303
    %595 = vmatprep.subr.bf16.mxu0 0
    %596 = vmatpush1.bf16.msra.mxu0 %v316
    %597 = vmatprep.subr.bf16.mxu0 0
    %598 = vmatpush1.bf16.msra.mxu0 0
    %599 = vmatprep.subr.bf16.mxu0 0
    %600 = vmatpush1.bf16.msra.mxu0 0
    %601 = vmatprep.subr.bf16.mxu0 0
    %602 = vmatpush1.bf16.msra.mxu0 0
    %603 = vmatprep.subr.bf16.mxu0 0
    %604 = vmatpush1.bf16.msra.mxu0 0
    %605 = vmatprep.subr.bf16.mxu0 0
    %606 = vmatpush1.bf16.msra.mxu0 0
    %607 = vmatprep.subr.bf16.mxu0 0
    %608 = vmatpush1.bf16.msra.mxu0 0
    %609 = vmatprep.subr.bf16.mxu0 0
    %610 = vmatpush1.bf16.msra.mxu0 0
    %611 = vmatprep.subr.bf16.mxu0 0
    %612 = vmatpush1.bf16.msra.mxu0 0
    %613 = vmatprep.subr.bf16.mxu0 0
    %614 = vmatpush1.bf16.msra.mxu0 0
    %615 = vmatprep.subr.bf16.mxu0 0
    %616 = vmatpush1.bf16.msra.mxu0 0
    %617 = vmatprep.subr.bf16.mxu0 0
    %618 = vmatpush1.bf16.msra.mxu0 0
    %619 = vmatprep.subr.bf16.mxu0 0
    %620 = vmatpush1.bf16.msra.mxu0 0
    %621 = vmatprep.subr.bf16.mxu0 0
    %622 = vmatpush1.bf16.msra.mxu0 0
    %623 = vmatprep.subr.bf16.mxu0 0
    %624 = vmatpush1.bf16.msra.mxu0 0
    %625 = vmatprep.mubr.bf16.mxu0 0
    %626 = vmatmul.mubr.bf16.gmra.mrb[0].mxu0 %v345
    %v627 = vpop.f32.mrb[0].mxu0
    %v628 = vadd.f32 0.0, %v627
    %v629 = vpop.f32.mrb[0].mxu0
    %v630 = vpop.f32.mrb[0].mxu0
    %v631 = vpop.f32.mrb[0].mxu0
    %632 = vdwg.mxu0
    %vm633 = vcmask 1041408
    %v634 = vsel %vm633, %v382, 0.0
    %v635 = vrot.slane %v634, 4
    %v636 = vadd.f32 %v634, %v635
    %v637 = vrot.slane %v636, 2
    %v638 = vadd.f32 %v636, %v637
    %v639 = vrot.slane %v638, 1
    %v640 = vadd.f32 %v638, %v639
    %v641 = vsel %vm633, %v384, 0.0
    %v642 = vrot.slane %v641, 4
    %v643 = vadd.f32 %v641, %v642
    %v644 = vrot.slane %v643, 2
    %v645 = vadd.f32 %v643, %v644
    %v646 = vrot.slane %v645, 1
    %v647 = vadd.f32 %v645, %v646
    %v648 = vsel %vm633, %v423, 0.0
    %v649 = vrot.slane %v648, 4
    %v650 = vadd.f32 %v648, %v649
    %v651 = vrot.slane %v650, 2
    %v652 = vadd.f32 %v650, %v651
    %v653 = vrot.slane %v652, 1
    %v654 = vadd.f32 %v652, %v653
    %v655 = vsel %vm633, %v425, 0.0
    %v656 = vrot.slane %v655, 4
    %v657 = vadd.f32 %v655, %v656
    %v658 = vrot.slane %v657, 2
    %v659 = vadd.f32 %v657, %v658
    %v660 = vrot.slane %v659, 1
    %v661 = vadd.f32 %v659, %v660
    %v662 = vsel %vm633, %v464, 0.0
    %v663 = vrot.slane %v662, 4
    %v664 = vadd.f32 %v662, %v663
    %v665 = vrot.slane %v664, 2
    %v666 = vadd.f32 %v664, %v665
    %v667 = vrot.slane %v666, 1
    %v668 = vadd.f32 %v666, %v667
    %v669 = vsel %vm633, %v466, 0.0
    %v670 = vrot.slane %v669, 4
    %v671 = vadd.f32 %v669, %v670
    %v672 = vrot.slane %v671, 2
    %v673 = vadd.f32 %v671, %v672
    %v674 = vrot.slane %v673, 1
    %v675 = vadd.f32 %v673, %v674
    %v676 = vsel %vm633, %v505, 0.0
    %v677 = vrot.slane %v676, 4
    %v678 = vadd.f32 %v676, %v677
    %v679 = vrot.slane %v678, 2
    %v680 = vadd.f32 %v678, %v679
    %v681 = vrot.slane %v680, 1
    %v682 = vadd.f32 %v680, %v681
    %v683 = vsel %vm633, %v507, 0.0
    %v684 = vrot.slane %v683, 4
    %v685 = vadd.f32 %v683, %v684
    %v686 = vrot.slane %v685, 2
    %v687 = vadd.f32 %v685, %v686
    %v688 = vrot.slane %v687, 1
    %v689 = vadd.f32 %v687, %v688
    %v690 = vsel %vm633, %v546, 0.0
    %v691 = vrot.slane %v690, 4
    %v692 = vadd.f32 %v690, %v691
    %v693 = vrot.slane %v692, 2
    %v694 = vadd.f32 %v692, %v693
    %v695 = vrot.slane %v694, 1
    %v696 = vadd.f32 %v694, %v695
    %v697 = vsel %vm633, %v548, 0.0
    %v698 = vrot.slane %v697, 4
    %v699 = vadd.f32 %v697, %v698
    %v700 = vrot.slane %v699, 2
    %v701 = vadd.f32 %v699, %v700
    %v702 = vrot.slane %v701, 1
    %v703 = vadd.f32 %v701, %v702
    %v704 = vsel %vm633, %v587, 0.0
    %v705 = vrot.slane %v704, 4
    %v706 = vadd.f32 %v704, %v705
    %v707 = vrot.slane %v706, 2
    %v708 = vadd.f32 %v706, %v707
    %v709 = vrot.slane %v708, 1
    %v710 = vadd.f32 %v708, %v709
    %v711 = vsel %vm633, %v589, 0.0
    %v712 = vrot.slane %v711, 4
    %v713 = vadd.f32 %v711, %v712
    %v714 = vrot.slane %v713, 2
    %v715 = vadd.f32 %v713, %v714
    %v716 = vrot.slane %v715, 1
    %v717 = vadd.f32 %v715, %v716
    %v718 = vsel %vm633, %v628, 0.0
    %v719 = vrot.slane %v718, 4
    %v720 = vadd.f32 %v718, %v719
    %v721 = vrot.slane %v720, 2
    %v722 = vadd.f32 %v720, %v721
    %v723 = vrot.slane %v722, 1
    %v724 = vadd.f32 %v722, %v723
    %v725 = vmul.f32 %v382, %v382
    %v726 = vmul.f32 %v384, %v384
    %v727 = vmul.f32 %v423, %v423
    %v728 = vmul.f32 %v425, %v425
    %v729 = vmul.f32 %v464, %v464
    %v730 = vmul.f32 %v466, %v466
    %v731 = vmul.f32 %v505, %v505
    %v732 = vmul.f32 %v507, %v507
    %v733 = vmul.f32 %v546, %v546
    %v734 = vmul.f32 %v548, %v548
    %v735 = vmul.f32 %v587, %v587
    %v736 = vmul.f32 %v589, %v589
    %v737 = vmul.f32 %v628, %v628
    %v738 = vsel %vm633, %v725, 0.0
    %v739 = vrot.slane %v738, 4
    %v740 = vadd.f32 %v738, %v739
    %v741 = vrot.slane %v740, 2
    %v742 = vadd.f32 %v740, %v741
    %v743 = vrot.slane %v742, 1
    %v744 = vadd.f32 %v742, %v743
    %v745 = vsel %vm633, %v726, 0.0
    %v746 = vrot.slane %v745, 4
    %v747 = vadd.f32 %v745, %v746
    %v748 = vrot.slane %v747, 2
    %v749 = vadd.f32 %v747, %v748
    %v750 = vrot.slane %v749, 1
    %v751 = vadd.f32 %v749, %v750
    %v752 = vsel %vm633, %v727, 0.0
    %v753 = vrot.slane %v752, 4
    %v754 = vadd.f32 %v752, %v753
    %v755 = vrot.slane %v754, 2
    %v756 = vadd.f32 %v754, %v755
    %v757 = vrot.slane %v756, 1
    %v758 = vadd.f32 %v756, %v757
    %v759 = vsel %vm633, %v728, 0.0
    %v760 = vrot.slane %v759, 4
    %v761 = vadd.f32 %v759, %v760
    %v762 = vrot.slane %v761, 2
    %v763 = vadd.f32 %v761, %v762
    %v764 = vrot.slane %v763, 1
    %v765 = vadd.f32 %v763, %v764
    %v766 = vsel %vm633, %v729, 0.0
    %v767 = vrot.slane %v766, 4
    %v768 = vadd.f32 %v766, %v767
    %v769 = vrot.slane %v768, 2
    %v770 = vadd.f32 %v768, %v769
    %v771 = vrot.slane %v770, 1
    %v772 = vadd.f32 %v770, %v771
    %v773 = vsel %vm633, %v730, 0.0
    %v774 = vrot.slane %v773, 4
    %v775 = vadd.f32 %v773, %v774
    %v776 = vrot.slane %v775, 2
    %v777 = vadd.f32 %v775, %v776
    %v778 = vrot.slane %v777, 1
    %v779 = vadd.f32 %v777, %v778
    %v780 = vsel %vm633, %v731, 0.0
    %v781 = vrot.slane %v780, 4
    %v782 = vadd.f32 %v780, %v781
    %v783 = vrot.slane %v782, 2
    %v784 = vadd.f32 %v782, %v783
    %v785 = vrot.slane %v784, 1
    %v786 = vadd.f32 %v784, %v785
    %v787 = vsel %vm633, %v732, 0.0
    %v788 = vrot.slane %v787, 4
    %v789 = vadd.f32 %v787, %v788
    %v790 = vrot.slane %v789, 2
    %v791 = vadd.f32 %v789, %v790
    %v792 = vrot.slane %v791, 1
    %v793 = vadd.f32 %v791, %v792
    %v794 = vsel %vm633, %v733, 0.0
    %v795 = vrot.slane %v794, 4
    %v796 = vadd.f32 %v794, %v795
    %v797 = vrot.slane %v796, 2
    %v798 = vadd.f32 %v796, %v797
    %v799 = vrot.slane %v798, 1
    %v800 = vadd.f32 %v798, %v799
    %v801 = vsel %vm633, %v734, 0.0
    %v802 = vrot.slane %v801, 4
    %v803 = vadd.f32 %v801, %v802
    %v804 = vrot.slane %v803, 2
    %v805 = vadd.f32 %v803, %v804
    %v806 = vrot.slane %v805, 1
    %v807 = vadd.f32 %v805, %v806
    %v808 = vsel %vm633, %v735, 0.0
    %v809 = vrot.slane %v808, 4
    %v810 = vadd.f32 %v808, %v809
    %v811 = vrot.slane %v810, 2
    %v812 = vadd.f32 %v810, %v811
    %v813 = vrot.slane %v812, 1
    %v814 = vadd.f32 %v812, %v813
    %v815 = vsel %vm633, %v736, 0.0
    %v816 = vrot.slane %v815, 4
    %v817 = vadd.f32 %v815, %v816
    %v818 = vrot.slane %v817, 2
    %v819 = vadd.f32 %v817, %v818
    %v820 = vrot.slane %v819, 1
    %v821 = vadd.f32 %v819, %v820
    %v822 = vsel %vm633, %v737, 0.0
    %v823 = vrot.slane %v822, 4
    %v824 = vadd.f32 %v822, %v823
    %v825 = vrot.slane %v824, 2
    %v826 = vadd.f32 %v824, %v825
    %v827 = vrot.slane %v826, 1
    %v828 = vadd.f32 %v826, %v827
    %v829 = vsel %vm180, 1, 0
    %vm830 = vcmp.eq.s32.totalorder %v829, 1
    %v831 = vsel %vm830, %v640, %v744
    %v832 = vsel %vm830, %v647, %v751
    %v833 = vsel %vm830, %v654, %v758
    %v834 = vsel %vm830, %v661, %v765
    %v835 = vsel %vm830, %v668, %v772
    %v836 = vsel %vm830, %v675, %v779
    %v837 = vsel %vm830, %v682, %v786
    %v838 = vsel %vm830, %v689, %v793
    %v839 = vsel %vm830, %v696, %v800
    %v840 = vsel %vm830, %v703, %v807
    %v841 = vsel %vm830, %v710, %v814
    %v842 = vsel %vm830, %v717, %v821
    %v843 = vsel %vm830, %v724, %v828
    %v844 = vld [vmem:[%s2] sm:$0xf]
    %v845 = vld [vmem:[%s2 + $0x4] sm:$0xf]
    %v846 = vld [vmem:[%s2 + $0x8] sm:$0xf]
    %v847 = vld [vmem:[%s2 + $0xc] sm:$0xf]
    %v848 = vld [vmem:[%s2 + $0x10] sm:$0xf]
    %v849 = vld [vmem:[%s2 + $0x14] sm:$0xf]
    %v850 = vld [vmem:[%s2 + $0x18] sm:$0xf]
    %v851 = vld [vmem:[%s2 + $0x1c] sm:$0xf]
    %v852 = vld [vmem:[%s2 + $0x20] sm:$0xf]
    %v853 = vld [vmem:[%s2 + $0x24] sm:$0xf]
    %v854 = vld [vmem:[%s2 + $0x28] sm:$0xf]
    %v855 = vld [vmem:[%s2 + $0x2c] sm:$0xf]
    %v856 = vld [vmem:[%s2 + $0x30] sm:$0xf]
    %v857 = vld [vmem:[%s2 + $0x34] sm:$0xf]
    %v858 = vld [vmem:[%s2 + $0x38] sm:$0xf]
    %v859 = vld [vmem:[%s2 + $0x3c] sm:$0xf]
    %v860 = vld [vmem:[%s2 + $0x40] sm:$0xf]
    %v861 = vld [vmem:[%s2 + $0x44] sm:$0xf]
    %v862 = vld [vmem:[%s2 + $0x48] sm:$0xf]
    %v863 = vld [vmem:[%s2 + $0x4c] sm:$0xf]
    %v864 = vld [vmem:[%s2 + $0x50] sm:$0xf]
    %v865 = vld [vmem:[%s2 + $0x54] sm:$0xf]
    %v866 = vld [vmem:[%s2 + $0x58] sm:$0xf]
    %v867 = vld [vmem:[%s2 + $0x5c] sm:$0xf]
    %v868 = vld [vmem:[%s2 + $0x60] sm:$0xf]
    %v869 = vld [vmem:[%s2 + $0x64] sm:$0xf]
    %v870 = vld [vmem:[%s2 + $0x68] sm:$0xf]
    %v871 = vld [vmem:[%s2 + $0x6c] sm:$0xf]
    %v872 = vld [vmem:[%s2 + $0x70] sm:$0xf]
    %v873 = vld [vmem:[%s2 + $0x74] sm:$0xf]
    %v874 = vld [vmem:[%s2 + $0x78] sm:$0xf]
    %v875 = vld [vmem:[%s2 + $0x7c] sm:$0xf]
    %v876 = vld [vmem:[%s2 + $0x80] sm:$0xf]
    %v877 = vld [vmem:[%s2 + $0x84] sm:$0xf]
    %v878 = vld [vmem:[%s2 + $0x88] sm:$0xf]
    %v879 = vld [vmem:[%s2 + $0x8c] sm:$0xf]
    %v880 = vld [vmem:[%s2 + $0x90] sm:$0xf]
    %v881 = vld [vmem:[%s2 + $0x94] sm:$0xf]
    %v882 = vld [vmem:[%s2 + $0x98] sm:$0xf]
    %v883 = vld [vmem:[%s2 + $0x9c] sm:$0xf]
    %v884 = vld [vmem:[%s2 + $0xa0] sm:$0xf]
    %v885 = vld [vmem:[%s2 + $0xa4] sm:$0xf]
    %v886 = vld [vmem:[%s2 + $0xa8] sm:$0xf]
    %v887 = vld [vmem:[%s2 + $0xac] sm:$0xf]
    %v888 = vld [vmem:[%s2 + $0xb0] sm:$0xf]
    %v889 = vld [vmem:[%s2 + $0xb4] sm:$0xf]
    %v890 = vld [vmem:[%s2 + $0xb8] sm:$0xf]
    %v891 = vld [vmem:[%s2 + $0xbc] sm:$0xf]
    %v892 = vld [vmem:[%s2 + $0xc0] sm:$0xf]
    %v893 = vld [vmem:[%s2 + $0xc4] sm:$0xf]
    %v894 = vld [vmem:[%s2 + $0xc8] sm:$0xf]
    %v895 = vld [vmem:[%s2 + $0xcc] sm:$0xf]
    %v896 = vld [vmem:[%s2 + $0xd0] sm:$0xf]
    %v897 = vld [vmem:[%s2 + $0xd4] sm:$0xf]
    %v898 = vld [vmem:[%s2 + $0xd8] sm:$0xf]
    %v899 = vld [vmem:[%s2 + $0xdc] sm:$0xf]
    %v900 = vld [vmem:[%s2 + $0xe0] sm:$0xf]
    %v901 = vld [vmem:[%s2 + $0xe4] sm:$0xf]
    %v902 = vld [vmem:[%s2 + $0xe8] sm:$0xf]
    %v903 = vld [vmem:[%s2 + $0xec] sm:$0xf]
    %v904 = vld [vmem:[%s2 + $0xf0] sm:$0xf]
    %v905 = vld [vmem:[%s2 + $0xf4] sm:$0xf]
    %v906 = vld [vmem:[%s2 + $0xf8] sm:$0xf]
    %v907 = vld [vmem:[%s2 + $0xfc] sm:$0xf]
    %v908 = vld [vmem:[%s2 + $0x100] sm:$0xf]
    %v909 = vld [vmem:[%s2 + $0x104] sm:$0xf]
    %v910 = vld [vmem:[%s2 + $0x108] sm:$0xf]
    %v911 = vld [vmem:[%s2 + $0x10c] sm:$0xf]
    %v912 = vld [vmem:[%s2 + $0x110] sm:$0xf]
    %v913 = vld [vmem:[%s2 + $0x114] sm:$0xf]
    %v914 = vld [vmem:[%s2 + $0x118] sm:$0xf]
    %v915 = vld [vmem:[%s2 + $0x11c] sm:$0xf]
    %v916 = vld [vmem:[%s2 + $0x120] sm:$0xf]
    %v917 = vld [vmem:[%s2 + $0x124] sm:$0xf]
    %v918 = vld [vmem:[%s2 + $0x128] sm:$0xf]
    %v919 = vld [vmem:[%s2 + $0x12c] sm:$0xf]
    %v920 = vld [vmem:[%s2 + $0x130] sm:$0xf]
    %v921 = vld [vmem:[%s2 + $0x134] sm:$0xf]
    %v922 = vld [vmem:[%s2 + $0x138] sm:$0xf]
    %v923 = vld [vmem:[%s2 + $0x13c] sm:$0xf]
    %v924 = vld [vmem:[%s2 + $0x140] sm:$0xf]
    %v925 = vld [vmem:[%s2 + $0x144] sm:$0xf]
    %v926 = vld [vmem:[%s2 + $0x148] sm:$0xf]
    %v927 = vld [vmem:[%s2 + $0x14c] sm:$0xf]
    %v928 = vld [vmem:[%s2 + $0x150] sm:$0xf]
    %v929 = vld [vmem:[%s2 + $0x154] sm:$0xf]
    %v930 = vld [vmem:[%s2 + $0x158] sm:$0xf]
    %v931 = vld [vmem:[%s2 + $0x15c] sm:$0xf]
    %v932 = vld [vmem:[%s2 + $0x160] sm:$0xf]
    %v933 = vld [vmem:[%s2 + $0x164] sm:$0xf]
    %v934 = vld [vmem:[%s2 + $0x168] sm:$0xf]
    %v935 = vld [vmem:[%s2 + $0x16c] sm:$0xf]
    %v936 = vld [vmem:[%s2 + $0x170] sm:$0xf]
    %v937 = vld [vmem:[%s2 + $0x174] sm:$0xf]
    %v938 = vld [vmem:[%s2 + $0x178] sm:$0xf]
    %v939 = vld [vmem:[%s2 + $0x17c] sm:$0xf]
    %v940 = vld [vmem:[%s2 + $0x180] sm:$0xf]
    %v941 = vld [vmem:[%s2 + $0x184] sm:$0xf]
    %v942 = vld [vmem:[%s2 + $0x188] sm:$0xf]
    %v943 = vld [vmem:[%s2 + $0x18c] sm:$0xf]
    %v944 = vld [vmem:[%s2 + $0x190] sm:$0xf]
    %v945 = vld [vmem:[%s2 + $0x194] sm:$0xf]
    %v946 = vld [vmem:[%s2 + $0x198] sm:$0xf]
    %v947 = vld [vmem:[%s2 + $0x19c] sm:$0xf]
    %v948 = vld [vmem:[%s2 + $0x1a0] sm:$0xf]
    %v949 = vld [vmem:[%s2 + $0x1a4] sm:$0xf]
    %v950 = vld [vmem:[%s2 + $0x1a8] sm:$0xf]
    %v951 = vld [vmem:[%s2 + $0x1ac] sm:$0xf]
    %v952 = vld [vmem:[%s2 + $0x1b0] sm:$0xf]
    %v953 = vld [vmem:[%s2 + $0x1b4] sm:$0xf]
    %v954 = vld [vmem:[%s2 + $0x1b8] sm:$0xf]
    %v955 = vld [vmem:[%s2 + $0x1bc] sm:$0xf]
    %v956 = vld [vmem:[%s2 + $0x1c0] sm:$0xf]
    %v957 = vld [vmem:[%s2 + $0x1c4] sm:$0xf]
    %v958 = vld [vmem:[%s2 + $0x1c8] sm:$0xf]
    %v959 = vld [vmem:[%s2 + $0x1cc] sm:$0xf]
    %v960 = vld [vmem:[%s2 + $0x1d0] sm:$0xf]
    %v961 = vld [vmem:[%s2 + $0x1d4] sm:$0xf]
    %v962 = vld [vmem:[%s2 + $0x1d8] sm:$0xf]
    %v963 = vld [vmem:[%s2 + $0x1dc] sm:$0xf]
    %v964 = vld [vmem:[%s2 + $0x1e0] sm:$0xf]
    %v965 = vld [vmem:[%s2 + $0x1e4] sm:$0xf]
    %v966 = vld [vmem:[%s2 + $0x1e8] sm:$0xf]
    %v967 = vld [vmem:[%s2 + $0x1ec] sm:$0xf]
    %v968 = vld [vmem:[%s2 + $0x1f0] sm:$0xf]
    %v969 = vld [vmem:[%s2 + $0x1f4] sm:$0xf]
    %v970 = vld [vmem:[%s2 + $0x1f8] sm:$0xf]
    %v971 = vld [vmem:[%s2 + $0x1fc] sm:$0xf]
    %v972 = vld [vmem:[%s2 + $0x200] sm:$0xf]
    %v973 = vld [vmem:[%s2 + $0x204] sm:$0xf]
    %v974 = vld [vmem:[%s2 + $0x208] sm:$0xf]
    %v975 = vld [vmem:[%s2 + $0x20c] sm:$0xf]
    %v976 = vld [vmem:[%s2 + $0x210] sm:$0xf]
    %v977 = vld [vmem:[%s2 + $0x214] sm:$0xf]
    %v978 = vld [vmem:[%s2 + $0x218] sm:$0xf]
    %v979 = vld [vmem:[%s2 + $0x21c] sm:$0xf]
    %v980 = vld [vmem:[%s2 + $0x220] sm:$0xf]
    %v981 = vld [vmem:[%s2 + $0x224] sm:$0xf]
    %v982 = vld [vmem:[%s2 + $0x228] sm:$0xf]
    %v983 = vld [vmem:[%s2 + $0x22c] sm:$0xf]
    %v984 = vld [vmem:[%s2 + $0x230] sm:$0xf]
    %v985 = vld [vmem:[%s2 + $0x234] sm:$0xf]
    %v986 = vld [vmem:[%s2 + $0x238] sm:$0xf]
    %v987 = vld [vmem:[%s2 + $0x23c] sm:$0xf]
    %v988 = vld [vmem:[%s2 + $0x240] sm:$0xf]
    %v989 = vld [vmem:[%s2 + $0x244] sm:$0xf]
    %v990 = vld [vmem:[%s2 + $0x248] sm:$0xf]
    %v991 = vld [vmem:[%s2 + $0x24c] sm:$0xf]
    %v992 = vld [vmem:[%s2 + $0x250] sm:$0xf]
    %v993 = vld [vmem:[%s2 + $0x254] sm:$0xf]
    %v994 = vld [vmem:[%s2 + $0x258] sm:$0xf]
    %v995 = vld [vmem:[%s2 + $0x25c] sm:$0xf]
    %v996 = vld [vmem:[%s2 + $0x260] sm:$0xf]
    %v997 = vld [vmem:[%s2 + $0x264] sm:$0xf]
    %v998 = vld [vmem:[%s2 + $0x268] sm:$0xf]
    %v999 = vld [vmem:[%s2 + $0x26c] sm:$0xf]
    %v1000 = vld [vmem:[%s2 + $0x270] sm:$0xf]
    %v1001 = vld [vmem:[%s2 + $0x274] sm:$0xf]
    %v1002 = vld [vmem:[%s2 + $0x278] sm:$0xf]
    %v1003 = vld [vmem:[%s2 + $0x27c] sm:$0xf]
    %v1004 = vld [vmem:[%s2 + $0x280] sm:$0xf]
    %v1005 = vld [vmem:[%s2 + $0x284] sm:$0xf]
    %v1006 = vld [vmem:[%s2 + $0x288] sm:$0xf]
    %v1007 = vld [vmem:[%s2 + $0x28c] sm:$0xf]
    %v1008 = vld [vmem:[%s2 + $0x290] sm:$0xf]
    %v1009 = vld [vmem:[%s2 + $0x294] sm:$0xf]
    %v1010 = vld [vmem:[%s2 + $0x298] sm:$0xf]
    %v1011 = vld [vmem:[%s2 + $0x29c] sm:$0xf]
    %v1012 = vld [vmem:[%s2 + $0x2a0] sm:$0xf]
    %v1013 = vld [vmem:[%s2 + $0x2a4] sm:$0xf]
    %v1014 = vld [vmem:[%s2 + $0x2a8] sm:$0xf]
    %v1015 = vld [vmem:[%s2 + $0x2ac] sm:$0xf]
    %v1016 = vld [vmem:[%s2 + $0x2b0] sm:$0xf]
    %v1017 = vld [vmem:[%s2 + $0x2b4] sm:$0xf]
    %v1018 = vld [vmem:[%s2 + $0x2b8] sm:$0xf]
    %v1019 = vld [vmem:[%s2 + $0x2bc] sm:$0xf]
    %v1020 = vld [vmem:[%s2 + $0x2c0] sm:$0xf]
    %v1021 = vld [vmem:[%s2 + $0x2c4] sm:$0xf]
    %v1022 = vld [vmem:[%s2 + $0x2c8] sm:$0xf]
    %v1023 = vld [vmem:[%s2 + $0x2cc] sm:$0xf]
    %v1024 = vld [vmem:[%s2 + $0x2d0] sm:$0xf]
    %v1025 = vld [vmem:[%s2 + $0x2d4] sm:$0xf]
    %v1026 = vld [vmem:[%s2 + $0x2d8] sm:$0xf]
    %v1027 = vld [vmem:[%s2 + $0x2dc] sm:$0xf]
    %v1028 = vld [vmem:[%s2 + $0x2e0] sm:$0xf]
    %v1029 = vld [vmem:[%s2 + $0x2e4] sm:$0xf]
    %v1030 = vld [vmem:[%s2 + $0x2e8] sm:$0xf]
    %v1031 = vld [vmem:[%s2 + $0x2ec] sm:$0xf]
    %v1032 = vld [vmem:[%s2 + $0x2f0] sm:$0xf]
    %v1033 = vld [vmem:[%s2 + $0x2f4] sm:$0xf]
    %v1034 = vld [vmem:[%s2 + $0x2f8] sm:$0xf]
    %v1035 = vld [vmem:[%s2 + $0x2fc] sm:$0xf]
    %v1036 = vld [vmem:[%s2 + $0x300] sm:$0xf]
    %v1037 = vld [vmem:[%s2 + $0x304] sm:$0xf]
    %v1038 = vld [vmem:[%s2 + $0x308] sm:$0xf]
    %v1039 = vld [vmem:[%s2 + $0x30c] sm:$0xf]
    %v1040 = vld [vmem:[%s2 + $0x310] sm:$0xf]
    %v1041 = vld [vmem:[%s2 + $0x314] sm:$0xf]
    %v1042 = vld [vmem:[%s2 + $0x318] sm:$0xf]
    %v1043 = vld [vmem:[%s2 + $0x31c] sm:$0xf]
    %v1044 = vld [vmem:[%s2 + $0x320] sm:$0xf]
    %v1045 = vld [vmem:[%s2 + $0x324] sm:$0xf]
    %v1046 = vld [vmem:[%s2 + $0x328] sm:$0xf]
    %v1047 = vld [vmem:[%s2 + $0x32c] sm:$0xf]
    %v1048 = vld [vmem:[%s2 + $0x330] sm:$0xf]
    %v1049 = vld [vmem:[%s2 + $0x334] sm:$0xf]
    %v1050 = vld [vmem:[%s2 + $0x338] sm:$0xf]
    %v1051 = vld [vmem:[%s2 + $0x33c] sm:$0xf]
    %v1052 = vunpack.c.l.bf16 %v844
    %v1053 = vunpack.c.l.bf16 %v845
    %v1054 = vunpack.c.l.bf16 %v846
    %v1055 = vunpack.c.l.bf16 %v847
    %v1056 = vunpack.c.l.bf16 %v848
    %v1057 = vunpack.c.l.bf16 %v849
    %v1058 = vunpack.c.l.bf16 %v850
    %v1059 = vunpack.c.l.bf16 %v851
    %v1060 = vunpack.c.l.bf16 %v852
    %v1061 = vunpack.c.l.bf16 %v853
    %v1062 = vunpack.c.l.bf16 %v854
    %v1063 = vunpack.c.l.bf16 %v855
    %v1064 = vunpack.c.l.bf16 %v856
    %v1065 = vunpack.c.l.bf16 %v857
    %v1066 = vunpack.c.l.bf16 %v858
    %v1067 = vunpack.c.l.bf16 %v859
    %v1068 = vunpack.c.l.bf16 %v860
    %v1069 = vunpack.c.l.bf16 %v861
    %v1070 = vunpack.c.l.bf16 %v862
    %v1071 = vunpack.c.l.bf16 %v863
    %v1072 = vunpack.c.l.bf16 %v864
    %v1073 = vunpack.c.l.bf16 %v865
    %v1074 = vunpack.c.l.bf16 %v866
    %v1075 = vunpack.c.l.bf16 %v867
    %v1076 = vunpack.c.l.bf16 %v868
    %v1077 = vunpack.c.l.bf16 %v869
    %v1078 = vunpack.c.l.bf16 %v870
    %v1079 = vunpack.c.l.bf16 %v871
    %v1080 = vunpack.c.l.bf16 %v872
    %v1081 = vunpack.c.l.bf16 %v873
    %v1082 = vunpack.c.l.bf16 %v874
    %v1083 = vunpack.c.l.bf16 %v875
    %v1084 = vunpack.c.l.bf16 %v876
    %v1085 = vunpack.c.l.bf16 %v877
    %v1086 = vunpack.c.l.bf16 %v878
    %v1087 = vunpack.c.l.bf16 %v879
    %v1088 = vunpack.c.l.bf16 %v880
    %v1089 = vunpack.c.l.bf16 %v881
    %v1090 = vunpack.c.l.bf16 %v882
    %v1091 = vunpack.c.l.bf16 %v883
    %v1092 = vunpack.c.l.bf16 %v884
    %v1093 = vunpack.c.l.bf16 %v885
    %v1094 = vunpack.c.l.bf16 %v886
    %v1095 = vunpack.c.l.bf16 %v887
    %v1096 = vunpack.c.l.bf16 %v888
    %v1097 = vunpack.c.l.bf16 %v889
    %v1098 = vunpack.c.l.bf16 %v890
    %v1099 = vunpack.c.l.bf16 %v891
    %v1100 = vunpack.c.l.bf16 %v892
    %v1101 = vunpack.c.l.bf16 %v893
    %v1102 = vunpack.c.l.bf16 %v894
    %v1103 = vunpack.c.l.bf16 %v895
    %v1104 = vunpack.c.l.bf16 %v896
    %v1105 = vunpack.c.l.bf16 %v897
    %v1106 = vunpack.c.l.bf16 %v898
    %v1107 = vunpack.c.l.bf16 %v899
    %v1108 = vunpack.c.l.bf16 %v900
    %v1109 = vunpack.c.l.bf16 %v901
    %v1110 = vunpack.c.l.bf16 %v902
    %v1111 = vunpack.c.l.bf16 %v903
    %v1112 = vunpack.c.l.bf16 %v904
    %v1113 = vunpack.c.l.bf16 %v905
    %v1114 = vunpack.c.l.bf16 %v906
    %v1115 = vunpack.c.l.bf16 %v907
    %v1116 = vunpack.c.l.bf16 %v908
    %v1117 = vunpack.c.l.bf16 %v909
    %v1118 = vunpack.c.l.bf16 %v910
    %v1119 = vunpack.c.l.bf16 %v911
    %v1120 = vunpack.c.l.bf16 %v912
    %v1121 = vunpack.c.l.bf16 %v913
    %v1122 = vunpack.c.l.bf16 %v914
    %v1123 = vunpack.c.l.bf16 %v915
    %v1124 = vunpack.c.l.bf16 %v916
    %v1125 = vunpack.c.l.bf16 %v917
    %v1126 = vunpack.c.l.bf16 %v918
    %v1127 = vunpack.c.l.bf16 %v919
    %v1128 = vunpack.c.l.bf16 %v920
    %v1129 = vunpack.c.l.bf16 %v921
    %v1130 = vunpack.c.l.bf16 %v922
    %v1131 = vunpack.c.l.bf16 %v923
    %v1132 = vunpack.c.l.bf16 %v924
    %v1133 = vunpack.c.l.bf16 %v925
    %v1134 = vunpack.c.l.bf16 %v926
    %v1135 = vunpack.c.l.bf16 %v927
    %v1136 = vunpack.c.l.bf16 %v928
    %v1137 = vunpack.c.l.bf16 %v929
    %v1138 = vunpack.c.l.bf16 %v930
    %v1139 = vunpack.c.l.bf16 %v931
    %v1140 = vunpack.c.l.bf16 %v932
    %v1141 = vunpack.c.l.bf16 %v933
    %v1142 = vunpack.c.l.bf16 %v934
    %v1143 = vunpack.c.l.bf16 %v935
    %v1144 = vunpack.c.l.bf16 %v936
    %v1145 = vunpack.c.l.bf16 %v937
    %v1146 = vunpack.c.l.bf16 %v938
    %v1147 = vunpack.c.l.bf16 %v939
    %v1148 = vunpack.c.l.bf16 %v940
    %v1149 = vunpack.c.l.bf16 %v941
    %v1150 = vunpack.c.l.bf16 %v942
    %v1151 = vunpack.c.l.bf16 %v943
    %v1152 = vunpack.c.l.bf16 %v944
    %v1153 = vunpack.c.l.bf16 %v945
    %v1154 = vunpack.c.l.bf16 %v946
    %v1155 = vunpack.c.l.bf16 %v947
    %v1156 = vunpack.c.l.bf16 %v948
    %v1157 = vunpack.c.l.bf16 %v949
    %v1158 = vunpack.c.l.bf16 %v950
    %v1159 = vunpack.c.l.bf16 %v951
    %v1160 = vunpack.c.l.bf16 %v952
    %v1161 = vunpack.c.l.bf16 %v953
    %v1162 = vunpack.c.l.bf16 %v954
    %v1163 = vunpack.c.l.bf16 %v955
    %v1164 = vunpack.c.l.bf16 %v956
    %v1165 = vunpack.c.l.bf16 %v957
    %v1166 = vunpack.c.l.bf16 %v958
    %v1167 = vunpack.c.l.bf16 %v959
    %v1168 = vunpack.c.l.bf16 %v960
    %v1169 = vunpack.c.l.bf16 %v961
    %v1170 = vunpack.c.l.bf16 %v962
    %v1171 = vunpack.c.l.bf16 %v963
    %v1172 = vunpack.c.l.bf16 %v964
    %v1173 = vunpack.c.l.bf16 %v965
    %v1174 = vunpack.c.l.bf16 %v966
    %v1175 = vunpack.c.l.bf16 %v967
    %v1176 = vunpack.c.l.bf16 %v968
    %v1177 = vunpack.c.l.bf16 %v969
    %v1178 = vunpack.c.l.bf16 %v970
    %v1179 = vunpack.c.l.bf16 %v971
    %v1180 = vunpack.c.l.bf16 %v972
    %v1181 = vunpack.c.l.bf16 %v973
    %v1182 = vunpack.c.l.bf16 %v974
    %v1183 = vunpack.c.l.bf16 %v975
    %v1184 = vunpack.c.l.bf16 %v976
    %v1185 = vunpack.c.l.bf16 %v977
    %v1186 = vunpack.c.l.bf16 %v978
    %v1187 = vunpack.c.l.bf16 %v979
    %v1188 = vunpack.c.l.bf16 %v980
    %v1189 = vunpack.c.l.bf16 %v981
    %v1190 = vunpack.c.l.bf16 %v982
    %v1191 = vunpack.c.l.bf16 %v983
    %v1192 = vunpack.c.l.bf16 %v984
    %v1193 = vunpack.c.l.bf16 %v985
    %v1194 = vunpack.c.l.bf16 %v986
    %v1195 = vunpack.c.l.bf16 %v987
    %v1196 = vunpack.c.l.bf16 %v988
    %v1197 = vunpack.c.l.bf16 %v989
    %v1198 = vunpack.c.l.bf16 %v990
    %v1199 = vunpack.c.l.bf16 %v991
    %v1200 = vunpack.c.l.bf16 %v992
    %v1201 = vunpack.c.l.bf16 %v993
    %v1202 = vunpack.c.l.bf16 %v994
    %v1203 = vunpack.c.l.bf16 %v995
    %v1204 = vunpack.c.l.bf16 %v996
    %v1205 = vunpack.c.l.bf16 %v997
    %v1206 = vunpack.c.l.bf16 %v998
    %v1207 = vunpack.c.l.bf16 %v999
    %v1208 = vunpack.c.l.bf16 %v1000
    %v1209 = vunpack.c.l.bf16 %v1001
    %v1210 = vunpack.c.l.bf16 %v1002
    %v1211 = vunpack.c.l.bf16 %v1003
    %v1212 = vunpack.c.l.bf16 %v1004
    %v1213 = vunpack.c.l.bf16 %v1005
    %v1214 = vunpack.c.l.bf16 %v1006
    %v1215 = vunpack.c.l.bf16 %v1007
    %v1216 = vunpack.c.l.bf16 %v1008
    %v1217 = vunpack.c.l.bf16 %v1009
    %v1218 = vunpack.c.l.bf16 %v1010
    %v1219 = vunpack.c.l.bf16 %v1011
    %v1220 = vunpack.c.l.bf16 %v1012
    %v1221 = vunpack.c.l.bf16 %v1013
    %v1222 = vunpack.c.l.bf16 %v1014
    %v1223 = vunpack.c.l.bf16 %v1015
    %v1224 = vunpack.c.l.bf16 %v1016
    %v1225 = vunpack.c.l.bf16 %v1017
    %v1226 = vunpack.c.l.bf16 %v1018
    %v1227 = vunpack.c.l.bf16 %v1019
    %v1228 = vunpack.c.l.bf16 %v1020
    %v1229 = vunpack.c.l.bf16 %v1021
    %v1230 = vunpack.c.l.bf16 %v1022
    %v1231 = vunpack.c.l.bf16 %v1023
    %v1232 = vunpack.c.l.bf16 %v1024
    %v1233 = vunpack.c.l.bf16 %v1025
    %v1234 = vunpack.c.l.bf16 %v1026
    %v1235 = vunpack.c.l.bf16 %v1027
    %v1236 = vunpack.c.l.bf16 %v1028
    %v1237 = vunpack.c.l.bf16 %v1029
    %v1238 = vunpack.c.l.bf16 %v1030
    %v1239 = vunpack.c.l.bf16 %v1031
    %v1240 = vunpack.c.l.bf16 %v1032
    %v1241 = vunpack.c.l.bf16 %v1033
    %v1242 = vunpack.c.l.bf16 %v1034
    %v1243 = vunpack.c.l.bf16 %v1035
    %v1244 = vunpack.c.l.bf16 %v1036
    %v1245 = vunpack.c.l.bf16 %v1037
    %v1246 = vunpack.c.l.bf16 %v1038
    %v1247 = vunpack.c.l.bf16 %v1039
    %v1248 = vunpack.c.l.bf16 %v1040
    %v1249 = vunpack.c.l.bf16 %v1041
    %v1250 = vunpack.c.l.bf16 %v1042
    %v1251 = vunpack.c.l.bf16 %v1043
    %v1252 = vunpack.c.l.bf16 %v1044
    %v1253 = vunpack.c.l.bf16 %v1045
    %v1254 = vunpack.c.l.bf16 %v1046
    %v1255 = vunpack.c.l.bf16 %v1047
    %v1256 = vunpack.c.l.bf16 %v1048
    %v1257 = vunpack.c.l.bf16 %v1049
    %v1258 = vunpack.c.l.bf16 %v1050
    %v1259 = vunpack.c.l.bf16 %v1051
    %1260 = vmatprep.subr.mxu0 0.0
    %1261 = vmatpush1.msra.mxu0 %v1052
    %1262 = vmatprep.subr.mxu0 0.0
    %1263 = vmatpush1.msra.mxu0 %v1053
    %1264 = vmatprep.subr.mxu0 0.0
    %1265 = vmatpush1.msra.mxu0 %v1054
    %1266 = vmatprep.subr.mxu0 0.0
    %1267 = vmatpush1.msra.mxu0 %v1055
    %1268 = vmatprep.subr.mxu0 0.0
    %1269 = vmatpush1.msra.mxu0 %v1056
    %1270 = vmatprep.subr.mxu0 0.0
    %1271 = vmatpush1.msra.mxu0 %v1057
    %1272 = vmatprep.subr.mxu0 0.0
    %1273 = vmatpush1.msra.mxu0 %v1058
    %1274 = vmatprep.subr.mxu0 0.0
    %1275 = vmatpush1.msra.mxu0 %v1059
    %1276 = vmatprep.subr.mxu0 0.0
    %1277 = vmatpush1.msra.mxu0 %v1060
    %1278 = vmatprep.subr.mxu0 0.0
    %1279 = vmatpush1.msra.mxu0 %v1061
    %1280 = vmatprep.subr.mxu0 0.0
    %1281 = vmatpush1.msra.mxu0 %v1062
    %1282 = vmatprep.subr.mxu0 0.0
    %1283 = vmatpush1.msra.mxu0 %v1063
    %1284 = vmatprep.subr.mxu0 0.0
    %1285 = vmatpush1.msra.mxu0 %v1064
    %1286 = vmatprep.subr.mxu0 0.0
    %1287 = vmatpush1.msra.mxu0 %v1065
    %1288 = vmatprep.subr.mxu0 0.0
    %1289 = vmatpush1.msra.mxu0 %v1066
    %1290 = vmatprep.subr.mxu0 0.0
    %1291 = vmatpush1.msra.mxu0 %v1067
    %1292 = vmatprep.subr.mxu0 0.0
    %1293 = vmatpush1.msra.mxu0 %v1068
    %1294 = vmatprep.subr.mxu0 0.0
    %1295 = vmatpush1.msra.mxu0 %v1069
    %1296 = vmatprep.subr.mxu0 0.0
    %1297 = vmatpush1.msra.mxu0 %v1070
    %1298 = vmatprep.subr.mxu0 0.0
    %1299 = vmatpush1.msra.mxu0 %v1071
    %1300 = vmatprep.subr.mxu0 0.0
    %1301 = vmatpush1.msra.mxu0 %v1072
    %1302 = vmatprep.subr.mxu0 0.0
    %1303 = vmatpush1.msra.mxu0 %v1073
    %1304 = vmatprep.subr.mxu0 0.0
    %1305 = vmatpush1.msra.mxu0 %v1074
    %1306 = vmatprep.subr.mxu0 0.0
    %1307 = vmatpush1.msra.mxu0 %v1075
    %1308 = vmatprep.subr.mxu0 0.0
    %1309 = vmatpush1.msra.mxu0 %v1076
    %1310 = vmatprep.subr.mxu0 0.0
    %1311 = vmatpush1.msra.mxu0 %v1077
    %1312 = vmatprep.subr.mxu0 0.0
    %1313 = vmatpush1.msra.mxu0 %v1078
    %1314 = vmatprep.subr.mxu0 0.0
    %1315 = vmatpush1.msra.mxu0 %v1079
    %1316 = vmatprep.subr.mxu0 0.0
    %1317 = vmatpush1.msra.mxu0 %v1080
    %1318 = vmatprep.subr.mxu0 0.0
    %1319 = vmatpush1.msra.mxu0 %v1081
    %1320 = vmatprep.subr.mxu0 0.0
    %1321 = vmatpush1.msra.mxu0 %v1082
    %1322 = vmatprep.subr.mxu0 0.0
    %1323 = vmatpush1.msra.mxu0 %v1083
    %1324 = vmatprep.mubr.f32.mxu0 %v832
    %1325 = vmatmul.mubr.f32.gmra.mrb[0].mxu0 %v831
    %v1326 = vpop.f32.mrb[0].mxu0
    %v1327 = vadd.f32 0.0, %v1326
    %v1328 = vpop.f32.mrb[0].mxu0
    %1329 = vdwg.mxu0
    %1330 = vmatprep.subr.mxu0 0.0
    %1331 = vmatpush1.msra.mxu0 %v1084
    %1332 = vmatprep.subr.mxu0 0.0
    %1333 = vmatpush1.msra.mxu0 %v1085
    %1334 = vmatprep.subr.mxu0 0.0
    %1335 = vmatpush1.msra.mxu0 %v1086
    %1336 = vmatprep.subr.mxu0 0.0
    %1337 = vmatpush1.msra.mxu0 %v1087
    %1338 = vmatprep.subr.mxu0 0.0
    %1339 = vmatpush1.msra.mxu0 %v1088
    %1340 = vmatprep.subr.mxu0 0.0
    %1341 = vmatpush1.msra.mxu0 %v1089
    %1342 = vmatprep.subr.mxu0 0.0
    %1343 = vmatpush1.msra.mxu0 %v1090
    %1344 = vmatprep.subr.mxu0 0.0
    %1345 = vmatpush1.msra.mxu0 %v1091
    %1346 = vmatprep.subr.mxu0 0.0
    %1347 = vmatpush1.msra.mxu0 %v1092
    %1348 = vmatprep.subr.mxu0 0.0
    %1349 = vmatpush1.msra.mxu0 %v1093
    %1350 = vmatprep.subr.mxu0 0.0
    %1351 = vmatpush1.msra.mxu0 %v1094
    %1352 = vmatprep.subr.mxu0 0.0
    %1353 = vmatpush1.msra.mxu0 %v1095
    %1354 = vmatprep.subr.mxu0 0.0
    %1355 = vmatpush1.msra.mxu0 %v1096
    %1356 = vmatprep.subr.mxu0 0.0
    %1357 = vmatpush1.msra.mxu0 %v1097
    %1358 = vmatprep.subr.mxu0 0.0
    %1359 = vmatpush1.msra.mxu0 %v1098
    %1360 = vmatprep.subr.mxu0 0.0
    %1361 = vmatpush1.msra.mxu0 %v1099
    %1362 = vmatprep.subr.mxu0 0.0
    %1363 = vmatpush1.msra.mxu0 %v1100
    %1364 = vmatprep.subr.mxu0 0.0
    %1365 = vmatpush1.msra.mxu0 %v1101
    %1366 = vmatprep.subr.mxu0 0.0
    %1367 = vmatpush1.msra.mxu0 %v1102
    %1368 = vmatprep.subr.mxu0 0.0
    %1369 = vmatpush1.msra.mxu0 %v1103
    %1370 = vmatprep.subr.mxu0 0.0
    %1371 = vmatpush1.msra.mxu0 %v1104
    %1372 = vmatprep.subr.mxu0 0.0
    %1373 = vmatpush1.msra.mxu0 %v1105
    %1374 = vmatprep.subr.mxu0 0.0
    %1375 = vmatpush1.msra.mxu0 %v1106
    %1376 = vmatprep.subr.mxu0 0.0
    %1377 = vmatpush1.msra.mxu0 %v1107
    %1378 = vmatprep.subr.mxu0 0.0
    %1379 = vmatpush1.msra.mxu0 %v1108
    %1380 = vmatprep.subr.mxu0 0.0
    %1381 = vmatpush1.msra.mxu0 %v1109
    %1382 = vmatprep.subr.mxu0 0.0
    %1383 = vmatpush1.msra.mxu0 %v1110
    %1384 = vmatprep.subr.mxu0 0.0
    %1385 = vmatpush1.msra.mxu0 %v1111
    %1386 = vmatprep.subr.mxu0 0.0
    %1387 = vmatpush1.msra.mxu0 %v1112
    %1388 = vmatprep.subr.mxu0 0.0
    %1389 = vmatpush1.msra.mxu0 %v1113
    %1390 = vmatprep.subr.mxu0 0.0
    %1391 = vmatpush1.msra.mxu0 %v1114
    %1392 = vmatprep.subr.mxu0 0.0
    %1393 = vmatpush1.msra.mxu0 %v1115
    %1394 = vmatprep.mubr.f32.mxu0 %v834
    %1395 = vmatmul.mubr.f32.gmra.mrb[0].mxu0 %v833
    %v1396 = vpop.f32.mrb[0].mxu0
    %v1397 = vadd.f32 %v1327, %v1396
    %v1398 = vpop.f32.mrb[0].mxu0
    %1399 = vdwg.mxu0
    %1400 = vmatprep.subr.mxu0 0.0
    %1401 = vmatpush1.msra.mxu0 %v1116
    %1402 = vmatprep.subr.mxu0 0.0
    %1403 = vmatpush1.msra.mxu0 %v1117
    %1404 = vmatprep.subr.mxu0 0.0
    %1405 = vmatpush1.msra.mxu0 %v1118
    %1406 = vmatprep.subr.mxu0 0.0
    %1407 = vmatpush1.msra.mxu0 %v1119
    %1408 = vmatprep.subr.mxu0 0.0
    %1409 = vmatpush1.msra.mxu0 %v1120
    %1410 = vmatprep.subr.mxu0 0.0
    %1411 = vmatpush1.msra.mxu0 %v1121
    %1412 = vmatprep.subr.mxu0 0.0
    %1413 = vmatpush1.msra.mxu0 %v1122
    %1414 = vmatprep.subr.mxu0 0.0
    %1415 = vmatpush1.msra.mxu0 %v1123
    %1416 = vmatprep.subr.mxu0 0.0
    %1417 = vmatpush1.msra.mxu0 %v1124
    %1418 = vmatprep.subr.mxu0 0.0
    %1419 = vmatpush1.msra.mxu0 %v1125
    %1420 = vmatprep.subr.mxu0 0.0
    %1421 = vmatpush1.msra.mxu0 %v1126
    %1422 = vmatprep.subr.mxu0 0.0
    %1423 = vmatpush1.msra.mxu0 %v1127
    %1424 = vmatprep.subr.mxu0 0.0
    %1425 = vmatpush1.msra.mxu0 %v1128
    %1426 = vmatprep.subr.mxu0 0.0
    %1427 = vmatpush1.msra.mxu0 %v1129
    %1428 = vmatprep.subr.mxu0 0.0
    %1429 = vmatpush1.msra.mxu0 %v1130
    %1430 = vmatprep.subr.mxu0 0.0
    %1431 = vmatpush1.msra.mxu0 %v1131
    %1432 = vmatprep.subr.mxu0 0.0
    %1433 = vmatpush1.msra.mxu0 %v1132
    %1434 = vmatprep.subr.mxu0 0.0
    %1435 = vmatpush1.msra.mxu0 %v1133
    %1436 = vmatprep.subr.mxu0 0.0
    %1437 = vmatpush1.msra.mxu0 %v1134
    %1438 = vmatprep.subr.mxu0 0.0
    %1439 = vmatpush1.msra.mxu0 %v1135
    %1440 = vmatprep.subr.mxu0 0.0
    %1441 = vmatpush1.msra.mxu0 %v1136
    %1442 = vmatprep.subr.mxu0 0.0
    %1443 = vmatpush1.msra.mxu0 %v1137
    %1444 = vmatprep.subr.mxu0 0.0
    %1445 = vmatpush1.msra.mxu0 %v1138
    %1446 = vmatprep.subr.mxu0 0.0
    %1447 = vmatpush1.msra.mxu0 %v1139
    %1448 = vmatprep.subr.mxu0 0.0
    %1449 = vmatpush1.msra.mxu0 %v1140
    %1450 = vmatprep.subr.mxu0 0.0
    %1451 = vmatpush1.msra.mxu0 %v1141
    %1452 = vmatprep.subr.mxu0 0.0
    %1453 = vmatpush1.msra.mxu0 %v1142
    %1454 = vmatprep.subr.mxu0 0.0
    %1455 = vmatpush1.msra.mxu0 %v1143
    %1456 = vmatprep.subr.mxu0 0.0
    %1457 = vmatpush1.msra.mxu0 %v1144
    %1458 = vmatprep.subr.mxu0 0.0
    %1459 = vmatpush1.msra.mxu0 %v1145
    %1460 = vmatprep.subr.mxu0 0.0
    %1461 = vmatpush1.msra.mxu0 %v1146
    %1462 = vmatprep.subr.mxu0 0.0
    %1463 = vmatpush1.msra.mxu0 %v1147
    %1464 = vmatprep.mubr.f32.mxu0 %v836
    %1465 = vmatmul.mubr.f32.gmra.mrb[0].mxu0 %v835
    %v1466 = vpop.f32.mrb[0].mxu0
    %v1467 = vadd.f32 %v1397, %v1466
    %v1468 = vpop.f32.mrb[0].mxu0
    %1469 = vdwg.mxu0
    %1470 = vmatprep.subr.mxu0 0.0
    %1471 = vmatpush1.msra.mxu0 %v1148
    %1472 = vmatprep.subr.mxu0 0.0
    %1473 = vmatpush1.msra.mxu0 %v1149
    %1474 = vmatprep.subr.mxu0 0.0
    %1475 = vmatpush1.msra.mxu0 %v1150
    %1476 = vmatprep.subr.mxu0 0.0
    %1477 = vmatpush1.msra.mxu0 %v1151
    %1478 = vmatprep.subr.mxu0 0.0
    %1479 = vmatpush1.msra.mxu0 %v1152
    %1480 = vmatprep.subr.mxu0 0.0
    %1481 = vmatpush1.msra.mxu0 %v1153
    %1482 = vmatprep.subr.mxu0 0.0
    %1483 = vmatpush1.msra.mxu0 %v1154
    %1484 = vmatprep.subr.mxu0 0.0
    %1485 = vmatpush1.msra.mxu0 %v1155
    %1486 = vmatprep.subr.mxu0 0.0
    %1487 = vmatpush1.msra.mxu0 %v1156
    %1488 = vmatprep.subr.mxu0 0.0
    %1489 = vmatpush1.msra.mxu0 %v1157
    %1490 = vmatprep.subr.mxu0 0.0
    %1491 = vmatpush1.msra.mxu0 %v1158
    %1492 = vmatprep.subr.mxu0 0.0
    %1493 = vmatpush1.msra.mxu0 %v1159
    %1494 = vmatprep.subr.mxu0 0.0
    %1495 = vmatpush1.msra.mxu0 %v1160
    %1496 = vmatprep.subr.mxu0 0.0
    %1497 = vmatpush1.msra.mxu0 %v1161
    %1498 = vmatprep.subr.mxu0 0.0
    %1499 = vmatpush1.msra.mxu0 %v1162
    %1500 = vmatprep.subr.mxu0 0.0
    %1501 = vmatpush1.msra.mxu0 %v1163
    %1502 = vmatprep.subr.mxu0 0.0
    %1503 = vmatpush1.msra.mxu0 %v1164
    %1504 = vmatprep.subr.mxu0 0.0
    %1505 = vmatpush1.msra.mxu0 %v1165
    %1506 = vmatprep.subr.mxu0 0.0
    %1507 = vmatpush1.msra.mxu0 %v1166
    %1508 = vmatprep.subr.mxu0 0.0
    %1509 = vmatpush1.msra.mxu0 %v1167
    %1510 = vmatprep.subr.mxu0 0.0
    %1511 = vmatpush1.msra.mxu0 %v1168
    %1512 = vmatprep.subr.mxu0 0.0
    %1513 = vmatpush1.msra.mxu0 %v1169
    %1514 = vmatprep.subr.mxu0 0.0
    %1515 = vmatpush1.msra.mxu0 %v1170
    %1516 = vmatprep.subr.mxu0 0.0
    %1517 = vmatpush1.msra.mxu0 %v1171
    %1518 = vmatprep.subr.mxu0 0.0
    %1519 = vmatpush1.msra.mxu0 %v1172
    %1520 = vmatprep.subr.mxu0 0.0
    %1521 = vmatpush1.msra.mxu0 %v1173
    %1522 = vmatprep.subr.mxu0 0.0
    %1523 = vmatpush1.msra.mxu0 %v1174
    %1524 = vmatprep.subr.mxu0 0.0
    %1525 = vmatpush1.msra.mxu0 %v1175
    %1526 = vmatprep.subr.mxu0 0.0
    %1527 = vmatpush1.msra.mxu0 %v1176
    %1528 = vmatprep.subr.mxu0 0.0
    %1529 = vmatpush1.msra.mxu0 %v1177
    %1530 = vmatprep.subr.mxu0 0.0
    %1531 = vmatpush1.msra.mxu0 %v1178
    %1532 = vmatprep.subr.mxu0 0.0
    %1533 = vmatpush1.msra.mxu0 %v1179
    %1534 = vmatprep.mubr.f32.mxu0 %v838
    %1535 = vmatmul.mubr.f32.gmra.mrb[0].mxu0 %v837
    %v1536 = vpop.f32.mrb[0].mxu0
    %v1537 = vadd.f32 %v1467, %v1536
    %v1538 = vpop.f32.mrb[0].mxu0
    %1539 = vdwg.mxu0
    %1540 = vmatprep.subr.mxu0 0.0
    %1541 = vmatpush1.msra.mxu0 %v1180
    %1542 = vmatprep.subr.mxu0 0.0
    %1543 = vmatpush1.msra.mxu0 %v1181
    %1544 = vmatprep.subr.mxu0 0.0
    %1545 = vmatpush1.msra.mxu0 %v1182
    %1546 = vmatprep.subr.mxu0 0.0
    %1547 = vmatpush1.msra.mxu0 %v1183
    %1548 = vmatprep.subr.mxu0 0.0
    %1549 = vmatpush1.msra.mxu0 %v1184
    %1550 = vmatprep.subr.mxu0 0.0
    %1551 = vmatpush1.msra.mxu0 %v1185
    %1552 = vmatprep.subr.mxu0 0.0
    %1553 = vmatpush1.msra.mxu0 %v1186
    %1554 = vmatprep.subr.mxu0 0.0
    %1555 = vmatpush1.msra.mxu0 %v1187
    %1556 = vmatprep.subr.mxu0 0.0
    %1557 = vmatpush1.msra.mxu0 %v1188
    %1558 = vmatprep.subr.mxu0 0.0
    %1559 = vmatpush1.msra.mxu0 %v1189
    %1560 = vmatprep.subr.mxu0 0.0
    %1561 = vmatpush1.msra.mxu0 %v1190
    %1562 = vmatprep.subr.mxu0 0.0
    %1563 = vmatpush1.msra.mxu0 %v1191
    %1564 = vmatprep.subr.mxu0 0.0
    %1565 = vmatpush1.msra.mxu0 %v1192
    %1566 = vmatprep.subr.mxu0 0.0
    %1567 = vmatpush1.msra.mxu0 %v1193
    %1568 = vmatprep.subr.mxu0 0.0
    %1569 = vmatpush1.msra.mxu0 %v1194
    %1570 = vmatprep.subr.mxu0 0.0
    %1571 = vmatpush1.msra.mxu0 %v1195
    %1572 = vmatprep.subr.mxu0 0.0
    %1573 = vmatpush1.msra.mxu0 %v1196
    %1574 = vmatprep.subr.mxu0 0.0
    %1575 = vmatpush1.msra.mxu0 %v1197
    %1576 = vmatprep.subr.mxu0 0.0
    %1577 = vmatpush1.msra.mxu0 %v1198
    %1578 = vmatprep.subr.mxu0 0.0
    %1579 = vmatpush1.msra.mxu0 %v1199
    %1580 = vmatprep.subr.mxu0 0.0
    %1581 = vmatpush1.msra.mxu0 %v1200
    %1582 = vmatprep.subr.mxu0 0.0
    %1583 = vmatpush1.msra.mxu0 %v1201
    %1584 = vmatprep.subr.mxu0 0.0
    %1585 = vmatpush1.msra.mxu0 %v1202
    %1586 = vmatprep.subr.mxu0 0.0
    %1587 = vmatpush1.msra.mxu0 %v1203
    %1588 = vmatprep.subr.mxu0 0.0
    %1589 = vmatpush1.msra.mxu0 %v1204
    %1590 = vmatprep.subr.mxu0 0.0
    %1591 = vmatpush1.msra.mxu0 %v1205
    %1592 = vmatprep.subr.mxu0 0.0
    %1593 = vmatpush1.msra.mxu0 %v1206
    %1594 = vmatprep.subr.mxu0 0.0
    %1595 = vmatpush1.msra.mxu0 %v1207
    %1596 = vmatprep.subr.mxu0 0.0
    %1597 = vmatpush1.msra.mxu0 %v1208
    %1598 = vmatprep.subr.mxu0 0.0
    %1599 = vmatpush1.msra.mxu0 %v1209
    %1600 = vmatprep.subr.mxu0 0.0
    %1601 = vmatpush1.msra.mxu0 %v1210
    %1602 = vmatprep.subr.mxu0 0.0
    %1603 = vmatpush1.msra.mxu0 %v1211
    %1604 = vmatprep.mubr.f32.mxu0 %v840
    %1605 = vmatmul.mubr.f32.gmra.mrb[0].mxu0 %v839
    %v1606 = vpop.f32.mrb[0].mxu0
    %v1607 = vadd.f32 %v1537, %v1606
    %v1608 = vpop.f32.mrb[0].mxu0
    %1609 = vdwg.mxu0
    %1610 = vmatprep.subr.mxu0 0.0
    %1611 = vmatpush1.msra.mxu0 %v1212
    %1612 = vmatprep.subr.mxu0 0.0
    %1613 = vmatpush1.msra.mxu0 %v1213
    %1614 = vmatprep.subr.mxu0 0.0
    %1615 = vmatpush1.msra.mxu0 %v1214
    %1616 = vmatprep.subr.mxu0 0.0
    %1617 = vmatpush1.msra.mxu0 %v1215
    %1618 = vmatprep.subr.mxu0 0.0
    %1619 = vmatpush1.msra.mxu0 %v1216
    %1620 = vmatprep.subr.mxu0 0.0
    %1621 = vmatpush1.msra.mxu0 %v1217
    %1622 = vmatprep.subr.mxu0 0.0
    %1623 = vmatpush1.msra.mxu0 %v1218
    %1624 = vmatprep.subr.mxu0 0.0
    %1625 = vmatpush1.msra.mxu0 %v1219
    %1626 = vmatprep.subr.mxu0 0.0
    %1627 = vmatpush1.msra.mxu0 %v1220
    %1628 = vmatprep.subr.mxu0 0.0
    %1629 = vmatpush1.msra.mxu0 %v1221
    %1630 = vmatprep.subr.mxu0 0.0
    %1631 = vmatpush1.msra.mxu0 %v1222
    %1632 = vmatprep.subr.mxu0 0.0
    %1633 = vmatpush1.msra.mxu0 %v1223
    %1634 = vmatprep.subr.mxu0 0.0
    %1635 = vmatpush1.msra.mxu0 %v1224
    %1636 = vmatprep.subr.mxu0 0.0
    %1637 = vmatpush1.msra.mxu0 %v1225
    %1638 = vmatprep.subr.mxu0 0.0
    %1639 = vmatpush1.msra.mxu0 %v1226
    %1640 = vmatprep.subr.mxu0 0.0
    %1641 = vmatpush1.msra.mxu0 %v1227
    %1642 = vmatprep.subr.mxu0 0.0
    %1643 = vmatpush1.msra.mxu0 %v1228
    %1644 = vmatprep.subr.mxu0 0.0
    %1645 = vmatpush1.msra.mxu0 %v1229
    %1646 = vmatprep.subr.mxu0 0.0
    %1647 = vmatpush1.msra.mxu0 %v1230
    %1648 = vmatprep.subr.mxu0 0.0
    %1649 = vmatpush1.msra.mxu0 %v1231
    %1650 = vmatprep.subr.mxu0 0.0
    %1651 = vmatpush1.msra.mxu0 %v1232
    %1652 = vmatprep.subr.mxu0 0.0
    %1653 = vmatpush1.msra.mxu0 %v1233
    %1654 = vmatprep.subr.mxu0 0.0
    %1655 = vmatpush1.msra.mxu0 %v1234
    %1656 = vmatprep.subr.mxu0 0.0
    %1657 = vmatpush1.msra.mxu0 %v1235
    %1658 = vmatprep.subr.mxu0 0.0
    %1659 = vmatpush1.msra.mxu0 %v1236
    %1660 = vmatprep.subr.mxu0 0.0
    %1661 = vmatpush1.msra.mxu0 %v1237
    %1662 = vmatprep.subr.mxu0 0.0
    %1663 = vmatpush1.msra.mxu0 %v1238
    %1664 = vmatprep.subr.mxu0 0.0
    %1665 = vmatpush1.msra.mxu0 %v1239
    %1666 = vmatprep.subr.mxu0 0.0
    %1667 = vmatpush1.msra.mxu0 %v1240
    %1668 = vmatprep.subr.mxu0 0.0
    %1669 = vmatpush1.msra.mxu0 %v1241
    %1670 = vmatprep.subr.mxu0 0.0
    %1671 = vmatpush1.msra.mxu0 %v1242
    %1672 = vmatprep.subr.mxu0 0.0
    %1673 = vmatpush1.msra.mxu0 %v1243
    %1674 = vmatprep.mubr.f32.mxu0 %v842
    %1675 = vmatmul.mubr.f32.gmra.mrb[0].mxu0 %v841
    %v1676 = vpop.f32.mrb[0].mxu0
    %v1677 = vadd.f32 %v1607, %v1676
    %v1678 = vpop.f32.mrb[0].mxu0
    %1679 = vdwg.mxu0
    %1680 = vmatprep.subr.mxu0 0.0
    %1681 = vmatpush1.msra.mxu0 %v1244
    %1682 = vmatprep.subr.mxu0 0.0
    %1683 = vmatpush1.msra.mxu0 %v1245
    %1684 = vmatprep.subr.mxu0 0.0
    %1685 = vmatpush1.msra.mxu0 %v1246
    %1686 = vmatprep.subr.mxu0 0.0
    %1687 = vmatpush1.msra.mxu0 %v1247
    %1688 = vmatprep.subr.mxu0 0.0
    %1689 = vmatpush1.msra.mxu0 %v1248
    %1690 = vmatprep.subr.mxu0 0.0
    %1691 = vmatpush1.msra.mxu0 %v1249
    %1692 = vmatprep.subr.mxu0 0.0
    %1693 = vmatpush1.msra.mxu0 %v1250
    %1694 = vmatprep.subr.mxu0 0.0
    %1695 = vmatpush1.msra.mxu0 %v1251
    %1696 = vmatprep.subr.mxu0 0.0
    %1697 = vmatpush1.msra.mxu0 %v1252
    %1698 = vmatprep.subr.mxu0 0.0
    %1699 = vmatpush1.msra.mxu0 %v1253
    %1700 = vmatprep.subr.mxu0 0.0
    %1701 = vmatpush1.msra.mxu0 %v1254
    %1702 = vmatprep.subr.mxu0 0.0
    %1703 = vmatpush1.msra.mxu0 %v1255
    %1704 = vmatprep.subr.mxu0 0.0
    %1705 = vmatpush1.msra.mxu0 %v1256
    %1706 = vmatprep.subr.mxu0 0.0
    %1707 = vmatpush1.msra.mxu0 %v1257
    %1708 = vmatprep.subr.mxu0 0.0
    %1709 = vmatpush1.msra.mxu0 %v1258
    %1710 = vmatprep.subr.mxu0 0.0
    %1711 = vmatpush1.msra.mxu0 %v1259
    %1712 = vmatprep.subr.mxu0 0.0
    %1713 = vmatpush1.msra.mxu0 0.0
    %1714 = vmatprep.subr.mxu0 0.0
    %1715 = vmatpush1.msra.mxu0 0.0
    %1716 = vmatprep.subr.mxu0 0.0
    %1717 = vmatpush1.msra.mxu0 0.0
    %1718 = vmatprep.subr.mxu0 0.0
    %1719 = vmatpush1.msra.mxu0 0.0
    %1720 = vmatprep.subr.mxu0 0.0
    %1721 = vmatpush1.msra.mxu0 0.0
    %1722 = vmatprep.subr.mxu0 0.0
    %1723 = vmatpush1.msra.mxu0 0.0
    %1724 = vmatprep.subr.mxu0 0.0
    %1725 = vmatpush1.msra.mxu0 0.0
    %1726 = vmatprep.subr.mxu0 0.0
    %1727 = vmatpush1.msra.mxu0 0.0
    %1728 = vmatprep.subr.mxu0 0.0
    %1729 = vmatpush1.msra.mxu0 0.0
    %1730 = vmatprep.subr.mxu0 0.0
    %1731 = vmatpush1.msra.mxu0 0.0
    %1732 = vmatprep.subr.mxu0 0.0
    %1733 = vmatpush1.msra.mxu0 0.0
    %1734 = vmatprep.subr.mxu0 0.0
    %1735 = vmatpush1.msra.mxu0 0.0
    %1736 = vmatprep.subr.mxu0 0.0
    %1737 = vmatpush1.msra.mxu0 0.0
    %1738 = vmatprep.subr.mxu0 0.0
    %1739 = vmatpush1.msra.mxu0 0.0
    %1740 = vmatprep.subr.mxu0 0.0
    %1741 = vmatpush1.msra.mxu0 0.0
    %1742 = vmatprep.subr.mxu0 0.0
    %1743 = vmatpush1.msra.mxu0 0.0
    %1744 = vmatprep.mubr.f32.mxu0 0.0
    %1745 = vmatmul.mubr.f32.gmra.mrb[0].mxu0 %v843
    %v1746 = vpop.f32.mrb[0].mxu0
    %v1747 = vadd.f32 %v1677, %v1746
    %v1748 = vpop.f32.mrb[0].mxu0
    %1749 = vdwg.mxu0
    %v1750 = vmul.f32 %v1747, 0.0025510204
    %v1751 = vmul.f32 %v1750, %v1750
    %v1753 = vrot.slane %v1751, 7
    %v1755 = vsub.f32 %v1750, %v1753
    %v1756 = vld [vmem:[#allocation7] sm:$0x1]
    %v1757 = vadd.f32 %v1755, 1e-05
    %v1758 = vrsqrt.pop %v1757
    %v1761 = vunpack.c.l.s4 1966171168
    %v1762 = vunpack.c.0.s8 %v1761
    %v1763 = vlaneseq
    %v1764 = vshrl.u32 %v1763, 7
    %v1765 = vsub.s32 %v1762, %v1764
    %v1766 = vrot.slane %v1758, %v1765
    %v1767 = vcombine.high %v1766, %v1766
    %v1769 = vunpack.c.l.s4 1966171168
    %v1770 = vunpack.c.0.s8 %v1769
    %v1771 = vlaneseq
    %v1772 = vshrl.u32 %v1771, 7
    %v1773 = vsub.s32 %v1770, %v1772
    %v1774 = vrot.slane %v1767, %v1773
    %v1776 = vmul.f32 %v1756, %v1774
    %v1777 = vld [vmem:[#allocation9] sm:$0x1]
    %v1778 = vmul.f32 %v1750, %v1776
    %v1779 = vsub.f32 %v1777, %v1778
    %v1781 = vlaneseq
    %v1782 = vshrl.u32 %v1781, 7
    %v1783 = vsub.s32 0, %v1782
    %v1784 = vrot.slane %v1776, %v1783
    %v1787 = vlaneseq
    %v1788 = vshrl.u32 %v1787, 7
    %v1789 = vsub.s32 0, %v1788
    %v1790 = vrot.slane %v1779, %v1789
    %v1792 = vsel %vm830, %v1784, %v1790
    %v1793 = vld [vmem:[#allocation6] sm:$0xff]
    %v1794 = vld [vmem:[#allocation6 + $0x8] sm:$0xff]
    %v1795 = vld [vmem:[#allocation6 + $0x10] sm:$0xff]
    %v1796 = vld [vmem:[#allocation6 + $0x18] sm:$0xff]
    %v1797 = vld [vmem:[#allocation6 + $0x20] sm:$0xff]
    %v1798 = vld [vmem:[#allocation6 + $0x28] sm:$0xff]
    %v1799 = vld [vmem:[#allocation6 + $0x30] sm:$0xf]
    %v1800 = vunpack.c.l.bf16 %v1793
    %v1801 = vunpack.c.h.bf16 %v1793
    %v1802 = vunpack.c.l.bf16 %v1794
    %v1803 = vunpack.c.h.bf16 %v1794
    %v1804 = vunpack.c.l.bf16 %v1795
    %v1805 = vunpack.c.h.bf16 %v1795
    %v1806 = vunpack.c.l.bf16 %v1796
    %v1807 = vunpack.c.h.bf16 %v1796
    %v1808 = vunpack.c.l.bf16 %v1797
    %v1809 = vunpack.c.h.bf16 %v1797
    %v1810 = vunpack.c.l.bf16 %v1798
    %v1811 = vunpack.c.h.bf16 %v1798
    %v1812 = vunpack.c.l.bf16 %v1799
    %vm1813 = vcmask 64512
    %v1815 = vsel %vm1813, %v1792, 0
    %1817 = vmatprep.subr.mxu0 %v1801
    %1818 = vmatpush1.msra.mxu0 %v1800
    %1819 = vmatprep.subr.mxu0 0.0
    %1820 = vmatpush1.msra.mxu0 0.0
    %1821 = vmatprep.subr.mxu0 0.0
    %1822 = vmatpush1.msra.mxu0 0.0
    %1823 = vmatprep.subr.mxu0 0.0
    %1824 = vmatpush1.msra.mxu0 0.0
    %1825 = vmatprep.subr.mxu0 0.0
    %1826 = vmatpush1.msra.mxu0 0.0
    %1827 = vmatprep.subr.mxu0 0.0
    %1828 = vmatpush1.msra.mxu0 0.0
    %1829 = vmatprep.subr.mxu0 0.0
    %1830 = vmatpush1.msra.mxu0 0.0
    %1831 = vmatprep.subr.mxu0 0.0
    %1832 = vmatpush1.msra.mxu0 0.0
    %1833 = vmatprep.subr.mxu0 0.0
    %1834 = vmatpush1.msra.mxu0 0.0
    %1835 = vmatprep.subr.mxu0 0.0
    %1836 = vmatpush1.msra.mxu0 0.0
    %1837 = vmatprep.subr.mxu0 0.0
    %1838 = vmatpush1.msra.mxu0 0.0
    %1839 = vmatprep.subr.mxu0 0.0
    %1840 = vmatpush1.msra.mxu0 0.0
    %1841 = vmatprep.subr.mxu0 0.0
    %1842 = vmatpush1.msra.mxu0 0.0
    %1843 = vmatprep.subr.mxu0 0.0
    %1844 = vmatpush1.msra.mxu0 0.0
    %1845 = vmatprep.subr.mxu0 0.0
    %1846 = vmatpush1.msra.mxu0 0.0
    %1847 = vmatprep.subr.mxu0 0.0
    %1848 = vmatpush1.msra.mxu0 0.0
    %1849 = vmatprep.subr.mxu0 0.0
    %1850 = vmatpush1.msra.mxu0 0.0
    %1851 = vmatprep.subr.mxu0 0.0
    %1852 = vmatpush1.msra.mxu0 0.0
    %1853 = vmatprep.subr.mxu0 0.0
    %1854 = vmatpush1.msra.mxu0 0.0
    %1855 = vmatprep.subr.mxu0 0.0
    %1856 = vmatpush1.msra.mxu0 0.0
    %1857 = vmatprep.subr.mxu0 0.0
    %1858 = vmatpush1.msra.mxu0 0.0
    %1859 = vmatprep.subr.mxu0 0.0
    %1860 = vmatpush1.msra.mxu0 0.0
    %1861 = vmatprep.subr.mxu0 0.0
    %1862 = vmatpush1.msra.mxu0 0.0
    %1863 = vmatprep.subr.mxu0 0.0
    %1864 = vmatpush1.msra.mxu0 0.0
    %1865 = vmatprep.subr.mxu0 0.0
    %1866 = vmatpush1.msra.mxu0 0.0
    %1867 = vmatprep.subr.mxu0 0.0
    %1868 = vmatpush1.msra.mxu0 0.0
    %1869 = vmatprep.subr.mxu0 0.0
    %1870 = vmatpush1.msra.mxu0 0.0
    %1871 = vmatprep.subr.mxu0 0.0
    %1872 = vmatpush1.msra.mxu0 0.0
    %1873 = vmatprep.subr.mxu0 0.0
    %1874 = vmatpush1.msra.mxu0 0.0
    %1875 = vmatprep.subr.mxu0 0.0
    %1876 = vmatpush1.msra.mxu0 0.0
    %1877 = vmatprep.subr.mxu0 0.0
    %1878 = vmatpush1.msra.mxu0 0.0
    %1879 = vmatprep.subr.mxu0 0.0
    %1880 = vmatpush1.msra.mxu0 0.0
    %1881 = vmatprep.mubr.f32.mxu0 0.0
    %1882 = vmatmul.mubr.f32.gmra.mrb[0].mxu0 %v1815
    %v1883 = vpop.f32.mrb[0].mxu0
    %v1884 = vadd.f32 0.0, %v1883
    %v1885 = vpop.f32.mrb[0].mxu0
    %v1886 = vadd.f32 0.0, %v1885
    %1887 = vdwg.mxu0
    %1888 = vmatprep.subr.mxu0 %v1803
    %1889 = vmatpush1.msra.mxu0 %v1802
    %1890 = vmatprep.subr.mxu0 0.0
    %1891 = vmatpush1.msra.mxu0 0.0
    %1892 = vmatprep.subr.mxu0 0.0
    %1893 = vmatpush1.msra.mxu0 0.0
    %1894 = vmatprep.subr.mxu0 0.0
    %1895 = vmatpush1.msra.mxu0 0.0
    %1896 = vmatprep.subr.mxu0 0.0
    %1897 = vmatpush1.msra.mxu0 0.0
    %1898 = vmatprep.subr.mxu0 0.0
    %1899 = vmatpush1.msra.mxu0 0.0
    %1900 = vmatprep.subr.mxu0 0.0
    %1901 = vmatpush1.msra.mxu0 0.0
    %1902 = vmatprep.subr.mxu0 0.0
    %1903 = vmatpush1.msra.mxu0 0.0
    %1904 = vmatprep.subr.mxu0 0.0
    %1905 = vmatpush1.msra.mxu0 0.0
    %1906 = vmatprep.subr.mxu0 0.0
    %1907 = vmatpush1.msra.mxu0 0.0
    %1908 = vmatprep.subr.mxu0 0.0
    %1909 = vmatpush1.msra.mxu0 0.0
    %1910 = vmatprep.subr.mxu0 0.0
    %1911 = vmatpush1.msra.mxu0 0.0
    %1912 = vmatprep.subr.mxu0 0.0
    %1913 = vmatpush1.msra.mxu0 0.0
    %1914 = vmatprep.subr.mxu0 0.0
    %1915 = vmatpush1.msra.mxu0 0.0
    %1916 = vmatprep.subr.mxu0 0.0
    %1917 = vmatpush1.msra.mxu0 0.0
    %1918 = vmatprep.subr.mxu0 0.0
    %1919 = vmatpush1.msra.mxu0 0.0
    %1920 = vmatprep.subr.mxu0 0.0
    %1921 = vmatpush1.msra.mxu0 0.0
    %1922 = vmatprep.subr.mxu0 0.0
    %1923 = vmatpush1.msra.mxu0 0.0
    %1924 = vmatprep.subr.mxu0 0.0
    %1925 = vmatpush1.msra.mxu0 0.0
    %1926 = vmatprep.subr.mxu0 0.0
    %1927 = vmatpush1.msra.mxu0 0.0
    %1928 = vmatprep.subr.mxu0 0.0
    %1929 = vmatpush1.msra.mxu0 0.0
    %1930 = vmatprep.subr.mxu0 0.0
    %1931 = vmatpush1.msra.mxu0 0.0
    %1932 = vmatprep.subr.mxu0 0.0
    %1933 = vmatpush1.msra.mxu0 0.0
    %1934 = vmatprep.subr.mxu0 0.0
    %1935 = vmatpush1.msra.mxu0 0.0
    %1936 = vmatprep.subr.mxu0 0.0
    %1937 = vmatpush1.msra.mxu0 0.0
    %1938 = vmatprep.subr.mxu0 0.0
    %1939 = vmatpush1.msra.mxu0 0.0
    %1940 = vmatprep.subr.mxu0 0.0
    %1941 = vmatpush1.msra.mxu0 0.0
    %1942 = vmatprep.subr.mxu0 0.0
    %1943 = vmatpush1.msra.mxu0 0.0
    %1944 = vmatprep.subr.mxu0 0.0
    %1945 = vmatpush1.msra.mxu0 0.0
    %1946 = vmatprep.subr.mxu0 0.0
    %1947 = vmatpush1.msra.mxu0 0.0
    %1948 = vmatprep.subr.mxu0 0.0
    %1949 = vmatpush1.msra.mxu0 0.0
    %1950 = vmatprep.subr.mxu0 0.0
    %1951 = vmatpush1.msra.mxu0 0.0
    %1952 = vmatprep.mubr.f32.mxu0 0.0
    %1953 = vmatmul.mubr.f32.gmra.mrb[0].mxu0 %v1815
    %v1954 = vpop.f32.mrb[0].mxu0
    %v1955 = vadd.f32 0.0, %v1954
    %v1956 = vpop.f32.mrb[0].mxu0
    %v1957 = vadd.f32 0.0, %v1956
    %1958 = vdwg.mxu0
    %1959 = vmatprep.subr.mxu0 %v1805
    %1960 = vmatpush1.msra.mxu0 %v1804
    %1961 = vmatprep.subr.mxu0 0.0
    %1962 = vmatpush1.msra.mxu0 0.0
    %1963 = vmatprep.subr.mxu0 0.0
    %1964 = vmatpush1.msra.mxu0 0.0
    %1965 = vmatprep.subr.mxu0 0.0
    %1966 = vmatpush1.msra.mxu0 0.0
    %1967 = vmatprep.subr.mxu0 0.0
    %1968 = vmatpush1.msra.mxu0 0.0
    %1969 = vmatprep.subr.mxu0 0.0
    %1970 = vmatpush1.msra.mxu0 0.0
    %1971 = vmatprep.subr.mxu0 0.0
    %1972 = vmatpush1.msra.mxu0 0.0
    %1973 = vmatprep.subr.mxu0 0.0
    %1974 = vmatpush1.msra.mxu0 0.0
    %1975 = vmatprep.subr.mxu0 0.0
    %1976 = vmatpush1.msra.mxu0 0.0
    %1977 = vmatprep.subr.mxu0 0.0
    %1978 = vmatpush1.msra.mxu0 0.0
    %1979 = vmatprep.subr.mxu0 0.0
    %1980 = vmatpush1.msra.mxu0 0.0
    %1981 = vmatprep.subr.mxu0 0.0
    %1982 = vmatpush1.msra.mxu0 0.0
    %1983 = vmatprep.subr.mxu0 0.0
    %1984 = vmatpush1.msra.mxu0 0.0
    %1985 = vmatprep.subr.mxu0 0.0
    %1986 = vmatpush1.msra.mxu0 0.0
    %1987 = vmatprep.subr.mxu0 0.0
    %1988 = vmatpush1.msra.mxu0 0.0
    %1989 = vmatprep.subr.mxu0 0.0
    %1990 = vmatpush1.msra.mxu0 0.0
    %1991 = vmatprep.subr.mxu0 0.0
    %1992 = vmatpush1.msra.mxu0 0.0
    %1993 = vmatprep.subr.mxu0 0.0
    %1994 = vmatpush1.msra.mxu0 0.0
    %1995 = vmatprep.subr.mxu0 0.0
    %1996 = vmatpush1.msra.mxu0 0.0
    %1997 = vmatprep.subr.mxu0 0.0
    %1998 = vmatpush1.msra.mxu0 0.0
    %1999 = vmatprep.subr.mxu0 0.0
    %2000 = vmatpush1.msra.mxu0 0.0
    %2001 = vmatprep.subr.mxu0 0.0
    %2002 = vmatpush1.msra.mxu0 0.0
    %2003 = vmatprep.subr.mxu0 0.0
    %2004 = vmatpush1.msra.mxu0 0.0
    %2005 = vmatprep.subr.mxu0 0.0
    %2006 = vmatpush1.msra.mxu0 0.0
    %2007 = vmatprep.subr.mxu0 0.0
    %2008 = vmatpush1.msra.mxu0 0.0
    %2009 = vmatprep.subr.mxu0 0.0
    %2010 = vmatpush1.msra.mxu0 0.0
    %2011 = vmatprep.subr.mxu0 0.0
    %2012 = vmatpush1.msra.mxu0 0.0
    %2013 = vmatprep.subr.mxu0 0.0
    %2014 = vmatpush1.msra.mxu0 0.0
    %2015 = vmatprep.subr.mxu0 0.0
    %2016 = vmatpush1.msra.mxu0 0.0
    %2017 = vmatprep.subr.mxu0 0.0
    %2018 = vmatpush1.msra.mxu0 0.0
    %2019 = vmatprep.subr.mxu0 0.0
    %2020 = vmatpush1.msra.mxu0 0.0
    %2021 = vmatprep.subr.mxu0 0.0
    %2022 = vmatpush1.msra.mxu0 0.0
    %2023 = vmatprep.mubr.f32.mxu0 0.0
    %2024 = vmatmul.mubr.f32.gmra.mrb[0].mxu0 %v1815
    %v2025 = vpop.f32.mrb[0].mxu0
    %v2026 = vadd.f32 0.0, %v2025
    %v2027 = vpop.f32.mrb[0].mxu0
    %v2028 = vadd.f32 0.0, %v2027
    %2029 = vdwg.mxu0
    %2030 = vmatprep.subr.mxu0 %v1807
    %2031 = vmatpush1.msra.mxu0 %v1806
    %2032 = vmatprep.subr.mxu0 0.0
    %2033 = vmatpush1.msra.mxu0 0.0
    %2034 = vmatprep.subr.mxu0 0.0
    %2035 = vmatpush1.msra.mxu0 0.0
    %2036 = vmatprep.subr.mxu0 0.0
    %2037 = vmatpush1.msra.mxu0 0.0
    %2038 = vmatprep.subr.mxu0 0.0
    %2039 = vmatpush1.msra.mxu0 0.0
    %2040 = vmatprep.subr.mxu0 0.0
    %2041 = vmatpush1.msra.mxu0 0.0
    %2042 = vmatprep.subr.mxu0 0.0
    %2043 = vmatpush1.msra.mxu0 0.0
    %2044 = vmatprep.subr.mxu0 0.0
    %2045 = vmatpush1.msra.mxu0 0.0
    %2046 = vmatprep.subr.mxu0 0.0
    %2047 = vmatpush1.msra.mxu0 0.0
    %2048 = vmatprep.subr.mxu0 0.0
    %2049 = vmatpush1.msra.mxu0 0.0
    %2050 = vmatprep.subr.mxu0 0.0
    %2051 = vmatpush1.msra.mxu0 0.0
    %2052 = vmatprep.subr.mxu0 0.0
    %2053 = vmatpush1.msra.mxu0 0.0
    %2054 = vmatprep.subr.mxu0 0.0
    %2055 = vmatpush1.msra.mxu0 0.0
    %2056 = vmatprep.subr.mxu0 0.0
    %2057 = vmatpush1.msra.mxu0 0.0
    %2058 = vmatprep.subr.mxu0 0.0
    %2059 = vmatpush1.msra.mxu0 0.0
    %2060 = vmatprep.subr.mxu0 0.0
    %2061 = vmatpush1.msra.mxu0 0.0
    %2062 = vmatprep.subr.mxu0 0.0
    %2063 = vmatpush1.msra.mxu0 0.0
    %2064 = vmatprep.subr.mxu0 0.0
    %2065 = vmatpush1.msra.mxu0 0.0
    %2066 = vmatprep.subr.mxu0 0.0
    %2067 = vmatpush1.msra.mxu0 0.0
    %2068 = vmatprep.subr.mxu0 0.0
    %2069 = vmatpush1.msra.mxu0 0.0
    %2070 = vmatprep.subr.mxu0 0.0
    %2071 = vmatpush1.msra.mxu0 0.0
    %2072 = vmatprep.subr.mxu0 0.0
    %2073 = vmatpush1.msra.mxu0 0.0
    %2074 = vmatprep.subr.mxu0 0.0
    %2075 = vmatpush1.msra.mxu0 0.0
    %2076 = vmatprep.subr.mxu0 0.0
    %2077 = vmatpush1.msra.mxu0 0.0
    %2078 = vmatprep.subr.mxu0 0.0
    %2079 = vmatpush1.msra.mxu0 0.0
    %2080 = vmatprep.subr.mxu0 0.0
    %2081 = vmatpush1.msra.mxu0 0.0
    %2082 = vmatprep.subr.mxu0 0.0
    %2083 = vmatpush1.msra.mxu0 0.0
    %2084 = vmatprep.subr.mxu0 0.0
    %2085 = vmatpush1.msra.mxu0 0.0
    %2086 = vmatprep.subr.mxu0 0.0
    %2087 = vmatpush1.msra.mxu0 0.0
    %2088 = vmatprep.subr.mxu0 0.0
    %2089 = vmatpush1.msra.mxu0 0.0
    %2090 = vmatprep.subr.mxu0 0.0
    %2091 = vmatpush1.msra.mxu0 0.0
    %2092 = vmatprep.subr.mxu0 0.0
    %2093 = vmatpush1.msra.mxu0 0.0
    %2094 = vmatprep.mubr.f32.mxu0 0.0
    %2095 = vmatmul.mubr.f32.gmra.mrb[0].mxu0 %v1815
    %v2096 = vpop.f32.mrb[0].mxu0
    %v2097 = vadd.f32 0.0, %v2096
    %v2098 = vpop.f32.mrb[0].mxu0
    %v2099 = vadd.f32 0.0, %v2098
    %2100 = vdwg.mxu0
    %2101 = vmatprep.subr.mxu0 %v1809
    %2102 = vmatpush1.msra.mxu0 %v1808
    %2103 = vmatprep.subr.mxu0 0.0
    %2104 = vmatpush1.msra.mxu0 0.0
    %2105 = vmatprep.subr.mxu0 0.0
    %2106 = vmatpush1.msra.mxu0 0.0
    %2107 = vmatprep.subr.mxu0 0.0
    %2108 = vmatpush1.msra.mxu0 0.0
    %2109 = vmatprep.subr.mxu0 0.0
    %2110 = vmatpush1.msra.mxu0 0.0
    %2111 = vmatprep.subr.mxu0 0.0
    %2112 = vmatpush1.msra.mxu0 0.0
    %2113 = vmatprep.subr.mxu0 0.0
    %2114 = vmatpush1.msra.mxu0 0.0
    %2115 = vmatprep.subr.mxu0 0.0
    %2116 = vmatpush1.msra.mxu0 0.0
    %2117 = vmatprep.subr.mxu0 0.0
    %2118 = vmatpush1.msra.mxu0 0.0
    %2119 = vmatprep.subr.mxu0 0.0
    %2120 = vmatpush1.msra.mxu0 0.0
    %2121 = vmatprep.subr.mxu0 0.0
    %2122 = vmatpush1.msra.mxu0 0.0
    %2123 = vmatprep.subr.mxu0 0.0
    %2124 = vmatpush1.msra.mxu0 0.0
    %2125 = vmatprep.subr.mxu0 0.0
    %2126 = vmatpush1.msra.mxu0 0.0
    %2127 = vmatprep.subr.mxu0 0.0
    %2128 = vmatpush1.msra.mxu0 0.0
    %2129 = vmatprep.subr.mxu0 0.0
    %2130 = vmatpush1.msra.mxu0 0.0
    %2131 = vmatprep.subr.mxu0 0.0
    %2132 = vmatpush1.msra.mxu0 0.0
    %2133 = vmatprep.subr.mxu0 0.0
    %2134 = vmatpush1.msra.mxu0 0.0
    %2135 = vmatprep.subr.mxu0 0.0
    %2136 = vmatpush1.msra.mxu0 0.0
    %2137 = vmatprep.subr.mxu0 0.0
    %2138 = vmatpush1.msra.mxu0 0.0
    %2139 = vmatprep.subr.mxu0 0.0
    %2140 = vmatpush1.msra.mxu0 0.0
    %2141 = vmatprep.subr.mxu0 0.0
    %2142 = vmatpush1.msra.mxu0 0.0
    %2143 = vmatprep.subr.mxu0 0.0
    %2144 = vmatpush1.msra.mxu0 0.0
    %2145 = vmatprep.subr.mxu0 0.0
    %2146 = vmatpush1.msra.mxu0 0.0
    %2147 = vmatprep.subr.mxu0 0.0
    %2148 = vmatpush1.msra.mxu0 0.0
    %2149 = vmatprep.subr.mxu0 0.0
    %2150 = vmatpush1.msra.mxu0 0.0
    %2151 = vmatprep.subr.mxu0 0.0
    %2152 = vmatpush1.msra.mxu0 0.0
    %2153 = vmatprep.subr.mxu0 0.0
    %2154 = vmatpush1.msra.mxu0 0.0
    %2155 = vmatprep.subr.mxu0 0.0
    %2156 = vmatpush1.msra.mxu0 0.0
    %2157 = vmatprep.subr.mxu0 0.0
    %2158 = vmatpush1.msra.mxu0 0.0
    %2159 = vmatprep.subr.mxu0 0.0
    %2160 = vmatpush1.msra.mxu0 0.0
    %2161 = vmatprep.subr.mxu0 0.0
    %2162 = vmatpush1.msra.mxu0 0.0
    %2163 = vmatprep.subr.mxu0 0.0
    %2164 = vmatpush1.msra.mxu0 0.0
    %2165 = vmatprep.mubr.f32.mxu0 0.0
    %2166 = vmatmul.mubr.f32.gmra.mrb[0].mxu0 %v1815
    %v2167 = vpop.f32.mrb[0].mxu0
    %v2168 = vadd.f32 0.0, %v2167
    %v2169 = vpop.f32.mrb[0].mxu0
    %v2170 = vadd.f32 0.0, %v2169
    %2171 = vdwg.mxu0
    %2172 = vmatprep.subr.mxu0 %v1811
    %2173 = vmatpush1.msra.mxu0 %v1810
    %2174 = vmatprep.subr.mxu0 0.0
    %2175 = vmatpush1.msra.mxu0 0.0
    %2176 = vmatprep.subr.mxu0 0.0
    %2177 = vmatpush1.msra.mxu0 0.0
    %2178 = vmatprep.subr.mxu0 0.0
    %2179 = vmatpush1.msra.mxu0 0.0
    %2180 = vmatprep.subr.mxu0 0.0
    %2181 = vmatpush1.msra.mxu0 0.0
    %2182 = vmatprep.subr.mxu0 0.0
    %2183 = vmatpush1.msra.mxu0 0.0
    %2184 = vmatprep.subr.mxu0 0.0
    %2185 = vmatpush1.msra.mxu0 0.0
    %2186 = vmatprep.subr.mxu0 0.0
    %2187 = vmatpush1.msra.mxu0 0.0
    %2188 = vmatprep.subr.mxu0 0.0
    %2189 = vmatpush1.msra.mxu0 0.0
    %2190 = vmatprep.subr.mxu0 0.0
    %2191 = vmatpush1.msra.mxu0 0.0
    %2192 = vmatprep.subr.mxu0 0.0
    %2193 = vmatpush1.msra.mxu0 0.0
    %2194 = vmatprep.subr.mxu0 0.0
    %2195 = vmatpush1.msra.mxu0 0.0
    %2196 = vmatprep.subr.mxu0 0.0
    %2197 = vmatpush1.msra.mxu0 0.0
    %2198 = vmatprep.subr.mxu0 0.0
    %2199 = vmatpush1.msra.mxu0 0.0
    %2200 = vmatprep.subr.mxu0 0.0
    %2201 = vmatpush1.msra.mxu0 0.0
    %2202 = vmatprep.subr.mxu0 0.0
    %2203 = vmatpush1.msra.mxu0 0.0
    %2204 = vmatprep.subr.mxu0 0.0
    %2205 = vmatpush1.msra.mxu0 0.0
    %2206 = vmatprep.subr.mxu0 0.0
    %2207 = vmatpush1.msra.mxu0 0.0
    %2208 = vmatprep.subr.mxu0 0.0
    %2209 = vmatpush1.msra.mxu0 0.0
    %2210 = vmatprep.subr.mxu0 0.0
    %2211 = vmatpush1.msra.mxu0 0.0
    %2212 = vmatprep.subr.mxu0 0.0
    %2213 = vmatpush1.msra.mxu0 0.0
    %2214 = vmatprep.subr.mxu0 0.0
    %2215 = vmatpush1.msra.mxu0 0.0
    %2216 = vmatprep.subr.mxu0 0.0
    %2217 = vmatpush1.msra.mxu0 0.0
    %2218 = vmatprep.subr.mxu0 0.0
    %2219 = vmatpush1.msra.mxu0 0.0
    %2220 = vmatprep.subr.mxu0 0.0
    %2221 = vmatpush1.msra.mxu0 0.0
    %2222 = vmatprep.subr.mxu0 0.0
    %2223 = vmatpush1.msra.mxu0 0.0
    %2224 = vmatprep.subr.mxu0 0.0
    %2225 = vmatpush1.msra.mxu0 0.0
    %2226 = vmatprep.subr.mxu0 0.0
    %2227 = vmatpush1.msra.mxu0 0.0
    %2228 = vmatprep.subr.mxu0 0.0
    %2229 = vmatpush1.msra.mxu0 0.0
    %2230 = vmatprep.subr.mxu0 0.0
    %2231 = vmatpush1.msra.mxu0 0.0
    %2232 = vmatprep.subr.mxu0 0.0
    %2233 = vmatpush1.msra.mxu0 0.0
    %2234 = vmatprep.subr.mxu0 0.0
    %2235 = vmatpush1.msra.mxu0 0.0
    %2236 = vmatprep.mubr.f32.mxu0 0.0
    %2237 = vmatmul.mubr.f32.gmra.mrb[0].mxu0 %v1815
    %v2238 = vpop.f32.mrb[0].mxu0
    %v2239 = vadd.f32 0.0, %v2238
    %v2240 = vpop.f32.mrb[0].mxu0
    %v2241 = vadd.f32 0.0, %v2240
    %2242 = vdwg.mxu0
    %2243 = vmatprep.subr.mxu0 0.0
    %2244 = vmatpush1.msra.mxu0 %v1812
    %2245 = vmatprep.subr.mxu0 0.0
    %2246 = vmatpush1.msra.mxu0 0.0
    %2247 = vmatprep.subr.mxu0 0.0
    %2248 = vmatpush1.msra.mxu0 0.0
    %2249 = vmatprep.subr.mxu0 0.0
    %2250 = vmatpush1.msra.mxu0 0.0
    %2251 = vmatprep.subr.mxu0 0.0
    %2252 = vmatpush1.msra.mxu0 0.0
    %2253 = vmatprep.subr.mxu0 0.0
    %2254 = vmatpush1.msra.mxu0 0.0
    %2255 = vmatprep.subr.mxu0 0.0
    %2256 = vmatpush1.msra.mxu0 0.0
    %2257 = vmatprep.subr.mxu0 0.0
    %2258 = vmatpush1.msra.mxu0 0.0
    %2259 = vmatprep.subr.mxu0 0.0
    %2260 = vmatpush1.msra.mxu0 0.0
    %2261 = vmatprep.subr.mxu0 0.0
    %2262 = vmatpush1.msra.mxu0 0.0
    %2263 = vmatprep.subr.mxu0 0.0
    %2264 = vmatpush1.msra.mxu0 0.0
    %2265 = vmatprep.subr.mxu0 0.0
    %2266 = vmatpush1.msra.mxu0 0.0
    %2267 = vmatprep.subr.mxu0 0.0
    %2268 = vmatpush1.msra.mxu0 0.0
    %2269 = vmatprep.subr.mxu0 0.0
    %2270 = vmatpush1.msra.mxu0 0.0
    %2271 = vmatprep.subr.mxu0 0.0
    %2272 = vmatpush1.msra.mxu0 0.0
    %2273 = vmatprep.subr.mxu0 0.0
    %2274 = vmatpush1.msra.mxu0 0.0
    %2275 = vmatprep.subr.mxu0 0.0
    %2276 = vmatpush1.msra.mxu0 0.0
    %2277 = vmatprep.subr.mxu0 0.0
    %2278 = vmatpush1.msra.mxu0 0.0
    %2279 = vmatprep.subr.mxu0 0.0
    %2280 = vmatpush1.msra.mxu0 0.0
    %2281 = vmatprep.subr.mxu0 0.0
    %2282 = vmatpush1.msra.mxu0 0.0
    %2283 = vmatprep.subr.mxu0 0.0
    %2284 = vmatpush1.msra.mxu0 0.0
    %2285 = vmatprep.subr.mxu0 0.0
    %2286 = vmatpush1.msra.mxu0 0.0
    %2287 = vmatprep.subr.mxu0 0.0
    %2288 = vmatpush1.msra.mxu0 0.0
    %2289 = vmatprep.subr.mxu0 0.0
    %2290 = vmatpush1.msra.mxu0 0.0
    %2291 = vmatprep.subr.mxu0 0.0
    %2292 = vmatpush1.msra.mxu0 0.0
    %2293 = vmatprep.subr.mxu0 0.0
    %2294 = vmatpush1.msra.mxu0 0.0
    %2295 = vmatprep.subr.mxu0 0.0
    %2296 = vmatpush1.msra.mxu0 0.0
    %2297 = vmatprep.subr.mxu0 0.0
    %2298 = vmatpush1.msra.mxu0 0.0
    %2299 = vmatprep.subr.mxu0 0.0
    %2300 = vmatpush1.msra.mxu0 0.0
    %2301 = vmatprep.subr.mxu0 0.0
    %2302 = vmatpush1.msra.mxu0 0.0
    %2303 = vmatprep.subr.mxu0 0.0
    %2304 = vmatpush1.msra.mxu0 0.0
    %2305 = vmatprep.subr.mxu0 0.0
    %2306 = vmatpush1.msra.mxu0 0.0
    %2307 = vmatprep.mubr.f32.mxu0 0.0
    %2308 = vmatmul.mubr.f32.gmra.mrb[0].mxu0 %v1815
    %v2309 = vpop.f32.mrb[0].mxu0
    %v2310 = vadd.f32 0.0, %v2309
    %v2311 = vpop.f32.mrb[0].mxu0
    %2312 = vdwg.mxu0
    %v2313 = vlaneseq
    %v2314 = vshrl.u32 %v2313, 7
    %v2315 = vsub.s32 0, %v2314
    %v2316 = vrot.slane %v1884, %v2315
    %v2317 = vlaneseq
    %v2318 = vshrl.u32 %v2317, 7
    %v2319 = vsub.s32 0, %v2318
    %v2320 = vrot.slane %v1886, %v2319
    %v2321 = vlaneseq
    %v2322 = vshrl.u32 %v2321, 7
    %v2323 = vsub.s32 0, %v2322
    %v2324 = vrot.slane %v1955, %v2323
    %v2325 = vlaneseq
    %v2326 = vshrl.u32 %v2325, 7
    %v2327 = vsub.s32 0, %v2326
    %v2328 = vrot.slane %v1957, %v2327
    %v2329 = vlaneseq
    %v2330 = vshrl.u32 %v2329, 7
    %v2331 = vsub.s32 0, %v2330
    %v2332 = vrot.slane %v2026, %v2331
    %v2333 = vlaneseq
    %v2334 = vshrl.u32 %v2333, 7
    %v2335 = vsub.s32 0, %v2334
    %v2336 = vrot.slane %v2028, %v2335
    %v2337 = vlaneseq
    %v2338 = vshrl.u32 %v2337, 7
    %v2339 = vsub.s32 0, %v2338
    %v2340 = vrot.slane %v2097, %v2339
    %v2341 = vlaneseq
    %v2342 = vshrl.u32 %v2341, 7
    %v2343 = vsub.s32 0, %v2342
    %v2344 = vrot.slane %v2099, %v2343
    %v2345 = vlaneseq
    %v2346 = vshrl.u32 %v2345, 7
    %v2347 = vsub.s32 0, %v2346
    %v2348 = vrot.slane %v2168, %v2347
    %v2349 = vlaneseq
    %v2350 = vshrl.u32 %v2349, 7
    %v2351 = vsub.s32 0, %v2350
    %v2352 = vrot.slane %v2170, %v2351
    %v2353 = vlaneseq
    %v2354 = vshrl.u32 %v2353, 7
    %v2355 = vsub.s32 0, %v2354
    %v2356 = vrot.slane %v2239, %v2355
    %v2357 = vlaneseq
    %v2358 = vshrl.u32 %v2357, 7
    %v2359 = vsub.s32 0, %v2358
    %v2360 = vrot.slane %v2241, %v2359
    %v2361 = vlaneseq
    %v2362 = vshrl.u32 %v2361, 7
    %v2363 = vsub.s32 0, %v2362
    %v2364 = vrot.slane %v2310, %v2363
    %v2365 = vmul.f32 %v382, %v2316
    %v2366 = vmul.f32 %v384, %v2320
    %v2367 = vmul.f32 %v423, %v2324
    %v2368 = vmul.f32 %v425, %v2328
    %v2369 = vmul.f32 %v464, %v2332
    %v2370 = vmul.f32 %v466, %v2336
    %v2371 = vmul.f32 %v505, %v2340
    %v2372 = vmul.f32 %v507, %v2344
    %v2373 = vmul.f32 %v546, %v2348
    %v2374 = vmul.f32 %v548, %v2352
    %v2375 = vmul.f32 %v587, %v2356
    %v2376 = vmul.f32 %v589, %v2360
    %v2377 = vmul.f32 %v628, %v2364
    %v2378 = vlaneseq
    %v2379 = vshrl.u32 %v2378, 7
    %v2380 = vsub.s32 1, %v2379
    %v2381 = vrot.slane %v1884, %v2380
    %v2382 = vlaneseq
    %v2383 = vshrl.u32 %v2382, 7
    %v2384 = vsub.s32 1, %v2383
    %v2385 = vrot.slane %v1886, %v2384
    %v2386 = vlaneseq
    %v2387 = vshrl.u32 %v2386, 7
    %v2388 = vsub.s32 1, %v2387
    %v2389 = vrot.slane %v1955, %v2388
    %v2390 = vlaneseq
    %v2391 = vshrl.u32 %v2390, 7
    %v2392 = vsub.s32 1, %v2391
    %v2393 = vrot.slane %v1957, %v2392
    %v2394 = vlaneseq
    %v2395 = vshrl.u32 %v2394, 7
    %v2396 = vsub.s32 1, %v2395
    %v2397 = vrot.slane %v2026, %v2396
    %v2398 = vlaneseq
    %v2399 = vshrl.u32 %v2398, 7
    %v2400 = vsub.s32 1, %v2399
    %v2401 = vrot.slane %v2028, %v2400
    %v2402 = vlaneseq
    %v2403 = vshrl.u32 %v2402, 7
    %v2404 = vsub.s32 1, %v2403
    %v2405 = vrot.slane %v2097, %v2404
    %v2406 = vlaneseq
    %v2407 = vshrl.u32 %v2406, 7
    %v2408 = vsub.s32 1, %v2407
    %v2409 = vrot.slane %v2099, %v2408
    %v2410 = vlaneseq
    %v2411 = vshrl.u32 %v2410, 7
    %v2412 = vsub.s32 1, %v2411
    %v2413 = vrot.slane %v2168, %v2412
    %v2414 = vlaneseq
    %v2415 = vshrl.u32 %v2414, 7
    %v2416 = vsub.s32 1, %v2415
    %v2417 = vrot.slane %v2170, %v2416
    %v2418 = vlaneseq
    %v2419 = vshrl.u32 %v2418, 7
    %v2420 = vsub.s32 1, %v2419
    %v2421 = vrot.slane %v2239, %v2420
    %v2422 = vlaneseq
    %v2423 = vshrl.u32 %v2422, 7
    %v2424 = vsub.s32 1, %v2423
    %v2425 = vrot.slane %v2241, %v2424
    %v2426 = vlaneseq
    %v2427 = vshrl.u32 %v2426, 7
    %v2428 = vsub.s32 1, %v2427
    %v2429 = vrot.slane %v2310, %v2428
    %v2430 = vadd.f32 %v2365, %v2381
    %v2431 = vadd.f32 %v2366, %v2385
    %v2432 = vadd.f32 %v2367, %v2389
    %v2433 = vadd.f32 %v2368, %v2393
    %v2434 = vadd.f32 %v2369, %v2397
    %v2435 = vadd.f32 %v2370, %v2401
    %v2436 = vadd.f32 %v2371, %v2405
    %v2437 = vadd.f32 %v2372, %v2409
    %v2438 = vadd.f32 %v2373, %v2413
    %v2439 = vadd.f32 %v2374, %v2417
    %v2440 = vadd.f32 %v2375, %v2421
    %v2441 = vadd.f32 %v2376, %v2425
    %v2442 = vadd.f32 %v2377, %v2429
    %v2443 = vmax.f32 %v2430, 0.0
    %v2444 = vmax.f32 %v2431, 0.0
    %v2445 = vmax.f32 %v2432, 0.0
    %v2446 = vmax.f32 %v2433, 0.0
    %v2447 = vmax.f32 %v2434, 0.0
    %v2448 = vmax.f32 %v2435, 0.0
    %v2449 = vmax.f32 %v2436, 0.0
    %v2450 = vmax.f32 %v2437, 0.0
    %v2451 = vmax.f32 %v2438, 0.0
    %v2452 = vmax.f32 %v2439, 0.0
    %v2453 = vmax.f32 %v2440, 0.0
    %v2454 = vmax.f32 %v2441, 0.0
    %v2455 = vmax.f32 %v2442, 0.0
    %v2456 = vpack.c.bf16 %v2443, %v2443
    %v2457 = vpack.c.bf16 %v2444, %v2444
    %v2458 = vpack.c.bf16 %v2445, %v2445
    %v2459 = vpack.c.bf16 %v2446, %v2446
    %v2460 = vpack.c.bf16 %v2447, %v2447
    %v2461 = vpack.c.bf16 %v2448, %v2448
    %v2462 = vpack.c.bf16 %v2449, %v2449
    %v2463 = vpack.c.bf16 %v2450, %v2450
    %v2464 = vpack.c.bf16 %v2451, %v2451
    %v2465 = vpack.c.bf16 %v2452, %v2452
    %v2466 = vpack.c.bf16 %v2453, %v2453
    %v2467 = vpack.c.bf16 %v2454, %v2454
    %v2468 = vpack.c.bf16 %v2455, %v2455
    %v2469 = vld [vmem:[#allocation10] sm:$0xff]
    %v2470 = vld [vmem:[#allocation10 + $0x8] sm:$0xff]
    %v2471 = vld [vmem:[#allocation10 + $0x10] sm:$0xff]
    %v2472 = vld [vmem:[#allocation10 + $0x18] sm:$0xf]
    %v2473 = vld [vmem:[#allocation10 + $0x1c] sm:$0xff]
    %v2474 = vld [vmem:[#allocation10 + $0x24] sm:$0xff]
    %v2475 = vld [vmem:[#allocation10 + $0x2c] sm:$0xff]
    %v2476 = vld [vmem:[#allocation10 + $0x34] sm:$0xf]
    %v2477 = vld [vmem:[#allocation10 + $0x38] sm:$0xff]
    %v2478 = vld [vmem:[#allocation10 + $0x40] sm:$0xff]
    %v2479 = vld [vmem:[#allocation10 + $0x48] sm:$0xff]
    %v2480 = vld [vmem:[#allocation10 + $0x50] sm:$0xf]
    %v2481 = vld [vmem:[#allocation10 + $0x54] sm:$0xff]
    %v2482 = vld [vmem:[#allocation10 + $0x5c] sm:$0xff]
    %v2483 = vld [vmem:[#allocation10 + $0x64] sm:$0xff]
    %v2484 = vld [vmem:[#allocation10 + $0x6c] sm:$0xf]
    %v2485 = vld [vmem:[#allocation10 + $0x70] sm:$0xff]
    %v2486 = vld [vmem:[#allocation10 + $0x78] sm:$0xff]
    %v2487 = vld [vmem:[#allocation10 + $0x80] sm:$0xff]
    %v2488 = vld [vmem:[#allocation10 + $0x88] sm:$0xf]
    %v2489 = vld [vmem:[#allocation10 + $0x8c] sm:$0xff]
    %v2490 = vld [vmem:[#allocation10 + $0x94] sm:$0xff]
    %v2491 = vld [vmem:[#allocation10 + $0x9c] sm:$0xff]
    %v2492 = vld [vmem:[#allocation10 + $0xa4] sm:$0xf]
    %v2493 = vld [vmem:[#allocation10 + $0xa8] sm:$0xff]
    %v2494 = vld [vmem:[#allocation10 + $0xb0] sm:$0xff]
    %v2495 = vld [vmem:[#allocation10 + $0xb8] sm:$0xff]
    %v2496 = vld [vmem:[#allocation10 + $0xc0] sm:$0xf]
    %v2497 = vld [vmem:[#allocation10 + $0xc4] sm:$0xff]
    %v2498 = vld [vmem:[#allocation10 + $0xcc] sm:$0xff]
    %v2499 = vld [vmem:[#allocation10 + $0xd4] sm:$0xff]
    %v2500 = vld [vmem:[#allocation10 + $0xdc] sm:$0xf]
    %v2501 = vld [vmem:[#allocation10 + $0xe0] sm:$0xff]
    %v2502 = vld [vmem:[#allocation10 + $0xe8] sm:$0xff]
    %v2503 = vld [vmem:[#allocation10 + $0xf0] sm:$0xff]
    %v2504 = vld [vmem:[#allocation10 + $0xf8] sm:$0xf]
    %v2505 = vld [vmem:[#allocation10 + $0xfc] sm:$0xff]
    %v2506 = vld [vmem:[#allocation10 + $0x104] sm:$0xff]
    %v2507 = vld [vmem:[#allocation10 + $0x10c] sm:$0xff]
    %v2508 = vld [vmem:[#allocation10 + $0x114] sm:$0xf]
    %v2509 = vld [vmem:[#allocation10 + $0x118] sm:$0xff]
    %v2510 = vld [vmem:[#allocation10 + $0x120] sm:$0xff]
    %v2511 = vld [vmem:[#allocation10 + $0x128] sm:$0xff]
    %v2512 = vld [vmem:[#allocation10 + $0x130] sm:$0xf]
    %v2513 = vld [vmem:[#allocation10 + $0x134] sm:$0xff]
    %v2514 = vld [vmem:[#allocation10 + $0x13c] sm:$0xff]
    %v2515 = vld [vmem:[#allocation10 + $0x144] sm:$0xff]
    %v2516 = vld [vmem:[#allocation10 + $0x14c] sm:$0xf]
    %v2517 = vld [vmem:[#allocation10 + $0x150] sm:$0xff]
    %v2518 = vld [vmem:[#allocation10 + $0x158] sm:$0xff]
    %v2519 = vld [vmem:[#allocation10 + $0x160] sm:$0xff]
    %v2520 = vld [vmem:[#allocation10 + $0x168] sm:$0xf]
    %v2521 = vld [vmem:[#allocation10 + $0x16c] sm:$0xff]
    %v2522 = vld [vmem:[#allocation10 + $0x174] sm:$0xff]
    %v2523 = vld [vmem:[#allocation10 + $0x17c] sm:$0xff]
    %v2524 = vld [vmem:[#allocation10 + $0x184] sm:$0xf]
    %v2525 = vld [vmem:[#allocation10 + $0x188] sm:$0xff]
    %v2526 = vld [vmem:[#allocation10 + $0x190] sm:$0xff]
    %v2527 = vld [vmem:[#allocation10 + $0x198] sm:$0xff]
    %v2528 = vld [vmem:[#allocation10 + $0x1a0] sm:$0xf]
    %v2529 = vld [vmem:[#allocation10 + $0x1a4] sm:$0xff]
    %v2530 = vld [vmem:[#allocation10 + $0x1ac] sm:$0xff]
    %v2531 = vld [vmem:[#allocation10 + $0x1b4] sm:$0xff]
    %v2532 = vld [vmem:[#allocation10 + $0x1bc] sm:$0xf]
    %v2533 = vld [vmem:[#allocation10 + $0x1c0] sm:$0xff]
    %v2534 = vld [vmem:[#allocation10 + $0x1c8] sm:$0xff]
    %v2535 = vld [vmem:[#allocation10 + $0x1d0] sm:$0xff]
    %v2536 = vld [vmem:[#allocation10 + $0x1d8] sm:$0xf]
    %v2537 = vld [vmem:[#allocation10 + $0x1dc] sm:$0xff]
    %v2538 = vld [vmem:[#allocation10 + $0x1e4] sm:$0xff]
    %v2539 = vld [vmem:[#allocation10 + $0x1ec] sm:$0xff]
    %v2540 = vld [vmem:[#allocation10 + $0x1f4] sm:$0xf]
    %v2541 = vld [vmem:[#allocation10 + $0x1f8] sm:$0xff]
    %v2542 = vld [vmem:[#allocation10 + $0x200] sm:$0xff]
    %v2543 = vld [vmem:[#allocation10 + $0x208] sm:$0xff]
    %v2544 = vld [vmem:[#allocation10 + $0x210] sm:$0xf]
    %v2545 = vld [vmem:[#allocation10 + $0x214] sm:$0xff]
    %v2546 = vld [vmem:[#allocation10 + $0x21c] sm:$0xff]
    %v2547 = vld [vmem:[#allocation10 + $0x224] sm:$0xff]
    %v2548 = vld [vmem:[#allocation10 + $0x22c] sm:$0xf]
    %v2549 = vld [vmem:[#allocation10 + $0x230] sm:$0xff]
    %v2550 = vld [vmem:[#allocation10 + $0x238] sm:$0xff]
    %v2551 = vld [vmem:[#allocation10 + $0x240] sm:$0xff]
    %v2552 = vld [vmem:[#allocation10 + $0x248] sm:$0xf]
    %v2553 = vld [vmem:[#allocation10 + $0x24c] sm:$0xff]
    %v2554 = vld [vmem:[#allocation10 + $0x254] sm:$0xff]
    %v2555 = vld [vmem:[#allocation10 + $0x25c] sm:$0xff]
    %v2556 = vld [vmem:[#allocation10 + $0x264] sm:$0xf]
    %v2557 = vld [vmem:[#allocation10 + $0x268] sm:$0xff]
    %v2558 = vld [vmem:[#allocation10 + $0x270] sm:$0xff]
    %v2559 = vld [vmem:[#allocation10 + $0x278] sm:$0xff]
    %v2560 = vld [vmem:[#allocation10 + $0x280] sm:$0xf]
    %v2561 = vld [vmem:[#allocation10 + $0x284] sm:$0xff]
    %v2562 = vld [vmem:[#allocation10 + $0x28c] sm:$0xff]
    %v2563 = vld [vmem:[#allocation10 + $0x294] sm:$0xff]
    %v2564 = vld [vmem:[#allocation10 + $0x29c] sm:$0xf]
    %v2565 = vld [vmem:[#allocation10 + $0x2a0] sm:$0xff]
    %v2566 = vld [vmem:[#allocation10 + $0x2a8] sm:$0xff]
    %v2567 = vld [vmem:[#allocation10 + $0x2b0] sm:$0xff]
    %v2568 = vld [vmem:[#allocation10 + $0x2b8] sm:$0xf]
    %v2569 = vld [vmem:[#allocation10 + $0x2bc] sm:$0xff]
    %v2570 = vld [vmem:[#allocation10 + $0x2c4] sm:$0xff]
    %v2571 = vld [vmem:[#allocation10 + $0x2cc] sm:$0xff]
    %v2572 = vld [vmem:[#allocation10 + $0x2d4] sm:$0xf]
    %v2573 = vld [vmem:[#allocation10 + $0x2d8] sm:$0xff]
    %v2574 = vld [vmem:[#allocation10 + $0x2e0] sm:$0xff]
    %v2575 = vld [vmem:[#allocation10 + $0x2e8] sm:$0xff]
    %v2576 = vld [vmem:[#allocation10 + $0x2f0] sm:$0xf]
    %v2577 = vld [vmem:[#allocation10 + $0x2f4] sm:$0xff]
    %v2578 = vld [vmem:[#allocation10 + $0x2fc] sm:$0xff]
    %v2579 = vld [vmem:[#allocation10 + $0x304] sm:$0xff]
    %v2580 = vld [vmem:[#allocation10 + $0x30c] sm:$0xf]
    %v2581 = vld [vmem:[#allocation10 + $0x310] sm:$0xff]
    %v2582 = vld [vmem:[#allocation10 + $0x318] sm:$0xff]
    %v2583 = vld [vmem:[#allocation10 + $0x320] sm:$0xff]
    %v2584 = vld [vmem:[#allocation10 + $0x328] sm:$0xf]
    %v2585 = vld [vmem:[#allocation10 + $0x32c] sm:$0xff]
    %v2586 = vld [vmem:[#allocation10 + $0x334] sm:$0xff]
    %v2587 = vld [vmem:[#allocation10 + $0x33c] sm:$0xff]
    %v2588 = vld [vmem:[#allocation10 + $0x344] sm:$0xf]
    %v2589 = vld [vmem:[#allocation10 + $0x348] sm:$0xff]
    %v2590 = vld [vmem:[#allocation10 + $0x350] sm:$0xff]
    %v2591 = vld [vmem:[#allocation10 + $0x358] sm:$0xff]
    %v2592 = vld [vmem:[#allocation10 + $0x360] sm:$0xf]
    %v2593 = vld [vmem:[#allocation10 + $0x364] sm:$0xff]
    %v2594 = vld [vmem:[#allocation10 + $0x36c] sm:$0xff]
    %v2595 = vld [vmem:[#allocation10 + $0x374] sm:$0xff]
    %v2596 = vld [vmem:[#allocation10 + $0x37c] sm:$0xf]
    %v2597 = vld [vmem:[#allocation10 + $0x380] sm:$0xff]
    %v2598 = vld [vmem:[#allocation10 + $0x388] sm:$0xff]
    %v2599 = vld [vmem:[#allocation10 + $0x390] sm:$0xff]
    %v2600 = vld [vmem:[#allocation10 + $0x398] sm:$0xf]
    %v2601 = vld [vmem:[#allocation10 + $0x39c] sm:$0xff]
    %v2602 = vld [vmem:[#allocation10 + $0x3a4] sm:$0xff]
    %v2603 = vld [vmem:[#allocation10 + $0x3ac] sm:$0xff]
    %v2604 = vld [vmem:[#allocation10 + $0x3b4] sm:$0xf]
    %v2605 = vld [vmem:[#allocation10 + $0x3b8] sm:$0xff]
    %v2606 = vld [vmem:[#allocation10 + $0x3c0] sm:$0xff]
    %v2607 = vld [vmem:[#allocation10 + $0x3c8] sm:$0xff]
    %v2608 = vld [vmem:[#allocation10 + $0x3d0] sm:$0xf]
    %v2609 = vld [vmem:[#allocation10 + $0x3d4] sm:$0xff]
    %v2610 = vld [vmem:[#allocation10 + $0x3dc] sm:$0xff]
    %v2611 = vld [vmem:[#allocation10 + $0x3e4] sm:$0xff]
    %v2612 = vld [vmem:[#allocation10 + $0x3ec] sm:$0xf]
    %v2613 = vld [vmem:[#allocation10 + $0x3f0] sm:$0xff]
    %v2614 = vld [vmem:[#allocation10 + $0x3f8] sm:$0xff]
    %v2615 = vld [vmem:[#allocation10 + $0x400] sm:$0xff]
    %v2616 = vld [vmem:[#allocation10 + $0x408] sm:$0xf]
    %v2617 = vld [vmem:[#allocation10 + $0x40c] sm:$0xff]
    %v2618 = vld [vmem:[#allocation10 + $0x414] sm:$0xff]
    %v2619 = vld [vmem:[#allocation10 + $0x41c] sm:$0xff]
    %v2620 = vld [vmem:[#allocation10 + $0x424] sm:$0xf]
    %v2621 = vld [vmem:[#allocation10 + $0x428] sm:$0xff]
    %v2622 = vld [vmem:[#allocation10 + $0x430] sm:$0xff]
    %v2623 = vld [vmem:[#allocation10 + $0x438] sm:$0xff]
    %v2624 = vld [vmem:[#allocation10 + $0x440] sm:$0xf]
    %v2625 = vld [vmem:[#allocation10 + $0x444] sm:$0xff]
    %v2626 = vld [vmem:[#allocation10 + $0x44c] sm:$0xff]
    %v2627 = vld [vmem:[#allocation10 + $0x454] sm:$0xff]
    %v2628 = vld [vmem:[#allocation10 + $0x45c] sm:$0xf]
    %v2629 = vld [vmem:[#allocation10 + $0x460] sm:$0xff]
    %v2630 = vld [vmem:[#allocation10 + $0x468] sm:$0xff]
    %v2631 = vld [vmem:[#allocation10 + $0x470] sm:$0xff]
    %v2632 = vld [vmem:[#allocation10 + $0x478] sm:$0xf]
    %v2633 = vld [vmem:[#allocation10 + $0x47c] sm:$0xff]
    %v2634 = vld [vmem:[#allocation10 + $0x484] sm:$0xff]
    %v2635 = vld [vmem:[#allocation10 + $0x48c] sm:$0xff]
    %v2636 = vld [vmem:[#allocation10 + $0x494] sm:$0xf]
    %v2637 = vld [vmem:[#allocation10 + $0x498] sm:$0xff]
    %v2638 = vld [vmem:[#allocation10 + $0x4a0] sm:$0xff]
    %v2639 = vld [vmem:[#allocation10 + $0x4a8] sm:$0xff]
    %v2640 = vld [vmem:[#allocation10 + $0x4b0] sm:$0xf]
    %v2641 = vld [vmem:[#allocation10 + $0x4b4] sm:$0xff]
    %v2642 = vld [vmem:[#allocation10 + $0x4bc] sm:$0xff]
    %v2643 = vld [vmem:[#allocation10 + $0x4c4] sm:$0xff]
    %v2644 = vld [vmem:[#allocation10 + $0x4cc] sm:$0xf]
    %v2645 = vld [vmem:[#allocation10 + $0x4d0] sm:$0xff]
    %v2646 = vld [vmem:[#allocation10 + $0x4d8] sm:$0xff]
    %v2647 = vld [vmem:[#allocation10 + $0x4e0] sm:$0xff]
    %v2648 = vld [vmem:[#allocation10 + $0x4e8] sm:$0xf]
    %v2649 = vld [vmem:[#allocation10 + $0x4ec] sm:$0xff]
    %v2650 = vld [vmem:[#allocation10 + $0x4f4] sm:$0xff]
    %v2651 = vld [vmem:[#allocation10 + $0x4fc] sm:$0xff]
    %v2652 = vld [vmem:[#allocation10 + $0x504] sm:$0xf]
    %v2653 = vld [vmem:[#allocation10 + $0x508] sm:$0xff]
    %v2654 = vld [vmem:[#allocation10 + $0x510] sm:$0xff]
    %v2655 = vld [vmem:[#allocation10 + $0x518] sm:$0xff]
    %v2656 = vld [vmem:[#allocation10 + $0x520] sm:$0xf]
    %v2657 = vld [vmem:[#allocation10 + $0x524] sm:$0xff]
    %v2658 = vld [vmem:[#allocation10 + $0x52c] sm:$0xff]
    %v2659 = vld [vmem:[#allocation10 + $0x534] sm:$0xff]
    %v2660 = vld [vmem:[#allocation10 + $0x53c] sm:$0xf]
    %v2661 = vld [vmem:[#allocation10 + $0x540] sm:$0xff]
    %v2662 = vld [vmem:[#allocation10 + $0x548] sm:$0xff]
    %v2663 = vld [vmem:[#allocation10 + $0x550] sm:$0xff]
    %v2664 = vld [vmem:[#allocation10 + $0x558] sm:$0xf]
    %v2665 = vld [vmem:[#allocation10 + $0x55c] sm:$0xff]
    %v2666 = vld [vmem:[#allocation10 + $0x564] sm:$0xff]
    %v2667 = vld [vmem:[#allocation10 + $0x56c] sm:$0xff]
    %v2668 = vld [vmem:[#allocation10 + $0x574] sm:$0xf]
    %v2669 = vld [vmem:[#allocation10 + $0x578] sm:$0xff]
    %v2670 = vld [vmem:[#allocation10 + $0x580] sm:$0xff]
    %v2671 = vld [vmem:[#allocation10 + $0x588] sm:$0xff]
    %v2672 = vld [vmem:[#allocation10 + $0x590] sm:$0xf]
    %v2673 = vld [vmem:[#allocation10 + $0x594] sm:$0xff]
    %v2674 = vld [vmem:[#allocation10 + $0x59c] sm:$0xff]
    %v2675 = vld [vmem:[#allocation10 + $0x5a4] sm:$0xff]
    %v2676 = vld [vmem:[#allocation10 + $0x5ac] sm:$0xf]
    %v2677 = vld [vmem:[#allocation10 + $0x5b0] sm:$0xff]
    %v2678 = vld [vmem:[#allocation10 + $0x5b8] sm:$0xff]
    %v2679 = vld [vmem:[#allocation10 + $0x5c0] sm:$0xff]
    %v2680 = vld [vmem:[#allocation10 + $0x5c8] sm:$0xf]
    %v2681 = vld [vmem:[#allocation10 + $0x5cc] sm:$0xff]
    %v2682 = vld [vmem:[#allocation10 + $0x5d4] sm:$0xff]
    %v2683 = vld [vmem:[#allocation10 + $0x5dc] sm:$0xff]
    %v2684 = vld [vmem:[#allocation10 + $0x5e4] sm:$0xf]
    %v2685 = vld [vmem:[#allocation10 + $0x5e8] sm:$0xff]
    %v2686 = vld [vmem:[#allocation10 + $0x5f0] sm:$0xff]
    %v2687 = vld [vmem:[#allocation10 + $0x5f8] sm:$0xff]
    %v2688 = vld [vmem:[#allocation10 + $0x600] sm:$0xf]
    %v2689 = vld [vmem:[#allocation10 + $0x604] sm:$0xff]
    %v2690 = vld [vmem:[#allocation10 + $0x60c] sm:$0xff]
    %v2691 = vld [vmem:[#allocation10 + $0x614] sm:$0xff]
    %v2692 = vld [vmem:[#allocation10 + $0x61c] sm:$0xf]
    %v2693 = vld [vmem:[#allocation10 + $0x620] sm:$0xff]
    %v2694 = vld [vmem:[#allocation10 + $0x628] sm:$0xff]
    %v2695 = vld [vmem:[#allocation10 + $0x630] sm:$0xff]
    %v2696 = vld [vmem:[#allocation10 + $0x638] sm:$0xf]
    %v2697 = vld [vmem:[#allocation10 + $0x63c] sm:$0xff]
    %v2698 = vld [vmem:[#allocation10 + $0x644] sm:$0xff]
    %v2699 = vld [vmem:[#allocation10 + $0x64c] sm:$0xff]
    %v2700 = vld [vmem:[#allocation10 + $0x654] sm:$0xf]
    %v2701 = vld [vmem:[#allocation10 + $0x658] sm:$0xff]
    %v2702 = vld [vmem:[#allocation10 + $0x660] sm:$0xff]
    %v2703 = vld [vmem:[#allocation10 + $0x668] sm:$0xff]
    %v2704 = vld [vmem:[#allocation10 + $0x670] sm:$0xf]
    %v2705 = vld [vmem:[#allocation10 + $0x674] sm:$0xff]
    %v2706 = vld [vmem:[#allocation10 + $0x67c] sm:$0xff]
    %v2707 = vld [vmem:[#allocation10 + $0x684] sm:$0xff]
    %v2708 = vld [vmem:[#allocation10 + $0x68c] sm:$0xf]
    %v2709 = vld [vmem:[#allocation10 + $0x690] sm:$0xff]
    %v2710 = vld [vmem:[#allocation10 + $0x698] sm:$0xff]
    %v2711 = vld [vmem:[#allocation10 + $0x6a0] sm:$0xff]
    %v2712 = vld [vmem:[#allocation10 + $0x6a8] sm:$0xf]
    %v2713 = vld [vmem:[#allocation10 + $0x6ac] sm:$0xff]
    %v2714 = vld [vmem:[#allocation10 + $0x6b4] sm:$0xff]
    %v2715 = vld [vmem:[#allocation10 + $0x6bc] sm:$0xff]
    %v2716 = vld [vmem:[#allocation10 + $0x6c4] sm:$0xf]
    %v2717 = vld [vmem:[#allocation10 + $0x6c8] sm:$0xff]
    %v2718 = vld [vmem:[#allocation10 + $0x6d0] sm:$0xff]
    %v2719 = vld [vmem:[#allocation10 + $0x6d8] sm:$0xff]
    %v2720 = vld [vmem:[#allocation10 + $0x6e0] sm:$0xf]
    %v2721 = vld [vmem:[#allocation10 + $0x6e4] sm:$0xff]
    %v2722 = vld [vmem:[#allocation10 + $0x6ec] sm:$0xff]
    %v2723 = vld [vmem:[#allocation10 + $0x6f4] sm:$0xff]
    %v2724 = vld [vmem:[#allocation10 + $0x6fc] sm:$0xf]
    %v2725 = vld [vmem:[#allocation10 + $0x700] sm:$0xff]
    %v2726 = vld [vmem:[#allocation10 + $0x708] sm:$0xff]
    %v2727 = vld [vmem:[#allocation10 + $0x710] sm:$0xff]
    %v2728 = vld [vmem:[#allocation10 + $0x718] sm:$0xf]
    %v2729 = vld [vmem:[#allocation10 + $0x71c] sm:$0xff]
    %v2730 = vld [vmem:[#allocation10 + $0x724] sm:$0xff]
    %v2731 = vld [vmem:[#allocation10 + $0x72c] sm:$0xff]
    %v2732 = vld [vmem:[#allocation10 + $0x734] sm:$0xf]
    %v2733 = vld [vmem:[#allocation10 + $0x738] sm:$0xff]
    %v2734 = vld [vmem:[#allocation10 + $0x740] sm:$0xff]
    %v2735 = vld [vmem:[#allocation10 + $0x748] sm:$0xff]
    %v2736 = vld [vmem:[#allocation10 + $0x750] sm:$0xf]
    %v2737 = vld [vmem:[#allocation10 + $0x754] sm:$0xff]
    %v2738 = vld [vmem:[#allocation10 + $0x75c] sm:$0xff]
    %v2739 = vld [vmem:[#allocation10 + $0x764] sm:$0xff]
    %v2740 = vld [vmem:[#allocation10 + $0x76c] sm:$0xf]
    %v2741 = vld [vmem:[#allocation10 + $0x770] sm:$0xff]
    %v2742 = vld [vmem:[#allocation10 + $0x778] sm:$0xff]
    %v2743 = vld [vmem:[#allocation10 + $0x780] sm:$0xff]
    %v2744 = vld [vmem:[#allocation10 + $0x788] sm:$0xf]
    %v2745 = vld [vmem:[#allocation10 + $0x78c] sm:$0xff]
    %v2746 = vld [vmem:[#allocation10 + $0x794] sm:$0xff]
    %v2747 = vld [vmem:[#allocation10 + $0x79c] sm:$0xff]
    %v2748 = vld [vmem:[#allocation10 + $0x7a4] sm:$0xf]
    %v2749 = vld [vmem:[#allocation10 + $0x7a8] sm:$0xff]
    %v2750 = vld [vmem:[#allocation10 + $0x7b0] sm:$0xff]
    %v2751 = vld [vmem:[#allocation10 + $0x7b8] sm:$0xff]
    %v2752 = vld [vmem:[#allocation10 + $0x7c0] sm:$0xf]
    %v2753 = vld [vmem:[#allocation10 + $0x7c4] sm:$0xff]
    %v2754 = vld [vmem:[#allocation10 + $0x7cc] sm:$0xff]
    %v2755 = vld [vmem:[#allocation10 + $0x7d4] sm:$0xff]
    %v2756 = vld [vmem:[#allocation10 + $0x7dc] sm:$0xf]
    %v2757 = vld [vmem:[#allocation10 + $0x7e0] sm:$0xff]
    %v2758 = vld [vmem:[#allocation10 + $0x7e8] sm:$0xff]
    %v2759 = vld [vmem:[#allocation10 + $0x7f0] sm:$0xff]
    %v2760 = vld [vmem:[#allocation10 + $0x7f8] sm:$0xf]
    %v2761 = vld [vmem:[#allocation10 + $0x7fc] sm:$0xff]
    %v2762 = vld [vmem:[#allocation10 + $0x804] sm:$0xff]
    %v2763 = vld [vmem:[#allocation10 + $0x80c] sm:$0xff]
    %v2764 = vld [vmem:[#allocation10 + $0x814] sm:$0xf]
    %v2765 = vld [vmem:[#allocation10 + $0x818] sm:$0xff]
    %v2766 = vld [vmem:[#allocation10 + $0x820] sm:$0xff]
    %v2767 = vld [vmem:[#allocation10 + $0x828] sm:$0xff]
    %v2768 = vld [vmem:[#allocation10 + $0x830] sm:$0xf]
    %v2769 = vld [vmem:[#allocation10 + $0x834] sm:$0xff]
    %v2770 = vld [vmem:[#allocation10 + $0x83c] sm:$0xff]
    %v2771 = vld [vmem:[#allocation10 + $0x844] sm:$0xff]
    %v2772 = vld [vmem:[#allocation10 + $0x84c] sm:$0xf]
    %v2773 = vld [vmem:[#allocation10 + $0x850] sm:$0xff]
    %v2774 = vld [vmem:[#allocation10 + $0x858] sm:$0xff]
    %v2775 = vld [vmem:[#allocation10 + $0x860] sm:$0xff]
    %v2776 = vld [vmem:[#allocation10 + $0x868] sm:$0xf]
    %v2777 = vld [vmem:[#allocation10 + $0x86c] sm:$0xff]
    %v2778 = vld [vmem:[#allocation10 + $0x874] sm:$0xff]
    %v2779 = vld [vmem:[#allocation10 + $0x87c] sm:$0xff]
    %v2780 = vld [vmem:[#allocation10 + $0x884] sm:$0xf]
    %v2781 = vld [vmem:[#allocation10 + $0x888] sm:$0xff]
    %v2782 = vld [vmem:[#allocation10 + $0x890] sm:$0xff]
    %v2783 = vld [vmem:[#allocation10 + $0x898] sm:$0xff]
    %v2784 = vld [vmem:[#allocation10 + $0x8a0] sm:$0xf]
    %v2785 = vld [vmem:[#allocation10 + $0x8a4] sm:$0xff]
    %v2786 = vld [vmem:[#allocation10 + $0x8ac] sm:$0xff]
    %v2787 = vld [vmem:[#allocation10 + $0x8b4] sm:$0xff]
    %v2788 = vld [vmem:[#allocation10 + $0x8bc] sm:$0xf]
    %v2789 = vld [vmem:[#allocation10 + $0x8c0] sm:$0xff]
    %v2790 = vld [vmem:[#allocation10 + $0x8c8] sm:$0xff]
    %v2791 = vld [vmem:[#allocation10 + $0x8d0] sm:$0xff]
    %v2792 = vld [vmem:[#allocation10 + $0x8d8] sm:$0xf]
    %v2793 = vld [vmem:[#allocation10 + $0x8dc] sm:$0xff]
    %v2794 = vld [vmem:[#allocation10 + $0x8e4] sm:$0xff]
    %v2795 = vld [vmem:[#allocation10 + $0x8ec] sm:$0xff]
    %v2796 = vld [vmem:[#allocation10 + $0x8f4] sm:$0xf]
    %v2797 = vld [vmem:[#allocation10 + $0x8f8] sm:$0xff]
    %v2798 = vld [vmem:[#allocation10 + $0x900] sm:$0xff]
    %v2799 = vld [vmem:[#allocation10 + $0x908] sm:$0xff]
    %v2800 = vld [vmem:[#allocation10 + $0x910] sm:$0xf]
    %v2801 = vld [vmem:[#allocation10 + $0x914] sm:$0xff]
    %v2802 = vld [vmem:[#allocation10 + $0x91c] sm:$0xff]
    %v2803 = vld [vmem:[#allocation10 + $0x924] sm:$0xff]
    %v2804 = vld [vmem:[#allocation10 + $0x92c] sm:$0xf]
    %v2805 = vld [vmem:[#allocation10 + $0x930] sm:$0xff]
    %v2806 = vld [vmem:[#allocation10 + $0x938] sm:$0xff]
    %v2807 = vld [vmem:[#allocation10 + $0x940] sm:$0xff]
    %v2808 = vld [vmem:[#allocation10 + $0x948] sm:$0xf]
    %v2809 = vld [vmem:[#allocation10 + $0x94c] sm:$0xff]
    %v2810 = vld [vmem:[#allocation10 + $0x954] sm:$0xff]
    %v2811 = vld [vmem:[#allocation10 + $0x95c] sm:$0xff]
    %v2812 = vld [vmem:[#allocation10 + $0x964] sm:$0xf]
    %v2813 = vld [vmem:[#allocation10 + $0x968] sm:$0xff]
    %v2814 = vld [vmem:[#allocation10 + $0x970] sm:$0xff]
    %v2815 = vld [vmem:[#allocation10 + $0x978] sm:$0xff]
    %v2816 = vld [vmem:[#allocation10 + $0x980] sm:$0xf]
    %v2817 = vld [vmem:[#allocation10 + $0x984] sm:$0xff]
    %v2818 = vld [vmem:[#allocation10 + $0x98c] sm:$0xff]
    %v2819 = vld [vmem:[#allocation10 + $0x994] sm:$0xff]
    %v2820 = vld [vmem:[#allocation10 + $0x99c] sm:$0xf]
    %v2821 = vld [vmem:[#allocation10 + $0x9a0] sm:$0xff]
    %v2822 = vld [vmem:[#allocation10 + $0x9a8] sm:$0xff]
    %v2823 = vld [vmem:[#allocation10 + $0x9b0] sm:$0xff]
    %v2824 = vld [vmem:[#allocation10 + $0x9b8] sm:$0xf]
    %v2825 = vld [vmem:[#allocation10 + $0x9bc] sm:$0xff]
    %v2826 = vld [vmem:[#allocation10 + $0x9c4] sm:$0xff]
    %v2827 = vld [vmem:[#allocation10 + $0x9cc] sm:$0xff]
    %v2828 = vld [vmem:[#allocation10 + $0x9d4] sm:$0xf]
    %v2829 = vld [vmem:[#allocation10 + $0x9d8] sm:$0xff]
    %v2830 = vld [vmem:[#allocation10 + $0x9e0] sm:$0xff]
    %v2831 = vld [vmem:[#allocation10 + $0x9e8] sm:$0xff]
    %v2832 = vld [vmem:[#allocation10 + $0x9f0] sm:$0xf]
    %v2833 = vld [vmem:[#allocation10 + $0x9f4] sm:$0xff]
    %v2834 = vld [vmem:[#allocation10 + $0x9fc] sm:$0xff]
    %v2835 = vld [vmem:[#allocation10 + $0xa04] sm:$0xff]
    %v2836 = vld [vmem:[#allocation10 + $0xa0c] sm:$0xf]
    %v2837 = vld [vmem:[#allocation10 + $0xa10] sm:$0xff]
    %v2838 = vld [vmem:[#allocation10 + $0xa18] sm:$0xff]
    %v2839 = vld [vmem:[#allocation10 + $0xa20] sm:$0xff]
    %v2840 = vld [vmem:[#allocation10 + $0xa28] sm:$0xf]
    %v2841 = vld [vmem:[#allocation10 + $0xa2c] sm:$0xff]
    %v2842 = vld [vmem:[#allocation10 + $0xa34] sm:$0xff]
    %v2843 = vld [vmem:[#allocation10 + $0xa3c] sm:$0xff]
    %v2844 = vld [vmem:[#allocation10 + $0xa44] sm:$0xf]
    %v2845 = vld [vmem:[#allocation10 + $0xa48] sm:$0xff]
    %v2846 = vld [vmem:[#allocation10 + $0xa50] sm:$0xff]
    %v2847 = vld [vmem:[#allocation10 + $0xa58] sm:$0xff]
    %v2848 = vld [vmem:[#allocation10 + $0xa60] sm:$0xf]
    %v2849 = vld [vmem:[#allocation10 + $0xa64] sm:$0xff]
    %v2850 = vld [vmem:[#allocation10 + $0xa6c] sm:$0xff]
    %v2851 = vld [vmem:[#allocation10 + $0xa74] sm:$0xff]
    %v2852 = vld [vmem:[#allocation10 + $0xa7c] sm:$0xf]
    %v2853 = vld [vmem:[#allocation10 + $0xa80] sm:$0xff]
    %v2854 = vld [vmem:[#allocation10 + $0xa88] sm:$0xff]
    %v2855 = vld [vmem:[#allocation10 + $0xa90] sm:$0xff]
    %v2856 = vld [vmem:[#allocation10 + $0xa98] sm:$0xf]
    %v2857 = vld [vmem:[#allocation10 + $0xa9c] sm:$0xff]
    %v2858 = vld [vmem:[#allocation10 + $0xaa4] sm:$0xff]
    %v2859 = vld [vmem:[#allocation10 + $0xaac] sm:$0xff]
    %v2860 = vld [vmem:[#allocation10 + $0xab4] sm:$0xf]
    %v2861 = vld [vmem:[#allocation10 + $0xab8] sm:$0xff]
    %v2862 = vld [vmem:[#allocation10 + $0xac0] sm:$0xff]
    %v2863 = vld [vmem:[#allocation10 + $0xac8] sm:$0xff]
    %v2864 = vld [vmem:[#allocation10 + $0xad0] sm:$0xf]
    %v2865 = vld [vmem:[#allocation10 + $0xad4] sm:$0xff]
    %v2866 = vld [vmem:[#allocation10 + $0xadc] sm:$0xff]
    %v2867 = vld [vmem:[#allocation10 + $0xae4] sm:$0xff]
    %v2868 = vld [vmem:[#allocation10 + $0xaec] sm:$0xf]
    %v2869 = vld [vmem:[#allocation10 + $0xaf0] sm:$0xff]
    %v2870 = vld [vmem:[#allocation10 + $0xaf8] sm:$0xff]
    %v2871 = vld [vmem:[#allocation10 + $0xb00] sm:$0xff]
    %v2872 = vld [vmem:[#allocation10 + $0xb08] sm:$0xf]
    %v2873 = vld [vmem:[#allocation10 + $0xb0c] sm:$0xff]
    %v2874 = vld [vmem:[#allocation10 + $0xb14] sm:$0xff]
    %v2875 = vld [vmem:[#allocation10 + $0xb1c] sm:$0xff]
    %v2876 = vld [vmem:[#allocation10 + $0xb24] sm:$0xf]
    %v2877 = vld [vmem:[#allocation10 + $0xb28] sm:$0xff]
    %v2878 = vld [vmem:[#allocation10 + $0xb30] sm:$0xff]
    %v2879 = vld [vmem:[#allocation10 + $0xb38] sm:$0xff]
    %v2880 = vld [vmem:[#allocation10 + $0xb40] sm:$0xf]
    %v2881 = vld [vmem:[#allocation10 + $0xb44] sm:$0xff]
    %v2882 = vld [vmem:[#allocation10 + $0xb4c] sm:$0xff]
    %v2883 = vld [vmem:[#allocation10 + $0xb54] sm:$0xff]
    %v2884 = vld [vmem:[#allocation10 + $0xb5c] sm:$0xf]
    %v2885 = vld [vmem:[#allocation10 + $0xb60] sm:$0xff]
    %v2886 = vld [vmem:[#allocation10 + $0xb68] sm:$0xff]
    %v2887 = vld [vmem:[#allocation10 + $0xb70] sm:$0xff]
    %v2888 = vld [vmem:[#allocation10 + $0xb78] sm:$0xf]
    %v2889 = vld [vmem:[#allocation10 + $0xb7c] sm:$0xff]
    %v2890 = vld [vmem:[#allocation10 + $0xb84] sm:$0xff]
    %v2891 = vld [vmem:[#allocation10 + $0xb8c] sm:$0xff]
    %v2892 = vld [vmem:[#allocation10 + $0xb94] sm:$0xf]
    %v2893 = vld [vmem:[#allocation10 + $0xb98] sm:$0xff]
    %v2894 = vld [vmem:[#allocation10 + $0xba0] sm:$0xff]
    %v2895 = vld [vmem:[#allocation10 + $0xba8] sm:$0xff]
    %v2896 = vld [vmem:[#allocation10 + $0xbb0] sm:$0xf]
    %v2897 = vld [vmem:[#allocation10 + $0xbb4] sm:$0xff]
    %v2898 = vld [vmem:[#allocation10 + $0xbbc] sm:$0xff]
    %v2899 = vld [vmem:[#allocation10 + $0xbc4] sm:$0xff]
    %v2900 = vld [vmem:[#allocation10 + $0xbcc] sm:$0xf]
    %v2901 = vld [vmem:[#allocation10 + $0xbd0] sm:$0xff]
    %v2902 = vld [vmem:[#allocation10 + $0xbd8] sm:$0xff]
    %v2903 = vld [vmem:[#allocation10 + $0xbe0] sm:$0xff]
    %v2904 = vld [vmem:[#allocation10 + $0xbe8] sm:$0xf]
    %v2905 = vld [vmem:[#allocation10 + $0xbec] sm:$0xff]
    %v2906 = vld [vmem:[#allocation10 + $0xbf4] sm:$0xff]
    %v2907 = vld [vmem:[#allocation10 + $0xbfc] sm:$0xff]
    %v2908 = vld [vmem:[#allocation10 + $0xc04] sm:$0xf]
    %v2909 = vld [vmem:[#allocation10 + $0xc08] sm:$0xff]
    %v2910 = vld [vmem:[#allocation10 + $0xc10] sm:$0xff]
    %v2911 = vld [vmem:[#allocation10 + $0xc18] sm:$0xff]
    %v2912 = vld [vmem:[#allocation10 + $0xc20] sm:$0xf]
    %v2913 = vld [vmem:[#allocation10 + $0xc24] sm:$0xff]
    %v2914 = vld [vmem:[#allocation10 + $0xc2c] sm:$0xff]
    %v2915 = vld [vmem:[#allocation10 + $0xc34] sm:$0xff]
    %v2916 = vld [vmem:[#allocation10 + $0xc3c] sm:$0xf]
    %v2917 = vld [vmem:[#allocation10 + $0xc40] sm:$0xff]
    %v2918 = vld [vmem:[#allocation10 + $0xc48] sm:$0xff]
    %v2919 = vld [vmem:[#allocation10 + $0xc50] sm:$0xff]
    %v2920 = vld [vmem:[#allocation10 + $0xc58] sm:$0xf]
    %v2921 = vld [vmem:[#allocation10 + $0xc5c] sm:$0xff]
    %v2922 = vld [vmem:[#allocation10 + $0xc64] sm:$0xff]
    %v2923 = vld [vmem:[#allocation10 + $0xc6c] sm:$0xff]
    %v2924 = vld [vmem:[#allocation10 + $0xc74] sm:$0xf]
    %v2925 = vld [vmem:[#allocation10 + $0xc78] sm:$0xff]
    %v2926 = vld [vmem:[#allocation10 + $0xc80] sm:$0xff]
    %v2927 = vld [vmem:[#allocation10 + $0xc88] sm:$0xff]
    %v2928 = vld [vmem:[#allocation10 + $0xc90] sm:$0xf]
    %v2929 = vld [vmem:[#allocation10 + $0xc94] sm:$0xff]
    %v2930 = vld [vmem:[#allocation10 + $0xc9c] sm:$0xff]
    %v2931 = vld [vmem:[#allocation10 + $0xca4] sm:$0xff]
    %v2932 = vld [vmem:[#allocation10 + $0xcac] sm:$0xf]
    %v2933 = vld [vmem:[#allocation10 + $0xcb0] sm:$0xff]
    %v2934 = vld [vmem:[#allocation10 + $0xcb8] sm:$0xff]
    %v2935 = vld [vmem:[#allocation10 + $0xcc0] sm:$0xff]
    %v2936 = vld [vmem:[#allocation10 + $0xcc8] sm:$0xf]
    %v2937 = vld [vmem:[#allocation10 + $0xccc] sm:$0xff]
    %v2938 = vld [vmem:[#allocation10 + $0xcd4] sm:$0xff]
    %v2939 = vld [vmem:[#allocation10 + $0xcdc] sm:$0xff]
    %v2940 = vld [vmem:[#allocation10 + $0xce4] sm:$0xf]
    %v2941 = vld [vmem:[#allocation10 + $0xce8] sm:$0xff]
    %v2942 = vld [vmem:[#allocation10 + $0xcf0] sm:$0xff]
    %v2943 = vld [vmem:[#allocation10 + $0xcf8] sm:$0xff]
    %v2944 = vld [vmem:[#allocation10 + $0xd00] sm:$0xf]
    %v2945 = vld [vmem:[#allocation10 + $0xd04] sm:$0xff]
    %v2946 = vld [vmem:[#allocation10 + $0xd0c] sm:$0xff]
    %v2947 = vld [vmem:[#allocation10 + $0xd14] sm:$0xff]
    %v2948 = vld [vmem:[#allocation10 + $0xd1c] sm:$0xf]
    %v2949 = vld [vmem:[#allocation10 + $0xd20] sm:$0xff]
    %v2950 = vld [vmem:[#allocation10 + $0xd28] sm:$0xff]
    %v2951 = vld [vmem:[#allocation10 + $0xd30] sm:$0xff]
    %v2952 = vld [vmem:[#allocation10 + $0xd38] sm:$0xf]
    %v2953 = vld [vmem:[#allocation10 + $0xd3c] sm:$0xff]
    %v2954 = vld [vmem:[#allocation10 + $0xd44] sm:$0xff]
    %v2955 = vld [vmem:[#allocation10 + $0xd4c] sm:$0xff]
    %v2956 = vld [vmem:[#allocation10 + $0xd54] sm:$0xf]
    %v2957 = vld [vmem:[#allocation10 + $0xd58] sm:$0xff]
    %v2958 = vld [vmem:[#allocation10 + $0xd60] sm:$0xff]
    %v2959 = vld [vmem:[#allocation10 + $0xd68] sm:$0xff]
    %v2960 = vld [vmem:[#allocation10 + $0xd70] sm:$0xf]
    %v2961 = vld [vmem:[#allocation10 + $0xd74] sm:$0xff]
    %v2962 = vld [vmem:[#allocation10 + $0xd7c] sm:$0xff]
    %v2963 = vld [vmem:[#allocation10 + $0xd84] sm:$0xff]
    %v2964 = vld [vmem:[#allocation10 + $0xd8c] sm:$0xf]
    %v2965 = vld [vmem:[#allocation10 + $0xd90] sm:$0xff]
    %v2966 = vld [vmem:[#allocation10 + $0xd98] sm:$0xff]
    %v2967 = vld [vmem:[#allocation10 + $0xda0] sm:$0xff]
    %v2968 = vld [vmem:[#allocation10 + $0xda8] sm:$0xf]
    %v2969 = vld [vmem:[#allocation10 + $0xdac] sm:$0xff]
    %v2970 = vld [vmem:[#allocation10 + $0xdb4] sm:$0xff]
    %v2971 = vld [vmem:[#allocation10 + $0xdbc] sm:$0xff]
    %v2972 = vld [vmem:[#allocation10 + $0xdc4] sm:$0xf]
    %v2973 = vld [vmem:[#allocation10 + $0xdc8] sm:$0xff]
    %v2974 = vld [vmem:[#allocation10 + $0xdd0] sm:$0xff]
    %v2975 = vld [vmem:[#allocation10 + $0xdd8] sm:$0xff]
    %v2976 = vld [vmem:[#allocation10 + $0xde0] sm:$0xf]
    %v2977 = vld [vmem:[#allocation10 + $0xde4] sm:$0xff]
    %v2978 = vld [vmem:[#allocation10 + $0xdec] sm:$0xff]
    %v2979 = vld [vmem:[#allocation10 + $0xdf4] sm:$0xff]
    %v2980 = vld [vmem:[#allocation10 + $0xdfc] sm:$0xf]
    %v2981 = vld [vmem:[#allocation10 + $0xe00] sm:$0xff]
    %v2982 = vld [vmem:[#allocation10 + $0xe08] sm:$0xff]
    %v2983 = vld [vmem:[#allocation10 + $0xe10] sm:$0xff]
    %v2984 = vld [vmem:[#allocation10 + $0xe18] sm:$0xf]
    %v2985 = vld [vmem:[#allocation10 + $0xe1c] sm:$0xff]
    %v2986 = vld [vmem:[#allocation10 + $0xe24] sm:$0xff]
    %v2987 = vld [vmem:[#allocation10 + $0xe2c] sm:$0xff]
    %v2988 = vld [vmem:[#allocation10 + $0xe34] sm:$0xf]
    %v2989 = vld [vmem:[#allocation10 + $0xe38] sm:$0xff]
    %v2990 = vld [vmem:[#allocation10 + $0xe40] sm:$0xff]
    %v2991 = vld [vmem:[#allocation10 + $0xe48] sm:$0xff]
    %v2992 = vld [vmem:[#allocation10 + $0xe50] sm:$0xf]
    %v2993 = vld [vmem:[#allocation10 + $0xe54] sm:$0xff]
    %v2994 = vld [vmem:[#allocation10 + $0xe5c] sm:$0xff]
    %v2995 = vld [vmem:[#allocation10 + $0xe64] sm:$0xff]
    %v2996 = vld [vmem:[#allocation10 + $0xe6c] sm:$0xf]
    %v2997 = vld [vmem:[#allocation10 + $0xe70] sm:$0xff]
    %v2998 = vld [vmem:[#allocation10 + $0xe78] sm:$0xff]
    %v2999 = vld [vmem:[#allocation10 + $0xe80] sm:$0xff]
    %v3000 = vld [vmem:[#allocation10 + $0xe88] sm:$0xf]
    %v3001 = vld [vmem:[#allocation10 + $0xe8c] sm:$0xff]
    %v3002 = vld [vmem:[#allocation10 + $0xe94] sm:$0xff]
    %v3003 = vld [vmem:[#allocation10 + $0xe9c] sm:$0xff]
    %v3004 = vld [vmem:[#allocation10 + $0xea4] sm:$0xf]
    %v3005 = vld [vmem:[#allocation10 + $0xea8] sm:$0xff]
    %v3006 = vld [vmem:[#allocation10 + $0xeb0] sm:$0xff]
    %v3007 = vld [vmem:[#allocation10 + $0xeb8] sm:$0xff]
    %v3008 = vld [vmem:[#allocation10 + $0xec0] sm:$0xf]
    %v3009 = vld [vmem:[#allocation10 + $0xec4] sm:$0xff]
    %v3010 = vld [vmem:[#allocation10 + $0xecc] sm:$0xff]
    %v3011 = vld [vmem:[#allocation10 + $0xed4] sm:$0xff]
    %v3012 = vld [vmem:[#allocation10 + $0xedc] sm:$0xf]
    %v3013 = vld [vmem:[#allocation10 + $0xee0] sm:$0xff]
    %v3014 = vld [vmem:[#allocation10 + $0xee8] sm:$0xff]
    %v3015 = vld [vmem:[#allocation10 + $0xef0] sm:$0xff]
    %v3016 = vld [vmem:[#allocation10 + $0xef8] sm:$0xf]
    %v3017 = vld [vmem:[#allocation10 + $0xefc] sm:$0xff]
    %v3018 = vld [vmem:[#allocation10 + $0xf04] sm:$0xff]
    %v3019 = vld [vmem:[#allocation10 + $0xf0c] sm:$0xff]
    %v3020 = vld [vmem:[#allocation10 + $0xf14] sm:$0xf]
    %v3021 = vld [vmem:[#allocation10 + $0xf18] sm:$0xff]
    %v3022 = vld [vmem:[#allocation10 + $0xf20] sm:$0xff]
    %v3023 = vld [vmem:[#allocation10 + $0xf28] sm:$0xff]
    %v3024 = vld [vmem:[#allocation10 + $0xf30] sm:$0xf]
    %v3025 = vld [vmem:[#allocation10 + $0xf34] sm:$0xff]
    %v3026 = vld [vmem:[#allocation10 + $0xf3c] sm:$0xff]
    %v3027 = vld [vmem:[#allocation10 + $0xf44] sm:$0xff]
    %v3028 = vld [vmem:[#allocation10 + $0xf4c] sm:$0xf]
    %v3029 = vld [vmem:[#allocation10 + $0xf50] sm:$0xff]
    %v3030 = vld [vmem:[#allocation10 + $0xf58] sm:$0xff]
    %v3031 = vld [vmem:[#allocation10 + $0xf60] sm:$0xff]
    %v3032 = vld [vmem:[#allocation10 + $0xf68] sm:$0xf]
    %v3033 = vld [vmem:[#allocation10 + $0xf6c] sm:$0xff]
    %v3034 = vld [vmem:[#allocation10 + $0xf74] sm:$0xff]
    %v3035 = vld [vmem:[#allocation10 + $0xf7c] sm:$0xff]
    %v3036 = vld [vmem:[#allocation10 + $0xf84] sm:$0xf]
    %v3037 = vld [vmem:[#allocation10 + $0xf88] sm:$0xff]
    %v3038 = vld [vmem:[#allocation10 + $0xf90] sm:$0xff]
    %v3039 = vld [vmem:[#allocation10 + $0xf98] sm:$0xff]
    %v3040 = vld [vmem:[#allocation10 + $0xfa0] sm:$0xf]
    %v3041 = vld [vmem:[#allocation10 + $0xfa4] sm:$0xff]
    %v3042 = vld [vmem:[#allocation10 + $0xfac] sm:$0xff]
    %v3043 = vld [vmem:[#allocation10 + $0xfb4] sm:$0xff]
    %v3044 = vld [vmem:[#allocation10 + $0xfbc] sm:$0xf]
    %v3045 = vld [vmem:[#allocation10 + $0xfc0] sm:$0xff]
    %v3046 = vld [vmem:[#allocation10 + $0xfc8] sm:$0xff]
    %v3047 = vld [vmem:[#allocation10 + $0xfd0] sm:$0xff]
    %v3048 = vld [vmem:[#allocation10 + $0xfd8] sm:$0xf]
    %v3049 = vld [vmem:[#allocation10 + $0xfdc] sm:$0xff]
    %v3050 = vld [vmem:[#allocation10 + $0xfe4] sm:$0xff]
    %v3051 = vld [vmem:[#allocation10 + $0xfec] sm:$0xff]
    %v3052 = vld [vmem:[#allocation10 + $0xff4] sm:$0xf]
    %v3053 = vld [vmem:[#allocation10 + $0xff8] sm:$0xff]
    %v3054 = vld [vmem:[#allocation10 + $0x1000] sm:$0xff]
    %v3055 = vld [vmem:[#allocation10 + $0x1008] sm:$0xff]
    %v3056 = vld [vmem:[#allocation10 + $0x1010] sm:$0xf]
    %v3057 = vld [vmem:[#allocation10 + $0x1014] sm:$0xff]
    %v3058 = vld [vmem:[#allocation10 + $0x101c] sm:$0xff]
    %v3059 = vld [vmem:[#allocation10 + $0x1024] sm:$0xff]
    %v3060 = vld [vmem:[#allocation10 + $0x102c] sm:$0xf]
    %v3061 = vld [vmem:[#allocation10 + $0x1030] sm:$0xff]
    %v3062 = vld [vmem:[#allocation10 + $0x1038] sm:$0xff]
    %v3063 = vld [vmem:[#allocation10 + $0x1040] sm:$0xff]
    %v3064 = vld [vmem:[#allocation10 + $0x1048] sm:$0xf]
    %v3065 = vld [vmem:[#allocation10 + $0x104c] sm:$0xff]
    %v3066 = vld [vmem:[#allocation10 + $0x1054] sm:$0xff]
    %v3067 = vld [vmem:[#allocation10 + $0x105c] sm:$0xff]
    %v3068 = vld [vmem:[#allocation10 + $0x1064] sm:$0xf]
    %v3069 = vld [vmem:[#allocation10 + $0x1068] sm:$0xff]
    %v3070 = vld [vmem:[#allocation10 + $0x1070] sm:$0xff]
    %v3071 = vld [vmem:[#allocation10 + $0x1078] sm:$0xff]
    %v3072 = vld [vmem:[#allocation10 + $0x1080] sm:$0xf]
    %v3073 = vld [vmem:[#allocation10 + $0x1084] sm:$0xff]
    %v3074 = vld [vmem:[#allocation10 + $0x108c] sm:$0xff]
    %v3075 = vld [vmem:[#allocation10 + $0x1094] sm:$0xff]
    %v3076 = vld [vmem:[#allocation10 + $0x109c] sm:$0xf]
    %v3077 = vld [vmem:[#allocation10 + $0x10a0] sm:$0xff]
    %v3078 = vld [vmem:[#allocation10 + $0x10a8] sm:$0xff]
    %v3079 = vld [vmem:[#allocation10 + $0x10b0] sm:$0xff]
    %v3080 = vld [vmem:[#allocation10 + $0x10b8] sm:$0xf]
    %v3081 = vld [vmem:[#allocation10 + $0x10bc] sm:$0xff]
    %v3082 = vld [vmem:[#allocation10 + $0x10c4] sm:$0xff]
    %v3083 = vld [vmem:[#allocation10 + $0x10cc] sm:$0xff]
    %v3084 = vld [vmem:[#allocation10 + $0x10d4] sm:$0xf]
    %v3085 = vld [vmem:[#allocation10 + $0x10d8] sm:$0xff]
    %v3086 = vld [vmem:[#allocation10 + $0x10e0] sm:$0xff]
    %v3087 = vld [vmem:[#allocation10 + $0x10e8] sm:$0xff]
    %v3088 = vld [vmem:[#allocation10 + $0x10f0] sm:$0xf]
    %v3089 = vld [vmem:[#allocation10 + $0x10f4] sm:$0xff]
    %v3090 = vld [vmem:[#allocation10 + $0x10fc] sm:$0xff]
    %v3091 = vld [vmem:[#allocation10 + $0x1104] sm:$0xff]
    %v3092 = vld [vmem:[#allocation10 + $0x110c] sm:$0xf]
    %v3093 = vld [vmem:[#allocation10 + $0x1110] sm:$0xff]
    %v3094 = vld [vmem:[#allocation10 + $0x1118] sm:$0xff]
    %v3095 = vld [vmem:[#allocation10 + $0x1120] sm:$0xff]
    %v3096 = vld [vmem:[#allocation10 + $0x1128] sm:$0xf]
    %v3097 = vld [vmem:[#allocation10 + $0x112c] sm:$0xff]
    %v3098 = vld [vmem:[#allocation10 + $0x1134] sm:$0xff]
    %v3099 = vld [vmem:[#allocation10 + $0x113c] sm:$0xff]
    %v3100 = vld [vmem:[#allocation10 + $0x1144] sm:$0xf]
    %v3101 = vld [vmem:[#allocation10 + $0x1148] sm:$0xff]
    %v3102 = vld [vmem:[#allocation10 + $0x1150] sm:$0xff]
    %v3103 = vld [vmem:[#allocation10 + $0x1158] sm:$0xff]
    %v3104 = vld [vmem:[#allocation10 + $0x1160] sm:$0xf]
    %v3105 = vld [vmem:[#allocation10 + $0x1164] sm:$0xff]
    %v3106 = vld [vmem:[#allocation10 + $0x116c] sm:$0xff]
    %v3107 = vld [vmem:[#allocation10 + $0x1174] sm:$0xff]
    %v3108 = vld [vmem:[#allocation10 + $0x117c] sm:$0xf]
    %v3109 = vld [vmem:[#allocation10 + $0x1180] sm:$0xff]
    %v3110 = vld [vmem:[#allocation10 + $0x1188] sm:$0xff]
    %v3111 = vld [vmem:[#allocation10 + $0x1190] sm:$0xff]
    %v3112 = vld [vmem:[#allocation10 + $0x1198] sm:$0xf]
    %v3113 = vld [vmem:[#allocation10 + $0x119c] sm:$0xff]
    %v3114 = vld [vmem:[#allocation10 + $0x11a4] sm:$0xff]
    %v3115 = vld [vmem:[#allocation10 + $0x11ac] sm:$0xff]
    %v3116 = vld [vmem:[#allocation10 + $0x11b4] sm:$0xf]
    %v3117 = vld [vmem:[#allocation10 + $0x11b8] sm:$0xff]
    %v3118 = vld [vmem:[#allocation10 + $0x11c0] sm:$0xff]
    %v3119 = vld [vmem:[#allocation10 + $0x11c8] sm:$0xff]
    %v3120 = vld [vmem:[#allocation10 + $0x11d0] sm:$0xf]
    %v3121 = vld [vmem:[#allocation10 + $0x11d4] sm:$0xff]
    %v3122 = vld [vmem:[#allocation10 + $0x11dc] sm:$0xff]
    %v3123 = vld [vmem:[#allocation10 + $0x11e4] sm:$0xff]
    %v3124 = vld [vmem:[#allocation10 + $0x11ec] sm:$0xf]
    %v3125 = vld [vmem:[#allocation10 + $0x11f0] sm:$0xff]
    %v3126 = vld [vmem:[#allocation10 + $0x11f8] sm:$0xff]
    %v3127 = vld [vmem:[#allocation10 + $0x1200] sm:$0xff]
    %v3128 = vld [vmem:[#allocation10 + $0x1208] sm:$0xf]
    %v3129 = vld [vmem:[#allocation10 + $0x120c] sm:$0xff]
    %v3130 = vld [vmem:[#allocation10 + $0x1214] sm:$0xff]
    %v3131 = vld [vmem:[#allocation10 + $0x121c] sm:$0xff]
    %v3132 = vld [vmem:[#allocation10 + $0x1224] sm:$0xf]
    %v3133 = vld [vmem:[#allocation10 + $0x1228] sm:$0xff]
    %v3134 = vld [vmem:[#allocation10 + $0x1230] sm:$0xff]
    %v3135 = vld [vmem:[#allocation10 + $0x1238] sm:$0xff]
    %v3136 = vld [vmem:[#allocation10 + $0x1240] sm:$0xf]
    %v3137 = vld [vmem:[#allocation10 + $0x1244] sm:$0xff]
    %v3138 = vld [vmem:[#allocation10 + $0x124c] sm:$0xff]
    %v3139 = vld [vmem:[#allocation10 + $0x1254] sm:$0xff]
    %v3140 = vld [vmem:[#allocation10 + $0x125c] sm:$0xf]
    %v3141 = vld [vmem:[#allocation10 + $0x1260] sm:$0xff]
    %v3142 = vld [vmem:[#allocation10 + $0x1268] sm:$0xff]
    %v3143 = vld [vmem:[#allocation10 + $0x1270] sm:$0xff]
    %v3144 = vld [vmem:[#allocation10 + $0x1278] sm:$0xf]
    %v3145 = vld [vmem:[#allocation10 + $0x127c] sm:$0xff]
    %v3146 = vld [vmem:[#allocation10 + $0x1284] sm:$0xff]
    %v3147 = vld [vmem:[#allocation10 + $0x128c] sm:$0xff]
    %v3148 = vld [vmem:[#allocation10 + $0x1294] sm:$0xf]
    %v3149 = vld [vmem:[#allocation10 + $0x1298] sm:$0xff]
    %v3150 = vld [vmem:[#allocation10 + $0x12a0] sm:$0xff]
    %v3151 = vld [vmem:[#allocation10 + $0x12a8] sm:$0xff]
    %v3152 = vld [vmem:[#allocation10 + $0x12b0] sm:$0xf]
    %v3153 = vld [vmem:[#allocation10 + $0x12b4] sm:$0xff]
    %v3154 = vld [vmem:[#allocation10 + $0x12bc] sm:$0xff]
    %v3155 = vld [vmem:[#allocation10 + $0x12c4] sm:$0xff]
    %v3156 = vld [vmem:[#allocation10 + $0x12cc] sm:$0xf]
    %v3157 = vld [vmem:[#allocation10 + $0x12d0] sm:$0xff]
    %v3158 = vld [vmem:[#allocation10 + $0x12d8] sm:$0xff]
    %v3159 = vld [vmem:[#allocation10 + $0x12e0] sm:$0xff]
    %v3160 = vld [vmem:[#allocation10 + $0x12e8] sm:$0xf]
    %v3161 = vld [vmem:[#allocation10 + $0x12ec] sm:$0xff]
    %v3162 = vld [vmem:[#allocation10 + $0x12f4] sm:$0xff]
    %v3163 = vld [vmem:[#allocation10 + $0x12fc] sm:$0xff]
    %v3164 = vld [vmem:[#allocation10 + $0x1304] sm:$0xf]
    %v3165 = vld [vmem:[#allocation10 + $0x1308] sm:$0xff]
    %v3166 = vld [vmem:[#allocation10 + $0x1310] sm:$0xff]
    %v3167 = vld [vmem:[#allocation10 + $0x1318] sm:$0xff]
    %v3168 = vld [vmem:[#allocation10 + $0x1320] sm:$0xf]
    %v3169 = vld [vmem:[#allocation10 + $0x1324] sm:$0xff]
    %v3170 = vld [vmem:[#allocation10 + $0x132c] sm:$0xff]
    %v3171 = vld [vmem:[#allocation10 + $0x1334] sm:$0xff]
    %v3172 = vld [vmem:[#allocation10 + $0x133c] sm:$0xf]
    %v3173 = vld [vmem:[#allocation10 + $0x1340] sm:$0xff]
    %v3174 = vld [vmem:[#allocation10 + $0x1348] sm:$0xff]
    %v3175 = vld [vmem:[#allocation10 + $0x1350] sm:$0xff]
    %v3176 = vld [vmem:[#allocation10 + $0x1358] sm:$0xf]
    %v3177 = vld [vmem:[#allocation10 + $0x135c] sm:$0xff]
    %v3178 = vld [vmem:[#allocation10 + $0x1364] sm:$0xff]
    %v3179 = vld [vmem:[#allocation10 + $0x136c] sm:$0xff]
    %v3180 = vld [vmem:[#allocation10 + $0x1374] sm:$0xf]
    %v3181 = vld [vmem:[#allocation10 + $0x1378] sm:$0xff]
    %v3182 = vld [vmem:[#allocation10 + $0x1380] sm:$0xff]
    %v3183 = vld [vmem:[#allocation10 + $0x1388] sm:$0xff]
    %v3184 = vld [vmem:[#allocation10 + $0x1390] sm:$0xf]
    %v3185 = vld [vmem:[#allocation10 + $0x1394] sm:$0xff]
    %v3186 = vld [vmem:[#allocation10 + $0x139c] sm:$0xff]
    %v3187 = vld [vmem:[#allocation10 + $0x13a4] sm:$0xff]
    %v3188 = vld [vmem:[#allocation10 + $0x13ac] sm:$0xf]
    %v3189 = vld [vmem:[#allocation10 + $0x13b0] sm:$0xff]
    %v3190 = vld [vmem:[#allocation10 + $0x13b8] sm:$0xff]
    %v3191 = vld [vmem:[#allocation10 + $0x13c0] sm:$0xff]
    %v3192 = vld [vmem:[#allocation10 + $0x13c8] sm:$0xf]
    %v3193 = vld [vmem:[#allocation10 + $0x13cc] sm:$0xff]
    %v3194 = vld [vmem:[#allocation10 + $0x13d4] sm:$0xff]
    %v3195 = vld [vmem:[#allocation10 + $0x13dc] sm:$0xff]
    %v3196 = vld [vmem:[#allocation10 + $0x13e4] sm:$0xf]
    %v3197 = vld [vmem:[#allocation10 + $0x13e8] sm:$0xff]
    %v3198 = vld [vmem:[#allocation10 + $0x13f0] sm:$0xff]
    %v3199 = vld [vmem:[#allocation10 + $0x13f8] sm:$0xff]
    %v3200 = vld [vmem:[#allocation10 + $0x1400] sm:$0xf]
    %v3201 = vld [vmem:[#allocation10 + $0x1404] sm:$0xff]
    %v3202 = vld [vmem:[#allocation10 + $0x140c] sm:$0xff]
    %v3203 = vld [vmem:[#allocation10 + $0x1414] sm:$0xff]
    %v3204 = vld [vmem:[#allocation10 + $0x141c] sm:$0xf]
    %v3205 = vld [vmem:[#allocation10 + $0x1420] sm:$0xff]
    %v3206 = vld [vmem:[#allocation10 + $0x1428] sm:$0xff]
    %v3207 = vld [vmem:[#allocation10 + $0x1430] sm:$0xff]
    %v3208 = vld [vmem:[#allocation10 + $0x1438] sm:$0xf]
    %v3209 = vld [vmem:[#allocation10 + $0x143c] sm:$0xff]
    %v3210 = vld [vmem:[#allocation10 + $0x1444] sm:$0xff]
    %v3211 = vld [vmem:[#allocation10 + $0x144c] sm:$0xff]
    %v3212 = vld [vmem:[#allocation10 + $0x1454] sm:$0xf]
    %v3213 = vld [vmem:[#allocation10 + $0x1458] sm:$0xff]
    %v3214 = vld [vmem:[#allocation10 + $0x1460] sm:$0xff]
    %v3215 = vld [vmem:[#allocation10 + $0x1468] sm:$0xff]
    %v3216 = vld [vmem:[#allocation10 + $0x1470] sm:$0xf]
    %v3217 = vld [vmem:[#allocation10 + $0x1474] sm:$0xff]
    %v3218 = vld [vmem:[#allocation10 + $0x147c] sm:$0xff]
    %v3219 = vld [vmem:[#allocation10 + $0x1484] sm:$0xff]
    %v3220 = vld [vmem:[#allocation10 + $0x148c] sm:$0xf]
    %v3221 = vld [vmem:[#allocation10 + $0x1490] sm:$0xff]
    %v3222 = vld [vmem:[#allocation10 + $0x1498] sm:$0xff]
    %v3223 = vld [vmem:[#allocation10 + $0x14a0] sm:$0xff]
    %v3224 = vld [vmem:[#allocation10 + $0x14a8] sm:$0xf]
    %v3225 = vld [vmem:[#allocation10 + $0x14ac] sm:$0xff]
    %v3226 = vld [vmem:[#allocation10 + $0x14b4] sm:$0xff]
    %v3227 = vld [vmem:[#allocation10 + $0x14bc] sm:$0xff]
    %v3228 = vld [vmem:[#allocation10 + $0x14c4] sm:$0xf]
    %v3229 = vld [vmem:[#allocation10 + $0x14c8] sm:$0xff]
    %v3230 = vld [vmem:[#allocation10 + $0x14d0] sm:$0xff]
    %v3231 = vld [vmem:[#allocation10 + $0x14d8] sm:$0xff]
    %v3232 = vld [vmem:[#allocation10 + $0x14e0] sm:$0xf]
    %v3233 = vld [vmem:[#allocation10 + $0x14e4] sm:$0xff]
    %v3234 = vld [vmem:[#allocation10 + $0x14ec] sm:$0xff]
    %v3235 = vld [vmem:[#allocation10 + $0x14f4] sm:$0xff]
    %v3236 = vld [vmem:[#allocation10 + $0x14fc] sm:$0xf]
    %v3237 = vld [vmem:[#allocation10 + $0x1500] sm:$0xff]
    %v3238 = vld [vmem:[#allocation10 + $0x1508] sm:$0xff]
    %v3239 = vld [vmem:[#allocation10 + $0x1510] sm:$0xff]
    %v3240 = vld [vmem:[#allocation10 + $0x1518] sm:$0xf]
    %v3241 = vld [vmem:[#allocation10 + $0x151c] sm:$0xff]
    %v3242 = vld [vmem:[#allocation10 + $0x1524] sm:$0xff]
    %v3243 = vld [vmem:[#allocation10 + $0x152c] sm:$0xff]
    %v3244 = vld [vmem:[#allocation10 + $0x1534] sm:$0xf]
    %v3245 = vld [vmem:[#allocation10 + $0x1538] sm:$0xff]
    %v3246 = vld [vmem:[#allocation10 + $0x1540] sm:$0xff]
    %v3247 = vld [vmem:[#allocation10 + $0x1548] sm:$0xff]
    %v3248 = vld [vmem:[#allocation10 + $0x1550] sm:$0xf]
    %v3249 = vld [vmem:[#allocation10 + $0x1554] sm:$0xff]
    %v3250 = vld [vmem:[#allocation10 + $0x155c] sm:$0xff]
    %v3251 = vld [vmem:[#allocation10 + $0x1564] sm:$0xff]
    %v3252 = vld [vmem:[#allocation10 + $0x156c] sm:$0xf]
    %v3253 = vld [vmem:[#allocation10 + $0x1570] sm:$0xff]
    %v3254 = vld [vmem:[#allocation10 + $0x1578] sm:$0xff]
    %v3255 = vld [vmem:[#allocation10 + $0x1580] sm:$0xff]
    %v3256 = vld [vmem:[#allocation10 + $0x1588] sm:$0xf]
    %v3257 = vld [vmem:[#allocation10 + $0x158c] sm:$0xff]
    %v3258 = vld [vmem:[#allocation10 + $0x1594] sm:$0xff]
    %v3259 = vld [vmem:[#allocation10 + $0x159c] sm:$0xff]
    %v3260 = vld [vmem:[#allocation10 + $0x15a4] sm:$0xf]
    %v3261 = vld [vmem:[#allocation10 + $0x15a8] sm:$0xff]
    %v3262 = vld [vmem:[#allocation10 + $0x15b0] sm:$0xff]
    %v3263 = vld [vmem:[#allocation10 + $0x15b8] sm:$0xff]
    %v3264 = vld [vmem:[#allocation10 + $0x15c0] sm:$0xf]
    %v3265 = vld [vmem:[#allocation10 + $0x15c4] sm:$0xff]
    %v3266 = vld [vmem:[#allocation10 + $0x15cc] sm:$0xff]
    %v3267 = vld [vmem:[#allocation10 + $0x15d4] sm:$0xff]
    %v3268 = vld [vmem:[#allocation10 + $0x15dc] sm:$0xf]
    %v3269 = vld [vmem:[#allocation10 + $0x15e0] sm:$0xff]
    %v3270 = vld [vmem:[#allocation10 + $0x15e8] sm:$0xff]
    %v3271 = vld [vmem:[#allocation10 + $0x15f0] sm:$0xff]
    %v3272 = vld [vmem:[#allocation10 + $0x15f8] sm:$0xf]
    %v3273 = vld [vmem:[#allocation10 + $0x15fc] sm:$0xff]
    %v3274 = vld [vmem:[#allocation10 + $0x1604] sm:$0xff]
    %v3275 = vld [vmem:[#allocation10 + $0x160c] sm:$0xff]
    %v3276 = vld [vmem:[#allocation10 + $0x1614] sm:$0xf]
    %v3277 = vld [vmem:[#allocation10 + $0x1618] sm:$0xff]
    %v3278 = vld [vmem:[#allocation10 + $0x1620] sm:$0xff]
    %v3279 = vld [vmem:[#allocation10 + $0x1628] sm:$0xff]
    %v3280 = vld [vmem:[#allocation10 + $0x1630] sm:$0xf]
    %v3281 = vld [vmem:[#allocation10 + $0x1634] sm:$0xff]
    %v3282 = vld [vmem:[#allocation10 + $0x163c] sm:$0xff]
    %v3283 = vld [vmem:[#allocation10 + $0x1644] sm:$0xff]
    %v3284 = vld [vmem:[#allocation10 + $0x164c] sm:$0xf]
    %v3285 = vld [vmem:[#allocation10 + $0x1650] sm:$0xff]
    %v3286 = vld [vmem:[#allocation10 + $0x1658] sm:$0xff]
    %v3287 = vld [vmem:[#allocation10 + $0x1660] sm:$0xff]
    %v3288 = vld [vmem:[#allocation10 + $0x1668] sm:$0xf]
    %v3289 = vld [vmem:[#allocation10 + $0x166c] sm:$0xff]
    %v3290 = vld [vmem:[#allocation10 + $0x1674] sm:$0xff]
    %v3291 = vld [vmem:[#allocation10 + $0x167c] sm:$0xff]
    %v3292 = vld [vmem:[#allocation10 + $0x1684] sm:$0xf]
    %v3293 = vld [vmem:[#allocation10 + $0x1688] sm:$0xff]
    %v3294 = vld [vmem:[#allocation10 + $0x1690] sm:$0xff]
    %v3295 = vld [vmem:[#allocation10 + $0x1698] sm:$0xff]
    %v3296 = vld [vmem:[#allocation10 + $0x16a0] sm:$0xf]
    %v3297 = vld [vmem:[#allocation10 + $0x16a4] sm:$0xff]
    %v3298 = vld [vmem:[#allocation10 + $0x16ac] sm:$0xff]
    %v3299 = vld [vmem:[#allocation10 + $0x16b4] sm:$0xff]
    %v3300 = vld [vmem:[#allocation10 + $0x16bc] sm:$0xf]
    %v4133 = vunpack.c.l.b16 %v2469
    %v4134 = vunpack.c.h.b16 %v2469
    %v4135 = vunpack.c.l.b16 %v2470
    %v4136 = vunpack.c.h.b16 %v2470
    %v4137 = vunpack.c.l.b16 %v2471
    %v4138 = vunpack.c.h.b16 %v2471
    %v4139 = vunpack.c.l.b16 %v2472
    %v4140 = vunpack.c.l.b16 %v2473
    %v4141 = vunpack.c.h.b16 %v2473
    %v4142 = vunpack.c.l.b16 %v2474
    %v4143 = vunpack.c.h.b16 %v2474
    %v4144 = vunpack.c.l.b16 %v2475
    %v4145 = vunpack.c.h.b16 %v2475
    %v4146 = vunpack.c.l.b16 %v2476
    %v4147 = vunpack.c.l.b16 %v2477
    %v4148 = vunpack.c.h.b16 %v2477
    %v4149 = vunpack.c.l.b16 %v2478
    %v4150 = vunpack.c.h.b16 %v2478
    %v4151 = vunpack.c.l.b16 %v2479
    %v4152 = vunpack.c.h.b16 %v2479
    %v4153 = vunpack.c.l.b16 %v2480
    %v4154 = vunpack.c.l.b16 %v2481
    %v4155 = vunpack.c.h.b16 %v2481
    %v4156 = vunpack.c.l.b16 %v2482
    %v4157 = vunpack.c.h.b16 %v2482
    %v4158 = vunpack.c.l.b16 %v2483
    %v4159 = vunpack.c.h.b16 %v2483
    %v4160 = vunpack.c.l.b16 %v2484
    %v4161 = vunpack.c.l.b16 %v2485
    %v4162 = vunpack.c.h.b16 %v2485
    %v4163 = vunpack.c.l.b16 %v2486
    %v4164 = vunpack.c.h.b16 %v2486
    %v4165 = vunpack.c.l.b16 %v2487
    %v4166 = vunpack.c.h.b16 %v2487
    %v4167 = vunpack.c.l.b16 %v2488
    %v4168 = vunpack.c.l.b16 %v2489
    %v4169 = vunpack.c.h.b16 %v2489
    %v4170 = vunpack.c.l.b16 %v2490
    %v4171 = vunpack.c.h.b16 %v2490
    %v4172 = vunpack.c.l.b16 %v2491
    %v4173 = vunpack.c.h.b16 %v2491
    %v4174 = vunpack.c.l.b16 %v2492
    %v4175 = vunpack.c.l.b16 %v2493
    %v4176 = vunpack.c.h.b16 %v2493
    %v4177 = vunpack.c.l.b16 %v2494
    %v4178 = vunpack.c.h.b16 %v2494
    %v4179 = vunpack.c.l.b16 %v2495
    %v4180 = vunpack.c.h.b16 %v2495
    %v4181 = vunpack.c.l.b16 %v2496
    %v4182 = vunpack.c.l.b16 %v2497
    %v4183 = vunpack.c.h.b16 %v2497
    %v4184 = vunpack.c.l.b16 %v2498
    %v4185 = vunpack.c.h.b16 %v2498
    %v4186 = vunpack.c.l.b16 %v2499
    %v4187 = vunpack.c.h.b16 %v2499
    %v4188 = vunpack.c.l.b16 %v2500
    %v4189 = vunpack.c.l.b16 %v2501
    %v4190 = vunpack.c.h.b16 %v2501
    %v4191 = vunpack.c.l.b16 %v2502
    %v4192 = vunpack.c.h.b16 %v2502
    %v4193 = vunpack.c.l.b16 %v2503
    %v4194 = vunpack.c.h.b16 %v2503
    %v4195 = vunpack.c.l.b16 %v2504
    %v4196 = vunpack.c.l.b16 %v2505
    %v4197 = vunpack.c.h.b16 %v2505
    %v4198 = vunpack.c.l.b16 %v2506
    %v4199 = vunpack.c.h.b16 %v2506
    %v4200 = vunpack.c.l.b16 %v2507
    %v4201 = vunpack.c.h.b16 %v2507
    %v4202 = vunpack.c.l.b16 %v2508
    %v4203 = vunpack.c.l.b16 %v2509
    %v4204 = vunpack.c.h.b16 %v2509
    %v4205 = vunpack.c.l.b16 %v2510
    %v4206 = vunpack.c.h.b16 %v2510
    %v4207 = vunpack.c.l.b16 %v2511
    %v4208 = vunpack.c.h.b16 %v2511
    %v4209 = vunpack.c.l.b16 %v2512
    %v4210 = vunpack.c.l.b16 %v2513
    %v4211 = vunpack.c.h.b16 %v2513
    %v4212 = vunpack.c.l.b16 %v2514
    %v4213 = vunpack.c.h.b16 %v2514
    %v4214 = vunpack.c.l.b16 %v2515
    %v4215 = vunpack.c.h.b16 %v2515
    %v4216 = vunpack.c.l.b16 %v2516
    %v4217 = vunpack.c.l.b16 %v2517
    %v4218 = vunpack.c.h.b16 %v2517
    %v4219 = vunpack.c.l.b16 %v2518
    %v4220 = vunpack.c.h.b16 %v2518
    %v4221 = vunpack.c.l.b16 %v2519
    %v4222 = vunpack.c.h.b16 %v2519
    %v4223 = vunpack.c.l.b16 %v2520
    %v4224 = vunpack.c.l.b16 %v2521
    %v4225 = vunpack.c.h.b16 %v2521
    %v4226 = vunpack.c.l.b16 %v2522
    %v4227 = vunpack.c.h.b16 %v2522
    %v4228 = vunpack.c.l.b16 %v2523
    %v4229 = vunpack.c.h.b16 %v2523
    %v4230 = vunpack.c.l.b16 %v2524
    %v4231 = vunpack.c.l.b16 %v2525
    %v4232 = vunpack.c.h.b16 %v2525
    %v4233 = vunpack.c.l.b16 %v2526
    %v4234 = vunpack.c.h.b16 %v2526
    %v4235 = vunpack.c.l.b16 %v2527
    %v4236 = vunpack.c.h.b16 %v2527
    %v4237 = vunpack.c.l.b16 %v2528
    %v4238 = vunpack.c.l.b16 %v2529
    %v4239 = vunpack.c.h.b16 %v2529
    %v4240 = vunpack.c.l.b16 %v2530
    %v4241 = vunpack.c.h.b16 %v2530
    %v4242 = vunpack.c.l.b16 %v2531
    %v4243 = vunpack.c.h.b16 %v2531
    %v4244 = vunpack.c.l.b16 %v2532
    %v4245 = vunpack.c.l.b16 %v2533
    %v4246 = vunpack.c.h.b16 %v2533
    %v4247 = vunpack.c.l.b16 %v2534
    %v4248 = vunpack.c.h.b16 %v2534
    %v4249 = vunpack.c.l.b16 %v2535
    %v4250 = vunpack.c.h.b16 %v2535
    %v4251 = vunpack.c.l.b16 %v2536
    %v4252 = vunpack.c.l.b16 %v2537
    %v4253 = vunpack.c.h.b16 %v2537
    %v4254 = vunpack.c.l.b16 %v2538
    %v4255 = vunpack.c.h.b16 %v2538
    %v4256 = vunpack.c.l.b16 %v2539
    %v4257 = vunpack.c.h.b16 %v2539
    %v4258 = vunpack.c.l.b16 %v2540
    %v4259 = vunpack.c.l.b16 %v2541
    %v4260 = vunpack.c.h.b16 %v2541
    %v4261 = vunpack.c.l.b16 %v2542
    %v4262 = vunpack.c.h.b16 %v2542
    %v4263 = vunpack.c.l.b16 %v2543
    %v4264 = vunpack.c.h.b16 %v2543
    %v4265 = vunpack.c.l.b16 %v2544
    %v4266 = vunpack.c.l.b16 %v2545
    %v4267 = vunpack.c.h.b16 %v2545
    %v4268 = vunpack.c.l.b16 %v2546
    %v4269 = vunpack.c.h.b16 %v2546
    %v4270 = vunpack.c.l.b16 %v2547
    %v4271 = vunpack.c.h.b16 %v2547
    %v4272 = vunpack.c.l.b16 %v2548
    %v4273 = vunpack.c.l.b16 %v2549
    %v4274 = vunpack.c.h.b16 %v2549
    %v4275 = vunpack.c.l.b16 %v2550
    %v4276 = vunpack.c.h.b16 %v2550
    %v4277 = vunpack.c.l.b16 %v2551
    %v4278 = vunpack.c.h.b16 %v2551
    %v4279 = vunpack.c.l.b16 %v2552
    %v4280 = vunpack.c.l.b16 %v2553
    %v4281 = vunpack.c.h.b16 %v2553
    %v4282 = vunpack.c.l.b16 %v2554
    %v4283 = vunpack.c.h.b16 %v2554
    %v4284 = vunpack.c.l.b16 %v2555
    %v4285 = vunpack.c.h.b16 %v2555
    %v4286 = vunpack.c.l.b16 %v2556
    %v4287 = vunpack.c.l.b16 %v2557
    %v4288 = vunpack.c.h.b16 %v2557
    %v4289 = vunpack.c.l.b16 %v2558
    %v4290 = vunpack.c.h.b16 %v2558
    %v4291 = vunpack.c.l.b16 %v2559
    %v4292 = vunpack.c.h.b16 %v2559
    %v4293 = vunpack.c.l.b16 %v2560
    %v4294 = vunpack.c.l.b16 %v2561
    %v4295 = vunpack.c.h.b16 %v2561
    %v4296 = vunpack.c.l.b16 %v2562
    %v4297 = vunpack.c.h.b16 %v2562
    %v4298 = vunpack.c.l.b16 %v2563
    %v4299 = vunpack.c.h.b16 %v2563
    %v4300 = vunpack.c.l.b16 %v2564
    %v4301 = vunpack.c.l.b16 %v2565
    %v4302 = vunpack.c.h.b16 %v2565
    %v4303 = vunpack.c.l.b16 %v2566
    %v4304 = vunpack.c.h.b16 %v2566
    %v4305 = vunpack.c.l.b16 %v2567
    %v4306 = vunpack.c.h.b16 %v2567
    %v4307 = vunpack.c.l.b16 %v2568
    %v4308 = vunpack.c.l.b16 %v2569
    %v4309 = vunpack.c.h.b16 %v2569
    %v4310 = vunpack.c.l.b16 %v2570
    %v4311 = vunpack.c.h.b16 %v2570
    %v4312 = vunpack.c.l.b16 %v2571
    %v4313 = vunpack.c.h.b16 %v2571
    %v4314 = vunpack.c.l.b16 %v2572
    %v4315 = vunpack.c.l.b16 %v2573
    %v4316 = vunpack.c.h.b16 %v2573
    %v4317 = vunpack.c.l.b16 %v2574
    %v4318 = vunpack.c.h.b16 %v2574
    %v4319 = vunpack.c.l.b16 %v2575
    %v4320 = vunpack.c.h.b16 %v2575
    %v4321 = vunpack.c.l.b16 %v2576
    %v4322 = vunpack.c.l.b16 %v2577
    %v4323 = vunpack.c.h.b16 %v2577
    %v4324 = vunpack.c.l.b16 %v2578
    %v4325 = vunpack.c.h.b16 %v2578
    %v4326 = vunpack.c.l.b16 %v2579
    %v4327 = vunpack.c.h.b16 %v2579
    %v4328 = vunpack.c.l.b16 %v2580
    %v4329 = vunpack.c.l.b16 %v2581
    %v4330 = vunpack.c.h.b16 %v2581
    %v4331 = vunpack.c.l.b16 %v2582
    %v4332 = vunpack.c.h.b16 %v2582
    %v4333 = vunpack.c.l.b16 %v2583
    %v4334 = vunpack.c.h.b16 %v2583
    %v4335 = vunpack.c.l.b16 %v2584
    %v4336 = vunpack.c.l.b16 %v2585
    %v4337 = vunpack.c.h.b16 %v2585
    %v4338 = vunpack.c.l.b16 %v2586
    %v4339 = vunpack.c.h.b16 %v2586
    %v4340 = vunpack.c.l.b16 %v2587
    %v4341 = vunpack.c.h.b16 %v2587
    %v4342 = vunpack.c.l.b16 %v2588
    %v4343 = vunpack.c.l.b16 %v2589
    %v4344 = vunpack.c.h.b16 %v2589
    %v4345 = vunpack.c.l.b16 %v2590
    %v4346 = vunpack.c.h.b16 %v2590
    %v4347 = vunpack.c.l.b16 %v2591
    %v4348 = vunpack.c.h.b16 %v2591
    %v4349 = vunpack.c.l.b16 %v2592
    %v4350 = vunpack.c.l.b16 %v2593
    %v4351 = vunpack.c.h.b16 %v2593
    %v4352 = vunpack.c.l.b16 %v2594
    %v4353 = vunpack.c.h.b16 %v2594
    %v4354 = vunpack.c.l.b16 %v2595
    %v4355 = vunpack.c.h.b16 %v2595
    %v4356 = vunpack.c.l.b16 %v2596
    %v4357 = vunpack.c.l.b16 %v2597
    %v4358 = vunpack.c.h.b16 %v2597
    %v4359 = vunpack.c.l.b16 %v2598
    %v4360 = vunpack.c.h.b16 %v2598
    %v4361 = vunpack.c.l.b16 %v2599
    %v4362 = vunpack.c.h.b16 %v2599
    %v4363 = vunpack.c.l.b16 %v2600
    %v4364 = vunpack.c.l.b16 %v2601
    %v4365 = vunpack.c.h.b16 %v2601
    %v4366 = vunpack.c.l.b16 %v2602
    %v4367 = vunpack.c.h.b16 %v2602
    %v4368 = vunpack.c.l.b16 %v2603
    %v4369 = vunpack.c.h.b16 %v2603
    %v4370 = vunpack.c.l.b16 %v2604
    %v4371 = vunpack.c.l.b16 %v2605
    %v4372 = vunpack.c.h.b16 %v2605
    %v4373 = vunpack.c.l.b16 %v2606
    %v4374 = vunpack.c.h.b16 %v2606
    %v4375 = vunpack.c.l.b16 %v2607
    %v4376 = vunpack.c.h.b16 %v2607
    %v4377 = vunpack.c.l.b16 %v2608
    %v4378 = vunpack.c.l.b16 %v2609
    %v4379 = vunpack.c.h.b16 %v2609
    %v4380 = vunpack.c.l.b16 %v2610
    %v4381 = vunpack.c.h.b16 %v2610
    %v4382 = vunpack.c.l.b16 %v2611
    %v4383 = vunpack.c.h.b16 %v2611
    %v4384 = vunpack.c.l.b16 %v2612
    %v4385 = vunpack.c.l.b16 %v2613
    %v4386 = vunpack.c.h.b16 %v2613
    %v4387 = vunpack.c.l.b16 %v2614
    %v4388 = vunpack.c.h.b16 %v2614
    %v4389 = vunpack.c.l.b16 %v2615
    %v4390 = vunpack.c.h.b16 %v2615
    %v4391 = vunpack.c.l.b16 %v2616
    %v4392 = vunpack.c.l.b16 %v2617
    %v4393 = vunpack.c.h.b16 %v2617
    %v4394 = vunpack.c.l.b16 %v2618
    %v4395 = vunpack.c.h.b16 %v2618
    %v4396 = vunpack.c.l.b16 %v2619
    %v4397 = vunpack.c.h.b16 %v2619
    %v4398 = vunpack.c.l.b16 %v2620
    %v4399 = vunpack.c.l.b16 %v2621
    %v4400 = vunpack.c.h.b16 %v2621
    %v4401 = vunpack.c.l.b16 %v2622
    %v4402 = vunpack.c.h.b16 %v2622
    %v4403 = vunpack.c.l.b16 %v2623
    %v4404 = vunpack.c.h.b16 %v2623
    %v4405 = vunpack.c.l.b16 %v2624
    %v4406 = vunpack.c.l.b16 %v2625
    %v4407 = vunpack.c.h.b16 %v2625
    %v4408 = vunpack.c.l.b16 %v2626
    %v4409 = vunpack.c.h.b16 %v2626
    %v4410 = vunpack.c.l.b16 %v2627
    %v4411 = vunpack.c.h.b16 %v2627
    %v4412 = vunpack.c.l.b16 %v2628
    %v4413 = vunpack.c.l.b16 %v2629
    %v4414 = vunpack.c.h.b16 %v2629
    %v4415 = vunpack.c.l.b16 %v2630
    %v4416 = vunpack.c.h.b16 %v2630
    %v4417 = vunpack.c.l.b16 %v2631
    %v4418 = vunpack.c.h.b16 %v2631
    %v4419 = vunpack.c.l.b16 %v2632
    %v4420 = vunpack.c.l.b16 %v2633
    %v4421 = vunpack.c.h.b16 %v2633
    %v4422 = vunpack.c.l.b16 %v2634
    %v4423 = vunpack.c.h.b16 %v2634
    %v4424 = vunpack.c.l.b16 %v2635
    %v4425 = vunpack.c.h.b16 %v2635
    %v4426 = vunpack.c.l.b16 %v2636
    %v4427 = vunpack.c.l.b16 %v2637
    %v4428 = vunpack.c.h.b16 %v2637
    %v4429 = vunpack.c.l.b16 %v2638
    %v4430 = vunpack.c.h.b16 %v2638
    %v4431 = vunpack.c.l.b16 %v2639
    %v4432 = vunpack.c.h.b16 %v2639
    %v4433 = vunpack.c.l.b16 %v2640
    %v4434 = vunpack.c.l.b16 %v2641
    %v4435 = vunpack.c.h.b16 %v2641
    %v4436 = vunpack.c.l.b16 %v2642
    %v4437 = vunpack.c.h.b16 %v2642
    %v4438 = vunpack.c.l.b16 %v2643
    %v4439 = vunpack.c.h.b16 %v2643
    %v4440 = vunpack.c.l.b16 %v2644
    %v4441 = vunpack.c.l.b16 %v2645
    %v4442 = vunpack.c.h.b16 %v2645
    %v4443 = vunpack.c.l.b16 %v2646
    %v4444 = vunpack.c.h.b16 %v2646
    %v4445 = vunpack.c.l.b16 %v2647
    %v4446 = vunpack.c.h.b16 %v2647
    %v4447 = vunpack.c.l.b16 %v2648
    %v4448 = vunpack.c.l.b16 %v2649
    %v4449 = vunpack.c.h.b16 %v2649
    %v4450 = vunpack.c.l.b16 %v2650
    %v4451 = vunpack.c.h.b16 %v2650
    %v4452 = vunpack.c.l.b16 %v2651
    %v4453 = vunpack.c.h.b16 %v2651
    %v4454 = vunpack.c.l.b16 %v2652
    %v4455 = vunpack.c.l.b16 %v2653
    %v4456 = vunpack.c.h.b16 %v2653
    %v4457 = vunpack.c.l.b16 %v2654
    %v4458 = vunpack.c.h.b16 %v2654
    %v4459 = vunpack.c.l.b16 %v2655
    %v4460 = vunpack.c.h.b16 %v2655
    %v4461 = vunpack.c.l.b16 %v2656
    %v4462 = vunpack.c.l.b16 %v2657
    %v4463 = vunpack.c.h.b16 %v2657
    %v4464 = vunpack.c.l.b16 %v2658
    %v4465 = vunpack.c.h.b16 %v2658
    %v4466 = vunpack.c.l.b16 %v2659
    %v4467 = vunpack.c.h.b16 %v2659
    %v4468 = vunpack.c.l.b16 %v2660
    %v4469 = vunpack.c.l.b16 %v2661
    %v4470 = vunpack.c.h.b16 %v2661
    %v4471 = vunpack.c.l.b16 %v2662
    %v4472 = vunpack.c.h.b16 %v2662
    %v4473 = vunpack.c.l.b16 %v2663
    %v4474 = vunpack.c.h.b16 %v2663
    %v4475 = vunpack.c.l.b16 %v2664
    %v4476 = vunpack.c.l.b16 %v2665
    %v4477 = vunpack.c.h.b16 %v2665
    %v4478 = vunpack.c.l.b16 %v2666
    %v4479 = vunpack.c.h.b16 %v2666
    %v4480 = vunpack.c.l.b16 %v2667
    %v4481 = vunpack.c.h.b16 %v2667
    %v4482 = vunpack.c.l.b16 %v2668
    %v4483 = vunpack.c.l.b16 %v2669
    %v4484 = vunpack.c.h.b16 %v2669
    %v4485 = vunpack.c.l.b16 %v2670
    %v4486 = vunpack.c.h.b16 %v2670
    %v4487 = vunpack.c.l.b16 %v2671
    %v4488 = vunpack.c.h.b16 %v2671
    %v4489 = vunpack.c.l.b16 %v2672
    %v4490 = vunpack.c.l.b16 %v2673
    %v4491 = vunpack.c.h.b16 %v2673
    %v4492 = vunpack.c.l.b16 %v2674
    %v4493 = vunpack.c.h.b16 %v2674
    %v4494 = vunpack.c.l.b16 %v2675
    %v4495 = vunpack.c.h.b16 %v2675
    %v4496 = vunpack.c.l.b16 %v2676
    %v4497 = vunpack.c.l.b16 %v2677
    %v4498 = vunpack.c.h.b16 %v2677
    %v4499 = vunpack.c.l.b16 %v2678
    %v4500 = vunpack.c.h.b16 %v2678
    %v4501 = vunpack.c.l.b16 %v2679
    %v4502 = vunpack.c.h.b16 %v2679
    %v4503 = vunpack.c.l.b16 %v2680
    %v4504 = vunpack.c.l.b16 %v2681
    %v4505 = vunpack.c.h.b16 %v2681
    %v4506 = vunpack.c.l.b16 %v2682
    %v4507 = vunpack.c.h.b16 %v2682
    %v4508 = vunpack.c.l.b16 %v2683
    %v4509 = vunpack.c.h.b16 %v2683
    %v4510 = vunpack.c.l.b16 %v2684
    %v4511 = vunpack.c.l.b16 %v2685
    %v4512 = vunpack.c.h.b16 %v2685
    %v4513 = vunpack.c.l.b16 %v2686
    %v4514 = vunpack.c.h.b16 %v2686
    %v4515 = vunpack.c.l.b16 %v2687
    %v4516 = vunpack.c.h.b16 %v2687
    %v4517 = vunpack.c.l.b16 %v2688
    %v4518 = vunpack.c.l.b16 %v2689
    %v4519 = vunpack.c.h.b16 %v2689
    %v4520 = vunpack.c.l.b16 %v2690
    %v4521 = vunpack.c.h.b16 %v2690
    %v4522 = vunpack.c.l.b16 %v2691
    %v4523 = vunpack.c.h.b16 %v2691
    %v4524 = vunpack.c.l.b16 %v2692
    %v4525 = vunpack.c.l.b16 %v2693
    %v4526 = vunpack.c.h.b16 %v2693
    %v4527 = vunpack.c.l.b16 %v2694
    %v4528 = vunpack.c.h.b16 %v2694
    %v4529 = vunpack.c.l.b16 %v2695
    %v4530 = vunpack.c.h.b16 %v2695
    %v4531 = vunpack.c.l.b16 %v2696
    %v4532 = vunpack.c.l.b16 %v2697
    %v4533 = vunpack.c.h.b16 %v2697
    %v4534 = vunpack.c.l.b16 %v2698
    %v4535 = vunpack.c.h.b16 %v2698
    %v4536 = vunpack.c.l.b16 %v2699
    %v4537 = vunpack.c.h.b16 %v2699
    %v4538 = vunpack.c.l.b16 %v2700
    %v4539 = vunpack.c.l.b16 %v2701
    %v4540 = vunpack.c.h.b16 %v2701
    %v4541 = vunpack.c.l.b16 %v2702
    %v4542 = vunpack.c.h.b16 %v2702
    %v4543 = vunpack.c.l.b16 %v2703
    %v4544 = vunpack.c.h.b16 %v2703
    %v4545 = vunpack.c.l.b16 %v2704
    %v4546 = vunpack.c.l.b16 %v2705
    %v4547 = vunpack.c.h.b16 %v2705
    %v4548 = vunpack.c.l.b16 %v2706
    %v4549 = vunpack.c.h.b16 %v2706
    %v4550 = vunpack.c.l.b16 %v2707
    %v4551 = vunpack.c.h.b16 %v2707
    %v4552 = vunpack.c.l.b16 %v2708
    %v4553 = vunpack.c.l.b16 %v2709
    %v4554 = vunpack.c.h.b16 %v2709
    %v4555 = vunpack.c.l.b16 %v2710
    %v4556 = vunpack.c.h.b16 %v2710
    %v4557 = vunpack.c.l.b16 %v2711
    %v4558 = vunpack.c.h.b16 %v2711
    %v4559 = vunpack.c.l.b16 %v2712
    %v4560 = vunpack.c.l.b16 %v2713
    %v4561 = vunpack.c.h.b16 %v2713
    %v4562 = vunpack.c.l.b16 %v2714
    %v4563 = vunpack.c.h.b16 %v2714
    %v4564 = vunpack.c.l.b16 %v2715
    %v4565 = vunpack.c.h.b16 %v2715
    %v4566 = vunpack.c.l.b16 %v2716
    %v4567 = vunpack.c.l.b16 %v2717
    %v4568 = vunpack.c.h.b16 %v2717
    %v4569 = vunpack.c.l.b16 %v2718
    %v4570 = vunpack.c.h.b16 %v2718
    %v4571 = vunpack.c.l.b16 %v2719
    %v4572 = vunpack.c.h.b16 %v2719
    %v4573 = vunpack.c.l.b16 %v2720
    %v4574 = vunpack.c.l.b16 %v2721
    %v4575 = vunpack.c.h.b16 %v2721
    %v4576 = vunpack.c.l.b16 %v2722
    %v4577 = vunpack.c.h.b16 %v2722
    %v4578 = vunpack.c.l.b16 %v2723
    %v4579 = vunpack.c.h.b16 %v2723
    %v4580 = vunpack.c.l.b16 %v2724
    %v4581 = vunpack.c.l.b16 %v2725
    %v4582 = vunpack.c.h.b16 %v2725
    %v4583 = vunpack.c.l.b16 %v2726
    %v4584 = vunpack.c.h.b16 %v2726
    %v4585 = vunpack.c.l.b16 %v2727
    %v4586 = vunpack.c.h.b16 %v2727
    %v4587 = vunpack.c.l.b16 %v2728
    %v4588 = vunpack.c.l.b16 %v2729
    %v4589 = vunpack.c.h.b16 %v2729
    %v4590 = vunpack.c.l.b16 %v2730
    %v4591 = vunpack.c.h.b16 %v2730
    %v4592 = vunpack.c.l.b16 %v2731
    %v4593 = vunpack.c.h.b16 %v2731
    %v4594 = vunpack.c.l.b16 %v2732
    %v4595 = vunpack.c.l.b16 %v2733
    %v4596 = vunpack.c.h.b16 %v2733
    %v4597 = vunpack.c.l.b16 %v2734
    %v4598 = vunpack.c.h.b16 %v2734
    %v4599 = vunpack.c.l.b16 %v2735
    %v4600 = vunpack.c.h.b16 %v2735
    %v4601 = vunpack.c.l.b16 %v2736
    %v4602 = vunpack.c.l.b16 %v2737
    %v4603 = vunpack.c.h.b16 %v2737
    %v4604 = vunpack.c.l.b16 %v2738
    %v4605 = vunpack.c.h.b16 %v2738
    %v4606 = vunpack.c.l.b16 %v2739
    %v4607 = vunpack.c.h.b16 %v2739
    %v4608 = vunpack.c.l.b16 %v2740
    %v4609 = vunpack.c.l.b16 %v2741
    %v4610 = vunpack.c.h.b16 %v2741
    %v4611 = vunpack.c.l.b16 %v2742
    %v4612 = vunpack.c.h.b16 %v2742
    %v4613 = vunpack.c.l.b16 %v2743
    %v4614 = vunpack.c.h.b16 %v2743
    %v4615 = vunpack.c.l.b16 %v2744
    %v4616 = vunpack.c.l.b16 %v2745
    %v4617 = vunpack.c.h.b16 %v2745
    %v4618 = vunpack.c.l.b16 %v2746
    %v4619 = vunpack.c.h.b16 %v2746
    %v4620 = vunpack.c.l.b16 %v2747
    %v4621 = vunpack.c.h.b16 %v2747
    %v4622 = vunpack.c.l.b16 %v2748
    %v4623 = vunpack.c.l.b16 %v2749
    %v4624 = vunpack.c.h.b16 %v2749
    %v4625 = vunpack.c.l.b16 %v2750
    %v4626 = vunpack.c.h.b16 %v2750
    %v4627 = vunpack.c.l.b16 %v2751
    %v4628 = vunpack.c.h.b16 %v2751
    %v4629 = vunpack.c.l.b16 %v2752
    %v4630 = vunpack.c.l.b16 %v2753
    %v4631 = vunpack.c.h.b16 %v2753
    %v4632 = vunpack.c.l.b16 %v2754
    %v4633 = vunpack.c.h.b16 %v2754
    %v4634 = vunpack.c.l.b16 %v2755
    %v4635 = vunpack.c.h.b16 %v2755
    %v4636 = vunpack.c.l.b16 %v2756
    %v4637 = vunpack.c.l.b16 %v2757
    %v4638 = vunpack.c.h.b16 %v2757
    %v4639 = vunpack.c.l.b16 %v2758
    %v4640 = vunpack.c.h.b16 %v2758
    %v4641 = vunpack.c.l.b16 %v2759
    %v4642 = vunpack.c.h.b16 %v2759
    %v4643 = vunpack.c.l.b16 %v2760
    %v4644 = vunpack.c.l.b16 %v2761
    %v4645 = vunpack.c.h.b16 %v2761
    %v4646 = vunpack.c.l.b16 %v2762
    %v4647 = vunpack.c.h.b16 %v2762
    %v4648 = vunpack.c.l.b16 %v2763
    %v4649 = vunpack.c.h.b16 %v2763
    %v4650 = vunpack.c.l.b16 %v2764
    %v4651 = vunpack.c.l.b16 %v2765
    %v4652 = vunpack.c.h.b16 %v2765
    %v4653 = vunpack.c.l.b16 %v2766
    %v4654 = vunpack.c.h.b16 %v2766
    %v4655 = vunpack.c.l.b16 %v2767
    %v4656 = vunpack.c.h.b16 %v2767
    %v4657 = vunpack.c.l.b16 %v2768
    %v4658 = vunpack.c.l.b16 %v2769
    %v4659 = vunpack.c.h.b16 %v2769
    %v4660 = vunpack.c.l.b16 %v2770
    %v4661 = vunpack.c.h.b16 %v2770
    %v4662 = vunpack.c.l.b16 %v2771
    %v4663 = vunpack.c.h.b16 %v2771
    %v4664 = vunpack.c.l.b16 %v2772
    %v4665 = vunpack.c.l.b16 %v2773
    %v4666 = vunpack.c.h.b16 %v2773
    %v4667 = vunpack.c.l.b16 %v2774
    %v4668 = vunpack.c.h.b16 %v2774
    %v4669 = vunpack.c.l.b16 %v2775
    %v4670 = vunpack.c.h.b16 %v2775
    %v4671 = vunpack.c.l.b16 %v2776
    %v4672 = vunpack.c.l.b16 %v2777
    %v4673 = vunpack.c.h.b16 %v2777
    %v4674 = vunpack.c.l.b16 %v2778
    %v4675 = vunpack.c.h.b16 %v2778
    %v4676 = vunpack.c.l.b16 %v2779
    %v4677 = vunpack.c.h.b16 %v2779
    %v4678 = vunpack.c.l.b16 %v2780
    %v4679 = vunpack.c.l.b16 %v2781
    %v4680 = vunpack.c.h.b16 %v2781
    %v4681 = vunpack.c.l.b16 %v2782
    %v4682 = vunpack.c.h.b16 %v2782
    %v4683 = vunpack.c.l.b16 %v2783
    %v4684 = vunpack.c.h.b16 %v2783
    %v4685 = vunpack.c.l.b16 %v2784
    %v4686 = vunpack.c.l.b16 %v2785
    %v4687 = vunpack.c.h.b16 %v2785
    %v4688 = vunpack.c.l.b16 %v2786
    %v4689 = vunpack.c.h.b16 %v2786
    %v4690 = vunpack.c.l.b16 %v2787
    %v4691 = vunpack.c.h.b16 %v2787
    %v4692 = vunpack.c.l.b16 %v2788
    %v4693 = vunpack.c.l.b16 %v2789
    %v4694 = vunpack.c.h.b16 %v2789
    %v4695 = vunpack.c.l.b16 %v2790
    %v4696 = vunpack.c.h.b16 %v2790
    %v4697 = vunpack.c.l.b16 %v2791
    %v4698 = vunpack.c.h.b16 %v2791
    %v4699 = vunpack.c.l.b16 %v2792
    %v4700 = vunpack.c.l.b16 %v2793
    %v4701 = vunpack.c.h.b16 %v2793
    %v4702 = vunpack.c.l.b16 %v2794
    %v4703 = vunpack.c.h.b16 %v2794
    %v4704 = vunpack.c.l.b16 %v2795
    %v4705 = vunpack.c.h.b16 %v2795
    %v4706 = vunpack.c.l.b16 %v2796
    %v4707 = vunpack.c.l.b16 %v2797
    %v4708 = vunpack.c.h.b16 %v2797
    %v4709 = vunpack.c.l.b16 %v2798
    %v4710 = vunpack.c.h.b16 %v2798
    %v4711 = vunpack.c.l.b16 %v2799
    %v4712 = vunpack.c.h.b16 %v2799
    %v4713 = vunpack.c.l.b16 %v2800
    %v4714 = vunpack.c.l.b16 %v2801
    %v4715 = vunpack.c.h.b16 %v2801
    %v4716 = vunpack.c.l.b16 %v2802
    %v4717 = vunpack.c.h.b16 %v2802
    %v4718 = vunpack.c.l.b16 %v2803
    %v4719 = vunpack.c.h.b16 %v2803
    %v4720 = vunpack.c.l.b16 %v2804
    %v4721 = vunpack.c.l.b16 %v2805
    %v4722 = vunpack.c.h.b16 %v2805
    %v4723 = vunpack.c.l.b16 %v2806
    %v4724 = vunpack.c.h.b16 %v2806
    %v4725 = vunpack.c.l.b16 %v2807
    %v4726 = vunpack.c.h.b16 %v2807
    %v4727 = vunpack.c.l.b16 %v2808
    %v4728 = vunpack.c.l.b16 %v2809
    %v4729 = vunpack.c.h.b16 %v2809
    %v4730 = vunpack.c.l.b16 %v2810
    %v4731 = vunpack.c.h.b16 %v2810
    %v4732 = vunpack.c.l.b16 %v2811
    %v4733 = vunpack.c.h.b16 %v2811
    %v4734 = vunpack.c.l.b16 %v2812
    %v4735 = vunpack.c.l.b16 %v2813
    %v4736 = vunpack.c.h.b16 %v2813
    %v4737 = vunpack.c.l.b16 %v2814
    %v4738 = vunpack.c.h.b16 %v2814
    %v4739 = vunpack.c.l.b16 %v2815
    %v4740 = vunpack.c.h.b16 %v2815
    %v4741 = vunpack.c.l.b16 %v2816
    %v4742 = vunpack.c.l.b16 %v2817
    %v4743 = vunpack.c.h.b16 %v2817
    %v4744 = vunpack.c.l.b16 %v2818
    %v4745 = vunpack.c.h.b16 %v2818
    %v4746 = vunpack.c.l.b16 %v2819
    %v4747 = vunpack.c.h.b16 %v2819
    %v4748 = vunpack.c.l.b16 %v2820
    %v4749 = vunpack.c.l.b16 %v2821
    %v4750 = vunpack.c.h.b16 %v2821
    %v4751 = vunpack.c.l.b16 %v2822
    %v4752 = vunpack.c.h.b16 %v2822
    %v4753 = vunpack.c.l.b16 %v2823
    %v4754 = vunpack.c.h.b16 %v2823
    %v4755 = vunpack.c.l.b16 %v2824
    %v4756 = vunpack.c.l.b16 %v2825
    %v4757 = vunpack.c.h.b16 %v2825
    %v4758 = vunpack.c.l.b16 %v2826
    %v4759 = vunpack.c.h.b16 %v2826
    %v4760 = vunpack.c.l.b16 %v2827
    %v4761 = vunpack.c.h.b16 %v2827
    %v4762 = vunpack.c.l.b16 %v2828
    %v4763 = vunpack.c.l.b16 %v2829
    %v4764 = vunpack.c.h.b16 %v2829
    %v4765 = vunpack.c.l.b16 %v2830
    %v4766 = vunpack.c.h.b16 %v2830
    %v4767 = vunpack.c.l.b16 %v2831
    %v4768 = vunpack.c.h.b16 %v2831
    %v4769 = vunpack.c.l.b16 %v2832
    %v4770 = vunpack.c.l.b16 %v2833
    %v4771 = vunpack.c.h.b16 %v2833
    %v4772 = vunpack.c.l.b16 %v2834
    %v4773 = vunpack.c.h.b16 %v2834
    %v4774 = vunpack.c.l.b16 %v2835
    %v4775 = vunpack.c.h.b16 %v2835
    %v4776 = vunpack.c.l.b16 %v2836
    %v4777 = vunpack.c.l.b16 %v2837
    %v4778 = vunpack.c.h.b16 %v2837
    %v4779 = vunpack.c.l.b16 %v2838
    %v4780 = vunpack.c.h.b16 %v2838
    %v4781 = vunpack.c.l.b16 %v2839
    %v4782 = vunpack.c.h.b16 %v2839
    %v4783 = vunpack.c.l.b16 %v2840
    %v4784 = vunpack.c.l.b16 %v2841
    %v4785 = vunpack.c.h.b16 %v2841
    %v4786 = vunpack.c.l.b16 %v2842
    %v4787 = vunpack.c.h.b16 %v2842
    %v4788 = vunpack.c.l.b16 %v2843
    %v4789 = vunpack.c.h.b16 %v2843
    %v4790 = vunpack.c.l.b16 %v2844
    %v4791 = vunpack.c.l.b16 %v2845
    %v4792 = vunpack.c.h.b16 %v2845
    %v4793 = vunpack.c.l.b16 %v2846
    %v4794 = vunpack.c.h.b16 %v2846
    %v4795 = vunpack.c.l.b16 %v2847
    %v4796 = vunpack.c.h.b16 %v2847
    %v4797 = vunpack.c.l.b16 %v2848
    %v4798 = vunpack.c.l.b16 %v2849
    %v4799 = vunpack.c.h.b16 %v2849
    %v4800 = vunpack.c.l.b16 %v2850
    %v4801 = vunpack.c.h.b16 %v2850
    %v4802 = vunpack.c.l.b16 %v2851
    %v4803 = vunpack.c.h.b16 %v2851
    %v4804 = vunpack.c.l.b16 %v2852
    %v4805 = vunpack.c.l.b16 %v2853
    %v4806 = vunpack.c.h.b16 %v2853
    %v4807 = vunpack.c.l.b16 %v2854
    %v4808 = vunpack.c.h.b16 %v2854
    %v4809 = vunpack.c.l.b16 %v2855
    %v4810 = vunpack.c.h.b16 %v2855
    %v4811 = vunpack.c.l.b16 %v2856
    %v4812 = vunpack.c.l.b16 %v2857
    %v4813 = vunpack.c.h.b16 %v2857
    %v4814 = vunpack.c.l.b16 %v2858
    %v4815 = vunpack.c.h.b16 %v2858
    %v4816 = vunpack.c.l.b16 %v2859
    %v4817 = vunpack.c.h.b16 %v2859
    %v4818 = vunpack.c.l.b16 %v2860
    %v4819 = vunpack.c.l.b16 %v2861
    %v4820 = vunpack.c.h.b16 %v2861
    %v4821 = vunpack.c.l.b16 %v2862
    %v4822 = vunpack.c.h.b16 %v2862
    %v4823 = vunpack.c.l.b16 %v2863
    %v4824 = vunpack.c.h.b16 %v2863
    %v4825 = vunpack.c.l.b16 %v2864
    %v4826 = vunpack.c.l.b16 %v2865
    %v4827 = vunpack.c.h.b16 %v2865
    %v4828 = vunpack.c.l.b16 %v2866
    %v4829 = vunpack.c.h.b16 %v2866
    %v4830 = vunpack.c.l.b16 %v2867
    %v4831 = vunpack.c.h.b16 %v2867
    %v4832 = vunpack.c.l.b16 %v2868
    %v4833 = vunpack.c.l.b16 %v2869
    %v4834 = vunpack.c.h.b16 %v2869
    %v4835 = vunpack.c.l.b16 %v2870
    %v4836 = vunpack.c.h.b16 %v2870
    %v4837 = vunpack.c.l.b16 %v2871
    %v4838 = vunpack.c.h.b16 %v2871
    %v4839 = vunpack.c.l.b16 %v2872
    %v4840 = vunpack.c.l.b16 %v2873
    %v4841 = vunpack.c.h.b16 %v2873
    %v4842 = vunpack.c.l.b16 %v2874
    %v4843 = vunpack.c.h.b16 %v2874
    %v4844 = vunpack.c.l.b16 %v2875
    %v4845 = vunpack.c.h.b16 %v2875
    %v4846 = vunpack.c.l.b16 %v2876
    %v4847 = vunpack.c.l.b16 %v2877
    %v4848 = vunpack.c.h.b16 %v2877
    %v4849 = vunpack.c.l.b16 %v2878
    %v4850 = vunpack.c.h.b16 %v2878
    %v4851 = vunpack.c.l.b16 %v2879
    %v4852 = vunpack.c.h.b16 %v2879
    %v4853 = vunpack.c.l.b16 %v2880
    %v4854 = vunpack.c.l.b16 %v2881
    %v4855 = vunpack.c.h.b16 %v2881
    %v4856 = vunpack.c.l.b16 %v2882
    %v4857 = vunpack.c.h.b16 %v2882
    %v4858 = vunpack.c.l.b16 %v2883
    %v4859 = vunpack.c.h.b16 %v2883
    %v4860 = vunpack.c.l.b16 %v2884
    %v4861 = vunpack.c.l.b16 %v2885
    %v4862 = vunpack.c.h.b16 %v2885
    %v4863 = vunpack.c.l.b16 %v2886
    %v4864 = vunpack.c.h.b16 %v2886
    %v4865 = vunpack.c.l.b16 %v2887
    %v4866 = vunpack.c.h.b16 %v2887
    %v4867 = vunpack.c.l.b16 %v2888
    %v4868 = vunpack.c.l.b16 %v2889
    %v4869 = vunpack.c.h.b16 %v2889
    %v4870 = vunpack.c.l.b16 %v2890
    %v4871 = vunpack.c.h.b16 %v2890
    %v4872 = vunpack.c.l.b16 %v2891
    %v4873 = vunpack.c.h.b16 %v2891
    %v4874 = vunpack.c.l.b16 %v2892
    %v4875 = vunpack.c.l.b16 %v2893
    %v4876 = vunpack.c.h.b16 %v2893
    %v4877 = vunpack.c.l.b16 %v2894
    %v4878 = vunpack.c.h.b16 %v2894
    %v4879 = vunpack.c.l.b16 %v2895
    %v4880 = vunpack.c.h.b16 %v2895
    %v4881 = vunpack.c.l.b16 %v2896
    %v4882 = vunpack.c.l.b16 %v2897
    %v4883 = vunpack.c.h.b16 %v2897
    %v4884 = vunpack.c.l.b16 %v2898
    %v4885 = vunpack.c.h.b16 %v2898
    %v4886 = vunpack.c.l.b16 %v2899
    %v4887 = vunpack.c.h.b16 %v2899
    %v4888 = vunpack.c.l.b16 %v2900
    %v4889 = vunpack.c.l.b16 %v2901
    %v4890 = vunpack.c.h.b16 %v2901
    %v4891 = vunpack.c.l.b16 %v2902
    %v4892 = vunpack.c.h.b16 %v2902
    %v4893 = vunpack.c.l.b16 %v2903
    %v4894 = vunpack.c.h.b16 %v2903
    %v4895 = vunpack.c.l.b16 %v2904
    %v4896 = vunpack.c.l.b16 %v2905
    %v4897 = vunpack.c.h.b16 %v2905
    %v4898 = vunpack.c.l.b16 %v2906
    %v4899 = vunpack.c.h.b16 %v2906
    %v4900 = vunpack.c.l.b16 %v2907
    %v4901 = vunpack.c.h.b16 %v2907
    %v4902 = vunpack.c.l.b16 %v2908
    %v4903 = vunpack.c.l.b16 %v2909
    %v4904 = vunpack.c.h.b16 %v2909
    %v4905 = vunpack.c.l.b16 %v2910
    %v4906 = vunpack.c.h.b16 %v2910
    %v4907 = vunpack.c.l.b16 %v2911
    %v4908 = vunpack.c.h.b16 %v2911
    %v4909 = vunpack.c.l.b16 %v2912
    %v4910 = vunpack.c.l.b16 %v2913
    %v4911 = vunpack.c.h.b16 %v2913
    %v4912 = vunpack.c.l.b16 %v2914
    %v4913 = vunpack.c.h.b16 %v2914
    %v4914 = vunpack.c.l.b16 %v2915
    %v4915 = vunpack.c.h.b16 %v2915
    %v4916 = vunpack.c.l.b16 %v2916
    %v4917 = vunpack.c.l.b16 %v2917
    %v4918 = vunpack.c.h.b16 %v2917
    %v4919 = vunpack.c.l.b16 %v2918
    %v4920 = vunpack.c.h.b16 %v2918
    %v4921 = vunpack.c.l.b16 %v2919
    %v4922 = vunpack.c.h.b16 %v2919
    %v4923 = vunpack.c.l.b16 %v2920
    %v4924 = vunpack.c.l.b16 %v2921
    %v4925 = vunpack.c.h.b16 %v2921
    %v4926 = vunpack.c.l.b16 %v2922
    %v4927 = vunpack.c.h.b16 %v2922
    %v4928 = vunpack.c.l.b16 %v2923
    %v4929 = vunpack.c.h.b16 %v2923
    %v4930 = vunpack.c.l.b16 %v2924
    %v4931 = vunpack.c.l.b16 %v2925
    %v4932 = vunpack.c.h.b16 %v2925
    %v4933 = vunpack.c.l.b16 %v2926
    %v4934 = vunpack.c.h.b16 %v2926
    %v4935 = vunpack.c.l.b16 %v2927
    %v4936 = vunpack.c.h.b16 %v2927
    %v4937 = vunpack.c.l.b16 %v2928
    %v4938 = vunpack.c.l.b16 %v2929
    %v4939 = vunpack.c.h.b16 %v2929
    %v4940 = vunpack.c.l.b16 %v2930
    %v4941 = vunpack.c.h.b16 %v2930
    %v4942 = vunpack.c.l.b16 %v2931
    %v4943 = vunpack.c.h.b16 %v2931
    %v4944 = vunpack.c.l.b16 %v2932
    %v4945 = vunpack.c.l.b16 %v2933
    %v4946 = vunpack.c.h.b16 %v2933
    %v4947 = vunpack.c.l.b16 %v2934
    %v4948 = vunpack.c.h.b16 %v2934
    %v4949 = vunpack.c.l.b16 %v2935
    %v4950 = vunpack.c.h.b16 %v2935
    %v4951 = vunpack.c.l.b16 %v2936
    %v4952 = vunpack.c.l.b16 %v2937
    %v4953 = vunpack.c.h.b16 %v2937
    %v4954 = vunpack.c.l.b16 %v2938
    %v4955 = vunpack.c.h.b16 %v2938
    %v4956 = vunpack.c.l.b16 %v2939
    %v4957 = vunpack.c.h.b16 %v2939
    %v4958 = vunpack.c.l.b16 %v2940
    %v4959 = vunpack.c.l.b16 %v2941
    %v4960 = vunpack.c.h.b16 %v2941
    %v4961 = vunpack.c.l.b16 %v2942
    %v4962 = vunpack.c.h.b16 %v2942
    %v4963 = vunpack.c.l.b16 %v2943
    %v4964 = vunpack.c.h.b16 %v2943
    %v4965 = vunpack.c.l.b16 %v2944
    %v4966 = vunpack.c.l.b16 %v2945
    %v4967 = vunpack.c.h.b16 %v2945
    %v4968 = vunpack.c.l.b16 %v2946
    %v4969 = vunpack.c.h.b16 %v2946
    %v4970 = vunpack.c.l.b16 %v2947
    %v4971 = vunpack.c.h.b16 %v2947
    %v4972 = vunpack.c.l.b16 %v2948
    %v4973 = vunpack.c.l.b16 %v2949
    %v4974 = vunpack.c.h.b16 %v2949
    %v4975 = vunpack.c.l.b16 %v2950
    %v4976 = vunpack.c.h.b16 %v2950
    %v4977 = vunpack.c.l.b16 %v2951
    %v4978 = vunpack.c.h.b16 %v2951
    %v4979 = vunpack.c.l.b16 %v2952
    %v4980 = vunpack.c.l.b16 %v2953
    %v4981 = vunpack.c.h.b16 %v2953
    %v4982 = vunpack.c.l.b16 %v2954
    %v4983 = vunpack.c.h.b16 %v2954
    %v4984 = vunpack.c.l.b16 %v2955
    %v4985 = vunpack.c.h.b16 %v2955
    %v4986 = vunpack.c.l.b16 %v2956
    %v4987 = vunpack.c.l.b16 %v2957
    %v4988 = vunpack.c.h.b16 %v2957
    %v4989 = vunpack.c.l.b16 %v2958
    %v4990 = vunpack.c.h.b16 %v2958
    %v4991 = vunpack.c.l.b16 %v2959
    %v4992 = vunpack.c.h.b16 %v2959
    %v4993 = vunpack.c.l.b16 %v2960
    %v4994 = vunpack.c.l.b16 %v2961
    %v4995 = vunpack.c.h.b16 %v2961
    %v4996 = vunpack.c.l.b16 %v2962
    %v4997 = vunpack.c.h.b16 %v2962
    %v4998 = vunpack.c.l.b16 %v2963
    %v4999 = vunpack.c.h.b16 %v2963
    %v5000 = vunpack.c.l.b16 %v2964
    %v5001 = vunpack.c.l.b16 %v2965
    %v5002 = vunpack.c.h.b16 %v2965
    %v5003 = vunpack.c.l.b16 %v2966
    %v5004 = vunpack.c.h.b16 %v2966
    %v5005 = vunpack.c.l.b16 %v2967
    %v5006 = vunpack.c.h.b16 %v2967
    %v5007 = vunpack.c.l.b16 %v2968
    %v5008 = vunpack.c.l.b16 %v2969
    %v5009 = vunpack.c.h.b16 %v2969
    %v5010 = vunpack.c.l.b16 %v2970
    %v5011 = vunpack.c.h.b16 %v2970
    %v5012 = vunpack.c.l.b16 %v2971
    %v5013 = vunpack.c.h.b16 %v2971
    %v5014 = vunpack.c.l.b16 %v2972
    %v5015 = vunpack.c.l.b16 %v2973
    %v5016 = vunpack.c.h.b16 %v2973
    %v5017 = vunpack.c.l.b16 %v2974
    %v5018 = vunpack.c.h.b16 %v2974
    %v5019 = vunpack.c.l.b16 %v2975
    %v5020 = vunpack.c.h.b16 %v2975
    %v5021 = vunpack.c.l.b16 %v2976
    %v5022 = vunpack.c.l.b16 %v2977
    %v5023 = vunpack.c.h.b16 %v2977
    %v5024 = vunpack.c.l.b16 %v2978
    %v5025 = vunpack.c.h.b16 %v2978
    %v5026 = vunpack.c.l.b16 %v2979
    %v5027 = vunpack.c.h.b16 %v2979
    %v5028 = vunpack.c.l.b16 %v2980
    %v5029 = vunpack.c.l.b16 %v2981
    %v5030 = vunpack.c.h.b16 %v2981
    %v5031 = vunpack.c.l.b16 %v2982
    %v5032 = vunpack.c.h.b16 %v2982
    %v5033 = vunpack.c.l.b16 %v2983
    %v5034 = vunpack.c.h.b16 %v2983
    %v5035 = vunpack.c.l.b16 %v2984
    %v5036 = vunpack.c.l.b16 %v2985
    %v5037 = vunpack.c.h.b16 %v2985
    %v5038 = vunpack.c.l.b16 %v2986
    %v5039 = vunpack.c.h.b16 %v2986
    %v5040 = vunpack.c.l.b16 %v2987
    %v5041 = vunpack.c.h.b16 %v2987
    %v5042 = vunpack.c.l.b16 %v2988
    %v5043 = vunpack.c.l.b16 %v2989
    %v5044 = vunpack.c.h.b16 %v2989
    %v5045 = vunpack.c.l.b16 %v2990
    %v5046 = vunpack.c.h.b16 %v2990
    %v5047 = vunpack.c.l.b16 %v2991
    %v5048 = vunpack.c.h.b16 %v2991
    %v5049 = vunpack.c.l.b16 %v2992
    %v5050 = vunpack.c.l.b16 %v2993
    %v5051 = vunpack.c.h.b16 %v2993
    %v5052 = vunpack.c.l.b16 %v2994
    %v5053 = vunpack.c.h.b16 %v2994
    %v5054 = vunpack.c.l.b16 %v2995
    %v5055 = vunpack.c.h.b16 %v2995
    %v5056 = vunpack.c.l.b16 %v2996
    %v5057 = vunpack.c.l.b16 %v2997
    %v5058 = vunpack.c.h.b16 %v2997
    %v5059 = vunpack.c.l.b16 %v2998
    %v5060 = vunpack.c.h.b16 %v2998
    %v5061 = vunpack.c.l.b16 %v2999
    %v5062 = vunpack.c.h.b16 %v2999
    %v5063 = vunpack.c.l.b16 %v3000
    %v5064 = vunpack.c.l.b16 %v3001
    %v5065 = vunpack.c.h.b16 %v3001
    %v5066 = vunpack.c.l.b16 %v3002
    %v5067 = vunpack.c.h.b16 %v3002
    %v5068 = vunpack.c.l.b16 %v3003
    %v5069 = vunpack.c.h.b16 %v3003
    %v5070 = vunpack.c.l.b16 %v3004
    %v5071 = vunpack.c.l.b16 %v3005
    %v5072 = vunpack.c.h.b16 %v3005
    %v5073 = vunpack.c.l.b16 %v3006
    %v5074 = vunpack.c.h.b16 %v3006
    %v5075 = vunpack.c.l.b16 %v3007
    %v5076 = vunpack.c.h.b16 %v3007
    %v5077 = vunpack.c.l.b16 %v3008
    %v5078 = vunpack.c.l.b16 %v3009
    %v5079 = vunpack.c.h.b16 %v3009
    %v5080 = vunpack.c.l.b16 %v3010
    %v5081 = vunpack.c.h.b16 %v3010
    %v5082 = vunpack.c.l.b16 %v3011
    %v5083 = vunpack.c.h.b16 %v3011
    %v5084 = vunpack.c.l.b16 %v3012
    %v5085 = vunpack.c.l.b16 %v3013
    %v5086 = vunpack.c.h.b16 %v3013
    %v5087 = vunpack.c.l.b16 %v3014
    %v5088 = vunpack.c.h.b16 %v3014
    %v5089 = vunpack.c.l.b16 %v3015
    %v5090 = vunpack.c.h.b16 %v3015
    %v5091 = vunpack.c.l.b16 %v3016
    %v5092 = vunpack.c.l.b16 %v3017
    %v5093 = vunpack.c.h.b16 %v3017
    %v5094 = vunpack.c.l.b16 %v3018
    %v5095 = vunpack.c.h.b16 %v3018
    %v5096 = vunpack.c.l.b16 %v3019
    %v5097 = vunpack.c.h.b16 %v3019
    %v5098 = vunpack.c.l.b16 %v3020
    %v5099 = vunpack.c.l.b16 %v3021
    %v5100 = vunpack.c.h.b16 %v3021
    %v5101 = vunpack.c.l.b16 %v3022
    %v5102 = vunpack.c.h.b16 %v3022
    %v5103 = vunpack.c.l.b16 %v3023
    %v5104 = vunpack.c.h.b16 %v3023
    %v5105 = vunpack.c.l.b16 %v3024
    %v5106 = vunpack.c.l.b16 %v3025
    %v5107 = vunpack.c.h.b16 %v3025
    %v5108 = vunpack.c.l.b16 %v3026
    %v5109 = vunpack.c.h.b16 %v3026
    %v5110 = vunpack.c.l.b16 %v3027
    %v5111 = vunpack.c.h.b16 %v3027
    %v5112 = vunpack.c.l.b16 %v3028
    %v5113 = vunpack.c.l.b16 %v3029
    %v5114 = vunpack.c.h.b16 %v3029
    %v5115 = vunpack.c.l.b16 %v3030
    %v5116 = vunpack.c.h.b16 %v3030
    %v5117 = vunpack.c.l.b16 %v3031
    %v5118 = vunpack.c.h.b16 %v3031
    %v5119 = vunpack.c.l.b16 %v3032
    %v5120 = vunpack.c.l.b16 %v3033
    %v5121 = vunpack.c.h.b16 %v3033
    %v5122 = vunpack.c.l.b16 %v3034
    %v5123 = vunpack.c.h.b16 %v3034
    %v5124 = vunpack.c.l.b16 %v3035
    %v5125 = vunpack.c.h.b16 %v3035
    %v5126 = vunpack.c.l.b16 %v3036
    %v5127 = vunpack.c.l.b16 %v3037
    %v5128 = vunpack.c.h.b16 %v3037
    %v5129 = vunpack.c.l.b16 %v3038
    %v5130 = vunpack.c.h.b16 %v3038
    %v5131 = vunpack.c.l.b16 %v3039
    %v5132 = vunpack.c.h.b16 %v3039
    %v5133 = vunpack.c.l.b16 %v3040
    %v5134 = vunpack.c.l.b16 %v3041
    %v5135 = vunpack.c.h.b16 %v3041
    %v5136 = vunpack.c.l.b16 %v3042
    %v5137 = vunpack.c.h.b16 %v3042
    %v5138 = vunpack.c.l.b16 %v3043
    %v5139 = vunpack.c.h.b16 %v3043
    %v5140 = vunpack.c.l.b16 %v3044
    %v5141 = vunpack.c.l.b16 %v3045
    %v5142 = vunpack.c.h.b16 %v3045
    %v5143 = vunpack.c.l.b16 %v3046
    %v5144 = vunpack.c.h.b16 %v3046
    %v5145 = vunpack.c.l.b16 %v3047
    %v5146 = vunpack.c.h.b16 %v3047
    %v5147 = vunpack.c.l.b16 %v3048
    %v5148 = vunpack.c.l.b16 %v3049
    %v5149 = vunpack.c.h.b16 %v3049
    %v5150 = vunpack.c.l.b16 %v3050
    %v5151 = vunpack.c.h.b16 %v3050
    %v5152 = vunpack.c.l.b16 %v3051
    %v5153 = vunpack.c.h.b16 %v3051
    %v5154 = vunpack.c.l.b16 %v3052
    %v5155 = vunpack.c.l.b16 %v3053
    %v5156 = vunpack.c.h.b16 %v3053
    %v5157 = vunpack.c.l.b16 %v3054
    %v5158 = vunpack.c.h.b16 %v3054
    %v5159 = vunpack.c.l.b16 %v3055
    %v5160 = vunpack.c.h.b16 %v3055
    %v5161 = vunpack.c.l.b16 %v3056
    %v5162 = vunpack.c.l.b16 %v3057
    %v5163 = vunpack.c.h.b16 %v3057
    %v5164 = vunpack.c.l.b16 %v3058
    %v5165 = vunpack.c.h.b16 %v3058
    %v5166 = vunpack.c.l.b16 %v3059
    %v5167 = vunpack.c.h.b16 %v3059
    %v5168 = vunpack.c.l.b16 %v3060
    %v5169 = vunpack.c.l.b16 %v3061
    %v5170 = vunpack.c.h.b16 %v3061
    %v5171 = vunpack.c.l.b16 %v3062
    %v5172 = vunpack.c.h.b16 %v3062
    %v5173 = vunpack.c.l.b16 %v3063
    %v5174 = vunpack.c.h.b16 %v3063
    %v5175 = vunpack.c.l.b16 %v3064
    %v5176 = vunpack.c.l.b16 %v3065
    %v5177 = vunpack.c.h.b16 %v3065
    %v5178 = vunpack.c.l.b16 %v3066
    %v5179 = vunpack.c.h.b16 %v3066
    %v5180 = vunpack.c.l.b16 %v3067
    %v5181 = vunpack.c.h.b16 %v3067
    %v5182 = vunpack.c.l.b16 %v3068
    %v5183 = vunpack.c.l.b16 %v3069
    %v5184 = vunpack.c.h.b16 %v3069
    %v5185 = vunpack.c.l.b16 %v3070
    %v5186 = vunpack.c.h.b16 %v3070
    %v5187 = vunpack.c.l.b16 %v3071
    %v5188 = vunpack.c.h.b16 %v3071
    %v5189 = vunpack.c.l.b16 %v3072
    %v5190 = vunpack.c.l.b16 %v3073
    %v5191 = vunpack.c.h.b16 %v3073
    %v5192 = vunpack.c.l.b16 %v3074
    %v5193 = vunpack.c.h.b16 %v3074
    %v5194 = vunpack.c.l.b16 %v3075
    %v5195 = vunpack.c.h.b16 %v3075
    %v5196 = vunpack.c.l.b16 %v3076
    %v5197 = vunpack.c.l.b16 %v3077
    %v5198 = vunpack.c.h.b16 %v3077
    %v5199 = vunpack.c.l.b16 %v3078
    %v5200 = vunpack.c.h.b16 %v3078
    %v5201 = vunpack.c.l.b16 %v3079
    %v5202 = vunpack.c.h.b16 %v3079
    %v5203 = vunpack.c.l.b16 %v3080
    %v5204 = vunpack.c.l.b16 %v3081
    %v5205 = vunpack.c.h.b16 %v3081
    %v5206 = vunpack.c.l.b16 %v3082
    %v5207 = vunpack.c.h.b16 %v3082
    %v5208 = vunpack.c.l.b16 %v3083
    %v5209 = vunpack.c.h.b16 %v3083
    %v5210 = vunpack.c.l.b16 %v3084
    %v5211 = vunpack.c.l.b16 %v3085
    %v5212 = vunpack.c.h.b16 %v3085
    %v5213 = vunpack.c.l.b16 %v3086
    %v5214 = vunpack.c.h.b16 %v3086
    %v5215 = vunpack.c.l.b16 %v3087
    %v5216 = vunpack.c.h.b16 %v3087
    %v5217 = vunpack.c.l.b16 %v3088
    %v5218 = vunpack.c.l.b16 %v3089
    %v5219 = vunpack.c.h.b16 %v3089
    %v5220 = vunpack.c.l.b16 %v3090
    %v5221 = vunpack.c.h.b16 %v3090
    %v5222 = vunpack.c.l.b16 %v3091
    %v5223 = vunpack.c.h.b16 %v3091
    %v5224 = vunpack.c.l.b16 %v3092
    %v5225 = vunpack.c.l.b16 %v3093
    %v5226 = vunpack.c.h.b16 %v3093
    %v5227 = vunpack.c.l.b16 %v3094
    %v5228 = vunpack.c.h.b16 %v3094
    %v5229 = vunpack.c.l.b16 %v3095
    %v5230 = vunpack.c.h.b16 %v3095
    %v5231 = vunpack.c.l.b16 %v3096
    %v5232 = vunpack.c.l.b16 %v3097
    %v5233 = vunpack.c.h.b16 %v3097
    %v5234 = vunpack.c.l.b16 %v3098
    %v5235 = vunpack.c.h.b16 %v3098
    %v5236 = vunpack.c.l.b16 %v3099
    %v5237 = vunpack.c.h.b16 %v3099
    %v5238 = vunpack.c.l.b16 %v3100
    %v5239 = vunpack.c.l.b16 %v3101
    %v5240 = vunpack.c.h.b16 %v3101
    %v5241 = vunpack.c.l.b16 %v3102
    %v5242 = vunpack.c.h.b16 %v3102
    %v5243 = vunpack.c.l.b16 %v3103
    %v5244 = vunpack.c.h.b16 %v3103
    %v5245 = vunpack.c.l.b16 %v3104
    %v5246 = vunpack.c.l.b16 %v3105
    %v5247 = vunpack.c.h.b16 %v3105
    %v5248 = vunpack.c.l.b16 %v3106
    %v5249 = vunpack.c.h.b16 %v3106
    %v5250 = vunpack.c.l.b16 %v3107
    %v5251 = vunpack.c.h.b16 %v3107
    %v5252 = vunpack.c.l.b16 %v3108
    %v5253 = vunpack.c.l.b16 %v3109
    %v5254 = vunpack.c.h.b16 %v3109
    %v5255 = vunpack.c.l.b16 %v3110
    %v5256 = vunpack.c.h.b16 %v3110
    %v5257 = vunpack.c.l.b16 %v3111
    %v5258 = vunpack.c.h.b16 %v3111
    %v5259 = vunpack.c.l.b16 %v3112
    %v5260 = vunpack.c.l.b16 %v3113
    %v5261 = vunpack.c.h.b16 %v3113
    %v5262 = vunpack.c.l.b16 %v3114
    %v5263 = vunpack.c.h.b16 %v3114
    %v5264 = vunpack.c.l.b16 %v3115
    %v5265 = vunpack.c.h.b16 %v3115
    %v5266 = vunpack.c.l.b16 %v3116
    %v5267 = vunpack.c.l.b16 %v3117
    %v5268 = vunpack.c.h.b16 %v3117
    %v5269 = vunpack.c.l.b16 %v3118
    %v5270 = vunpack.c.h.b16 %v3118
    %v5271 = vunpack.c.l.b16 %v3119
    %v5272 = vunpack.c.h.b16 %v3119
    %v5273 = vunpack.c.l.b16 %v3120
    %v5274 = vunpack.c.l.b16 %v3121
    %v5275 = vunpack.c.h.b16 %v3121
    %v5276 = vunpack.c.l.b16 %v3122
    %v5277 = vunpack.c.h.b16 %v3122
    %v5278 = vunpack.c.l.b16 %v3123
    %v5279 = vunpack.c.h.b16 %v3123
    %v5280 = vunpack.c.l.b16 %v3124
    %v5281 = vunpack.c.l.b16 %v3125
    %v5282 = vunpack.c.h.b16 %v3125
    %v5283 = vunpack.c.l.b16 %v3126
    %v5284 = vunpack.c.h.b16 %v3126
    %v5285 = vunpack.c.l.b16 %v3127
    %v5286 = vunpack.c.h.b16 %v3127
    %v5287 = vunpack.c.l.b16 %v3128
    %v5288 = vunpack.c.l.b16 %v3129
    %v5289 = vunpack.c.h.b16 %v3129
    %v5290 = vunpack.c.l.b16 %v3130
    %v5291 = vunpack.c.h.b16 %v3130
    %v5292 = vunpack.c.l.b16 %v3131
    %v5293 = vunpack.c.h.b16 %v3131
    %v5294 = vunpack.c.l.b16 %v3132
    %v5295 = vunpack.c.l.b16 %v3133
    %v5296 = vunpack.c.h.b16 %v3133
    %v5297 = vunpack.c.l.b16 %v3134
    %v5298 = vunpack.c.h.b16 %v3134
    %v5299 = vunpack.c.l.b16 %v3135
    %v5300 = vunpack.c.h.b16 %v3135
    %v5301 = vunpack.c.l.b16 %v3136
    %v5302 = vunpack.c.l.b16 %v3137
    %v5303 = vunpack.c.h.b16 %v3137
    %v5304 = vunpack.c.l.b16 %v3138
    %v5305 = vunpack.c.h.b16 %v3138
    %v5306 = vunpack.c.l.b16 %v3139
    %v5307 = vunpack.c.h.b16 %v3139
    %v5308 = vunpack.c.l.b16 %v3140
    %v5309 = vunpack.c.l.b16 %v3141
    %v5310 = vunpack.c.h.b16 %v3141
    %v5311 = vunpack.c.l.b16 %v3142
    %v5312 = vunpack.c.h.b16 %v3142
    %v5313 = vunpack.c.l.b16 %v3143
    %v5314 = vunpack.c.h.b16 %v3143
    %v5315 = vunpack.c.l.b16 %v3144
    %v5316 = vunpack.c.l.b16 %v3145
    %v5317 = vunpack.c.h.b16 %v3145
    %v5318 = vunpack.c.l.b16 %v3146
    %v5319 = vunpack.c.h.b16 %v3146
    %v5320 = vunpack.c.l.b16 %v3147
    %v5321 = vunpack.c.h.b16 %v3147
    %v5322 = vunpack.c.l.b16 %v3148
    %v5323 = vunpack.c.l.b16 %v3149
    %v5324 = vunpack.c.h.b16 %v3149
    %v5325 = vunpack.c.l.b16 %v3150
    %v5326 = vunpack.c.h.b16 %v3150
    %v5327 = vunpack.c.l.b16 %v3151
    %v5328 = vunpack.c.h.b16 %v3151
    %v5329 = vunpack.c.l.b16 %v3152
    %v5330 = vunpack.c.l.b16 %v3153
    %v5331 = vunpack.c.h.b16 %v3153
    %v5332 = vunpack.c.l.b16 %v3154
    %v5333 = vunpack.c.h.b16 %v3154
    %v5334 = vunpack.c.l.b16 %v3155
    %v5335 = vunpack.c.h.b16 %v3155
    %v5336 = vunpack.c.l.b16 %v3156
    %v5337 = vunpack.c.l.b16 %v3157
    %v5338 = vunpack.c.h.b16 %v3157
    %v5339 = vunpack.c.l.b16 %v3158
    %v5340 = vunpack.c.h.b16 %v3158
    %v5341 = vunpack.c.l.b16 %v3159
    %v5342 = vunpack.c.h.b16 %v3159
    %v5343 = vunpack.c.l.b16 %v3160
    %v5344 = vunpack.c.l.b16 %v3161
    %v5345 = vunpack.c.h.b16 %v3161
    %v5346 = vunpack.c.l.b16 %v3162
    %v5347 = vunpack.c.h.b16 %v3162
    %v5348 = vunpack.c.l.b16 %v3163
    %v5349 = vunpack.c.h.b16 %v3163
    %v5350 = vunpack.c.l.b16 %v3164
    %v5351 = vunpack.c.l.b16 %v3165
    %v5352 = vunpack.c.h.b16 %v3165
    %v5353 = vunpack.c.l.b16 %v3166
    %v5354 = vunpack.c.h.b16 %v3166
    %v5355 = vunpack.c.l.b16 %v3167
    %v5356 = vunpack.c.h.b16 %v3167
    %v5357 = vunpack.c.l.b16 %v3168
    %v5358 = vunpack.c.l.b16 %v3169
    %v5359 = vunpack.c.h.b16 %v3169
    %v5360 = vunpack.c.l.b16 %v3170
    %v5361 = vunpack.c.h.b16 %v3170
    %v5362 = vunpack.c.l.b16 %v3171
    %v5363 = vunpack.c.h.b16 %v3171
    %v5364 = vunpack.c.l.b16 %v3172
    %v5365 = vunpack.c.l.b16 %v3173
    %v5366 = vunpack.c.h.b16 %v3173
    %v5367 = vunpack.c.l.b16 %v3174
    %v5368 = vunpack.c.h.b16 %v3174
    %v5369 = vunpack.c.l.b16 %v3175
    %v5370 = vunpack.c.h.b16 %v3175
    %v5371 = vunpack.c.l.b16 %v3176
    %v5372 = vunpack.c.l.b16 %v3177
    %v5373 = vunpack.c.h.b16 %v3177
    %v5374 = vunpack.c.l.b16 %v3178
    %v5375 = vunpack.c.h.b16 %v3178
    %v5376 = vunpack.c.l.b16 %v3179
    %v5377 = vunpack.c.h.b16 %v3179
    %v5378 = vunpack.c.l.b16 %v3180
    %v5379 = vunpack.c.l.b16 %v3181
    %v5380 = vunpack.c.h.b16 %v3181
    %v5381 = vunpack.c.l.b16 %v3182
    %v5382 = vunpack.c.h.b16 %v3182
    %v5383 = vunpack.c.l.b16 %v3183
    %v5384 = vunpack.c.h.b16 %v3183
    %v5385 = vunpack.c.l.b16 %v3184
    %v5386 = vunpack.c.l.b16 %v3185
    %v5387 = vunpack.c.h.b16 %v3185
    %v5388 = vunpack.c.l.b16 %v3186
    %v5389 = vunpack.c.h.b16 %v3186
    %v5390 = vunpack.c.l.b16 %v3187
    %v5391 = vunpack.c.h.b16 %v3187
    %v5392 = vunpack.c.l.b16 %v3188
    %v5393 = vunpack.c.l.b16 %v3189
    %v5394 = vunpack.c.h.b16 %v3189
    %v5395 = vunpack.c.l.b16 %v3190
    %v5396 = vunpack.c.h.b16 %v3190
    %v5397 = vunpack.c.l.b16 %v3191
    %v5398 = vunpack.c.h.b16 %v3191
    %v5399 = vunpack.c.l.b16 %v3192
    %v5400 = vunpack.c.l.b16 %v3193
    %v5401 = vunpack.c.h.b16 %v3193
    %v5402 = vunpack.c.l.b16 %v3194
    %v5403 = vunpack.c.h.b16 %v3194
    %v5404 = vunpack.c.l.b16 %v3195
    %v5405 = vunpack.c.h.b16 %v3195
    %v5406 = vunpack.c.l.b16 %v3196
    %v5407 = vunpack.c.l.b16 %v3197
    %v5408 = vunpack.c.h.b16 %v3197
    %v5409 = vunpack.c.l.b16 %v3198
    %v5410 = vunpack.c.h.b16 %v3198
    %v5411 = vunpack.c.l.b16 %v3199
    %v5412 = vunpack.c.h.b16 %v3199
    %v5413 = vunpack.c.l.b16 %v3200
    %v5414 = vunpack.c.l.b16 %v3201
    %v5415 = vunpack.c.h.b16 %v3201
    %v5416 = vunpack.c.l.b16 %v3202
    %v5417 = vunpack.c.h.b16 %v3202
    %v5418 = vunpack.c.l.b16 %v3203
    %v5419 = vunpack.c.h.b16 %v3203
    %v5420 = vunpack.c.l.b16 %v3204
    %v5421 = vunpack.c.l.b16 %v3205
    %v5422 = vunpack.c.h.b16 %v3205
    %v5423 = vunpack.c.l.b16 %v3206
    %v5424 = vunpack.c.h.b16 %v3206
    %v5425 = vunpack.c.l.b16 %v3207
    %v5426 = vunpack.c.h.b16 %v3207
    %v5427 = vunpack.c.l.b16 %v3208
    %v5428 = vunpack.c.l.b16 %v3209
    %v5429 = vunpack.c.h.b16 %v3209
    %v5430 = vunpack.c.l.b16 %v3210
    %v5431 = vunpack.c.h.b16 %v3210
    %v5432 = vunpack.c.l.b16 %v3211
    %v5433 = vunpack.c.h.b16 %v3211
    %v5434 = vunpack.c.l.b16 %v3212
    %v5435 = vunpack.c.l.b16 %v3213
    %v5436 = vunpack.c.h.b16 %v3213
    %v5437 = vunpack.c.l.b16 %v3214
    %v5438 = vunpack.c.h.b16 %v3214
    %v5439 = vunpack.c.l.b16 %v3215
    %v5440 = vunpack.c.h.b16 %v3215
    %v5441 = vunpack.c.l.b16 %v3216
    %v5442 = vunpack.c.l.b16 %v3217
    %v5443 = vunpack.c.h.b16 %v3217
    %v5444 = vunpack.c.l.b16 %v3218
    %v5445 = vunpack.c.h.b16 %v3218
    %v5446 = vunpack.c.l.b16 %v3219
    %v5447 = vunpack.c.h.b16 %v3219
    %v5448 = vunpack.c.l.b16 %v3220
    %v5449 = vunpack.c.l.b16 %v3221
    %v5450 = vunpack.c.h.b16 %v3221
    %v5451 = vunpack.c.l.b16 %v3222
    %v5452 = vunpack.c.h.b16 %v3222
    %v5453 = vunpack.c.l.b16 %v3223
    %v5454 = vunpack.c.h.b16 %v3223
    %v5455 = vunpack.c.l.b16 %v3224
    %v5456 = vunpack.c.l.b16 %v3225
    %v5457 = vunpack.c.h.b16 %v3225
    %v5458 = vunpack.c.l.b16 %v3226
    %v5459 = vunpack.c.h.b16 %v3226
    %v5460 = vunpack.c.l.b16 %v3227
    %v5461 = vunpack.c.h.b16 %v3227
    %v5462 = vunpack.c.l.b16 %v3228
    %v5463 = vunpack.c.l.b16 %v3229
    %v5464 = vunpack.c.h.b16 %v3229
    %v5465 = vunpack.c.l.b16 %v3230
    %v5466 = vunpack.c.h.b16 %v3230
    %v5467 = vunpack.c.l.b16 %v3231
    %v5468 = vunpack.c.h.b16 %v3231
    %v5469 = vunpack.c.l.b16 %v3232
    %v5470 = vunpack.c.l.b16 %v3233
    %v5471 = vunpack.c.h.b16 %v3233
    %v5472 = vunpack.c.l.b16 %v3234
    %v5473 = vunpack.c.h.b16 %v3234
    %v5474 = vunpack.c.l.b16 %v3235
    %v5475 = vunpack.c.h.b16 %v3235
    %v5476 = vunpack.c.l.b16 %v3236
    %v5477 = vunpack.c.l.b16 %v3237
    %v5478 = vunpack.c.h.b16 %v3237
    %v5479 = vunpack.c.l.b16 %v3238
    %v5480 = vunpack.c.h.b16 %v3238
    %v5481 = vunpack.c.l.b16 %v3239
    %v5482 = vunpack.c.h.b16 %v3239
    %v5483 = vunpack.c.l.b16 %v3240
    %v5484 = vunpack.c.l.b16 %v3241
    %v5485 = vunpack.c.h.b16 %v3241
    %v5486 = vunpack.c.l.b16 %v3242
    %v5487 = vunpack.c.h.b16 %v3242
    %v5488 = vunpack.c.l.b16 %v3243
    %v5489 = vunpack.c.h.b16 %v3243
    %v5490 = vunpack.c.l.b16 %v3244
    %v5491 = vunpack.c.l.b16 %v3245
    %v5492 = vunpack.c.h.b16 %v3245
    %v5493 = vunpack.c.l.b16 %v3246
    %v5494 = vunpack.c.h.b16 %v3246
    %v5495 = vunpack.c.l.b16 %v3247
    %v5496 = vunpack.c.h.b16 %v3247
    %v5497 = vunpack.c.l.b16 %v3248
    %v5498 = vunpack.c.l.b16 %v3249
    %v5499 = vunpack.c.h.b16 %v3249
    %v5500 = vunpack.c.l.b16 %v3250
    %v5501 = vunpack.c.h.b16 %v3250
    %v5502 = vunpack.c.l.b16 %v3251
    %v5503 = vunpack.c.h.b16 %v3251
    %v5504 = vunpack.c.l.b16 %v3252
    %v5505 = vunpack.c.l.b16 %v3253
    %v5506 = vunpack.c.h.b16 %v3253
    %v5507 = vunpack.c.l.b16 %v3254
    %v5508 = vunpack.c.h.b16 %v3254
    %v5509 = vunpack.c.l.b16 %v3255
    %v5510 = vunpack.c.h.b16 %v3255
    %v5511 = vunpack.c.l.b16 %v3256
    %v5512 = vunpack.c.l.b16 %v3257
    %v5513 = vunpack.c.h.b16 %v3257
    %v5514 = vunpack.c.l.b16 %v3258
    %v5515 = vunpack.c.h.b16 %v3258
    %v5516 = vunpack.c.l.b16 %v3259
    %v5517 = vunpack.c.h.b16 %v3259
    %v5518 = vunpack.c.l.b16 %v3260
    %v5519 = vunpack.c.l.b16 %v3261
    %v5520 = vunpack.c.h.b16 %v3261
    %v5521 = vunpack.c.l.b16 %v3262
    %v5522 = vunpack.c.h.b16 %v3262
    %v5523 = vunpack.c.l.b16 %v3263
    %v5524 = vunpack.c.h.b16 %v3263
    %v5525 = vunpack.c.l.b16 %v3264
    %v5526 = vunpack.c.l.b16 %v3265
    %v5527 = vunpack.c.h.b16 %v3265
    %v5528 = vunpack.c.l.b16 %v3266
    %v5529 = vunpack.c.h.b16 %v3266
    %v5530 = vunpack.c.l.b16 %v3267
    %v5531 = vunpack.c.h.b16 %v3267
    %v5532 = vunpack.c.l.b16 %v3268
    %v5533 = vunpack.c.l.b16 %v3269
    %v5534 = vunpack.c.h.b16 %v3269
    %v5535 = vunpack.c.l.b16 %v3270
    %v5536 = vunpack.c.h.b16 %v3270
    %v5537 = vunpack.c.l.b16 %v3271
    %v5538 = vunpack.c.h.b16 %v3271
    %v5539 = vunpack.c.l.b16 %v3272
    %v5540 = vunpack.c.l.b16 %v3273
    %v5541 = vunpack.c.h.b16 %v3273
    %v5542 = vunpack.c.l.b16 %v3274
    %v5543 = vunpack.c.h.b16 %v3274
    %v5544 = vunpack.c.l.b16 %v3275
    %v5545 = vunpack.c.h.b16 %v3275
    %v5546 = vunpack.c.l.b16 %v3276
    %v5547 = vunpack.c.l.b16 %v3277
    %v5548 = vunpack.c.h.b16 %v3277
    %v5549 = vunpack.c.l.b16 %v3278
    %v5550 = vunpack.c.h.b16 %v3278
    %v5551 = vunpack.c.l.b16 %v3279
    %v5552 = vunpack.c.h.b16 %v3279
    %v5553 = vunpack.c.l.b16 %v3280
    %v5554 = vunpack.c.l.b16 %v3281
    %v5555 = vunpack.c.h.b16 %v3281
    %v5556 = vunpack.c.l.b16 %v3282
    %v5557 = vunpack.c.h.b16 %v3282
    %v5558 = vunpack.c.l.b16 %v3283
    %v5559 = vunpack.c.h.b16 %v3283
    %v5560 = vunpack.c.l.b16 %v3284
    %v5561 = vunpack.c.l.b16 %v3285
    %v5562 = vunpack.c.h.b16 %v3285
    %v5563 = vunpack.c.l.b16 %v3286
    %v5564 = vunpack.c.h.b16 %v3286
    %v5565 = vunpack.c.l.b16 %v3287
    %v5566 = vunpack.c.h.b16 %v3287
    %v5567 = vunpack.c.l.b16 %v3288
    %v5568 = vunpack.c.l.b16 %v3289
    %v5569 = vunpack.c.h.b16 %v3289
    %v5570 = vunpack.c.l.b16 %v3290
    %v5571 = vunpack.c.h.b16 %v3290
    %v5572 = vunpack.c.l.b16 %v3291
    %v5573 = vunpack.c.h.b16 %v3291
    %v5574 = vunpack.c.l.b16 %v3292
    %v5575 = vunpack.c.l.b16 %v3293
    %v5576 = vunpack.c.h.b16 %v3293
    %v5577 = vunpack.c.l.b16 %v3294
    %v5578 = vunpack.c.h.b16 %v3294
    %v5579 = vunpack.c.l.b16 %v3295
    %v5580 = vunpack.c.h.b16 %v3295
    %v5581 = vunpack.c.l.b16 %v3296
    %v5582 = vunpack.c.l.b16 %v3297
    %v5583 = vunpack.c.h.b16 %v3297
    %v5584 = vunpack.c.l.b16 %v3298
    %v5585 = vunpack.c.h.b16 %v3298
    %v5586 = vunpack.c.l.b16 %v3299
    %v5587 = vunpack.c.h.b16 %v3299
    %v5588 = vunpack.c.l.b16 %v3300
    %v5589 = vpack.c.b16 %v4140, %v4133
    %v5590 = vpack.c.b16 %v4141, %v4134
    %v5591 = vpack.c.b16 %v4142, %v4135
    %v5592 = vpack.c.b16 %v4143, %v4136
    %v5593 = vpack.c.b16 %v4144, %v4137
    %v5594 = vpack.c.b16 %v4145, %v4138
    %v5595 = vpack.c.b16 %v4146, %v4139
    %v5596 = vpack.c.b16 %v4154, %v4147
    %v5597 = vpack.c.b16 %v4155, %v4148
    %v5598 = vpack.c.b16 %v4156, %v4149
    %v5599 = vpack.c.b16 %v4157, %v4150
    %v5600 = vpack.c.b16 %v4158, %v4151
    %v5601 = vpack.c.b16 %v4159, %v4152
    %v5602 = vpack.c.b16 %v4160, %v4153
    %v5603 = vpack.c.b16 %v4168, %v4161
    %v5604 = vpack.c.b16 %v4169, %v4162
    %v5605 = vpack.c.b16 %v4170, %v4163
    %v5606 = vpack.c.b16 %v4171, %v4164
    %v5607 = vpack.c.b16 %v4172, %v4165
    %v5608 = vpack.c.b16 %v4173, %v4166
    %v5609 = vpack.c.b16 %v4174, %v4167
    %v5610 = vpack.c.b16 %v4182, %v4175
    %v5611 = vpack.c.b16 %v4183, %v4176
    %v5612 = vpack.c.b16 %v4184, %v4177
    %v5613 = vpack.c.b16 %v4185, %v4178
    %v5614 = vpack.c.b16 %v4186, %v4179
    %v5615 = vpack.c.b16 %v4187, %v4180
    %v5616 = vpack.c.b16 %v4188, %v4181
    %v5617 = vpack.c.b16 %v4196, %v4189
    %v5618 = vpack.c.b16 %v4197, %v4190
    %v5619 = vpack.c.b16 %v4198, %v4191
    %v5620 = vpack.c.b16 %v4199, %v4192
    %v5621 = vpack.c.b16 %v4200, %v4193
    %v5622 = vpack.c.b16 %v4201, %v4194
    %v5623 = vpack.c.b16 %v4202, %v4195
    %v5624 = vpack.c.b16 %v4210, %v4203
    %v5625 = vpack.c.b16 %v4211, %v4204
    %v5626 = vpack.c.b16 %v4212, %v4205
    %v5627 = vpack.c.b16 %v4213, %v4206
    %v5628 = vpack.c.b16 %v4214, %v4207
    %v5629 = vpack.c.b16 %v4215, %v4208
    %v5630 = vpack.c.b16 %v4216, %v4209
    %v5631 = vpack.c.b16 %v4224, %v4217
    %v5632 = vpack.c.b16 %v4225, %v4218
    %v5633 = vpack.c.b16 %v4226, %v4219
    %v5634 = vpack.c.b16 %v4227, %v4220
    %v5635 = vpack.c.b16 %v4228, %v4221
    %v5636 = vpack.c.b16 %v4229, %v4222
    %v5637 = vpack.c.b16 %v4230, %v4223
    %v5638 = vpack.c.b16 %v4238, %v4231
    %v5639 = vpack.c.b16 %v4239, %v4232
    %v5640 = vpack.c.b16 %v4240, %v4233
    %v5641 = vpack.c.b16 %v4241, %v4234
    %v5642 = vpack.c.b16 %v4242, %v4235
    %v5643 = vpack.c.b16 %v4243, %v4236
    %v5644 = vpack.c.b16 %v4244, %v4237
    %v5645 = vpack.c.b16 %v4252, %v4245
    %v5646 = vpack.c.b16 %v4253, %v4246
    %v5647 = vpack.c.b16 %v4254, %v4247
    %v5648 = vpack.c.b16 %v4255, %v4248
    %v5649 = vpack.c.b16 %v4256, %v4249
    %v5650 = vpack.c.b16 %v4257, %v4250
    %v5651 = vpack.c.b16 %v4258, %v4251
    %v5652 = vpack.c.b16 %v4266, %v4259
    %v5653 = vpack.c.b16 %v4267, %v4260
    %v5654 = vpack.c.b16 %v4268, %v4261
    %v5655 = vpack.c.b16 %v4269, %v4262
    %v5656 = vpack.c.b16 %v4270, %v4263
    %v5657 = vpack.c.b16 %v4271, %v4264
    %v5658 = vpack.c.b16 %v4272, %v4265
    %v5659 = vpack.c.b16 %v4280, %v4273
    %v5660 = vpack.c.b16 %v4281, %v4274
    %v5661 = vpack.c.b16 %v4282, %v4275
    %v5662 = vpack.c.b16 %v4283, %v4276
    %v5663 = vpack.c.b16 %v4284, %v4277
    %v5664 = vpack.c.b16 %v4285, %v4278
    %v5665 = vpack.c.b16 %v4286, %v4279
    %v5666 = vpack.c.b16 %v4294, %v4287
    %v5667 = vpack.c.b16 %v4295, %v4288
    %v5668 = vpack.c.b16 %v4296, %v4289
    %v5669 = vpack.c.b16 %v4297, %v4290
    %v5670 = vpack.c.b16 %v4298, %v4291
    %v5671 = vpack.c.b16 %v4299, %v4292
    %v5672 = vpack.c.b16 %v4300, %v4293
    %v5673 = vpack.c.b16 %v4308, %v4301
    %v5674 = vpack.c.b16 %v4309, %v4302
    %v5675 = vpack.c.b16 %v4310, %v4303
    %v5676 = vpack.c.b16 %v4311, %v4304
    %v5677 = vpack.c.b16 %v4312, %v4305
    %v5678 = vpack.c.b16 %v4313, %v4306
    %v5679 = vpack.c.b16 %v4314, %v4307
    %v5680 = vpack.c.b16 %v4322, %v4315
    %v5681 = vpack.c.b16 %v4323, %v4316
    %v5682 = vpack.c.b16 %v4324, %v4317
    %v5683 = vpack.c.b16 %v4325, %v4318
    %v5684 = vpack.c.b16 %v4326, %v4319
    %v5685 = vpack.c.b16 %v4327, %v4320
    %v5686 = vpack.c.b16 %v4328, %v4321
    %v5687 = vpack.c.b16 %v4336, %v4329
    %v5688 = vpack.c.b16 %v4337, %v4330
    %v5689 = vpack.c.b16 %v4338, %v4331
    %v5690 = vpack.c.b16 %v4339, %v4332
    %v5691 = vpack.c.b16 %v4340, %v4333
    %v5692 = vpack.c.b16 %v4341, %v4334
    %v5693 = vpack.c.b16 %v4342, %v4335
    %v5694 = vpack.c.b16 %v4350, %v4343
    %v5695 = vpack.c.b16 %v4351, %v4344
    %v5696 = vpack.c.b16 %v4352, %v4345
    %v5697 = vpack.c.b16 %v4353, %v4346
    %v5698 = vpack.c.b16 %v4354, %v4347
    %v5699 = vpack.c.b16 %v4355, %v4348
    %v5700 = vpack.c.b16 %v4356, %v4349
    %v5701 = vpack.c.b16 %v4364, %v4357
    %v5702 = vpack.c.b16 %v4365, %v4358
    %v5703 = vpack.c.b16 %v4366, %v4359
    %v5704 = vpack.c.b16 %v4367, %v4360
    %v5705 = vpack.c.b16 %v4368, %v4361
    %v5706 = vpack.c.b16 %v4369, %v4362
    %v5707 = vpack.c.b16 %v4370, %v4363
    %v5708 = vpack.c.b16 %v4378, %v4371
    %v5709 = vpack.c.b16 %v4379, %v4372
    %v5710 = vpack.c.b16 %v4380, %v4373
    %v5711 = vpack.c.b16 %v4381, %v4374
    %v5712 = vpack.c.b16 %v4382, %v4375
    %v5713 = vpack.c.b16 %v4383, %v4376
    %v5714 = vpack.c.b16 %v4384, %v4377
    %v5715 = vpack.c.b16 %v4392, %v4385
    %v5716 = vpack.c.b16 %v4393, %v4386
    %v5717 = vpack.c.b16 %v4394, %v4387
    %v5718 = vpack.c.b16 %v4395, %v4388
    %v5719 = vpack.c.b16 %v4396, %v4389
    %v5720 = vpack.c.b16 %v4397, %v4390
    %v5721 = vpack.c.b16 %v4398, %v4391
    %v5722 = vpack.c.b16 %v4406, %v4399
    %v5723 = vpack.c.b16 %v4407, %v4400
    %v5724 = vpack.c.b16 %v4408, %v4401
    %v5725 = vpack.c.b16 %v4409, %v4402
    %v5726 = vpack.c.b16 %v4410, %v4403
    %v5727 = vpack.c.b16 %v4411, %v4404
    %v5728 = vpack.c.b16 %v4412, %v4405
    %v5729 = vpack.c.b16 %v4420, %v4413
    %v5730 = vpack.c.b16 %v4421, %v4414
    %v5731 = vpack.c.b16 %v4422, %v4415
    %v5732 = vpack.c.b16 %v4423, %v4416
    %v5733 = vpack.c.b16 %v4424, %v4417
    %v5734 = vpack.c.b16 %v4425, %v4418
    %v5735 = vpack.c.b16 %v4426, %v4419
    %v5736 = vpack.c.b16 %v4434, %v4427
    %v5737 = vpack.c.b16 %v4435, %v4428
    %v5738 = vpack.c.b16 %v4436, %v4429
    %v5739 = vpack.c.b16 %v4437, %v4430
    %v5740 = vpack.c.b16 %v4438, %v4431
    %v5741 = vpack.c.b16 %v4439, %v4432
    %v5742 = vpack.c.b16 %v4440, %v4433
    %v5743 = vpack.c.b16 %v4448, %v4441
    %v5744 = vpack.c.b16 %v4449, %v4442
    %v5745 = vpack.c.b16 %v4450, %v4443
    %v5746 = vpack.c.b16 %v4451, %v4444
    %v5747 = vpack.c.b16 %v4452, %v4445
    %v5748 = vpack.c.b16 %v4453, %v4446
    %v5749 = vpack.c.b16 %v4454, %v4447
    %v5750 = vpack.c.b16 %v4462, %v4455
    %v5751 = vpack.c.b16 %v4463, %v4456
    %v5752 = vpack.c.b16 %v4464, %v4457
    %v5753 = vpack.c.b16 %v4465, %v4458
    %v5754 = vpack.c.b16 %v4466, %v4459
    %v5755 = vpack.c.b16 %v4467, %v4460
    %v5756 = vpack.c.b16 %v4468, %v4461
    %v5757 = vpack.c.b16 %v4476, %v4469
    %v5758 = vpack.c.b16 %v4477, %v4470
    %v5759 = vpack.c.b16 %v4478, %v4471
    %v5760 = vpack.c.b16 %v4479, %v4472
    %v5761 = vpack.c.b16 %v4480, %v4473
    %v5762 = vpack.c.b16 %v4481, %v4474
    %v5763 = vpack.c.b16 %v4482, %v4475
    %v5764 = vpack.c.b16 %v4490, %v4483
    %v5765 = vpack.c.b16 %v4491, %v4484
    %v5766 = vpack.c.b16 %v4492, %v4485
    %v5767 = vpack.c.b16 %v4493, %v4486
    %v5768 = vpack.c.b16 %v4494, %v4487
    %v5769 = vpack.c.b16 %v4495, %v4488
    %v5770 = vpack.c.b16 %v4496, %v4489
    %v5771 = vpack.c.b16 %v4504, %v4497
    %v5772 = vpack.c.b16 %v4505, %v4498
    %v5773 = vpack.c.b16 %v4506, %v4499
    %v5774 = vpack.c.b16 %v4507, %v4500
    %v5775 = vpack.c.b16 %v4508, %v4501
    %v5776 = vpack.c.b16 %v4509, %v4502
    %v5777 = vpack.c.b16 %v4510, %v4503
    %v5778 = vpack.c.b16 %v4518, %v4511
    %v5779 = vpack.c.b16 %v4519, %v4512
    %v5780 = vpack.c.b16 %v4520, %v4513
    %v5781 = vpack.c.b16 %v4521, %v4514
    %v5782 = vpack.c.b16 %v4522, %v4515
    %v5783 = vpack.c.b16 %v4523, %v4516
    %v5784 = vpack.c.b16 %v4524, %v4517
    %v5785 = vpack.c.b16 %v4532, %v4525
    %v5786 = vpack.c.b16 %v4533, %v4526
    %v5787 = vpack.c.b16 %v4534, %v4527
    %v5788 = vpack.c.b16 %v4535, %v4528
    %v5789 = vpack.c.b16 %v4536, %v4529
    %v5790 = vpack.c.b16 %v4537, %v4530
    %v5791 = vpack.c.b16 %v4538, %v4531
    %v5792 = vpack.c.b16 %v4546, %v4539
    %v5793 = vpack.c.b16 %v4547, %v4540
    %v5794 = vpack.c.b16 %v4548, %v4541
    %v5795 = vpack.c.b16 %v4549, %v4542
    %v5796 = vpack.c.b16 %v4550, %v4543
    %v5797 = vpack.c.b16 %v4551, %v4544
    %v5798 = vpack.c.b16 %v4552, %v4545
    %v5799 = vpack.c.b16 %v4560, %v4553
    %v5800 = vpack.c.b16 %v4561, %v4554
    %v5801 = vpack.c.b16 %v4562, %v4555
    %v5802 = vpack.c.b16 %v4563, %v4556
    %v5803 = vpack.c.b16 %v4564, %v4557
    %v5804 = vpack.c.b16 %v4565, %v4558
    %v5805 = vpack.c.b16 %v4566, %v4559
    %v5806 = vpack.c.b16 %v4574, %v4567
    %v5807 = vpack.c.b16 %v4575, %v4568
    %v5808 = vpack.c.b16 %v4576, %v4569
    %v5809 = vpack.c.b16 %v4577, %v4570
    %v5810 = vpack.c.b16 %v4578, %v4571
    %v5811 = vpack.c.b16 %v4579, %v4572
    %v5812 = vpack.c.b16 %v4580, %v4573
    %v5813 = vpack.c.b16 %v4588, %v4581
    %v5814 = vpack.c.b16 %v4589, %v4582
    %v5815 = vpack.c.b16 %v4590, %v4583
    %v5816 = vpack.c.b16 %v4591, %v4584
    %v5817 = vpack.c.b16 %v4592, %v4585
    %v5818 = vpack.c.b16 %v4593, %v4586
    %v5819 = vpack.c.b16 %v4594, %v4587
    %v5820 = vpack.c.b16 %v4602, %v4595
    %v5821 = vpack.c.b16 %v4603, %v4596
    %v5822 = vpack.c.b16 %v4604, %v4597
    %v5823 = vpack.c.b16 %v4605, %v4598
    %v5824 = vpack.c.b16 %v4606, %v4599
    %v5825 = vpack.c.b16 %v4607, %v4600
    %v5826 = vpack.c.b16 %v4608, %v4601
    %v5827 = vpack.c.b16 %v4616, %v4609
    %v5828 = vpack.c.b16 %v4617, %v4610
    %v5829 = vpack.c.b16 %v4618, %v4611
    %v5830 = vpack.c.b16 %v4619, %v4612
    %v5831 = vpack.c.b16 %v4620, %v4613
    %v5832 = vpack.c.b16 %v4621, %v4614
    %v5833 = vpack.c.b16 %v4622, %v4615
    %v5834 = vpack.c.b16 %v4630, %v4623
    %v5835 = vpack.c.b16 %v4631, %v4624
    %v5836 = vpack.c.b16 %v4632, %v4625
    %v5837 = vpack.c.b16 %v4633, %v4626
    %v5838 = vpack.c.b16 %v4634, %v4627
    %v5839 = vpack.c.b16 %v4635, %v4628
    %v5840 = vpack.c.b16 %v4636, %v4629
    %v5841 = vpack.c.b16 %v4644, %v4637
    %v5842 = vpack.c.b16 %v4645, %v4638
    %v5843 = vpack.c.b16 %v4646, %v4639
    %v5844 = vpack.c.b16 %v4647, %v4640
    %v5845 = vpack.c.b16 %v4648, %v4641
    %v5846 = vpack.c.b16 %v4649, %v4642
    %v5847 = vpack.c.b16 %v4650, %v4643
    %v5848 = vpack.c.b16 %v4658, %v4651
    %v5849 = vpack.c.b16 %v4659, %v4652
    %v5850 = vpack.c.b16 %v4660, %v4653
    %v5851 = vpack.c.b16 %v4661, %v4654
    %v5852 = vpack.c.b16 %v4662, %v4655
    %v5853 = vpack.c.b16 %v4663, %v4656
    %v5854 = vpack.c.b16 %v4664, %v4657
    %v5855 = vpack.c.b16 %v4672, %v4665
    %v5856 = vpack.c.b16 %v4673, %v4666
    %v5857 = vpack.c.b16 %v4674, %v4667
    %v5858 = vpack.c.b16 %v4675, %v4668
    %v5859 = vpack.c.b16 %v4676, %v4669
    %v5860 = vpack.c.b16 %v4677, %v4670
    %v5861 = vpack.c.b16 %v4678, %v4671
    %v5862 = vpack.c.b16 %v4686, %v4679
    %v5863 = vpack.c.b16 %v4687, %v4680
    %v5864 = vpack.c.b16 %v4688, %v4681
    %v5865 = vpack.c.b16 %v4689, %v4682
    %v5866 = vpack.c.b16 %v4690, %v4683
    %v5867 = vpack.c.b16 %v4691, %v4684
    %v5868 = vpack.c.b16 %v4692, %v4685
    %v5869 = vpack.c.b16 %v4700, %v4693
    %v5870 = vpack.c.b16 %v4701, %v4694
    %v5871 = vpack.c.b16 %v4702, %v4695
    %v5872 = vpack.c.b16 %v4703, %v4696
    %v5873 = vpack.c.b16 %v4704, %v4697
    %v5874 = vpack.c.b16 %v4705, %v4698
    %v5875 = vpack.c.b16 %v4706, %v4699
    %v5876 = vpack.c.b16 %v4714, %v4707
    %v5877 = vpack.c.b16 %v4715, %v4708
    %v5878 = vpack.c.b16 %v4716, %v4709
    %v5879 = vpack.c.b16 %v4717, %v4710
    %v5880 = vpack.c.b16 %v4718, %v4711
    %v5881 = vpack.c.b16 %v4719, %v4712
    %v5882 = vpack.c.b16 %v4720, %v4713
    %v5883 = vpack.c.b16 %v4728, %v4721
    %v5884 = vpack.c.b16 %v4729, %v4722
    %v5885 = vpack.c.b16 %v4730, %v4723
    %v5886 = vpack.c.b16 %v4731, %v4724
    %v5887 = vpack.c.b16 %v4732, %v4725
    %v5888 = vpack.c.b16 %v4733, %v4726
    %v5889 = vpack.c.b16 %v4734, %v4727
    %v5890 = vpack.c.b16 %v4742, %v4735
    %v5891 = vpack.c.b16 %v4743, %v4736
    %v5892 = vpack.c.b16 %v4744, %v4737
    %v5893 = vpack.c.b16 %v4745, %v4738
    %v5894 = vpack.c.b16 %v4746, %v4739
    %v5895 = vpack.c.b16 %v4747, %v4740
    %v5896 = vpack.c.b16 %v4748, %v4741
    %v5897 = vpack.c.b16 %v4756, %v4749
    %v5898 = vpack.c.b16 %v4757, %v4750
    %v5899 = vpack.c.b16 %v4758, %v4751
    %v5900 = vpack.c.b16 %v4759, %v4752
    %v5901 = vpack.c.b16 %v4760, %v4753
    %v5902 = vpack.c.b16 %v4761, %v4754
    %v5903 = vpack.c.b16 %v4762, %v4755
    %v5904 = vpack.c.b16 %v4770, %v4763
    %v5905 = vpack.c.b16 %v4771, %v4764
    %v5906 = vpack.c.b16 %v4772, %v4765
    %v5907 = vpack.c.b16 %v4773, %v4766
    %v5908 = vpack.c.b16 %v4774, %v4767
    %v5909 = vpack.c.b16 %v4775, %v4768
    %v5910 = vpack.c.b16 %v4776, %v4769
    %v5911 = vpack.c.b16 %v4784, %v4777
    %v5912 = vpack.c.b16 %v4785, %v4778
    %v5913 = vpack.c.b16 %v4786, %v4779
    %v5914 = vpack.c.b16 %v4787, %v4780
    %v5915 = vpack.c.b16 %v4788, %v4781
    %v5916 = vpack.c.b16 %v4789, %v4782
    %v5917 = vpack.c.b16 %v4790, %v4783
    %v5918 = vpack.c.b16 %v4798, %v4791
    %v5919 = vpack.c.b16 %v4799, %v4792
    %v5920 = vpack.c.b16 %v4800, %v4793
    %v5921 = vpack.c.b16 %v4801, %v4794
    %v5922 = vpack.c.b16 %v4802, %v4795
    %v5923 = vpack.c.b16 %v4803, %v4796
    %v5924 = vpack.c.b16 %v4804, %v4797
    %v5925 = vpack.c.b16 %v4812, %v4805
    %v5926 = vpack.c.b16 %v4813, %v4806
    %v5927 = vpack.c.b16 %v4814, %v4807
    %v5928 = vpack.c.b16 %v4815, %v4808
    %v5929 = vpack.c.b16 %v4816, %v4809
    %v5930 = vpack.c.b16 %v4817, %v4810
    %v5931 = vpack.c.b16 %v4818, %v4811
    %v5932 = vpack.c.b16 %v4826, %v4819
    %v5933 = vpack.c.b16 %v4827, %v4820
    %v5934 = vpack.c.b16 %v4828, %v4821
    %v5935 = vpack.c.b16 %v4829, %v4822
    %v5936 = vpack.c.b16 %v4830, %v4823
    %v5937 = vpack.c.b16 %v4831, %v4824
    %v5938 = vpack.c.b16 %v4832, %v4825
    %v5939 = vpack.c.b16 %v4840, %v4833
    %v5940 = vpack.c.b16 %v4841, %v4834
    %v5941 = vpack.c.b16 %v4842, %v4835
    %v5942 = vpack.c.b16 %v4843, %v4836
    %v5943 = vpack.c.b16 %v4844, %v4837
    %v5944 = vpack.c.b16 %v4845, %v4838
    %v5945 = vpack.c.b16 %v4846, %v4839
    %v5946 = vpack.c.b16 %v4854, %v4847
    %v5947 = vpack.c.b16 %v4855, %v4848
    %v5948 = vpack.c.b16 %v4856, %v4849
    %v5949 = vpack.c.b16 %v4857, %v4850
    %v5950 = vpack.c.b16 %v4858, %v4851
    %v5951 = vpack.c.b16 %v4859, %v4852
    %v5952 = vpack.c.b16 %v4860, %v4853
    %v5953 = vpack.c.b16 %v4868, %v4861
    %v5954 = vpack.c.b16 %v4869, %v4862
    %v5955 = vpack.c.b16 %v4870, %v4863
    %v5956 = vpack.c.b16 %v4871, %v4864
    %v5957 = vpack.c.b16 %v4872, %v4865
    %v5958 = vpack.c.b16 %v4873, %v4866
    %v5959 = vpack.c.b16 %v4874, %v4867
    %v5960 = vpack.c.b16 %v4882, %v4875
    %v5961 = vpack.c.b16 %v4883, %v4876
    %v5962 = vpack.c.b16 %v4884, %v4877
    %v5963 = vpack.c.b16 %v4885, %v4878
    %v5964 = vpack.c.b16 %v4886, %v4879
    %v5965 = vpack.c.b16 %v4887, %v4880
    %v5966 = vpack.c.b16 %v4888, %v4881
    %v5967 = vpack.c.b16 %v4896, %v4889
    %v5968 = vpack.c.b16 %v4897, %v4890
    %v5969 = vpack.c.b16 %v4898, %v4891
    %v5970 = vpack.c.b16 %v4899, %v4892
    %v5971 = vpack.c.b16 %v4900, %v4893
    %v5972 = vpack.c.b16 %v4901, %v4894
    %v5973 = vpack.c.b16 %v4902, %v4895
    %v5974 = vpack.c.b16 %v4910, %v4903
    %v5975 = vpack.c.b16 %v4911, %v4904
    %v5976 = vpack.c.b16 %v4912, %v4905
    %v5977 = vpack.c.b16 %v4913, %v4906
    %v5978 = vpack.c.b16 %v4914, %v4907
    %v5979 = vpack.c.b16 %v4915, %v4908
    %v5980 = vpack.c.b16 %v4916, %v4909
    %v5981 = vpack.c.b16 %v4924, %v4917
    %v5982 = vpack.c.b16 %v4925, %v4918
    %v5983 = vpack.c.b16 %v4926, %v4919
    %v5984 = vpack.c.b16 %v4927, %v4920
    %v5985 = vpack.c.b16 %v4928, %v4921
    %v5986 = vpack.c.b16 %v4929, %v4922
    %v5987 = vpack.c.b16 %v4930, %v4923
    %v5988 = vpack.c.b16 %v4938, %v4931
    %v5989 = vpack.c.b16 %v4939, %v4932
    %v5990 = vpack.c.b16 %v4940, %v4933
    %v5991 = vpack.c.b16 %v4941, %v4934
    %v5992 = vpack.c.b16 %v4942, %v4935
    %v5993 = vpack.c.b16 %v4943, %v4936
    %v5994 = vpack.c.b16 %v4944, %v4937
    %v5995 = vpack.c.b16 %v4952, %v4945
    %v5996 = vpack.c.b16 %v4953, %v4946
    %v5997 = vpack.c.b16 %v4954, %v4947
    %v5998 = vpack.c.b16 %v4955, %v4948
    %v5999 = vpack.c.b16 %v4956, %v4949
    %v6000 = vpack.c.b16 %v4957, %v4950
    %v6001 = vpack.c.b16 %v4958, %v4951
    %v6002 = vpack.c.b16 %v4966, %v4959
    %v6003 = vpack.c.b16 %v4967, %v4960
    %v6004 = vpack.c.b16 %v4968, %v4961
    %v6005 = vpack.c.b16 %v4969, %v4962
    %v6006 = vpack.c.b16 %v4970, %v4963
    %v6007 = vpack.c.b16 %v4971, %v4964
    %v6008 = vpack.c.b16 %v4972, %v4965
    %v6009 = vpack.c.b16 %v4980, %v4973
    %v6010 = vpack.c.b16 %v4981, %v4974
    %v6011 = vpack.c.b16 %v4982, %v4975
    %v6012 = vpack.c.b16 %v4983, %v4976
    %v6013 = vpack.c.b16 %v4984, %v4977
    %v6014 = vpack.c.b16 %v4985, %v4978
    %v6015 = vpack.c.b16 %v4986, %v4979
    %v6016 = vpack.c.b16 %v4994, %v4987
    %v6017 = vpack.c.b16 %v4995, %v4988
    %v6018 = vpack.c.b16 %v4996, %v4989
    %v6019 = vpack.c.b16 %v4997, %v4990
    %v6020 = vpack.c.b16 %v4998, %v4991
    %v6021 = vpack.c.b16 %v4999, %v4992
    %v6022 = vpack.c.b16 %v5000, %v4993
    %v6023 = vpack.c.b16 %v5008, %v5001
    %v6024 = vpack.c.b16 %v5009, %v5002
    %v6025 = vpack.c.b16 %v5010, %v5003
    %v6026 = vpack.c.b16 %v5011, %v5004
    %v6027 = vpack.c.b16 %v5012, %v5005
    %v6028 = vpack.c.b16 %v5013, %v5006
    %v6029 = vpack.c.b16 %v5014, %v5007
    %v6030 = vpack.c.b16 %v5022, %v5015
    %v6031 = vpack.c.b16 %v5023, %v5016
    %v6032 = vpack.c.b16 %v5024, %v5017
    %v6033 = vpack.c.b16 %v5025, %v5018
    %v6034 = vpack.c.b16 %v5026, %v5019
    %v6035 = vpack.c.b16 %v5027, %v5020
    %v6036 = vpack.c.b16 %v5028, %v5021
    %v6037 = vpack.c.b16 %v5036, %v5029
    %v6038 = vpack.c.b16 %v5037, %v5030
    %v6039 = vpack.c.b16 %v5038, %v5031
    %v6040 = vpack.c.b16 %v5039, %v5032
    %v6041 = vpack.c.b16 %v5040, %v5033
    %v6042 = vpack.c.b16 %v5041, %v5034
    %v6043 = vpack.c.b16 %v5042, %v5035
    %v6044 = vpack.c.b16 %v5050, %v5043
    %v6045 = vpack.c.b16 %v5051, %v5044
    %v6046 = vpack.c.b16 %v5052, %v5045
    %v6047 = vpack.c.b16 %v5053, %v5046
    %v6048 = vpack.c.b16 %v5054, %v5047
    %v6049 = vpack.c.b16 %v5055, %v5048
    %v6050 = vpack.c.b16 %v5056, %v5049
    %v6051 = vpack.c.b16 %v5064, %v5057
    %v6052 = vpack.c.b16 %v5065, %v5058
    %v6053 = vpack.c.b16 %v5066, %v5059
    %v6054 = vpack.c.b16 %v5067, %v5060
    %v6055 = vpack.c.b16 %v5068, %v5061
    %v6056 = vpack.c.b16 %v5069, %v5062
    %v6057 = vpack.c.b16 %v5070, %v5063
    %v6058 = vpack.c.b16 %v5078, %v5071
    %v6059 = vpack.c.b16 %v5079, %v5072
    %v6060 = vpack.c.b16 %v5080, %v5073
    %v6061 = vpack.c.b16 %v5081, %v5074
    %v6062 = vpack.c.b16 %v5082, %v5075
    %v6063 = vpack.c.b16 %v5083, %v5076
    %v6064 = vpack.c.b16 %v5084, %v5077
    %v6065 = vpack.c.b16 %v5092, %v5085
    %v6066 = vpack.c.b16 %v5093, %v5086
    %v6067 = vpack.c.b16 %v5094, %v5087
    %v6068 = vpack.c.b16 %v5095, %v5088
    %v6069 = vpack.c.b16 %v5096, %v5089
    %v6070 = vpack.c.b16 %v5097, %v5090
    %v6071 = vpack.c.b16 %v5098, %v5091
    %v6072 = vpack.c.b16 %v5106, %v5099
    %v6073 = vpack.c.b16 %v5107, %v5100
    %v6074 = vpack.c.b16 %v5108, %v5101
    %v6075 = vpack.c.b16 %v5109, %v5102
    %v6076 = vpack.c.b16 %v5110, %v5103
    %v6077 = vpack.c.b16 %v5111, %v5104
    %v6078 = vpack.c.b16 %v5112, %v5105
    %v6079 = vpack.c.b16 %v5120, %v5113
    %v6080 = vpack.c.b16 %v5121, %v5114
    %v6081 = vpack.c.b16 %v5122, %v5115
    %v6082 = vpack.c.b16 %v5123, %v5116
    %v6083 = vpack.c.b16 %v5124, %v5117
    %v6084 = vpack.c.b16 %v5125, %v5118
    %v6085 = vpack.c.b16 %v5126, %v5119
    %v6086 = vpack.c.b16 %v5134, %v5127
    %v6087 = vpack.c.b16 %v5135, %v5128
    %v6088 = vpack.c.b16 %v5136, %v5129
    %v6089 = vpack.c.b16 %v5137, %v5130
    %v6090 = vpack.c.b16 %v5138, %v5131
    %v6091 = vpack.c.b16 %v5139, %v5132
    %v6092 = vpack.c.b16 %v5140, %v5133
    %v6093 = vpack.c.b16 %v5148, %v5141
    %v6094 = vpack.c.b16 %v5149, %v5142
    %v6095 = vpack.c.b16 %v5150, %v5143
    %v6096 = vpack.c.b16 %v5151, %v5144
    %v6097 = vpack.c.b16 %v5152, %v5145
    %v6098 = vpack.c.b16 %v5153, %v5146
    %v6099 = vpack.c.b16 %v5154, %v5147
    %v6100 = vpack.c.b16 %v5162, %v5155
    %v6101 = vpack.c.b16 %v5163, %v5156
    %v6102 = vpack.c.b16 %v5164, %v5157
    %v6103 = vpack.c.b16 %v5165, %v5158
    %v6104 = vpack.c.b16 %v5166, %v5159
    %v6105 = vpack.c.b16 %v5167, %v5160
    %v6106 = vpack.c.b16 %v5168, %v5161
    %v6107 = vpack.c.b16 %v5176, %v5169
    %v6108 = vpack.c.b16 %v5177, %v5170
    %v6109 = vpack.c.b16 %v5178, %v5171
    %v6110 = vpack.c.b16 %v5179, %v5172
    %v6111 = vpack.c.b16 %v5180, %v5173
    %v6112 = vpack.c.b16 %v5181, %v5174
    %v6113 = vpack.c.b16 %v5182, %v5175
    %v6114 = vpack.c.b16 %v5190, %v5183
    %v6115 = vpack.c.b16 %v5191, %v5184
    %v6116 = vpack.c.b16 %v5192, %v5185
    %v6117 = vpack.c.b16 %v5193, %v5186
    %v6118 = vpack.c.b16 %v5194, %v5187
    %v6119 = vpack.c.b16 %v5195, %v5188
    %v6120 = vpack.c.b16 %v5196, %v5189
    %v6121 = vpack.c.b16 %v5204, %v5197
    %v6122 = vpack.c.b16 %v5205, %v5198
    %v6123 = vpack.c.b16 %v5206, %v5199
    %v6124 = vpack.c.b16 %v5207, %v5200
    %v6125 = vpack.c.b16 %v5208, %v5201
    %v6126 = vpack.c.b16 %v5209, %v5202
    %v6127 = vpack.c.b16 %v5210, %v5203
    %v6128 = vpack.c.b16 %v5218, %v5211
    %v6129 = vpack.c.b16 %v5219, %v5212
    %v6130 = vpack.c.b16 %v5220, %v5213
    %v6131 = vpack.c.b16 %v5221, %v5214
    %v6132 = vpack.c.b16 %v5222, %v5215
    %v6133 = vpack.c.b16 %v5223, %v5216
    %v6134 = vpack.c.b16 %v5224, %v5217
    %v6135 = vpack.c.b16 %v5232, %v5225
    %v6136 = vpack.c.b16 %v5233, %v5226
    %v6137 = vpack.c.b16 %v5234, %v5227
    %v6138 = vpack.c.b16 %v5235, %v5228
    %v6139 = vpack.c.b16 %v5236, %v5229
    %v6140 = vpack.c.b16 %v5237, %v5230
    %v6141 = vpack.c.b16 %v5238, %v5231
    %v6142 = vpack.c.b16 %v5246, %v5239
    %v6143 = vpack.c.b16 %v5247, %v5240
    %v6144 = vpack.c.b16 %v5248, %v5241
    %v6145 = vpack.c.b16 %v5249, %v5242
    %v6146 = vpack.c.b16 %v5250, %v5243
    %v6147 = vpack.c.b16 %v5251, %v5244
    %v6148 = vpack.c.b16 %v5252, %v5245
    %v6149 = vpack.c.b16 %v5260, %v5253
    %v6150 = vpack.c.b16 %v5261, %v5254
    %v6151 = vpack.c.b16 %v5262, %v5255
    %v6152 = vpack.c.b16 %v5263, %v5256
    %v6153 = vpack.c.b16 %v5264, %v5257
    %v6154 = vpack.c.b16 %v5265, %v5258
    %v6155 = vpack.c.b16 %v5266, %v5259
    %v6156 = vpack.c.b16 %v5274, %v5267
    %v6157 = vpack.c.b16 %v5275, %v5268
    %v6158 = vpack.c.b16 %v5276, %v5269
    %v6159 = vpack.c.b16 %v5277, %v5270
    %v6160 = vpack.c.b16 %v5278, %v5271
    %v6161 = vpack.c.b16 %v5279, %v5272
    %v6162 = vpack.c.b16 %v5280, %v5273
    %v6163 = vpack.c.b16 %v5288, %v5281
    %v6164 = vpack.c.b16 %v5289, %v5282
    %v6165 = vpack.c.b16 %v5290, %v5283
    %v6166 = vpack.c.b16 %v5291, %v5284
    %v6167 = vpack.c.b16 %v5292, %v5285
    %v6168 = vpack.c.b16 %v5293, %v5286
    %v6169 = vpack.c.b16 %v5294, %v5287
    %v6170 = vpack.c.b16 %v5302, %v5295
    %v6171 = vpack.c.b16 %v5303, %v5296
    %v6172 = vpack.c.b16 %v5304, %v5297
    %v6173 = vpack.c.b16 %v5305, %v5298
    %v6174 = vpack.c.b16 %v5306, %v5299
    %v6175 = vpack.c.b16 %v5307, %v5300
    %v6176 = vpack.c.b16 %v5308, %v5301
    %v6177 = vpack.c.b16 %v5316, %v5309
    %v6178 = vpack.c.b16 %v5317, %v5310
    %v6179 = vpack.c.b16 %v5318, %v5311
    %v6180 = vpack.c.b16 %v5319, %v5312
    %v6181 = vpack.c.b16 %v5320, %v5313
    %v6182 = vpack.c.b16 %v5321, %v5314
    %v6183 = vpack.c.b16 %v5322, %v5315
    %v6184 = vpack.c.b16 %v5330, %v5323
    %v6185 = vpack.c.b16 %v5331, %v5324
    %v6186 = vpack.c.b16 %v5332, %v5325
    %v6187 = vpack.c.b16 %v5333, %v5326
    %v6188 = vpack.c.b16 %v5334, %v5327
    %v6189 = vpack.c.b16 %v5335, %v5328
    %v6190 = vpack.c.b16 %v5336, %v5329
    %v6191 = vpack.c.b16 %v5344, %v5337
    %v6192 = vpack.c.b16 %v5345, %v5338
    %v6193 = vpack.c.b16 %v5346, %v5339
    %v6194 = vpack.c.b16 %v5347, %v5340
    %v6195 = vpack.c.b16 %v5348, %v5341
    %v6196 = vpack.c.b16 %v5349, %v5342
    %v6197 = vpack.c.b16 %v5350, %v5343
    %v6198 = vpack.c.b16 %v5358, %v5351
    %v6199 = vpack.c.b16 %v5359, %v5352
    %v6200 = vpack.c.b16 %v5360, %v5353
    %v6201 = vpack.c.b16 %v5361, %v5354
    %v6202 = vpack.c.b16 %v5362, %v5355
    %v6203 = vpack.c.b16 %v5363, %v5356
    %v6204 = vpack.c.b16 %v5364, %v5357
    %v6205 = vpack.c.b16 %v5372, %v5365
    %v6206 = vpack.c.b16 %v5373, %v5366
    %v6207 = vpack.c.b16 %v5374, %v5367
    %v6208 = vpack.c.b16 %v5375, %v5368
    %v6209 = vpack.c.b16 %v5376, %v5369
    %v6210 = vpack.c.b16 %v5377, %v5370
    %v6211 = vpack.c.b16 %v5378, %v5371
    %v6212 = vpack.c.b16 %v5386, %v5379
    %v6213 = vpack.c.b16 %v5387, %v5380
    %v6214 = vpack.c.b16 %v5388, %v5381
    %v6215 = vpack.c.b16 %v5389, %v5382
    %v6216 = vpack.c.b16 %v5390, %v5383
    %v6217 = vpack.c.b16 %v5391, %v5384
    %v6218 = vpack.c.b16 %v5392, %v5385
    %v6219 = vpack.c.b16 %v5400, %v5393
    %v6220 = vpack.c.b16 %v5401, %v5394
    %v6221 = vpack.c.b16 %v5402, %v5395
    %v6222 = vpack.c.b16 %v5403, %v5396
    %v6223 = vpack.c.b16 %v5404, %v5397
    %v6224 = vpack.c.b16 %v5405, %v5398
    %v6225 = vpack.c.b16 %v5406, %v5399
    %v6226 = vpack.c.b16 %v5414, %v5407
    %v6227 = vpack.c.b16 %v5415, %v5408
    %v6228 = vpack.c.b16 %v5416, %v5409
    %v6229 = vpack.c.b16 %v5417, %v5410
    %v6230 = vpack.c.b16 %v5418, %v5411
    %v6231 = vpack.c.b16 %v5419, %v5412
    %v6232 = vpack.c.b16 %v5420, %v5413
    %v6233 = vpack.c.b16 %v5428, %v5421
    %v6234 = vpack.c.b16 %v5429, %v5422
    %v6235 = vpack.c.b16 %v5430, %v5423
    %v6236 = vpack.c.b16 %v5431, %v5424
    %v6237 = vpack.c.b16 %v5432, %v5425
    %v6238 = vpack.c.b16 %v5433, %v5426
    %v6239 = vpack.c.b16 %v5434, %v5427
    %v6240 = vpack.c.b16 %v5442, %v5435
    %v6241 = vpack.c.b16 %v5443, %v5436
    %v6242 = vpack.c.b16 %v5444, %v5437
    %v6243 = vpack.c.b16 %v5445, %v5438
    %v6244 = vpack.c.b16 %v5446, %v5439
    %v6245 = vpack.c.b16 %v5447, %v5440
    %v6246 = vpack.c.b16 %v5448, %v5441
    %v6247 = vpack.c.b16 %v5456, %v5449
    %v6248 = vpack.c.b16 %v5457, %v5450
    %v6249 = vpack.c.b16 %v5458, %v5451
    %v6250 = vpack.c.b16 %v5459, %v5452
    %v6251 = vpack.c.b16 %v5460, %v5453
    %v6252 = vpack.c.b16 %v5461, %v5454
    %v6253 = vpack.c.b16 %v5462, %v5455
    %v6254 = vpack.c.b16 %v5470, %v5463
    %v6255 = vpack.c.b16 %v5471, %v5464
    %v6256 = vpack.c.b16 %v5472, %v5465
    %v6257 = vpack.c.b16 %v5473, %v5466
    %v6258 = vpack.c.b16 %v5474, %v5467
    %v6259 = vpack.c.b16 %v5475, %v5468
    %v6260 = vpack.c.b16 %v5476, %v5469
    %v6261 = vpack.c.b16 %v5484, %v5477
    %v6262 = vpack.c.b16 %v5485, %v5478
    %v6263 = vpack.c.b16 %v5486, %v5479
    %v6264 = vpack.c.b16 %v5487, %v5480
    %v6265 = vpack.c.b16 %v5488, %v5481
    %v6266 = vpack.c.b16 %v5489, %v5482
    %v6267 = vpack.c.b16 %v5490, %v5483
    %v6268 = vpack.c.b16 %v5498, %v5491
    %v6269 = vpack.c.b16 %v5499, %v5492
    %v6270 = vpack.c.b16 %v5500, %v5493
    %v6271 = vpack.c.b16 %v5501, %v5494
    %v6272 = vpack.c.b16 %v5502, %v5495
    %v6273 = vpack.c.b16 %v5503, %v5496
    %v6274 = vpack.c.b16 %v5504, %v5497
    %v6275 = vpack.c.b16 %v5512, %v5505
    %v6276 = vpack.c.b16 %v5513, %v5506
    %v6277 = vpack.c.b16 %v5514, %v5507
    %v6278 = vpack.c.b16 %v5515, %v5508
    %v6279 = vpack.c.b16 %v5516, %v5509
    %v6280 = vpack.c.b16 %v5517, %v5510
    %v6281 = vpack.c.b16 %v5518, %v5511
    %v6282 = vpack.c.b16 %v5526, %v5519
    %v6283 = vpack.c.b16 %v5527, %v5520
    %v6284 = vpack.c.b16 %v5528, %v5521
    %v6285 = vpack.c.b16 %v5529, %v5522
    %v6286 = vpack.c.b16 %v5530, %v5523
    %v6287 = vpack.c.b16 %v5531, %v5524
    %v6288 = vpack.c.b16 %v5532, %v5525
    %v6289 = vpack.c.b16 %v5540, %v5533
    %v6290 = vpack.c.b16 %v5541, %v5534
    %v6291 = vpack.c.b16 %v5542, %v5535
    %v6292 = vpack.c.b16 %v5543, %v5536
    %v6293 = vpack.c.b16 %v5544, %v5537
    %v6294 = vpack.c.b16 %v5545, %v5538
    %v6295 = vpack.c.b16 %v5546, %v5539
    %v6296 = vpack.c.b16 %v5554, %v5547
    %v6297 = vpack.c.b16 %v5555, %v5548
    %v6298 = vpack.c.b16 %v5556, %v5549
    %v6299 = vpack.c.b16 %v5557, %v5550
    %v6300 = vpack.c.b16 %v5558, %v5551
    %v6301 = vpack.c.b16 %v5559, %v5552
    %v6302 = vpack.c.b16 %v5560, %v5553
    %v6303 = vpack.c.b16 %v5568, %v5561
    %v6304 = vpack.c.b16 %v5569, %v5562
    %v6305 = vpack.c.b16 %v5570, %v5563
    %v6306 = vpack.c.b16 %v5571, %v5564
    %v6307 = vpack.c.b16 %v5572, %v5565
    %v6308 = vpack.c.b16 %v5573, %v5566
    %v6309 = vpack.c.b16 %v5574, %v5567
    %v6310 = vpack.c.b16 %v5582, %v5575
    %v6311 = vpack.c.b16 %v5583, %v5576
    %v6312 = vpack.c.b16 %v5584, %v5577
    %v6313 = vpack.c.b16 %v5585, %v5578
    %v6314 = vpack.c.b16 %v5586, %v5579
    %v6315 = vpack.c.b16 %v5587, %v5580
    %v6316 = vpack.c.b16 %v5588, %v5581
    %7045 = vmatprep.subr.bf16.mxu0 %v5590
    %7046 = vmatpush1.bf16.msra.mxu0 %v5589
    %7047 = vmatprep.subr.bf16.mxu0 %v5597
    %7048 = vmatpush1.bf16.msra.mxu0 %v5596
    %7049 = vmatprep.subr.bf16.mxu0 %v5604
    %7050 = vmatpush1.bf16.msra.mxu0 %v5603
    %7051 = vmatprep.subr.bf16.mxu0 %v5611
    %7052 = vmatpush1.bf16.msra.mxu0 %v5610
    %7053 = vmatprep.subr.bf16.mxu0 %v5618
    %7054 = vmatpush1.bf16.msra.mxu0 %v5617
    %7055 = vmatprep.subr.bf16.mxu0 %v5625
    %7056 = vmatpush1.bf16.msra.mxu0 %v5624
    %7057 = vmatprep.subr.bf16.mxu0 %v5632
    %7058 = vmatpush1.bf16.msra.mxu0 %v5631
    %7059 = vmatprep.subr.bf16.mxu0 %v5639
    %7060 = vmatpush1.bf16.msra.mxu0 %v5638
    %7061 = vmatprep.subr.bf16.mxu0 %v5646
    %7062 = vmatpush1.bf16.msra.mxu0 %v5645
    %7063 = vmatprep.subr.bf16.mxu0 %v5653
    %7064 = vmatpush1.bf16.msra.mxu0 %v5652
    %7065 = vmatprep.subr.bf16.mxu0 %v5660
    %7066 = vmatpush1.bf16.msra.mxu0 %v5659
    %7067 = vmatprep.subr.bf16.mxu0 %v5667
    %7068 = vmatpush1.bf16.msra.mxu0 %v5666
    %7069 = vmatprep.subr.bf16.mxu0 %v5674
    %7070 = vmatpush1.bf16.msra.mxu0 %v5673
    %7071 = vmatprep.subr.bf16.mxu0 %v5681
    %7072 = vmatpush1.bf16.msra.mxu0 %v5680
    %7073 = vmatprep.subr.bf16.mxu0 %v5688
    %7074 = vmatpush1.bf16.msra.mxu0 %v5687
    %7075 = vmatprep.subr.bf16.mxu0 %v5695
    %7076 = vmatpush1.bf16.msra.mxu0 %v5694
    %7077 = vmatprep.mubr.bf16.mxu0 %v2457
    %7078 = vmatmul.mubr.bf16.gmra.mrb[0].mxu0 %v2456
    %v7079 = vpop.f32.mrb[0].mxu0
    %v7080 = vadd.f32 0.0, %v7079
    %v7081 = vpop.f32.mrb[0].mxu0
    %v7082 = vadd.f32 0.0, %v7081
    %v7083 = vpop.f32.mrb[0].mxu0
    %v7084 = vpop.f32.mrb[0].mxu0
    %7085 = vdwg.mxu0
    %7086 = vmatprep.subr.bf16.mxu0 %v5702
    %7087 = vmatpush1.bf16.msra.mxu0 %v5701
    %7088 = vmatprep.subr.bf16.mxu0 %v5709
    %7089 = vmatpush1.bf16.msra.mxu0 %v5708
    %7090 = vmatprep.subr.bf16.mxu0 %v5716
    %7091 = vmatpush1.bf16.msra.mxu0 %v5715
    %7092 = vmatprep.subr.bf16.mxu0 %v5723
    %7093 = vmatpush1.bf16.msra.mxu0 %v5722
    %7094 = vmatprep.subr.bf16.mxu0 %v5730
    %7095 = vmatpush1.bf16.msra.mxu0 %v5729
    %7096 = vmatprep.subr.bf16.mxu0 %v5737
    %7097 = vmatpush1.bf16.msra.mxu0 %v5736
    %7098 = vmatprep.subr.bf16.mxu0 %v5744
    %7099 = vmatpush1.bf16.msra.mxu0 %v5743
    %7100 = vmatprep.subr.bf16.mxu0 %v5751
    %7101 = vmatpush1.bf16.msra.mxu0 %v5750
    %7102 = vmatprep.subr.bf16.mxu0 %v5758
    %7103 = vmatpush1.bf16.msra.mxu0 %v5757
    %7104 = vmatprep.subr.bf16.mxu0 %v5765
    %7105 = vmatpush1.bf16.msra.mxu0 %v5764
    %7106 = vmatprep.subr.bf16.mxu0 %v5772
    %7107 = vmatpush1.bf16.msra.mxu0 %v5771
    %7108 = vmatprep.subr.bf16.mxu0 %v5779
    %7109 = vmatpush1.bf16.msra.mxu0 %v5778
    %7110 = vmatprep.subr.bf16.mxu0 %v5786
    %7111 = vmatpush1.bf16.msra.mxu0 %v5785
    %7112 = vmatprep.subr.bf16.mxu0 %v5793
    %7113 = vmatpush1.bf16.msra.mxu0 %v5792
    %7114 = vmatprep.subr.bf16.mxu0 %v5800
    %7115 = vmatpush1.bf16.msra.mxu0 %v5799
    %7116 = vmatprep.subr.bf16.mxu0 %v5807
    %7117 = vmatpush1.bf16.msra.mxu0 %v5806
    %7118 = vmatprep.mubr.bf16.mxu0 %v2459
    %7119 = vmatmul.mubr.bf16.gmra.mrb[0].mxu0 %v2458
    %v7120 = vpop.f32.mrb[0].mxu0
    %v7121 = vadd.f32 %v7080, %v7120
    %v7122 = vpop.f32.mrb[0].mxu0
    %v7123 = vadd.f32 %v7082, %v7122
    %v7124 = vpop.f32.mrb[0].mxu0
    %v7125 = vpop.f32.mrb[0].mxu0
    %7126 = vdwg.mxu0
    %7127 = vmatprep.subr.bf16.mxu0 %v5814
    %7128 = vmatpush1.bf16.msra.mxu0 %v5813
    %7129 = vmatprep.subr.bf16.mxu0 %v5821
    %7130 = vmatpush1.bf16.msra.mxu0 %v5820
    %7131 = vmatprep.subr.bf16.mxu0 %v5828
    %7132 = vmatpush1.bf16.msra.mxu0 %v5827
    %7133 = vmatprep.subr.bf16.mxu0 %v5835
    %7134 = vmatpush1.bf16.msra.mxu0 %v5834
    %7135 = vmatprep.subr.bf16.mxu0 %v5842
    %7136 = vmatpush1.bf16.msra.mxu0 %v5841
    %7137 = vmatprep.subr.bf16.mxu0 %v5849
    %7138 = vmatpush1.bf16.msra.mxu0 %v5848
    %7139 = vmatprep.subr.bf16.mxu0 %v5856
    %7140 = vmatpush1.bf16.msra.mxu0 %v5855
    %7141 = vmatprep.subr.bf16.mxu0 %v5863
    %7142 = vmatpush1.bf16.msra.mxu0 %v5862
    %7143 = vmatprep.subr.bf16.mxu0 %v5870
    %7144 = vmatpush1.bf16.msra.mxu0 %v5869
    %7145 = vmatprep.subr.bf16.mxu0 %v5877
    %7146 = vmatpush1.bf16.msra.mxu0 %v5876
    %7147 = vmatprep.subr.bf16.mxu0 %v5884
    %7148 = vmatpush1.bf16.msra.mxu0 %v5883
    %7149 = vmatprep.subr.bf16.mxu0 %v5891
    %7150 = vmatpush1.bf16.msra.mxu0 %v5890
    %7151 = vmatprep.subr.bf16.mxu0 %v5898
    %7152 = vmatpush1.bf16.msra.mxu0 %v5897
    %7153 = vmatprep.subr.bf16.mxu0 %v5905
    %7154 = vmatpush1.bf16.msra.mxu0 %v5904
    %7155 = vmatprep.subr.bf16.mxu0 %v5912
    %7156 = vmatpush1.bf16.msra.mxu0 %v5911
    %7157 = vmatprep.subr.bf16.mxu0 %v5919
    %7158 = vmatpush1.bf16.msra.mxu0 %v5918
    %7159 = vmatprep.mubr.bf16.mxu0 %v2461
    %7160 = vmatmul.mubr.bf16.gmra.mrb[0].mxu0 %v2460
    %v7161 = vpop.f32.mrb[0].mxu0
    %v7162 = vadd.f32 %v7121, %v7161
    %v7163 = vpop.f32.mrb[0].mxu0
    %v7164 = vadd.f32 %v7123, %v7163
    %v7165 = vpop.f32.mrb[0].mxu0
    %v7166 = vpop.f32.mrb[0].mxu0
    %7167 = vdwg.mxu0
    %7168 = vmatprep.subr.bf16.mxu0 %v5926
    %7169 = vmatpush1.bf16.msra.mxu0 %v5925
    %7170 = vmatprep.subr.bf16.mxu0 %v5933
    %7171 = vmatpush1.bf16.msra.mxu0 %v5932
    %7172 = vmatprep.subr.bf16.mxu0 %v5940
    %7173 = vmatpush1.bf16.msra.mxu0 %v5939
    %7174 = vmatprep.subr.bf16.mxu0 %v5947
    %7175 = vmatpush1.bf16.msra.mxu0 %v5946
    %7176 = vmatprep.subr.bf16.mxu0 %v5954
    %7177 = vmatpush1.bf16.msra.mxu0 %v5953
    %7178 = vmatprep.subr.bf16.mxu0 %v5961
    %7179 = vmatpush1.bf16.msra.mxu0 %v5960
    %7180 = vmatprep.subr.bf16.mxu0 %v5968
    %7181 = vmatpush1.bf16.msra.mxu0 %v5967
    %7182 = vmatprep.subr.bf16.mxu0 %v5975
    %7183 = vmatpush1.bf16.msra.mxu0 %v5974
    %7184 = vmatprep.subr.bf16.mxu0 %v5982
    %7185 = vmatpush1.bf16.msra.mxu0 %v5981
    %7186 = vmatprep.subr.bf16.mxu0 %v5989
    %7187 = vmatpush1.bf16.msra.mxu0 %v5988
    %7188 = vmatprep.subr.bf16.mxu0 %v5996
    %7189 = vmatpush1.bf16.msra.mxu0 %v5995
    %7190 = vmatprep.subr.bf16.mxu0 %v6003
    %7191 = vmatpush1.bf16.msra.mxu0 %v6002
    %7192 = vmatprep.subr.bf16.mxu0 %v6010
    %7193 = vmatpush1.bf16.msra.mxu0 %v6009
    %7194 = vmatprep.subr.bf16.mxu0 %v6017
    %7195 = vmatpush1.bf16.msra.mxu0 %v6016
    %7196 = vmatprep.subr.bf16.mxu0 %v6024
    %7197 = vmatpush1.bf16.msra.mxu0 %v6023
    %7198 = vmatprep.subr.bf16.mxu0 %v6031
    %7199 = vmatpush1.bf16.msra.mxu0 %v6030
    %7200 = vmatprep.mubr.bf16.mxu0 %v2463
    %7201 = vmatmul.mubr.bf16.gmra.mrb[0].mxu0 %v2462
    %v7202 = vpop.f32.mrb[0].mxu0
    %v7203 = vadd.f32 %v7162, %v7202
    %v7204 = vpop.f32.mrb[0].mxu0
    %v7205 = vadd.f32 %v7164, %v7204
    %v7206 = vpop.f32.mrb[0].mxu0
    %v7207 = vpop.f32.mrb[0].mxu0
    %7208 = vdwg.mxu0
    %7209 = vmatprep.subr.bf16.mxu0 %v6038
    %7210 = vmatpush1.bf16.msra.mxu0 %v6037
    %7211 = vmatprep.subr.bf16.mxu0 %v6045
    %7212 = vmatpush1.bf16.msra.mxu0 %v6044
    %7213 = vmatprep.subr.bf16.mxu0 %v6052
    %7214 = vmatpush1.bf16.msra.mxu0 %v6051
    %7215 = vmatprep.subr.bf16.mxu0 %v6059
    %7216 = vmatpush1.bf16.msra.mxu0 %v6058
    %7217 = vmatprep.subr.bf16.mxu0 %v6066
    %7218 = vmatpush1.bf16.msra.mxu0 %v6065
    %7219 = vmatprep.subr.bf16.mxu0 %v6073
    %7220 = vmatpush1.bf16.msra.mxu0 %v6072
    %7221 = vmatprep.subr.bf16.mxu0 %v6080
    %7222 = vmatpush1.bf16.msra.mxu0 %v6079
    %7223 = vmatprep.subr.bf16.mxu0 %v6087
    %7224 = vmatpush1.bf16.msra.mxu0 %v6086
    %7225 = vmatprep.subr.bf16.mxu0 %v6094
    %7226 = vmatpush1.bf16.msra.mxu0 %v6093
    %7227 = vmatprep.subr.bf16.mxu0 %v6101
    %7228 = vmatpush1.bf16.msra.mxu0 %v6100
    %7229 = vmatprep.subr.bf16.mxu0 %v6108
    %7230 = vmatpush1.bf16.msra.mxu0 %v6107
    %7231 = vmatprep.subr.bf16.mxu0 %v6115
    %7232 = vmatpush1.bf16.msra.mxu0 %v6114
    %7233 = vmatprep.subr.bf16.mxu0 %v6122
    %7234 = vmatpush1.bf16.msra.mxu0 %v6121
    %7235 = vmatprep.subr.bf16.mxu0 %v6129
    %7236 = vmatpush1.bf16.msra.mxu0 %v6128
    %7237 = vmatprep.subr.bf16.mxu0 %v6136
    %7238 = vmatpush1.bf16.msra.mxu0 %v6135
    %7239 = vmatprep.subr.bf16.mxu0 %v6143
    %7240 = vmatpush1.bf16.msra.mxu0 %v6142
    %7241 = vmatprep.mubr.bf16.mxu0 %v2465
    %7242 = vmatmul.mubr.bf16.gmra.mrb[0].mxu0 %v2464
    %v7243 = vpop.f32.mrb[0].mxu0
    %v7244 = vadd.f32 %v7203, %v7243
    %v7245 = vpop.f32.mrb[0].mxu0
    %v7246 = vadd.f32 %v7205, %v7245
    %v7247 = vpop.f32.mrb[0].mxu0
    %v7248 = vpop.f32.mrb[0].mxu0
    %7249 = vdwg.mxu0
    %7250 = vmatprep.subr.bf16.mxu0 %v6150
    %7251 = vmatpush1.bf16.msra.mxu0 %v6149
    %7252 = vmatprep.subr.bf16.mxu0 %v6157
    %7253 = vmatpush1.bf16.msra.mxu0 %v6156
    %7254 = vmatprep.subr.bf16.mxu0 %v6164
    %7255 = vmatpush1.bf16.msra.mxu0 %v6163
    %7256 = vmatprep.subr.bf16.mxu0 %v6171
    %7257 = vmatpush1.bf16.msra.mxu0 %v6170
    %7258 = vmatprep.subr.bf16.mxu0 %v6178
    %7259 = vmatpush1.bf16.msra.mxu0 %v6177
    %7260 = vmatprep.subr.bf16.mxu0 %v6185
    %7261 = vmatpush1.bf16.msra.mxu0 %v6184
    %7262 = vmatprep.subr.bf16.mxu0 %v6192
    %7263 = vmatpush1.bf16.msra.mxu0 %v6191
    %7264 = vmatprep.subr.bf16.mxu0 %v6199
    %7265 = vmatpush1.bf16.msra.mxu0 %v6198
    %7266 = vmatprep.subr.bf16.mxu0 %v6206
    %7267 = vmatpush1.bf16.msra.mxu0 %v6205
    %7268 = vmatprep.subr.bf16.mxu0 %v6213
    %7269 = vmatpush1.bf16.msra.mxu0 %v6212
    %7270 = vmatprep.subr.bf16.mxu0 %v6220
    %7271 = vmatpush1.bf16.msra.mxu0 %v6219
    %7272 = vmatprep.subr.bf16.mxu0 %v6227
    %7273 = vmatpush1.bf16.msra.mxu0 %v6226
    %7274 = vmatprep.subr.bf16.mxu0 %v6234
    %7275 = vmatpush1.bf16.msra.mxu0 %v6233
    %7276 = vmatprep.subr.bf16.mxu0 %v6241
    %7277 = vmatpush1.bf16.msra.mxu0 %v6240
    %7278 = vmatprep.subr.bf16.mxu0 %v6248
    %7279 = vmatpush1.bf16.msra.mxu0 %v6247
    %7280 = vmatprep.subr.bf16.mxu0 %v6255
    %7281 = vmatpush1.bf16.msra.mxu0 %v6254
    %7282 = vmatprep.mubr.bf16.mxu0 %v2467
    %7283 = vmatmul.mubr.bf16.gmra.mrb[0].mxu0 %v2466
    %v7284 = vpop.f32.mrb[0].mxu0
    %v7285 = vadd.f32 %v7244, %v7284
    %v7286 = vpop.f32.mrb[0].mxu0
    %v7287 = vadd.f32 %v7246, %v7286
    %v7288 = vpop.f32.mrb[0].mxu0
    %v7289 = vpop.f32.mrb[0].mxu0
    %7290 = vdwg.mxu0
    %7291 = vmatprep.subr.bf16.mxu0 %v6262
    %7292 = vmatpush1.bf16.msra.mxu0 %v6261
    %7293 = vmatprep.subr.bf16.mxu0 %v6269
    %7294 = vmatpush1.bf16.msra.mxu0 %v6268
    %7295 = vmatprep.subr.bf16.mxu0 %v6276
    %7296 = vmatpush1.bf16.msra.mxu0 %v6275
    %7297 = vmatprep.subr.bf16.mxu0 %v6283
    %7298 = vmatpush1.bf16.msra.mxu0 %v6282
    %7299 = vmatprep.subr.bf16.mxu0 %v6290
    %7300 = vmatpush1.bf16.msra.mxu0 %v6289
    %7301 = vmatprep.subr.bf16.mxu0 %v6297
    %7302 = vmatpush1.bf16.msra.mxu0 %v6296
    %7303 = vmatprep.subr.bf16.mxu0 %v6304
    %7304 = vmatpush1.bf16.msra.mxu0 %v6303
    %7305 = vmatprep.subr.bf16.mxu0 %v6311
    %7306 = vmatpush1.bf16.msra.mxu0 %v6310
    %7307 = vmatprep.subr.bf16.mxu0 0
    %7308 = vmatpush1.bf16.msra.mxu0 0
    %7309 = vmatprep.subr.bf16.mxu0 0
    %7310 = vmatpush1.bf16.msra.mxu0 0
    %7311 = vmatprep.subr.bf16.mxu0 0
    %7312 = vmatpush1.bf16.msra.mxu0 0
    %7313 = vmatprep.subr.bf16.mxu0 0
    %7314 = vmatpush1.bf16.msra.mxu0 0
    %7315 = vmatprep.subr.bf16.mxu0 0
    %7316 = vmatpush1.bf16.msra.mxu0 0
    %7317 = vmatprep.subr.bf16.mxu0 0
    %7318 = vmatpush1.bf16.msra.mxu0 0
    %7319 = vmatprep.subr.bf16.mxu0 0
    %7320 = vmatpush1.bf16.msra.mxu0 0
    %7321 = vmatprep.subr.bf16.mxu0 0
    %7322 = vmatpush1.bf16.msra.mxu0 0
    %7323 = vmatprep.mubr.bf16.mxu0 0
    %7324 = vmatmul.mubr.bf16.gmra.mrb[0].mxu0 %v2468
    %v7325 = vpop.f32.mrb[0].mxu0
    %v7326 = vadd.f32 %v7285, %v7325
    %v7327 = vpop.f32.mrb[0].mxu0
    %v7328 = vadd.f32 %v7287, %v7327
    %v7329 = vpop.f32.mrb[0].mxu0
    %v7330 = vpop.f32.mrb[0].mxu0
    %7331 = vdwg.mxu0
    %7332 = vmatprep.subr.bf16.mxu0 %v5592
    %7333 = vmatpush1.bf16.msra.mxu0 %v5591
    %7334 = vmatprep.subr.bf16.mxu0 %v5599
    %7335 = vmatpush1.bf16.msra.mxu0 %v5598
    %7336 = vmatprep.subr.bf16.mxu0 %v5606
    %7337 = vmatpush1.bf16.msra.mxu0 %v5605
    %7338 = vmatprep.subr.bf16.mxu0 %v5613
    %7339 = vmatpush1.bf16.msra.mxu0 %v5612
    %7340 = vmatprep.subr.bf16.mxu0 %v5620
    %7341 = vmatpush1.bf16.msra.mxu0 %v5619
    %7342 = vmatprep.subr.bf16.mxu0 %v5627
    %7343 = vmatpush1.bf16.msra.mxu0 %v5626
    %7344 = vmatprep.subr.bf16.mxu0 %v5634
    %7345 = vmatpush1.bf16.msra.mxu0 %v5633
    %7346 = vmatprep.subr.bf16.mxu0 %v5641
    %7347 = vmatpush1.bf16.msra.mxu0 %v5640
    %7348 = vmatprep.subr.bf16.mxu0 %v5648
    %7349 = vmatpush1.bf16.msra.mxu0 %v5647
    %7350 = vmatprep.subr.bf16.mxu0 %v5655
    %7351 = vmatpush1.bf16.msra.mxu0 %v5654
    %7352 = vmatprep.subr.bf16.mxu0 %v5662
    %7353 = vmatpush1.bf16.msra.mxu0 %v5661
    %7354 = vmatprep.subr.bf16.mxu0 %v5669
    %7355 = vmatpush1.bf16.msra.mxu0 %v5668
    %7356 = vmatprep.subr.bf16.mxu0 %v5676
    %7357 = vmatpush1.bf16.msra.mxu0 %v5675
    %7358 = vmatprep.subr.bf16.mxu0 %v5683
    %7359 = vmatpush1.bf16.msra.mxu0 %v5682
    %7360 = vmatprep.subr.bf16.mxu0 %v5690
    %7361 = vmatpush1.bf16.msra.mxu0 %v5689
    %7362 = vmatprep.subr.bf16.mxu0 %v5697
    %7363 = vmatpush1.bf16.msra.mxu0 %v5696
    %7364 = vmatprep.mubr.bf16.mxu0 %v2457
    %7365 = vmatmul.mubr.bf16.gmra.mrb[0].mxu0 %v2456
    %v7366 = vpop.f32.mrb[0].mxu0
    %v7367 = vadd.f32 0.0, %v7366
    %v7368 = vpop.f32.mrb[0].mxu0
    %v7369 = vadd.f32 0.0, %v7368
    %v7370 = vpop.f32.mrb[0].mxu0
    %v7371 = vpop.f32.mrb[0].mxu0
    %7372 = vdwg.mxu0
    %7373 = vmatprep.subr.bf16.mxu0 %v5704
    %7374 = vmatpush1.bf16.msra.mxu0 %v5703
    %7375 = vmatprep.subr.bf16.mxu0 %v5711
    %7376 = vmatpush1.bf16.msra.mxu0 %v5710
    %7377 = vmatprep.subr.bf16.mxu0 %v5718
    %7378 = vmatpush1.bf16.msra.mxu0 %v5717
    %7379 = vmatprep.subr.bf16.mxu0 %v5725
    %7380 = vmatpush1.bf16.msra.mxu0 %v5724
    %7381 = vmatprep.subr.bf16.mxu0 %v5732
    %7382 = vmatpush1.bf16.msra.mxu0 %v5731
    %7383 = vmatprep.subr.bf16.mxu0 %v5739
    %7384 = vmatpush1.bf16.msra.mxu0 %v5738
    %7385 = vmatprep.subr.bf16.mxu0 %v5746
    %7386 = vmatpush1.bf16.msra.mxu0 %v5745
    %7387 = vmatprep.subr.bf16.mxu0 %v5753
    %7388 = vmatpush1.bf16.msra.mxu0 %v5752
    %7389 = vmatprep.subr.bf16.mxu0 %v5760
    %7390 = vmatpush1.bf16.msra.mxu0 %v5759
    %7391 = vmatprep.subr.bf16.mxu0 %v5767
    %7392 = vmatpush1.bf16.msra.mxu0 %v5766
    %7393 = vmatprep.subr.bf16.mxu0 %v5774
    %7394 = vmatpush1.bf16.msra.mxu0 %v5773
    %7395 = vmatprep.subr.bf16.mxu0 %v5781
    %7396 = vmatpush1.bf16.msra.mxu0 %v5780
    %7397 = vmatprep.subr.bf16.mxu0 %v5788
    %7398 = vmatpush1.bf16.msra.mxu0 %v5787
    %7399 = vmatprep.subr.bf16.mxu0 %v5795
    %7400 = vmatpush1.bf16.msra.mxu0 %v5794
    %7401 = vmatprep.subr.bf16.mxu0 %v5802
    %7402 = vmatpush1.bf16.msra.mxu0 %v5801
    %7403 = vmatprep.subr.bf16.mxu0 %v5809
    %7404 = vmatpush1.bf16.msra.mxu0 %v5808
    %7405 = vmatprep.mubr.bf16.mxu0 %v2459
    %7406 = vmatmul.mubr.bf16.gmra.mrb[0].mxu0 %v2458
    %v7407 = vpop.f32.mrb[0].mxu0
    %v7408 = vadd.f32 %v7367, %v7407
    %v7409 = vpop.f32.mrb[0].mxu0
    %v7410 = vadd.f32 %v7369, %v7409
    %v7411 = vpop.f32.mrb[0].mxu0
    %v7412 = vpop.f32.mrb[0].mxu0
    %7413 = vdwg.mxu0
    %7414 = vmatprep.subr.bf16.mxu0 %v5816
    %7415 = vmatpush1.bf16.msra.mxu0 %v5815
    %7416 = vmatprep.subr.bf16.mxu0 %v5823
    %7417 = vmatpush1.bf16.msra.mxu0 %v5822
    %7418 = vmatprep.subr.bf16.mxu0 %v5830
    %7419 = vmatpush1.bf16.msra.mxu0 %v5829
    %7420 = vmatprep.subr.bf16.mxu0 %v5837
    %7421 = vmatpush1.bf16.msra.mxu0 %v5836
    %7422 = vmatprep.subr.bf16.mxu0 %v5844
    %7423 = vmatpush1.bf16.msra.mxu0 %v5843
    %7424 = vmatprep.subr.bf16.mxu0 %v5851
    %7425 = vmatpush1.bf16.msra.mxu0 %v5850
    %7426 = vmatprep.subr.bf16.mxu0 %v5858
    %7427 = vmatpush1.bf16.msra.mxu0 %v5857
    %7428 = vmatprep.subr.bf16.mxu0 %v5865
    %7429 = vmatpush1.bf16.msra.mxu0 %v5864
    %7430 = vmatprep.subr.bf16.mxu0 %v5872
    %7431 = vmatpush1.bf16.msra.mxu0 %v5871
    %7432 = vmatprep.subr.bf16.mxu0 %v5879
    %7433 = vmatpush1.bf16.msra.mxu0 %v5878
    %7434 = vmatprep.subr.bf16.mxu0 %v5886
    %7435 = vmatpush1.bf16.msra.mxu0 %v5885
    %7436 = vmatprep.subr.bf16.mxu0 %v5893
    %7437 = vmatpush1.bf16.msra.mxu0 %v5892
    %7438 = vmatprep.subr.bf16.mxu0 %v5900
    %7439 = vmatpush1.bf16.msra.mxu0 %v5899
    %7440 = vmatprep.subr.bf16.mxu0 %v5907
    %7441 = vmatpush1.bf16.msra.mxu0 %v5906
    %7442 = vmatprep.subr.bf16.mxu0 %v5914
    %7443 = vmatpush1.bf16.msra.mxu0 %v5913
    %7444 = vmatprep.subr.bf16.mxu0 %v5921
    %7445 = vmatpush1.bf16.msra.mxu0 %v5920
    %7446 = vmatprep.mubr.bf16.mxu0 %v2461
    %7447 = vmatmul.mubr.bf16.gmra.mrb[0].mxu0 %v2460
    %v7448 = vpop.f32.mrb[0].mxu0
    %v7449 = vadd.f32 %v7408, %v7448
    %v7450 = vpop.f32.mrb[0].mxu0
    %v7451 = vadd.f32 %v7410, %v7450
    %v7452 = vpop.f32.mrb[0].mxu0
    %v7453 = vpop.f32.mrb[0].mxu0
    %7454 = vdwg.mxu0
    %7455 = vmatprep.subr.bf16.mxu0 %v5928
    %7456 = vmatpush1.bf16.msra.mxu0 %v5927
    %7457 = vmatprep.subr.bf16.mxu0 %v5935
    %7458 = vmatpush1.bf16.msra.mxu0 %v5934
    %7459 = vmatprep.subr.bf16.mxu0 %v5942
    %7460 = vmatpush1.bf16.msra.mxu0 %v5941
    %7461 = vmatprep.subr.bf16.mxu0 %v5949
    %7462 = vmatpush1.bf16.msra.mxu0 %v5948
    %7463 = vmatprep.subr.bf16.mxu0 %v5956
    %7464 = vmatpush1.bf16.msra.mxu0 %v5955
    %7465 = vmatprep.subr.bf16.mxu0 %v5963
    %7466 = vmatpush1.bf16.msra.mxu0 %v5962
    %7467 = vmatprep.subr.bf16.mxu0 %v5970
    %7468 = vmatpush1.bf16.msra.mxu0 %v5969
    %7469 = vmatprep.subr.bf16.mxu0 %v5977
    %7470 = vmatpush1.bf16.msra.mxu0 %v5976
    %7471 = vmatprep.subr.bf16.mxu0 %v5984
    %7472 = vmatpush1.bf16.msra.mxu0 %v5983
    %7473 = vmatprep.subr.bf16.mxu0 %v5991
    %7474 = vmatpush1.bf16.msra.mxu0 %v5990
    %7475 = vmatprep.subr.bf16.mxu0 %v5998
    %7476 = vmatpush1.bf16.msra.mxu0 %v5997
    %7477 = vmatprep.subr.bf16.mxu0 %v6005
    %7478 = vmatpush1.bf16.msra.mxu0 %v6004
    %7479 = vmatprep.subr.bf16.mxu0 %v6012
    %7480 = vmatpush1.bf16.msra.mxu0 %v6011
    %7481 = vmatprep.subr.bf16.mxu0 %v6019
    %7482 = vmatpush1.bf16.msra.mxu0 %v6018
    %7483 = vmatprep.subr.bf16.mxu0 %v6026
    %7484 = vmatpush1.bf16.msra.mxu0 %v6025
    %7485 = vmatprep.subr.bf16.mxu0 %v6033
    %7486 = vmatpush1.bf16.msra.mxu0 %v6032
    %7487 = vmatprep.mubr.bf16.mxu0 %v2463
    %7488 = vmatmul.mubr.bf16.gmra.mrb[0].mxu0 %v2462
    %v7489 = vpop.f32.mrb[0].mxu0
    %v7490 = vadd.f32 %v7449, %v7489
    %v7491 = vpop.f32.mrb[0].mxu0
    %v7492 = vadd.f32 %v7451, %v7491
    %v7493 = vpop.f32.mrb[0].mxu0
    %v7494 = vpop.f32.mrb[0].mxu0
    %7495 = vdwg.mxu0
    %7496 = vmatprep.subr.bf16.mxu0 %v6040
    %7497 = vmatpush1.bf16.msra.mxu0 %v6039
    %7498 = vmatprep.subr.bf16.mxu0 %v6047
    %7499 = vmatpush1.bf16.msra.mxu0 %v6046
    %7500 = vmatprep.subr.bf16.mxu0 %v6054
    %7501 = vmatpush1.bf16.msra.mxu0 %v6053
    %7502 = vmatprep.subr.bf16.mxu0 %v6061
    %7503 = vmatpush1.bf16.msra.mxu0 %v6060
    %7504 = vmatprep.subr.bf16.mxu0 %v6068
    %7505 = vmatpush1.bf16.msra.mxu0 %v6067
    %7506 = vmatprep.subr.bf16.mxu0 %v6075
    %7507 = vmatpush1.bf16.msra.mxu0 %v6074
    %7508 = vmatprep.subr.bf16.mxu0 %v6082
    %7509 = vmatpush1.bf16.msra.mxu0 %v6081
    %7510 = vmatprep.subr.bf16.mxu0 %v6089
    %7511 = vmatpush1.bf16.msra.mxu0 %v6088
    %7512 = vmatprep.subr.bf16.mxu0 %v6096
    %7513 = vmatpush1.bf16.msra.mxu0 %v6095
    %7514 = vmatprep.subr.bf16.mxu0 %v6103
    %7515 = vmatpush1.bf16.msra.mxu0 %v6102
    %7516 = vmatprep.subr.bf16.mxu0 %v6110
    %7517 = vmatpush1.bf16.msra.mxu0 %v6109
    %7518 = vmatprep.subr.bf16.mxu0 %v6117
    %7519 = vmatpush1.bf16.msra.mxu0 %v6116
    %7520 = vmatprep.subr.bf16.mxu0 %v6124
    %7521 = vmatpush1.bf16.msra.mxu0 %v6123
    %7522 = vmatprep.subr.bf16.mxu0 %v6131
    %7523 = vmatpush1.bf16.msra.mxu0 %v6130
    %7524 = vmatprep.subr.bf16.mxu0 %v6138
    %7525 = vmatpush1.bf16.msra.mxu0 %v6137
    %7526 = vmatprep.subr.bf16.mxu0 %v6145
    %7527 = vmatpush1.bf16.msra.mxu0 %v6144
    %7528 = vmatprep.mubr.bf16.mxu0 %v2465
    %7529 = vmatmul.mubr.bf16.gmra.mrb[0].mxu0 %v2464
    %v7530 = vpop.f32.mrb[0].mxu0
    %v7531 = vadd.f32 %v7490, %v7530
    %v7532 = vpop.f32.mrb[0].mxu0
    %v7533 = vadd.f32 %v7492, %v7532
    %v7534 = vpop.f32.mrb[0].mxu0
    %v7535 = vpop.f32.mrb[0].mxu0
    %7536 = vdwg.mxu0
    %7537 = vmatprep.subr.bf16.mxu0 %v6152
    %7538 = vmatpush1.bf16.msra.mxu0 %v6151
    %7539 = vmatprep.subr.bf16.mxu0 %v6159
    %7540 = vmatpush1.bf16.msra.mxu0 %v6158
    %7541 = vmatprep.subr.bf16.mxu0 %v6166
    %7542 = vmatpush1.bf16.msra.mxu0 %v6165
    %7543 = vmatprep.subr.bf16.mxu0 %v6173
    %7544 = vmatpush1.bf16.msra.mxu0 %v6172
    %7545 = vmatprep.subr.bf16.mxu0 %v6180
    %7546 = vmatpush1.bf16.msra.mxu0 %v6179
    %7547 = vmatprep.subr.bf16.mxu0 %v6187
    %7548 = vmatpush1.bf16.msra.mxu0 %v6186
    %7549 = vmatprep.subr.bf16.mxu0 %v6194
    %7550 = vmatpush1.bf16.msra.mxu0 %v6193
    %7551 = vmatprep.subr.bf16.mxu0 %v6201
    %7552 = vmatpush1.bf16.msra.mxu0 %v6200
    %7553 = vmatprep.subr.bf16.mxu0 %v6208
    %7554 = vmatpush1.bf16.msra.mxu0 %v6207
    %7555 = vmatprep.subr.bf16.mxu0 %v6215
    %7556 = vmatpush1.bf16.msra.mxu0 %v6214
    %7557 = vmatprep.subr.bf16.mxu0 %v6222
    %7558 = vmatpush1.bf16.msra.mxu0 %v6221
    %7559 = vmatprep.subr.bf16.mxu0 %v6229
    %7560 = vmatpush1.bf16.msra.mxu0 %v6228
    %7561 = vmatprep.subr.bf16.mxu0 %v6236
    %7562 = vmatpush1.bf16.msra.mxu0 %v6235
    %7563 = vmatprep.subr.bf16.mxu0 %v6243
    %7564 = vmatpush1.bf16.msra.mxu0 %v6242
    %7565 = vmatprep.subr.bf16.mxu0 %v6250
    %7566 = vmatpush1.bf16.msra.mxu0 %v6249
    %7567 = vmatprep.subr.bf16.mxu0 %v6257
    %7568 = vmatpush1.bf16.msra.mxu0 %v6256
    %7569 = vmatprep.mubr.bf16.mxu0 %v2467
    %7570 = vmatmul.mubr.bf16.gmra.mrb[0].mxu0 %v2466
    %v7571 = vpop.f32.mrb[0].mxu0
    %v7572 = vadd.f32 %v7531, %v7571
    %v7573 = vpop.f32.mrb[0].mxu0
    %v7574 = vadd.f32 %v7533, %v7573
    %v7575 = vpop.f32.mrb[0].mxu0
    %v7576 = vpop.f32.mrb[0].mxu0
    %7577 = vdwg.mxu0
    %7578 = vmatprep.subr.bf16.mxu0 %v6264
    %7579 = vmatpush1.bf16.msra.mxu0 %v6263
    %7580 = vmatprep.subr.bf16.mxu0 %v6271
    %7581 = vmatpush1.bf16.msra.mxu0 %v6270
    %7582 = vmatprep.subr.bf16.mxu0 %v6278
    %7583 = vmatpush1.bf16.msra.mxu0 %v6277
    %7584 = vmatprep.subr.bf16.mxu0 %v6285
    %7585 = vmatpush1.bf16.msra.mxu0 %v6284
    %7586 = vmatprep.subr.bf16.mxu0 %v6292
    %7587 = vmatpush1.bf16.msra.mxu0 %v6291
    %7588 = vmatprep.subr.bf16.mxu0 %v6299
    %7589 = vmatpush1.bf16.msra.mxu0 %v6298
    %7590 = vmatprep.subr.bf16.mxu0 %v6306
    %7591 = vmatpush1.bf16.msra.mxu0 %v6305
    %7592 = vmatprep.subr.bf16.mxu0 %v6313
    %7593 = vmatpush1.bf16.msra.mxu0 %v6312
    %7594 = vmatprep.subr.bf16.mxu0 0
    %7595 = vmatpush1.bf16.msra.mxu0 0
    %7596 = vmatprep.subr.bf16.mxu0 0
    %7597 = vmatpush1.bf16.msra.mxu0 0
    %7598 = vmatprep.subr.bf16.mxu0 0
    %7599 = vmatpush1.bf16.msra.mxu0 0
    %7600 = vmatprep.subr.bf16.mxu0 0
    %7601 = vmatpush1.bf16.msra.mxu0 0
    %7602 = vmatprep.subr.bf16.mxu0 0
    %7603 = vmatpush1.bf16.msra.mxu0 0
    %7604 = vmatprep.subr.bf16.mxu0 0
    %7605 = vmatpush1.bf16.msra.mxu0 0
    %7606 = vmatprep.subr.bf16.mxu0 0
    %7607 = vmatpush1.bf16.msra.mxu0 0
    %7608 = vmatprep.subr.bf16.mxu0 0
    %7609 = vmatpush1.bf16.msra.mxu0 0
    %7610 = vmatprep.mubr.bf16.mxu0 0
    %7611 = vmatmul.mubr.bf16.gmra.mrb[0].mxu0 %v2468
    %v7612 = vpop.f32.mrb[0].mxu0
    %v7613 = vadd.f32 %v7572, %v7612
    %v7614 = vpop.f32.mrb[0].mxu0
    %v7615 = vadd.f32 %v7574, %v7614
    %v7616 = vpop.f32.mrb[0].mxu0
    %v7617 = vpop.f32.mrb[0].mxu0
    %7618 = vdwg.mxu0
    %7619 = vmatprep.subr.bf16.mxu0 %v5594
    %7620 = vmatpush1.bf16.msra.mxu0 %v5593
    %7621 = vmatprep.subr.bf16.mxu0 %v5601
    %7622 = vmatpush1.bf16.msra.mxu0 %v5600
    %7623 = vmatprep.subr.bf16.mxu0 %v5608
    %7624 = vmatpush1.bf16.msra.mxu0 %v5607
    %7625 = vmatprep.subr.bf16.mxu0 %v5615
    %7626 = vmatpush1.bf16.msra.mxu0 %v5614
    %7627 = vmatprep.subr.bf16.mxu0 %v5622
    %7628 = vmatpush1.bf16.msra.mxu0 %v5621
    %7629 = vmatprep.subr.bf16.mxu0 %v5629
    %7630 = vmatpush1.bf16.msra.mxu0 %v5628
    %7631 = vmatprep.subr.bf16.mxu0 %v5636
    %7632 = vmatpush1.bf16.msra.mxu0 %v5635
    %7633 = vmatprep.subr.bf16.mxu0 %v5643
    %7634 = vmatpush1.bf16.msra.mxu0 %v5642
    %7635 = vmatprep.subr.bf16.mxu0 %v5650
    %7636 = vmatpush1.bf16.msra.mxu0 %v5649
    %7637 = vmatprep.subr.bf16.mxu0 %v5657
    %7638 = vmatpush1.bf16.msra.mxu0 %v5656
    %7639 = vmatprep.subr.bf16.mxu0 %v5664
    %7640 = vmatpush1.bf16.msra.mxu0 %v5663
    %7641 = vmatprep.subr.bf16.mxu0 %v5671
    %7642 = vmatpush1.bf16.msra.mxu0 %v5670
    %7643 = vmatprep.subr.bf16.mxu0 %v5678
    %7644 = vmatpush1.bf16.msra.mxu0 %v5677
    %7645 = vmatprep.subr.bf16.mxu0 %v5685
    %7646 = vmatpush1.bf16.msra.mxu0 %v5684
    %7647 = vmatprep.subr.bf16.mxu0 %v5692
    %7648 = vmatpush1.bf16.msra.mxu0 %v5691
    %7649 = vmatprep.subr.bf16.mxu0 %v5699
    %7650 = vmatpush1.bf16.msra.mxu0 %v5698
    %7651 = vmatprep.mubr.bf16.mxu0 %v2457
    %7652 = vmatmul.mubr.bf16.gmra.mrb[0].mxu0 %v2456
    %v7653 = vpop.f32.mrb[0].mxu0
    %v7654 = vadd.f32 0.0, %v7653
    %v7655 = vpop.f32.mrb[0].mxu0
    %v7656 = vadd.f32 0.0, %v7655
    %v7657 = vpop.f32.mrb[0].mxu0
    %v7658 = vpop.f32.mrb[0].mxu0
    %7659 = vdwg.mxu0
    %7660 = vmatprep.subr.bf16.mxu0 %v5706
    %7661 = vmatpush1.bf16.msra.mxu0 %v5705
    %7662 = vmatprep.subr.bf16.mxu0 %v5713
    %7663 = vmatpush1.bf16.msra.mxu0 %v5712
    %7664 = vmatprep.subr.bf16.mxu0 %v5720
    %7665 = vmatpush1.bf16.msra.mxu0 %v5719
    %7666 = vmatprep.subr.bf16.mxu0 %v5727
    %7667 = vmatpush1.bf16.msra.mxu0 %v5726
    %7668 = vmatprep.subr.bf16.mxu0 %v5734
    %7669 = vmatpush1.bf16.msra.mxu0 %v5733
    %7670 = vmatprep.subr.bf16.mxu0 %v5741
    %7671 = vmatpush1.bf16.msra.mxu0 %v5740
    %7672 = vmatprep.subr.bf16.mxu0 %v5748
    %7673 = vmatpush1.bf16.msra.mxu0 %v5747
    %7674 = vmatprep.subr.bf16.mxu0 %v5755
    %7675 = vmatpush1.bf16.msra.mxu0 %v5754
    %7676 = vmatprep.subr.bf16.mxu0 %v5762
    %7677 = vmatpush1.bf16.msra.mxu0 %v5761
    %7678 = vmatprep.subr.bf16.mxu0 %v5769
    %7679 = vmatpush1.bf16.msra.mxu0 %v5768
    %7680 = vmatprep.subr.bf16.mxu0 %v5776
    %7681 = vmatpush1.bf16.msra.mxu0 %v5775
    %7682 = vmatprep.subr.bf16.mxu0 %v5783
    %7683 = vmatpush1.bf16.msra.mxu0 %v5782
    %7684 = vmatprep.subr.bf16.mxu0 %v5790
    %7685 = vmatpush1.bf16.msra.mxu0 %v5789
    %7686 = vmatprep.subr.bf16.mxu0 %v5797
    %7687 = vmatpush1.bf16.msra.mxu0 %v5796
    %7688 = vmatprep.subr.bf16.mxu0 %v5804
    %7689 = vmatpush1.bf16.msra.mxu0 %v5803
    %7690 = vmatprep.subr.bf16.mxu0 %v5811
    %7691 = vmatpush1.bf16.msra.mxu0 %v5810
    %7692 = vmatprep.mubr.bf16.mxu0 %v2459
    %7693 = vmatmul.mubr.bf16.gmra.mrb[0].mxu0 %v2458
    %v7694 = vpop.f32.mrb[0].mxu0
    %v7695 = vadd.f32 %v7654, %v7694
    %v7696 = vpop.f32.mrb[0].mxu0
    %v7697 = vadd.f32 %v7656, %v7696
    %v7698 = vpop.f32.mrb[0].mxu0
    %v7699 = vpop.f32.mrb[0].mxu0
    %7700 = vdwg.mxu0
    %7701 = vmatprep.subr.bf16.mxu0 %v5818
    %7702 = vmatpush1.bf16.msra.mxu0 %v5817
    %7703 = vmatprep.subr.bf16.mxu0 %v5825
    %7704 = vmatpush1.bf16.msra.mxu0 %v5824
    %7705 = vmatprep.subr.bf16.mxu0 %v5832
    %7706 = vmatpush1.bf16.msra.mxu0 %v5831
    %7707 = vmatprep.subr.bf16.mxu0 %v5839
    %7708 = vmatpush1.bf16.msra.mxu0 %v5838
    %7709 = vmatprep.subr.bf16.mxu0 %v5846
    %7710 = vmatpush1.bf16.msra.mxu0 %v5845
    %7711 = vmatprep.subr.bf16.mxu0 %v5853
    %7712 = vmatpush1.bf16.msra.mxu0 %v5852
    %7713 = vmatprep.subr.bf16.mxu0 %v5860
    %7714 = vmatpush1.bf16.msra.mxu0 %v5859
    %7715 = vmatprep.subr.bf16.mxu0 %v5867
    %7716 = vmatpush1.bf16.msra.mxu0 %v5866
    %7717 = vmatprep.subr.bf16.mxu0 %v5874
    %7718 = vmatpush1.bf16.msra.mxu0 %v5873
    %7719 = vmatprep.subr.bf16.mxu0 %v5881
    %7720 = vmatpush1.bf16.msra.mxu0 %v5880
    %7721 = vmatprep.subr.bf16.mxu0 %v5888
    %7722 = vmatpush1.bf16.msra.mxu0 %v5887
    %7723 = vmatprep.subr.bf16.mxu0 %v5895
    %7724 = vmatpush1.bf16.msra.mxu0 %v5894
    %7725 = vmatprep.subr.bf16.mxu0 %v5902
    %7726 = vmatpush1.bf16.msra.mxu0 %v5901
    %7727 = vmatprep.subr.bf16.mxu0 %v5909
    %7728 = vmatpush1.bf16.msra.mxu0 %v5908
    %7729 = vmatprep.subr.bf16.mxu0 %v5916
    %7730 = vmatpush1.bf16.msra.mxu0 %v5915
    %7731 = vmatprep.subr.bf16.mxu0 %v5923
    %7732 = vmatpush1.bf16.msra.mxu0 %v5922
    %7733 = vmatprep.mubr.bf16.mxu0 %v2461
    %7734 = vmatmul.mubr.bf16.gmra.mrb[0].mxu0 %v2460
    %v7735 = vpop.f32.mrb[0].mxu0
    %v7736 = vadd.f32 %v7695, %v7735
    %v7737 = vpop.f32.mrb[0].mxu0
    %v7738 = vadd.f32 %v7697, %v7737
    %v7739 = vpop.f32.mrb[0].mxu0
    %v7740 = vpop.f32.mrb[0].mxu0
    %7741 = vdwg.mxu0
    %7742 = vmatprep.subr.bf16.mxu0 %v5930
    %7743 = vmatpush1.bf16.msra.mxu0 %v5929
    %7744 = vmatprep.subr.bf16.mxu0 %v5937
    %7745 = vmatpush1.bf16.msra.mxu0 %v5936
    %7746 = vmatprep.subr.bf16.mxu0 %v5944
    %7747 = vmatpush1.bf16.msra.mxu0 %v5943
    %7748 = vmatprep.subr.bf16.mxu0 %v5951
    %7749 = vmatpush1.bf16.msra.mxu0 %v5950
    %7750 = vmatprep.subr.bf16.mxu0 %v5958
    %7751 = vmatpush1.bf16.msra.mxu0 %v5957
    %7752 = vmatprep.subr.bf16.mxu0 %v5965
    %7753 = vmatpush1.bf16.msra.mxu0 %v5964
    %7754 = vmatprep.subr.bf16.mxu0 %v5972
    %7755 = vmatpush1.bf16.msra.mxu0 %v5971
    %7756 = vmatprep.subr.bf16.mxu0 %v5979
    %7757 = vmatpush1.bf16.msra.mxu0 %v5978
    %7758 = vmatprep.subr.bf16.mxu0 %v5986
    %7759 = vmatpush1.bf16.msra.mxu0 %v5985
    %7760 = vmatprep.subr.bf16.mxu0 %v5993
    %7761 = vmatpush1.bf16.msra.mxu0 %v5992
    %7762 = vmatprep.subr.bf16.mxu0 %v6000
    %7763 = vmatpush1.bf16.msra.mxu0 %v5999
    %7764 = vmatprep.subr.bf16.mxu0 %v6007
    %7765 = vmatpush1.bf16.msra.mxu0 %v6006
    %7766 = vmatprep.subr.bf16.mxu0 %v6014
    %7767 = vmatpush1.bf16.msra.mxu0 %v6013
    %7768 = vmatprep.subr.bf16.mxu0 %v6021
    %7769 = vmatpush1.bf16.msra.mxu0 %v6020
    %7770 = vmatprep.subr.bf16.mxu0 %v6028
    %7771 = vmatpush1.bf16.msra.mxu0 %v6027
    %7772 = vmatprep.subr.bf16.mxu0 %v6035
    %7773 = vmatpush1.bf16.msra.mxu0 %v6034
    %7774 = vmatprep.mubr.bf16.mxu0 %v2463
    %7775 = vmatmul.mubr.bf16.gmra.mrb[0].mxu0 %v2462
    %v7776 = vpop.f32.mrb[0].mxu0
    %v7777 = vadd.f32 %v7736, %v7776
    %v7778 = vpop.f32.mrb[0].mxu0
    %v7779 = vadd.f32 %v7738, %v7778
    %v7780 = vpop.f32.mrb[0].mxu0
    %v7781 = vpop.f32.mrb[0].mxu0
    %7782 = vdwg.mxu0
    %7783 = vmatprep.subr.bf16.mxu0 %v6042
    %7784 = vmatpush1.bf16.msra.mxu0 %v6041
    %7785 = vmatprep.subr.bf16.mxu0 %v6049
    %7786 = vmatpush1.bf16.msra.mxu0 %v6048
    %7787 = vmatprep.subr.bf16.mxu0 %v6056
    %7788 = vmatpush1.bf16.msra.mxu0 %v6055
    %7789 = vmatprep.subr.bf16.mxu0 %v6063
    %7790 = vmatpush1.bf16.msra.mxu0 %v6062
    %7791 = vmatprep.subr.bf16.mxu0 %v6070
    %7792 = vmatpush1.bf16.msra.mxu0 %v6069
    %7793 = vmatprep.subr.bf16.mxu0 %v6077
    %7794 = vmatpush1.bf16.msra.mxu0 %v6076
    %7795 = vmatprep.subr.bf16.mxu0 %v6084
    %7796 = vmatpush1.bf16.msra.mxu0 %v6083
    %7797 = vmatprep.subr.bf16.mxu0 %v6091
    %7798 = vmatpush1.bf16.msra.mxu0 %v6090
    %7799 = vmatprep.subr.bf16.mxu0 %v6098
    %7800 = vmatpush1.bf16.msra.mxu0 %v6097
    %7801 = vmatprep.subr.bf16.mxu0 %v6105
    %7802 = vmatpush1.bf16.msra.mxu0 %v6104
    %7803 = vmatprep.subr.bf16.mxu0 %v6112
    %7804 = vmatpush1.bf16.msra.mxu0 %v6111
    %7805 = vmatprep.subr.bf16.mxu0 %v6119
    %7806 = vmatpush1.bf16.msra.mxu0 %v6118
    %7807 = vmatprep.subr.bf16.mxu0 %v6126
    %7808 = vmatpush1.bf16.msra.mxu0 %v6125
    %7809 = vmatprep.subr.bf16.mxu0 %v6133
    %7810 = vmatpush1.bf16.msra.mxu0 %v6132
    %7811 = vmatprep.subr.bf16.mxu0 %v6140
    %7812 = vmatpush1.bf16.msra.mxu0 %v6139
    %7813 = vmatprep.subr.bf16.mxu0 %v6147
    %7814 = vmatpush1.bf16.msra.mxu0 %v6146
    %7815 = vmatprep.mubr.bf16.mxu0 %v2465
    %7816 = vmatmul.mubr.bf16.gmra.mrb[0].mxu0 %v2464
    %v7817 = vpop.f32.mrb[0].mxu0
    %v7818 = vadd.f32 %v7777, %v7817
    %v7819 = vpop.f32.mrb[0].mxu0
    %v7820 = vadd.f32 %v7779, %v7819
    %v7821 = vpop.f32.mrb[0].mxu0
    %v7822 = vpop.f32.mrb[0].mxu0
    %7823 = vdwg.mxu0
    %7824 = vmatprep.subr.bf16.mxu0 %v6154
    %7825 = vmatpush1.bf16.msra.mxu0 %v6153
    %7826 = vmatprep.subr.bf16.mxu0 %v6161
    %7827 = vmatpush1.bf16.msra.mxu0 %v6160
    %7828 = vmatprep.subr.bf16.mxu0 %v6168
    %7829 = vmatpush1.bf16.msra.mxu0 %v6167
    %7830 = vmatprep.subr.bf16.mxu0 %v6175
    %7831 = vmatpush1.bf16.msra.mxu0 %v6174
    %7832 = vmatprep.subr.bf16.mxu0 %v6182
    %7833 = vmatpush1.bf16.msra.mxu0 %v6181
    %7834 = vmatprep.subr.bf16.mxu0 %v6189
    %7835 = vmatpush1.bf16.msra.mxu0 %v6188
    %7836 = vmatprep.subr.bf16.mxu0 %v6196
    %7837 = vmatpush1.bf16.msra.mxu0 %v6195
    %7838 = vmatprep.subr.bf16.mxu0 %v6203
    %7839 = vmatpush1.bf16.msra.mxu0 %v6202
    %7840 = vmatprep.subr.bf16.mxu0 %v6210
    %7841 = vmatpush1.bf16.msra.mxu0 %v6209
    %7842 = vmatprep.subr.bf16.mxu0 %v6217
    %7843 = vmatpush1.bf16.msra.mxu0 %v6216
    %7844 = vmatprep.subr.bf16.mxu0 %v6224
    %7845 = vmatpush1.bf16.msra.mxu0 %v6223
    %7846 = vmatprep.subr.bf16.mxu0 %v6231
    %7847 = vmatpush1.bf16.msra.mxu0 %v6230
    %7848 = vmatprep.subr.bf16.mxu0 %v6238
    %7849 = vmatpush1.bf16.msra.mxu0 %v6237
    %7850 = vmatprep.subr.bf16.mxu0 %v6245
    %7851 = vmatpush1.bf16.msra.mxu0 %v6244
    %7852 = vmatprep.subr.bf16.mxu0 %v6252
    %7853 = vmatpush1.bf16.msra.mxu0 %v6251
    %7854 = vmatprep.subr.bf16.mxu0 %v6259
    %7855 = vmatpush1.bf16.msra.mxu0 %v6258
    %7856 = vmatprep.mubr.bf16.mxu0 %v2467
    %7857 = vmatmul.mubr.bf16.gmra.mrb[0].mxu0 %v2466
    %v7858 = vpop.f32.mrb[0].mxu0
    %v7859 = vadd.f32 %v7818, %v7858
    %v7860 = vpop.f32.mrb[0].mxu0
    %v7861 = vadd.f32 %v7820, %v7860
    %v7862 = vpop.f32.mrb[0].mxu0
    %v7863 = vpop.f32.mrb[0].mxu0
    %7864 = vdwg.mxu0
    %7865 = vmatprep.subr.bf16.mxu0 %v6266
    %7866 = vmatpush1.bf16.msra.mxu0 %v6265
    %7867 = vmatprep.subr.bf16.mxu0 %v6273
    %7868 = vmatpush1.bf16.msra.mxu0 %v6272
    %7869 = vmatprep.subr.bf16.mxu0 %v6280
    %7870 = vmatpush1.bf16.msra.mxu0 %v6279
    %7871 = vmatprep.subr.bf16.mxu0 %v6287
    %7872 = vmatpush1.bf16.msra.mxu0 %v6286
    %7873 = vmatprep.subr.bf16.mxu0 %v6294
    %7874 = vmatpush1.bf16.msra.mxu0 %v6293
    %7875 = vmatprep.subr.bf16.mxu0 %v6301
    %7876 = vmatpush1.bf16.msra.mxu0 %v6300
    %7877 = vmatprep.subr.bf16.mxu0 %v6308
    %7878 = vmatpush1.bf16.msra.mxu0 %v6307
    %7879 = vmatprep.subr.bf16.mxu0 %v6315
    %7880 = vmatpush1.bf16.msra.mxu0 %v6314
    %7881 = vmatprep.subr.bf16.mxu0 0
    %7882 = vmatpush1.bf16.msra.mxu0 0
    %7883 = vmatprep.subr.bf16.mxu0 0
    %7884 = vmatpush1.bf16.msra.mxu0 0
    %7885 = vmatprep.subr.bf16.mxu0 0
    %7886 = vmatpush1.bf16.msra.mxu0 0
    %7887 = vmatprep.subr.bf16.mxu0 0
    %7888 = vmatpush1.bf16.msra.mxu0 0
    %7889 = vmatprep.subr.bf16.mxu0 0
    %7890 = vmatpush1.bf16.msra.mxu0 0
    %7891 = vmatprep.subr.bf16.mxu0 0
    %7892 = vmatpush1.bf16.msra.mxu0 0
    %7893 = vmatprep.subr.bf16.mxu0 0
    %7894 = vmatpush1.bf16.msra.mxu0 0
    %7895 = vmatprep.subr.bf16.mxu0 0
    %7896 = vmatpush1.bf16.msra.mxu0 0
    %7897 = vmatprep.mubr.bf16.mxu0 0
    %7898 = vmatmul.mubr.bf16.gmra.mrb[0].mxu0 %v2468
    %v7899 = vpop.f32.mrb[0].mxu0
    %v7900 = vadd.f32 %v7859, %v7899
    %v7901 = vpop.f32.mrb[0].mxu0
    %v7902 = vadd.f32 %v7861, %v7901
    %v7903 = vpop.f32.mrb[0].mxu0
    %v7904 = vpop.f32.mrb[0].mxu0
    %7905 = vdwg.mxu0
    %7906 = vmatprep.subr.bf16.mxu0 0
    %7907 = vmatpush1.bf16.msra.mxu0 %v5595
    %7908 = vmatprep.subr.bf16.mxu0 0
    %7909 = vmatpush1.bf16.msra.mxu0 %v5602
    %7910 = vmatprep.subr.bf16.mxu0 0
    %7911 = vmatpush1.bf16.msra.mxu0 %v5609
    %7912 = vmatprep.subr.bf16.mxu0 0
    %7913 = vmatpush1.bf16.msra.mxu0 %v5616
    %7914 = vmatprep.subr.bf16.mxu0 0
    %7915 = vmatpush1.bf16.msra.mxu0 %v5623
    %7916 = vmatprep.subr.bf16.mxu0 0
    %7917 = vmatpush1.bf16.msra.mxu0 %v5630
    %7918 = vmatprep.subr.bf16.mxu0 0
    %7919 = vmatpush1.bf16.msra.mxu0 %v5637
    %7920 = vmatprep.subr.bf16.mxu0 0
    %7921 = vmatpush1.bf16.msra.mxu0 %v5644
    %7922 = vmatprep.subr.bf16.mxu0 0
    %7923 = vmatpush1.bf16.msra.mxu0 %v5651
    %7924 = vmatprep.subr.bf16.mxu0 0
    %7925 = vmatpush1.bf16.msra.mxu0 %v5658
    %7926 = vmatprep.subr.bf16.mxu0 0
    %7927 = vmatpush1.bf16.msra.mxu0 %v5665
    %7928 = vmatprep.subr.bf16.mxu0 0
    %7929 = vmatpush1.bf16.msra.mxu0 %v5672
    %7930 = vmatprep.subr.bf16.mxu0 0
    %7931 = vmatpush1.bf16.msra.mxu0 %v5679
    %7932 = vmatprep.subr.bf16.mxu0 0
    %7933 = vmatpush1.bf16.msra.mxu0 %v5686
    %7934 = vmatprep.subr.bf16.mxu0 0
    %7935 = vmatpush1.bf16.msra.mxu0 %v5693
    %7936 = vmatprep.subr.bf16.mxu0 0
    %7937 = vmatpush1.bf16.msra.mxu0 %v5700
    %7938 = vmatprep.mubr.bf16.mxu0 %v2457
    %7939 = vmatmul.mubr.bf16.gmra.mrb[0].mxu0 %v2456
    %v7940 = vpop.f32.mrb[0].mxu0
    %v7941 = vadd.f32 0.0, %v7940
    %v7942 = vpop.f32.mrb[0].mxu0
    %v7943 = vpop.f32.mrb[0].mxu0
    %v7944 = vpop.f32.mrb[0].mxu0
    %7945 = vdwg.mxu0
    %7946 = vmatprep.subr.bf16.mxu0 0
    %7947 = vmatpush1.bf16.msra.mxu0 %v5707
    %7948 = vmatprep.subr.bf16.mxu0 0
    %7949 = vmatpush1.bf16.msra.mxu0 %v5714
    %7950 = vmatprep.subr.bf16.mxu0 0
    %7951 = vmatpush1.bf16.msra.mxu0 %v5721
    %7952 = vmatprep.subr.bf16.mxu0 0
    %7953 = vmatpush1.bf16.msra.mxu0 %v5728
    %7954 = vmatprep.subr.bf16.mxu0 0
    %7955 = vmatpush1.bf16.msra.mxu0 %v5735
    %7956 = vmatprep.subr.bf16.mxu0 0
    %7957 = vmatpush1.bf16.msra.mxu0 %v5742
    %7958 = vmatprep.subr.bf16.mxu0 0
    %7959 = vmatpush1.bf16.msra.mxu0 %v5749
    %7960 = vmatprep.subr.bf16.mxu0 0
    %7961 = vmatpush1.bf16.msra.mxu0 %v5756
    %7962 = vmatprep.subr.bf16.mxu0 0
    %7963 = vmatpush1.bf16.msra.mxu0 %v5763
    %7964 = vmatprep.subr.bf16.mxu0 0
    %7965 = vmatpush1.bf16.msra.mxu0 %v5770
    %7966 = vmatprep.subr.bf16.mxu0 0
    %7967 = vmatpush1.bf16.msra.mxu0 %v5777
    %7968 = vmatprep.subr.bf16.mxu0 0
    %7969 = vmatpush1.bf16.msra.mxu0 %v5784
    %7970 = vmatprep.subr.bf16.mxu0 0
    %7971 = vmatpush1.bf16.msra.mxu0 %v5791
    %7972 = vmatprep.subr.bf16.mxu0 0
    %7973 = vmatpush1.bf16.msra.mxu0 %v5798
    %7974 = vmatprep.subr.bf16.mxu0 0
    %7975 = vmatpush1.bf16.msra.mxu0 %v5805
    %7976 = vmatprep.subr.bf16.mxu0 0
    %7977 = vmatpush1.bf16.msra.mxu0 %v5812
    %7978 = vmatprep.mubr.bf16.mxu0 %v2459
    %7979 = vmatmul.mubr.bf16.gmra.mrb[0].mxu0 %v2458
    %v7980 = vpop.f32.mrb[0].mxu0
    %v7981 = vadd.f32 %v7941, %v7980
    %v7982 = vpop.f32.mrb[0].mxu0
    %v7983 = vpop.f32.mrb[0].mxu0
    %v7984 = vpop.f32.mrb[0].mxu0
    %7985 = vdwg.mxu0
    %7986 = vmatprep.subr.bf16.mxu0 0
    %7987 = vmatpush1.bf16.msra.mxu0 %v5819
    %7988 = vmatprep.subr.bf16.mxu0 0
    %7989 = vmatpush1.bf16.msra.mxu0 %v5826
    %7990 = vmatprep.subr.bf16.mxu0 0
    %7991 = vmatpush1.bf16.msra.mxu0 %v5833
    %7992 = vmatprep.subr.bf16.mxu0 0
    %7993 = vmatpush1.bf16.msra.mxu0 %v5840
    %7994 = vmatprep.subr.bf16.mxu0 0
    %7995 = vmatpush1.bf16.msra.mxu0 %v5847
    %7996 = vmatprep.subr.bf16.mxu0 0
    %7997 = vmatpush1.bf16.msra.mxu0 %v5854
    %7998 = vmatprep.subr.bf16.mxu0 0
    %7999 = vmatpush1.bf16.msra.mxu0 %v5861
    %8000 = vmatprep.subr.bf16.mxu0 0
    %8001 = vmatpush1.bf16.msra.mxu0 %v5868
    %8002 = vmatprep.subr.bf16.mxu0 0
    %8003 = vmatpush1.bf16.msra.mxu0 %v5875
    %8004 = vmatprep.subr.bf16.mxu0 0
    %8005 = vmatpush1.bf16.msra.mxu0 %v5882
    %8006 = vmatprep.subr.bf16.mxu0 0
    %8007 = vmatpush1.bf16.msra.mxu0 %v5889
    %8008 = vmatprep.subr.bf16.mxu0 0
    %8009 = vmatpush1.bf16.msra.mxu0 %v5896
    %8010 = vmatprep.subr.bf16.mxu0 0
    %8011 = vmatpush1.bf16.msra.mxu0 %v5903
    %8012 = vmatprep.subr.bf16.mxu0 0
    %8013 = vmatpush1.bf16.msra.mxu0 %v5910
    %8014 = vmatprep.subr.bf16.mxu0 0
    %8015 = vmatpush1.bf16.msra.mxu0 %v5917
    %8016 = vmatprep.subr.bf16.mxu0 0
    %8017 = vmatpush1.bf16.msra.mxu0 %v5924
    %8018 = vmatprep.mubr.bf16.mxu0 %v2461
    %8019 = vmatmul.mubr.bf16.gmra.mrb[0].mxu0 %v2460
    %v8020 = vpop.f32.mrb[0].mxu0
    %v8021 = vadd.f32 %v7981, %v8020
    %v8022 = vpop.f32.mrb[0].mxu0
    %v8023 = vpop.f32.mrb[0].mxu0
    %v8024 = vpop.f32.mrb[0].mxu0
    %8025 = vdwg.mxu0
    %8026 = vmatprep.subr.bf16.mxu0 0
    %8027 = vmatpush1.bf16.msra.mxu0 %v5931
    %8028 = vmatprep.subr.bf16.mxu0 0
    %8029 = vmatpush1.bf16.msra.mxu0 %v5938
    %8030 = vmatprep.subr.bf16.mxu0 0
    %8031 = vmatpush1.bf16.msra.mxu0 %v5945
    %8032 = vmatprep.subr.bf16.mxu0 0
    %8033 = vmatpush1.bf16.msra.mxu0 %v5952
    %8034 = vmatprep.subr.bf16.mxu0 0
    %8035 = vmatpush1.bf16.msra.mxu0 %v5959
    %8036 = vmatprep.subr.bf16.mxu0 0
    %8037 = vmatpush1.bf16.msra.mxu0 %v5966
    %8038 = vmatprep.subr.bf16.mxu0 0
    %8039 = vmatpush1.bf16.msra.mxu0 %v5973
    %8040 = vmatprep.subr.bf16.mxu0 0
    %8041 = vmatpush1.bf16.msra.mxu0 %v5980
    %8042 = vmatprep.subr.bf16.mxu0 0
    %8043 = vmatpush1.bf16.msra.mxu0 %v5987
    %8044 = vmatprep.subr.bf16.mxu0 0
    %8045 = vmatpush1.bf16.msra.mxu0 %v5994
    %8046 = vmatprep.subr.bf16.mxu0 0
    %8047 = vmatpush1.bf16.msra.mxu0 %v6001
    %8048 = vmatprep.subr.bf16.mxu0 0
    %8049 = vmatpush1.bf16.msra.mxu0 %v6008
    %8050 = vmatprep.subr.bf16.mxu0 0
    %8051 = vmatpush1.bf16.msra.mxu0 %v6015
    %8052 = vmatprep.subr.bf16.mxu0 0
    %8053 = vmatpush1.bf16.msra.mxu0 %v6022
    %8054 = vmatprep.subr.bf16.mxu0 0
    %8055 = vmatpush1.bf16.msra.mxu0 %v6029
    %8056 = vmatprep.subr.bf16.mxu0 0
    %8057 = vmatpush1.bf16.msra.mxu0 %v6036
    %8058 = vmatprep.mubr.bf16.mxu0 %v2463
    %8059 = vmatmul.mubr.bf16.gmra.mrb[0].mxu0 %v2462
    %v8060 = vpop.f32.mrb[0].mxu0
    %v8061 = vadd.f32 %v8021, %v8060
    %v8062 = vpop.f32.mrb[0].mxu0
    %v8063 = vpop.f32.mrb[0].mxu0
    %v8064 = vpop.f32.mrb[0].mxu0
    %8065 = vdwg.mxu0
    %8066 = vmatprep.subr.bf16.mxu0 0
    %8067 = vmatpush1.bf16.msra.mxu0 %v6043
    %8068 = vmatprep.subr.bf16.mxu0 0
    %8069 = vmatpush1.bf16.msra.mxu0 %v6050
    %8070 = vmatprep.subr.bf16.mxu0 0
    %8071 = vmatpush1.bf16.msra.mxu0 %v6057
    %8072 = vmatprep.subr.bf16.mxu0 0
    %8073 = vmatpush1.bf16.msra.mxu0 %v6064
    %8074 = vmatprep.subr.bf16.mxu0 0
    %8075 = vmatpush1.bf16.msra.mxu0 %v6071
    %8076 = vmatprep.subr.bf16.mxu0 0
    %8077 = vmatpush1.bf16.msra.mxu0 %v6078
    %8078 = vmatprep.subr.bf16.mxu0 0
    %8079 = vmatpush1.bf16.msra.mxu0 %v6085
    %8080 = vmatprep.subr.bf16.mxu0 0
    %8081 = vmatpush1.bf16.msra.mxu0 %v6092
    %8082 = vmatprep.subr.bf16.mxu0 0
    %8083 = vmatpush1.bf16.msra.mxu0 %v6099
    %8084 = vmatprep.subr.bf16.mxu0 0
    %8085 = vmatpush1.bf16.msra.mxu0 %v6106
    %8086 = vmatprep.subr.bf16.mxu0 0
    %8087 = vmatpush1.bf16.msra.mxu0 %v6113
    %8088 = vmatprep.subr.bf16.mxu0 0
    %8089 = vmatpush1.bf16.msra.mxu0 %v6120
    %8090 = vmatprep.subr.bf16.mxu0 0
    %8091 = vmatpush1.bf16.msra.mxu0 %v6127
    %8092 = vmatprep.subr.bf16.mxu0 0
    %8093 = vmatpush1.bf16.msra.mxu0 %v6134
    %8094 = vmatprep.subr.bf16.mxu0 0
    %8095 = vmatpush1.bf16.msra.mxu0 %v6141
    %8096 = vmatprep.subr.bf16.mxu0 0
    %8097 = vmatpush1.bf16.msra.mxu0 %v6148
    %8098 = vmatprep.mubr.bf16.mxu0 %v2465
    %8099 = vmatmul.mubr.bf16.gmra.mrb[0].mxu0 %v2464
    %v8100 = vpop.f32.mrb[0].mxu0
    %v8101 = vadd.f32 %v8061, %v8100
    %v8102 = vpop.f32.mrb[0].mxu0
    %v8103 = vpop.f32.mrb[0].mxu0
    %v8104 = vpop.f32.mrb[0].mxu0
    %8105 = vdwg.mxu0
    %8106 = vmatprep.subr.bf16.mxu0 0
    %8107 = vmatpush1.bf16.msra.mxu0 %v6155
    %8108 = vmatprep.subr.bf16.mxu0 0
    %8109 = vmatpush1.bf16.msra.mxu0 %v6162
    %8110 = vmatprep.subr.bf16.mxu0 0
    %8111 = vmatpush1.bf16.msra.mxu0 %v6169
    %8112 = vmatprep.subr.bf16.mxu0 0
    %8113 = vmatpush1.bf16.msra.mxu0 %v6176
    %8114 = vmatprep.subr.bf16.mxu0 0
    %8115 = vmatpush1.bf16.msra.mxu0 %v6183
    %8116 = vmatprep.subr.bf16.mxu0 0
    %8117 = vmatpush1.bf16.msra.mxu0 %v6190
    %8118 = vmatprep.subr.bf16.mxu0 0
    %8119 = vmatpush1.bf16.msra.mxu0 %v6197
    %8120 = vmatprep.subr.bf16.mxu0 0
    %8121 = vmatpush1.bf16.msra.mxu0 %v6204
    %8122 = vmatprep.subr.bf16.mxu0 0
    %8123 = vmatpush1.bf16.msra.mxu0 %v6211
    %8124 = vmatprep.subr.bf16.mxu0 0
    %8125 = vmatpush1.bf16.msra.mxu0 %v6218
    %8126 = vmatprep.subr.bf16.mxu0 0
    %8127 = vmatpush1.bf16.msra.mxu0 %v6225
    %8128 = vmatprep.subr.bf16.mxu0 0
    %8129 = vmatpush1.bf16.msra.mxu0 %v6232
    %8130 = vmatprep.subr.bf16.mxu0 0
    %8131 = vmatpush1.bf16.msra.mxu0 %v6239
    %8132 = vmatprep.subr.bf16.mxu0 0
    %8133 = vmatpush1.bf16.msra.mxu0 %v6246
    %8134 = vmatprep.subr.bf16.mxu0 0
    %8135 = vmatpush1.bf16.msra.mxu0 %v6253
    %8136 = vmatprep.subr.bf16.mxu0 0
    %8137 = vmatpush1.bf16.msra.mxu0 %v6260
    %8138 = vmatprep.mubr.bf16.mxu0 %v2467
    %8139 = vmatmul.mubr.bf16.gmra.mrb[0].mxu0 %v2466
    %v8140 = vpop.f32.mrb[0].mxu0
    %v8141 = vadd.f32 %v8101, %v8140
    %v8142 = vpop.f32.mrb[0].mxu0
    %v8143 = vpop.f32.mrb[0].mxu0
    %v8144 = vpop.f32.mrb[0].mxu0
    %8145 = vdwg.mxu0
    %8146 = vmatprep.subr.bf16.mxu0 0
    %8147 = vmatpush1.bf16.msra.mxu0 %v6267
    %8148 = vmatprep.subr.bf16.mxu0 0
    %8149 = vmatpush1.bf16.msra.mxu0 %v6274
    %8150 = vmatprep.subr.bf16.mxu0 0
    %8151 = vmatpush1.bf16.msra.mxu0 %v6281
    %8152 = vmatprep.subr.bf16.mxu0 0
    %8153 = vmatpush1.bf16.msra.mxu0 %v6288
    %8154 = vmatprep.subr.bf16.mxu0 0
    %8155 = vmatpush1.bf16.msra.mxu0 %v6295
    %8156 = vmatprep.subr.bf16.mxu0 0
    %8157 = vmatpush1.bf16.msra.mxu0 %v6302
    %8158 = vmatprep.subr.bf16.mxu0 0
    %8159 = vmatpush1.bf16.msra.mxu0 %v6309
    %8160 = vmatprep.subr.bf16.mxu0 0
    %8161 = vmatpush1.bf16.msra.mxu0 %v6316
    %8162 = vmatprep.subr.bf16.mxu0 0
    %8163 = vmatpush1.bf16.msra.mxu0 0
    %8164 = vmatprep.subr.bf16.mxu0 0
    %8165 = vmatpush1.bf16.msra.mxu0 0
    %8166 = vmatprep.subr.bf16.mxu0 0
    %8167 = vmatpush1.bf16.msra.mxu0 0
    %8168 = vmatprep.subr.bf16.mxu0 0
    %8169 = vmatpush1.bf16.msra.mxu0 0
    %8170 = vmatprep.subr.bf16.mxu0 0
    %8171 = vmatpush1.bf16.msra.mxu0 0
    %8172 = vmatprep.subr.bf16.mxu0 0
    %8173 = vmatpush1.bf16.msra.mxu0 0
    %8174 = vmatprep.subr.bf16.mxu0 0
    %8175 = vmatpush1.bf16.msra.mxu0 0
    %8176 = vmatprep.subr.bf16.mxu0 0
    %8177 = vmatpush1.bf16.msra.mxu0 0
    %8178 = vmatprep.mubr.bf16.mxu0 0
    %8179 = vmatmul.mubr.bf16.gmra.mrb[0].mxu0 %v2468
    %v8180 = vpop.f32.mrb[0].mxu0
    %v8181 = vadd.f32 %v8141, %v8180
    %v8182 = vpop.f32.mrb[0].mxu0
    %v8183 = vpop.f32.mrb[0].mxu0
    %v8184 = vpop.f32.mrb[0].mxu0
    %8185 = vdwg.mxu0
    %v8186 = vsel %vm633, %v7326, 0.0
    %v8187 = vrot.slane %v8186, 4
    %v8188 = vadd.f32 %v8186, %v8187
    %v8189 = vrot.slane %v8188, 2
    %v8190 = vadd.f32 %v8188, %v8189
    %v8191 = vrot.slane %v8190, 1
    %v8192 = vadd.f32 %v8190, %v8191
    %v8193 = vsel %vm633, %v7328, 0.0
    %v8194 = vrot.slane %v8193, 4
    %v8195 = vadd.f32 %v8193, %v8194
    %v8196 = vrot.slane %v8195, 2
    %v8197 = vadd.f32 %v8195, %v8196
    %v8198 = vrot.slane %v8197, 1
    %v8199 = vadd.f32 %v8197, %v8198
    %v8200 = vsel %vm633, %v7613, 0.0
    %v8201 = vrot.slane %v8200, 4
    %v8202 = vadd.f32 %v8200, %v8201
    %v8203 = vrot.slane %v8202, 2
    %v8204 = vadd.f32 %v8202, %v8203
    %v8205 = vrot.slane %v8204, 1
    %v8206 = vadd.f32 %v8204, %v8205
    %v8207 = vsel %vm633, %v7615, 0.0
    %v8208 = vrot.slane %v8207, 4
    %v8209 = vadd.f32 %v8207, %v8208
    %v8210 = vrot.slane %v8209, 2
    %v8211 = vadd.f32 %v8209, %v8210
    %v8212 = vrot.slane %v8211, 1
    %v8213 = vadd.f32 %v8211, %v8212
    %v8214 = vsel %vm633, %v7900, 0.0
    %v8215 = vrot.slane %v8214, 4
    %v8216 = vadd.f32 %v8214, %v8215
    %v8217 = vrot.slane %v8216, 2
    %v8218 = vadd.f32 %v8216, %v8217
    %v8219 = vrot.slane %v8218, 1
    %v8220 = vadd.f32 %v8218, %v8219
    %v8221 = vsel %vm633, %v7902, 0.0
    %v8222 = vrot.slane %v8221, 4
    %v8223 = vadd.f32 %v8221, %v8222
    %v8224 = vrot.slane %v8223, 2
    %v8225 = vadd.f32 %v8223, %v8224
    %v8226 = vrot.slane %v8225, 1
    %v8227 = vadd.f32 %v8225, %v8226
    %v8228 = vsel %vm633, %v8181, 0.0
    %v8229 = vrot.slane %v8228, 4
    %v8230 = vadd.f32 %v8228, %v8229
    %v8231 = vrot.slane %v8230, 2
    %v8232 = vadd.f32 %v8230, %v8231
    %v8233 = vrot.slane %v8232, 1
    %v8234 = vadd.f32 %v8232, %v8233
    %v8235 = vmul.f32 %v7326, %v7326
    %v8236 = vmul.f32 %v7328, %v7328
    %v8237 = vmul.f32 %v7613, %v7613
    %v8238 = vmul.f32 %v7615, %v7615
    %v8239 = vmul.f32 %v7900, %v7900
    %v8240 = vmul.f32 %v7902, %v7902
    %v8241 = vmul.f32 %v8181, %v8181
    %v8242 = vsel %vm633, %v8235, 0.0
    %v8243 = vrot.slane %v8242, 4
    %v8244 = vadd.f32 %v8242, %v8243
    %v8245 = vrot.slane %v8244, 2
    %v8246 = vadd.f32 %v8244, %v8245
    %v8247 = vrot.slane %v8246, 1
    %v8248 = vadd.f32 %v8246, %v8247
    %v8249 = vsel %vm633, %v8236, 0.0
    %v8250 = vrot.slane %v8249, 4
    %v8251 = vadd.f32 %v8249, %v8250
    %v8252 = vrot.slane %v8251, 2
    %v8253 = vadd.f32 %v8251, %v8252
    %v8254 = vrot.slane %v8253, 1
    %v8255 = vadd.f32 %v8253, %v8254
    %v8256 = vsel %vm633, %v8237, 0.0
    %v8257 = vrot.slane %v8256, 4
    %v8258 = vadd.f32 %v8256, %v8257
    %v8259 = vrot.slane %v8258, 2
    %v8260 = vadd.f32 %v8258, %v8259
    %v8261 = vrot.slane %v8260, 1
    %v8262 = vadd.f32 %v8260, %v8261
    %v8263 = vsel %vm633, %v8238, 0.0
    %v8264 = vrot.slane %v8263, 4
    %v8265 = vadd.f32 %v8263, %v8264
    %v8266 = vrot.slane %v8265, 2
    %v8267 = vadd.f32 %v8265, %v8266
    %v8268 = vrot.slane %v8267, 1
    %v8269 = vadd.f32 %v8267, %v8268
    %v8270 = vsel %vm633, %v8239, 0.0
    %v8271 = vrot.slane %v8270, 4
    %v8272 = vadd.f32 %v8270, %v8271
    %v8273 = vrot.slane %v8272, 2
    %v8274 = vadd.f32 %v8272, %v8273
    %v8275 = vrot.slane %v8274, 1
    %v8276 = vadd.f32 %v8274, %v8275
    %v8277 = vsel %vm633, %v8240, 0.0
    %v8278 = vrot.slane %v8277, 4
    %v8279 = vadd.f32 %v8277, %v8278
    %v8280 = vrot.slane %v8279, 2
    %v8281 = vadd.f32 %v8279, %v8280
    %v8282 = vrot.slane %v8281, 1
    %v8283 = vadd.f32 %v8281, %v8282
    %v8284 = vsel %vm633, %v8241, 0.0
    %v8285 = vrot.slane %v8284, 4
    %v8286 = vadd.f32 %v8284, %v8285
    %v8287 = vrot.slane %v8286, 2
    %v8288 = vadd.f32 %v8286, %v8287
    %v8289 = vrot.slane %v8288, 1
    %v8290 = vadd.f32 %v8288, %v8289
    %v8291 = vsel %vm830, %v8192, %v8248
    %v8292 = vsel %vm830, %v8199, %v8255
    %v8293 = vsel %vm830, %v8206, %v8262
    %v8294 = vsel %vm830, %v8213, %v8269
    %v8295 = vsel %vm830, %v8220, %v8276
    %v8296 = vsel %vm830, %v8227, %v8283
    %v8297 = vsel %vm830, %v8234, %v8290
    %v8298 = vld [vmem:[%s7] sm:$0xf]
    %v8299 = vld [vmem:[%s7 + $0x4] sm:$0xf]
    %v8300 = vld [vmem:[%s7 + $0x8] sm:$0xf]
    %v8301 = vld [vmem:[%s7 + $0xc] sm:$0xf]
    %v8302 = vld [vmem:[%s7 + $0x10] sm:$0xf]
    %v8303 = vld [vmem:[%s7 + $0x14] sm:$0xf]
    %v8304 = vld [vmem:[%s7 + $0x18] sm:$0xf]
    %v8305 = vld [vmem:[%s7 + $0x1c] sm:$0xf]
    %v8306 = vld [vmem:[%s7 + $0x20] sm:$0xf]
    %v8307 = vld [vmem:[%s7 + $0x24] sm:$0xf]
    %v8308 = vld [vmem:[%s7 + $0x28] sm:$0xf]
    %v8309 = vld [vmem:[%s7 + $0x2c] sm:$0xf]
    %v8310 = vld [vmem:[%s7 + $0x30] sm:$0xf]
    %v8311 = vld [vmem:[%s7 + $0x34] sm:$0xf]
    %v8312 = vld [vmem:[%s7 + $0x38] sm:$0xf]
    %v8313 = vld [vmem:[%s7 + $0x3c] sm:$0xf]
    %v8314 = vld [vmem:[%s7 + $0x40] sm:$0xf]
    %v8315 = vld [vmem:[%s7 + $0x44] sm:$0xf]
    %v8316 = vld [vmem:[%s7 + $0x48] sm:$0xf]
    %v8317 = vld [vmem:[%s7 + $0x4c] sm:$0xf]
    %v8318 = vld [vmem:[%s7 + $0x50] sm:$0xf]
    %v8319 = vld [vmem:[%s7 + $0x54] sm:$0xf]
    %v8320 = vld [vmem:[%s7 + $0x58] sm:$0xf]
    %v8321 = vld [vmem:[%s7 + $0x5c] sm:$0xf]
    %v8322 = vld [vmem:[%s7 + $0x60] sm:$0xf]
    %v8323 = vld [vmem:[%s7 + $0x64] sm:$0xf]
    %v8324 = vld [vmem:[%s7 + $0x68] sm:$0xf]
    %v8325 = vld [vmem:[%s7 + $0x6c] sm:$0xf]
    %v8326 = vld [vmem:[%s7 + $0x70] sm:$0xf]
    %v8327 = vld [vmem:[%s7 + $0x74] sm:$0xf]
    %v8328 = vld [vmem:[%s7 + $0x78] sm:$0xf]
    %v8329 = vld [vmem:[%s7 + $0x7c] sm:$0xf]
    %v8330 = vld [vmem:[%s7 + $0x80] sm:$0xf]
    %v8331 = vld [vmem:[%s7 + $0x84] sm:$0xf]
    %v8332 = vld [vmem:[%s7 + $0x88] sm:$0xf]
    %v8333 = vld [vmem:[%s7 + $0x8c] sm:$0xf]
    %v8334 = vld [vmem:[%s7 + $0x90] sm:$0xf]
    %v8335 = vld [vmem:[%s7 + $0x94] sm:$0xf]
    %v8336 = vld [vmem:[%s7 + $0x98] sm:$0xf]
    %v8337 = vld [vmem:[%s7 + $0x9c] sm:$0xf]
    %v8338 = vld [vmem:[%s7 + $0xa0] sm:$0xf]
    %v8339 = vld [vmem:[%s7 + $0xa4] sm:$0xf]
    %v8340 = vld [vmem:[%s7 + $0xa8] sm:$0xf]
    %v8341 = vld [vmem:[%s7 + $0xac] sm:$0xf]
    %v8342 = vld [vmem:[%s7 + $0xb0] sm:$0xf]
    %v8343 = vld [vmem:[%s7 + $0xb4] sm:$0xf]
    %v8344 = vld [vmem:[%s7 + $0xb8] sm:$0xf]
    %v8345 = vld [vmem:[%s7 + $0xbc] sm:$0xf]
    %v8346 = vld [vmem:[%s7 + $0xc0] sm:$0xf]
    %v8347 = vld [vmem:[%s7 + $0xc4] sm:$0xf]
    %v8348 = vld [vmem:[%s7 + $0xc8] sm:$0xf]
    %v8349 = vld [vmem:[%s7 + $0xcc] sm:$0xf]
    %v8350 = vld [vmem:[%s7 + $0xd0] sm:$0xf]
    %v8351 = vld [vmem:[%s7 + $0xd4] sm:$0xf]
    %v8352 = vld [vmem:[%s7 + $0xd8] sm:$0xf]
    %v8353 = vld [vmem:[%s7 + $0xdc] sm:$0xf]
    %v8354 = vld [vmem:[%s7 + $0xe0] sm:$0xf]
    %v8355 = vld [vmem:[%s7 + $0xe4] sm:$0xf]
    %v8356 = vld [vmem:[%s7 + $0xe8] sm:$0xf]
    %v8357 = vld [vmem:[%s7 + $0xec] sm:$0xf]
    %v8358 = vld [vmem:[%s7 + $0xf0] sm:$0xf]
    %v8359 = vld [vmem:[%s7 + $0xf4] sm:$0xf]
    %v8360 = vld [vmem:[%s7 + $0xf8] sm:$0xf]
    %v8361 = vld [vmem:[%s7 + $0xfc] sm:$0xf]
    %v8362 = vld [vmem:[%s7 + $0x100] sm:$0xf]
    %v8363 = vld [vmem:[%s7 + $0x104] sm:$0xf]
    %v8364 = vld [vmem:[%s7 + $0x108] sm:$0xf]
    %v8365 = vld [vmem:[%s7 + $0x10c] sm:$0xf]
    %v8366 = vld [vmem:[%s7 + $0x110] sm:$0xf]
    %v8367 = vld [vmem:[%s7 + $0x114] sm:$0xf]
    %v8368 = vld [vmem:[%s7 + $0x118] sm:$0xf]
    %v8369 = vld [vmem:[%s7 + $0x11c] sm:$0xf]
    %v8370 = vld [vmem:[%s7 + $0x120] sm:$0xf]
    %v8371 = vld [vmem:[%s7 + $0x124] sm:$0xf]
    %v8372 = vld [vmem:[%s7 + $0x128] sm:$0xf]
    %v8373 = vld [vmem:[%s7 + $0x12c] sm:$0xf]
    %v8374 = vld [vmem:[%s7 + $0x130] sm:$0xf]
    %v8375 = vld [vmem:[%s7 + $0x134] sm:$0xf]
    %v8376 = vld [vmem:[%s7 + $0x138] sm:$0xf]
    %v8377 = vld [vmem:[%s7 + $0x13c] sm:$0xf]
    %v8378 = vld [vmem:[%s7 + $0x140] sm:$0xf]
    %v8379 = vld [vmem:[%s7 + $0x144] sm:$0xf]
    %v8380 = vld [vmem:[%s7 + $0x148] sm:$0xf]
    %v8381 = vld [vmem:[%s7 + $0x14c] sm:$0xf]
    %v8382 = vld [vmem:[%s7 + $0x150] sm:$0xf]
    %v8383 = vld [vmem:[%s7 + $0x154] sm:$0xf]
    %v8384 = vld [vmem:[%s7 + $0x158] sm:$0xf]
    %v8385 = vld [vmem:[%s7 + $0x15c] sm:$0xf]
    %v8386 = vld [vmem:[%s7 + $0x160] sm:$0xf]
    %v8387 = vld [vmem:[%s7 + $0x164] sm:$0xf]
    %v8388 = vld [vmem:[%s7 + $0x168] sm:$0xf]
    %v8389 = vld [vmem:[%s7 + $0x16c] sm:$0xf]
    %v8390 = vld [vmem:[%s7 + $0x170] sm:$0xf]
    %v8391 = vld [vmem:[%s7 + $0x174] sm:$0xf]
    %v8392 = vld [vmem:[%s7 + $0x178] sm:$0xf]
    %v8393 = vld [vmem:[%s7 + $0x17c] sm:$0xf]
    %v8394 = vld [vmem:[%s7 + $0x180] sm:$0xf]
    %v8395 = vld [vmem:[%s7 + $0x184] sm:$0xf]
    %v8396 = vld [vmem:[%s7 + $0x188] sm:$0xf]
    %v8397 = vld [vmem:[%s7 + $0x18c] sm:$0xf]
    %v8398 = vld [vmem:[%s7 + $0x190] sm:$0xf]
    %v8399 = vld [vmem:[%s7 + $0x194] sm:$0xf]
    %v8400 = vld [vmem:[%s7 + $0x198] sm:$0xf]
    %v8401 = vld [vmem:[%s7 + $0x19c] sm:$0xf]
    %v8402 = vld [vmem:[%s7 + $0x1a0] sm:$0xf]
    %v8403 = vld [vmem:[%s7 + $0x1a4] sm:$0xf]
    %v8404 = vld [vmem:[%s7 + $0x1a8] sm:$0xf]
    %v8405 = vld [vmem:[%s7 + $0x1ac] sm:$0xf]
    %v8406 = vld [vmem:[%s7 + $0x1b0] sm:$0xf]
    %v8407 = vld [vmem:[%s7 + $0x1b4] sm:$0xf]
    %v8408 = vld [vmem:[%s7 + $0x1b8] sm:$0xf]
    %v8409 = vld [vmem:[%s7 + $0x1bc] sm:$0xf]
    %v8410 = vunpack.c.l.bf16 %v8298
    %v8411 = vunpack.c.l.bf16 %v8299
    %v8412 = vunpack.c.l.bf16 %v8300
    %v8413 = vunpack.c.l.bf16 %v8301
    %v8414 = vunpack.c.l.bf16 %v8302
    %v8415 = vunpack.c.l.bf16 %v8303
    %v8416 = vunpack.c.l.bf16 %v8304
    %v8417 = vunpack.c.l.bf16 %v8305
    %v8418 = vunpack.c.l.bf16 %v8306
    %v8419 = vunpack.c.l.bf16 %v8307
    %v8420 = vunpack.c.l.bf16 %v8308
    %v8421 = vunpack.c.l.bf16 %v8309
    %v8422 = vunpack.c.l.bf16 %v8310
    %v8423 = vunpack.c.l.bf16 %v8311
    %v8424 = vunpack.c.l.bf16 %v8312
    %v8425 = vunpack.c.l.bf16 %v8313
    %v8426 = vunpack.c.l.bf16 %v8314
    %v8427 = vunpack.c.l.bf16 %v8315
    %v8428 = vunpack.c.l.bf16 %v8316
    %v8429 = vunpack.c.l.bf16 %v8317
    %v8430 = vunpack.c.l.bf16 %v8318
    %v8431 = vunpack.c.l.bf16 %v8319
    %v8432 = vunpack.c.l.bf16 %v8320
    %v8433 = vunpack.c.l.bf16 %v8321
    %v8434 = vunpack.c.l.bf16 %v8322
    %v8435 = vunpack.c.l.bf16 %v8323
    %v8436 = vunpack.c.l.bf16 %v8324
    %v8437 = vunpack.c.l.bf16 %v8325
    %v8438 = vunpack.c.l.bf16 %v8326
    %v8439 = vunpack.c.l.bf16 %v8327
    %v8440 = vunpack.c.l.bf16 %v8328
    %v8441 = vunpack.c.l.bf16 %v8329
    %v8442 = vunpack.c.l.bf16 %v8330
    %v8443 = vunpack.c.l.bf16 %v8331
    %v8444 = vunpack.c.l.bf16 %v8332
    %v8445 = vunpack.c.l.bf16 %v8333
    %v8446 = vunpack.c.l.bf16 %v8334
    %v8447 = vunpack.c.l.bf16 %v8335
    %v8448 = vunpack.c.l.bf16 %v8336
    %v8449 = vunpack.c.l.bf16 %v8337
    %v8450 = vunpack.c.l.bf16 %v8338
    %v8451 = vunpack.c.l.bf16 %v8339
    %v8452 = vunpack.c.l.bf16 %v8340
    %v8453 = vunpack.c.l.bf16 %v8341
    %v8454 = vunpack.c.l.bf16 %v8342
    %v8455 = vunpack.c.l.bf16 %v8343
    %v8456 = vunpack.c.l.bf16 %v8344
    %v8457 = vunpack.c.l.bf16 %v8345
    %v8458 = vunpack.c.l.bf16 %v8346
    %v8459 = vunpack.c.l.bf16 %v8347
    %v8460 = vunpack.c.l.bf16 %v8348
    %v8461 = vunpack.c.l.bf16 %v8349
    %v8462 = vunpack.c.l.bf16 %v8350
    %v8463 = vunpack.c.l.bf16 %v8351
    %v8464 = vunpack.c.l.bf16 %v8352
    %v8465 = vunpack.c.l.bf16 %v8353
    %v8466 = vunpack.c.l.bf16 %v8354
    %v8467 = vunpack.c.l.bf16 %v8355
    %v8468 = vunpack.c.l.bf16 %v8356
    %v8469 = vunpack.c.l.bf16 %v8357
    %v8470 = vunpack.c.l.bf16 %v8358
    %v8471 = vunpack.c.l.bf16 %v8359
    %v8472 = vunpack.c.l.bf16 %v8360
    %v8473 = vunpack.c.l.bf16 %v8361
    %v8474 = vunpack.c.l.bf16 %v8362
    %v8475 = vunpack.c.l.bf16 %v8363
    %v8476 = vunpack.c.l.bf16 %v8364
    %v8477 = vunpack.c.l.bf16 %v8365
    %v8478 = vunpack.c.l.bf16 %v8366
    %v8479 = vunpack.c.l.bf16 %v8367
    %v8480 = vunpack.c.l.bf16 %v8368
    %v8481 = vunpack.c.l.bf16 %v8369
    %v8482 = vunpack.c.l.bf16 %v8370
    %v8483 = vunpack.c.l.bf16 %v8371
    %v8484 = vunpack.c.l.bf16 %v8372
    %v8485 = vunpack.c.l.bf16 %v8373
    %v8486 = vunpack.c.l.bf16 %v8374
    %v8487 = vunpack.c.l.bf16 %v8375
    %v8488 = vunpack.c.l.bf16 %v8376
    %v8489 = vunpack.c.l.bf16 %v8377
    %v8490 = vunpack.c.l.bf16 %v8378
    %v8491 = vunpack.c.l.bf16 %v8379
    %v8492 = vunpack.c.l.bf16 %v8380
    %v8493 = vunpack.c.l.bf16 %v8381
    %v8494 = vunpack.c.l.bf16 %v8382
    %v8495 = vunpack.c.l.bf16 %v8383
    %v8496 = vunpack.c.l.bf16 %v8384
    %v8497 = vunpack.c.l.bf16 %v8385
    %v8498 = vunpack.c.l.bf16 %v8386
    %v8499 = vunpack.c.l.bf16 %v8387
    %v8500 = vunpack.c.l.bf16 %v8388
    %v8501 = vunpack.c.l.bf16 %v8389
    %v8502 = vunpack.c.l.bf16 %v8390
    %v8503 = vunpack.c.l.bf16 %v8391
    %v8504 = vunpack.c.l.bf16 %v8392
    %v8505 = vunpack.c.l.bf16 %v8393
    %v8506 = vunpack.c.l.bf16 %v8394
    %v8507 = vunpack.c.l.bf16 %v8395
    %v8508 = vunpack.c.l.bf16 %v8396
    %v8509 = vunpack.c.l.bf16 %v8397
    %v8510 = vunpack.c.l.bf16 %v8398
    %v8511 = vunpack.c.l.bf16 %v8399
    %v8512 = vunpack.c.l.bf16 %v8400
    %v8513 = vunpack.c.l.bf16 %v8401
    %v8514 = vunpack.c.l.bf16 %v8402
    %v8515 = vunpack.c.l.bf16 %v8403
    %v8516 = vunpack.c.l.bf16 %v8404
    %v8517 = vunpack.c.l.bf16 %v8405
    %v8518 = vunpack.c.l.bf16 %v8406
    %v8519 = vunpack.c.l.bf16 %v8407
    %v8520 = vunpack.c.l.bf16 %v8408
    %v8521 = vunpack.c.l.bf16 %v8409
    %8522 = vmatprep.subr.mxu0 0.0
    %8523 = vmatpush1.msra.mxu0 %v8410
    %8524 = vmatprep.subr.mxu0 0.0
    %8525 = vmatpush1.msra.mxu0 %v8411
    %8526 = vmatprep.subr.mxu0 0.0
    %8527 = vmatpush1.msra.mxu0 %v8412
    %8528 = vmatprep.subr.mxu0 0.0
    %8529 = vmatpush1.msra.mxu0 %v8413
    %8530 = vmatprep.subr.mxu0 0.0
    %8531 = vmatpush1.msra.mxu0 %v8414
    %8532 = vmatprep.subr.mxu0 0.0
    %8533 = vmatpush1.msra.mxu0 %v8415
    %8534 = vmatprep.subr.mxu0 0.0
    %8535 = vmatpush1.msra.mxu0 %v8416
    %8536 = vmatprep.subr.mxu0 0.0
    %8537 = vmatpush1.msra.mxu0 %v8417
    %8538 = vmatprep.subr.mxu0 0.0
    %8539 = vmatpush1.msra.mxu0 %v8418
    %8540 = vmatprep.subr.mxu0 0.0
    %8541 = vmatpush1.msra.mxu0 %v8419
    %8542 = vmatprep.subr.mxu0 0.0
    %8543 = vmatpush1.msra.mxu0 %v8420
    %8544 = vmatprep.subr.mxu0 0.0
    %8545 = vmatpush1.msra.mxu0 %v8421
    %8546 = vmatprep.subr.mxu0 0.0
    %8547 = vmatpush1.msra.mxu0 %v8422
    %8548 = vmatprep.subr.mxu0 0.0
    %8549 = vmatpush1.msra.mxu0 %v8423
    %8550 = vmatprep.subr.mxu0 0.0
    %8551 = vmatpush1.msra.mxu0 %v8424
    %8552 = vmatprep.subr.mxu0 0.0
    %8553 = vmatpush1.msra.mxu0 %v8425
    %8554 = vmatprep.subr.mxu0 0.0
    %8555 = vmatpush1.msra.mxu0 %v8426
    %8556 = vmatprep.subr.mxu0 0.0
    %8557 = vmatpush1.msra.mxu0 %v8427
    %8558 = vmatprep.subr.mxu0 0.0
    %8559 = vmatpush1.msra.mxu0 %v8428
    %8560 = vmatprep.subr.mxu0 0.0
    %8561 = vmatpush1.msra.mxu0 %v8429
    %8562 = vmatprep.subr.mxu0 0.0
    %8563 = vmatpush1.msra.mxu0 %v8430
    %8564 = vmatprep.subr.mxu0 0.0
    %8565 = vmatpush1.msra.mxu0 %v8431
    %8566 = vmatprep.subr.mxu0 0.0
    %8567 = vmatpush1.msra.mxu0 %v8432
    %8568 = vmatprep.subr.mxu0 0.0
    %8569 = vmatpush1.msra.mxu0 %v8433
    %8570 = vmatprep.subr.mxu0 0.0
    %8571 = vmatpush1.msra.mxu0 %v8434
    %8572 = vmatprep.subr.mxu0 0.0
    %8573 = vmatpush1.msra.mxu0 %v8435
    %8574 = vmatprep.subr.mxu0 0.0
    %8575 = vmatpush1.msra.mxu0 %v8436
    %8576 = vmatprep.subr.mxu0 0.0
    %8577 = vmatpush1.msra.mxu0 %v8437
    %8578 = vmatprep.subr.mxu0 0.0
    %8579 = vmatpush1.msra.mxu0 %v8438
    %8580 = vmatprep.subr.mxu0 0.0
    %8581 = vmatpush1.msra.mxu0 %v8439
    %8582 = vmatprep.subr.mxu0 0.0
    %8583 = vmatpush1.msra.mxu0 %v8440
    %8584 = vmatprep.subr.mxu0 0.0
    %8585 = vmatpush1.msra.mxu0 %v8441
    %8586 = vmatprep.mubr.f32.mxu0 %v8292
    %8587 = vmatmul.mubr.f32.gmra.mrb[0].mxu0 %v8291
    %v8588 = vpop.f32.mrb[0].mxu0
    %v8589 = vadd.f32 0.0, %v8588
    %v8590 = vpop.f32.mrb[0].mxu0
    %8591 = vdwg.mxu0
    %8592 = vmatprep.subr.mxu0 0.0
    %8593 = vmatpush1.msra.mxu0 %v8442
    %8594 = vmatprep.subr.mxu0 0.0
    %8595 = vmatpush1.msra.mxu0 %v8443
    %8596 = vmatprep.subr.mxu0 0.0
    %8597 = vmatpush1.msra.mxu0 %v8444
    %8598 = vmatprep.subr.mxu0 0.0
    %8599 = vmatpush1.msra.mxu0 %v8445
    %8600 = vmatprep.subr.mxu0 0.0
    %8601 = vmatpush1.msra.mxu0 %v8446
    %8602 = vmatprep.subr.mxu0 0.0
    %8603 = vmatpush1.msra.mxu0 %v8447
    %8604 = vmatprep.subr.mxu0 0.0
    %8605 = vmatpush1.msra.mxu0 %v8448
    %8606 = vmatprep.subr.mxu0 0.0
    %8607 = vmatpush1.msra.mxu0 %v8449
    %8608 = vmatprep.subr.mxu0 0.0
    %8609 = vmatpush1.msra.mxu0 %v8450
    %8610 = vmatprep.subr.mxu0 0.0
    %8611 = vmatpush1.msra.mxu0 %v8451
    %8612 = vmatprep.subr.mxu0 0.0
    %8613 = vmatpush1.msra.mxu0 %v8452
    %8614 = vmatprep.subr.mxu0 0.0
    %8615 = vmatpush1.msra.mxu0 %v8453
    %8616 = vmatprep.subr.mxu0 0.0
    %8617 = vmatpush1.msra.mxu0 %v8454
    %8618 = vmatprep.subr.mxu0 0.0
    %8619 = vmatpush1.msra.mxu0 %v8455
    %8620 = vmatprep.subr.mxu0 0.0
    %8621 = vmatpush1.msra.mxu0 %v8456
    %8622 = vmatprep.subr.mxu0 0.0
    %8623 = vmatpush1.msra.mxu0 %v8457
    %8624 = vmatprep.subr.mxu0 0.0
    %8625 = vmatpush1.msra.mxu0 %v8458
    %8626 = vmatprep.subr.mxu0 0.0
    %8627 = vmatpush1.msra.mxu0 %v8459
    %8628 = vmatprep.subr.mxu0 0.0
    %8629 = vmatpush1.msra.mxu0 %v8460
    %8630 = vmatprep.subr.mxu0 0.0
    %8631 = vmatpush1.msra.mxu0 %v8461
    %8632 = vmatprep.subr.mxu0 0.0
    %8633 = vmatpush1.msra.mxu0 %v8462
    %8634 = vmatprep.subr.mxu0 0.0
    %8635 = vmatpush1.msra.mxu0 %v8463
    %8636 = vmatprep.subr.mxu0 0.0
    %8637 = vmatpush1.msra.mxu0 %v8464
    %8638 = vmatprep.subr.mxu0 0.0
    %8639 = vmatpush1.msra.mxu0 %v8465
    %8640 = vmatprep.subr.mxu0 0.0
    %8641 = vmatpush1.msra.mxu0 %v8466
    %8642 = vmatprep.subr.mxu0 0.0
    %8643 = vmatpush1.msra.mxu0 %v8467
    %8644 = vmatprep.subr.mxu0 0.0
    %8645 = vmatpush1.msra.mxu0 %v8468
    %8646 = vmatprep.subr.mxu0 0.0
    %8647 = vmatpush1.msra.mxu0 %v8469
    %8648 = vmatprep.subr.mxu0 0.0
    %8649 = vmatpush1.msra.mxu0 %v8470
    %8650 = vmatprep.subr.mxu0 0.0
    %8651 = vmatpush1.msra.mxu0 %v8471
    %8652 = vmatprep.subr.mxu0 0.0
    %8653 = vmatpush1.msra.mxu0 %v8472
    %8654 = vmatprep.subr.mxu0 0.0
    %8655 = vmatpush1.msra.mxu0 %v8473
    %8656 = vmatprep.mubr.f32.mxu0 %v8294
    %8657 = vmatmul.mubr.f32.gmra.mrb[0].mxu0 %v8293
    %v8658 = vpop.f32.mrb[0].mxu0
    %v8659 = vadd.f32 %v8589, %v8658
    %v8660 = vpop.f32.mrb[0].mxu0
    %8661 = vdwg.mxu0
    %8662 = vmatprep.subr.mxu0 0.0
    %8663 = vmatpush1.msra.mxu0 %v8474
    %8664 = vmatprep.subr.mxu0 0.0
    %8665 = vmatpush1.msra.mxu0 %v8475
    %8666 = vmatprep.subr.mxu0 0.0
    %8667 = vmatpush1.msra.mxu0 %v8476
    %8668 = vmatprep.subr.mxu0 0.0
    %8669 = vmatpush1.msra.mxu0 %v8477
    %8670 = vmatprep.subr.mxu0 0.0
    %8671 = vmatpush1.msra.mxu0 %v8478
    %8672 = vmatprep.subr.mxu0 0.0
    %8673 = vmatpush1.msra.mxu0 %v8479
    %8674 = vmatprep.subr.mxu0 0.0
    %8675 = vmatpush1.msra.mxu0 %v8480
    %8676 = vmatprep.subr.mxu0 0.0
    %8677 = vmatpush1.msra.mxu0 %v8481
    %8678 = vmatprep.subr.mxu0 0.0
    %8679 = vmatpush1.msra.mxu0 %v8482
    %8680 = vmatprep.subr.mxu0 0.0
    %8681 = vmatpush1.msra.mxu0 %v8483
    %8682 = vmatprep.subr.mxu0 0.0
    %8683 = vmatpush1.msra.mxu0 %v8484
    %8684 = vmatprep.subr.mxu0 0.0
    %8685 = vmatpush1.msra.mxu0 %v8485
    %8686 = vmatprep.subr.mxu0 0.0
    %8687 = vmatpush1.msra.mxu0 %v8486
    %8688 = vmatprep.subr.mxu0 0.0
    %8689 = vmatpush1.msra.mxu0 %v8487
    %8690 = vmatprep.subr.mxu0 0.0
    %8691 = vmatpush1.msra.mxu0 %v8488
    %8692 = vmatprep.subr.mxu0 0.0
    %8693 = vmatpush1.msra.mxu0 %v8489
    %8694 = vmatprep.subr.mxu0 0.0
    %8695 = vmatpush1.msra.mxu0 %v8490
    %8696 = vmatprep.subr.mxu0 0.0
    %8697 = vmatpush1.msra.mxu0 %v8491
    %8698 = vmatprep.subr.mxu0 0.0
    %8699 = vmatpush1.msra.mxu0 %v8492
    %8700 = vmatprep.subr.mxu0 0.0
    %8701 = vmatpush1.msra.mxu0 %v8493
    %8702 = vmatprep.subr.mxu0 0.0
    %8703 = vmatpush1.msra.mxu0 %v8494
    %8704 = vmatprep.subr.mxu0 0.0
    %8705 = vmatpush1.msra.mxu0 %v8495
    %8706 = vmatprep.subr.mxu0 0.0
    %8707 = vmatpush1.msra.mxu0 %v8496
    %8708 = vmatprep.subr.mxu0 0.0
    %8709 = vmatpush1.msra.mxu0 %v8497
    %8710 = vmatprep.subr.mxu0 0.0
    %8711 = vmatpush1.msra.mxu0 %v8498
    %8712 = vmatprep.subr.mxu0 0.0
    %8713 = vmatpush1.msra.mxu0 %v8499
    %8714 = vmatprep.subr.mxu0 0.0
    %8715 = vmatpush1.msra.mxu0 %v8500
    %8716 = vmatprep.subr.mxu0 0.0
    %8717 = vmatpush1.msra.mxu0 %v8501
    %8718 = vmatprep.subr.mxu0 0.0
    %8719 = vmatpush1.msra.mxu0 %v8502
    %8720 = vmatprep.subr.mxu0 0.0
    %8721 = vmatpush1.msra.mxu0 %v8503
    %8722 = vmatprep.subr.mxu0 0.0
    %8723 = vmatpush1.msra.mxu0 %v8504
    %8724 = vmatprep.subr.mxu0 0.0
    %8725 = vmatpush1.msra.mxu0 %v8505
    %8726 = vmatprep.mubr.f32.mxu0 %v8296
    %8727 = vmatmul.mubr.f32.gmra.mrb[0].mxu0 %v8295
    %v8728 = vpop.f32.mrb[0].mxu0
    %v8729 = vadd.f32 %v8659, %v8728
    %v8730 = vpop.f32.mrb[0].mxu0
    %8731 = vdwg.mxu0
    %8732 = vmatprep.subr.mxu0 0.0
    %8733 = vmatpush1.msra.mxu0 %v8506
    %8734 = vmatprep.subr.mxu0 0.0
    %8735 = vmatpush1.msra.mxu0 %v8507
    %8736 = vmatprep.subr.mxu0 0.0
    %8737 = vmatpush1.msra.mxu0 %v8508
    %8738 = vmatprep.subr.mxu0 0.0
    %8739 = vmatpush1.msra.mxu0 %v8509
    %8740 = vmatprep.subr.mxu0 0.0
    %8741 = vmatpush1.msra.mxu0 %v8510
    %8742 = vmatprep.subr.mxu0 0.0
    %8743 = vmatpush1.msra.mxu0 %v8511
    %8744 = vmatprep.subr.mxu0 0.0
    %8745 = vmatpush1.msra.mxu0 %v8512
    %8746 = vmatprep.subr.mxu0 0.0
    %8747 = vmatpush1.msra.mxu0 %v8513
    %8748 = vmatprep.subr.mxu0 0.0
    %8749 = vmatpush1.msra.mxu0 %v8514
    %8750 = vmatprep.subr.mxu0 0.0
    %8751 = vmatpush1.msra.mxu0 %v8515
    %8752 = vmatprep.subr.mxu0 0.0
    %8753 = vmatpush1.msra.mxu0 %v8516
    %8754 = vmatprep.subr.mxu0 0.0
    %8755 = vmatpush1.msra.mxu0 %v8517
    %8756 = vmatprep.subr.mxu0 0.0
    %8757 = vmatpush1.msra.mxu0 %v8518
    %8758 = vmatprep.subr.mxu0 0.0
    %8759 = vmatpush1.msra.mxu0 %v8519
    %8760 = vmatprep.subr.mxu0 0.0
    %8761 = vmatpush1.msra.mxu0 %v8520
    %8762 = vmatprep.subr.mxu0 0.0
    %8763 = vmatpush1.msra.mxu0 %v8521
    %8764 = vmatprep.subr.mxu0 0.0
    %8765 = vmatpush1.msra.mxu0 0.0
    %8766 = vmatprep.subr.mxu0 0.0
    %8767 = vmatpush1.msra.mxu0 0.0
    %8768 = vmatprep.subr.mxu0 0.0
    %8769 = vmatpush1.msra.mxu0 0.0
    %8770 = vmatprep.subr.mxu0 0.0
    %8771 = vmatpush1.msra.mxu0 0.0
    %8772 = vmatprep.subr.mxu0 0.0
    %8773 = vmatpush1.msra.mxu0 0.0
    %8774 = vmatprep.subr.mxu0 0.0
    %8775 = vmatpush1.msra.mxu0 0.0
    %8776 = vmatprep.subr.mxu0 0.0
    %8777 = vmatpush1.msra.mxu0 0.0
    %8778 = vmatprep.subr.mxu0 0.0
    %8779 = vmatpush1.msra.mxu0 0.0
    %8780 = vmatprep.subr.mxu0 0.0
    %8781 = vmatpush1.msra.mxu0 0.0
    %8782 = vmatprep.subr.mxu0 0.0
    %8783 = vmatpush1.msra.mxu0 0.0
    %8784 = vmatprep.subr.mxu0 0.0
    %8785 = vmatpush1.msra.mxu0 0.0
    %8786 = vmatprep.subr.mxu0 0.0
    %8787 = vmatpush1.msra.mxu0 0.0
    %8788 = vmatprep.subr.mxu0 0.0
    %8789 = vmatpush1.msra.mxu0 0.0
    %8790 = vmatprep.subr.mxu0 0.0
    %8791 = vmatpush1.msra.mxu0 0.0
    %8792 = vmatprep.subr.mxu0 0.0
    %8793 = vmatpush1.msra.mxu0 0.0
    %8794 = vmatprep.subr.mxu0 0.0
    %8795 = vmatpush1.msra.mxu0 0.0
    %8796 = vmatprep.mubr.f32.mxu0 0.0
    %8797 = vmatmul.mubr.f32.gmra.mrb[0].mxu0 %v8297
    %v8798 = vpop.f32.mrb[0].mxu0
    %v8799 = vadd.f32 %v8729, %v8798
    %v8800 = vpop.f32.mrb[0].mxu0
    %8801 = vdwg.mxu0
    %v8802 = vmul.f32 %v8799, 0.0025510204
    %v8803 = vmul.f32 %v8802, %v8802
    %v8805 = vrot.slane %v8803, 7
    %v8807 = vsub.f32 %v8802, %v8805
    %v8808 = vld [vmem:[#allocation13] sm:$0x1]
    %v8809 = vadd.f32 %v8807, 1e-05
    %v8810 = vrsqrt.pop %v8809
    %v8813 = vunpack.c.l.s4 1966171168
    %v8814 = vunpack.c.0.s8 %v8813
    %v8815 = vlaneseq
    %v8816 = vshrl.u32 %v8815, 7
    %v8817 = vsub.s32 %v8814, %v8816
    %v8818 = vrot.slane %v8810, %v8817
    %v8819 = vcombine.high %v8818, %v8818
    %v8821 = vunpack.c.l.s4 1966171168
    %v8822 = vunpack.c.0.s8 %v8821
    %v8823 = vlaneseq
    %v8824 = vshrl.u32 %v8823, 7
    %v8825 = vsub.s32 %v8822, %v8824
    %v8826 = vrot.slane %v8819, %v8825
    %v8828 = vmul.f32 %v8808, %v8826
    %v8829 = vld [vmem:[#allocation15] sm:$0x1]
    %v8830 = vmul.f32 %v8802, %v8828
    %v8831 = vsub.f32 %v8829, %v8830
    %v8833 = vlaneseq
    %v8834 = vshrl.u32 %v8833, 7
    %v8835 = vsub.s32 0, %v8834
    %v8836 = vrot.slane %v8828, %v8835
    %v8839 = vlaneseq
    %v8840 = vshrl.u32 %v8839, 7
    %v8841 = vsub.s32 0, %v8840
    %v8842 = vrot.slane %v8831, %v8841
    %v8844 = vsel %vm830, %v8836, %v8842
    %v8845 = vld [vmem:[#allocation12] sm:$0xff]
    %v8846 = vld [vmem:[#allocation12 + $0x8] sm:$0x3f]
    %v8847 = vunpack.c.l.bf16 %v8845
    %v8848 = vunpack.c.h.bf16 %v8845
    %v8849 = vunpack.c.l.bf16 %v8846
    %v8850 = vunpack.c.h.bf16 %v8846
    %v8855 = vcombine.high %v8847, %v8847
    %v8856 = vcombine.high %v8848, %v8848
    %v8857 = vcombine.high %v8849, %v8849
    %vm8858 = vcmask 31744
    %v8860 = vsel %vm8858, %v8844, 0
    %vm8862 = vcmask 1043456
    %v8863 = vsel %vm8862, %v8847, 0
    %v8865 = vsel %vm8862, %v8855, 0
    %v8867 = vsel %vm8862, %v8848, 0
    %v8869 = vsel %vm8862, %v8856, 0
    %v8871 = vsel %vm8862, %v8849, 0
    %v8873 = vsel %vm8862, %v8857, 0
    %v8875 = vsel %vm8862, %v8850, 0
    %8877 = vmatprep.subr.mxu0 %v8865
    %8878 = vmatpush1.msra.mxu0 %v8863
    %8879 = vmatprep.subr.mxu0 0.0
    %8880 = vmatpush1.msra.mxu0 0.0
    %8881 = vmatprep.subr.mxu0 0.0
    %8882 = vmatpush1.msra.mxu0 0.0
    %8883 = vmatprep.subr.mxu0 0.0
    %8884 = vmatpush1.msra.mxu0 0.0
    %8885 = vmatprep.subr.mxu0 0.0
    %8886 = vmatpush1.msra.mxu0 0.0
    %8887 = vmatprep.subr.mxu0 0.0
    %8888 = vmatpush1.msra.mxu0 0.0
    %8889 = vmatprep.subr.mxu0 0.0
    %8890 = vmatpush1.msra.mxu0 0.0
    %8891 = vmatprep.subr.mxu0 0.0
    %8892 = vmatpush1.msra.mxu0 0.0
    %8893 = vmatprep.subr.mxu0 0.0
    %8894 = vmatpush1.msra.mxu0 0.0
    %8895 = vmatprep.subr.mxu0 0.0
    %8896 = vmatpush1.msra.mxu0 0.0
    %8897 = vmatprep.subr.mxu0 0.0
    %8898 = vmatpush1.msra.mxu0 0.0
    %8899 = vmatprep.subr.mxu0 0.0
    %8900 = vmatpush1.msra.mxu0 0.0
    %8901 = vmatprep.subr.mxu0 0.0
    %8902 = vmatpush1.msra.mxu0 0.0
    %8903 = vmatprep.subr.mxu0 0.0
    %8904 = vmatpush1.msra.mxu0 0.0
    %8905 = vmatprep.subr.mxu0 0.0
    %8906 = vmatpush1.msra.mxu0 0.0
    %8907 = vmatprep.subr.mxu0 0.0
    %8908 = vmatpush1.msra.mxu0 0.0
    %8909 = vmatprep.subr.mxu0 0.0
    %8910 = vmatpush1.msra.mxu0 0.0
    %8911 = vmatprep.subr.mxu0 0.0
    %8912 = vmatpush1.msra.mxu0 0.0
    %8913 = vmatprep.subr.mxu0 0.0
    %8914 = vmatpush1.msra.mxu0 0.0
    %8915 = vmatprep.subr.mxu0 0.0
    %8916 = vmatpush1.msra.mxu0 0.0
    %8917 = vmatprep.subr.mxu0 0.0
    %8918 = vmatpush1.msra.mxu0 0.0
    %8919 = vmatprep.subr.mxu0 0.0
    %8920 = vmatpush1.msra.mxu0 0.0
    %8921 = vmatprep.subr.mxu0 0.0
    %8922 = vmatpush1.msra.mxu0 0.0
    %8923 = vmatprep.subr.mxu0 0.0
    %8924 = vmatpush1.msra.mxu0 0.0
    %8925 = vmatprep.subr.mxu0 0.0
    %8926 = vmatpush1.msra.mxu0 0.0
    %8927 = vmatprep.subr.mxu0 0.0
    %8928 = vmatpush1.msra.mxu0 0.0
    %8929 = vmatprep.subr.mxu0 0.0
    %8930 = vmatpush1.msra.mxu0 0.0
    %8931 = vmatprep.subr.mxu0 0.0
    %8932 = vmatpush1.msra.mxu0 0.0
    %8933 = vmatprep.subr.mxu0 0.0
    %8934 = vmatpush1.msra.mxu0 0.0
    %8935 = vmatprep.subr.mxu0 0.0
    %8936 = vmatpush1.msra.mxu0 0.0
    %8937 = vmatprep.subr.mxu0 0.0
    %8938 = vmatpush1.msra.mxu0 0.0
    %8939 = vmatprep.subr.mxu0 0.0
    %8940 = vmatpush1.msra.mxu0 0.0
    %8941 = vmatprep.mubr.f32.mxu0 0.0
    %8942 = vmatmul.mubr.f32.gmra.mrb[0].mxu0 %v8860
    %v8943 = vpop.f32.mrb[0].mxu0
    %v8944 = vadd.f32 0.0, %v8943
    %v8945 = vpop.f32.mrb[0].mxu0
    %v8946 = vadd.f32 0.0, %v8945
    %8947 = vdwg.mxu0
    %8948 = vmatprep.subr.mxu0 %v8869
    %8949 = vmatpush1.msra.mxu0 %v8867
    %8950 = vmatprep.subr.mxu0 0.0
    %8951 = vmatpush1.msra.mxu0 0.0
    %8952 = vmatprep.subr.mxu0 0.0
    %8953 = vmatpush1.msra.mxu0 0.0
    %8954 = vmatprep.subr.mxu0 0.0
    %8955 = vmatpush1.msra.mxu0 0.0
    %8956 = vmatprep.subr.mxu0 0.0
    %8957 = vmatpush1.msra.mxu0 0.0
    %8958 = vmatprep.subr.mxu0 0.0
    %8959 = vmatpush1.msra.mxu0 0.0
    %8960 = vmatprep.subr.mxu0 0.0
    %8961 = vmatpush1.msra.mxu0 0.0
    %8962 = vmatprep.subr.mxu0 0.0
    %8963 = vmatpush1.msra.mxu0 0.0
    %8964 = vmatprep.subr.mxu0 0.0
    %8965 = vmatpush1.msra.mxu0 0.0
    %8966 = vmatprep.subr.mxu0 0.0
    %8967 = vmatpush1.msra.mxu0 0.0
    %8968 = vmatprep.subr.mxu0 0.0
    %8969 = vmatpush1.msra.mxu0 0.0
    %8970 = vmatprep.subr.mxu0 0.0
    %8971 = vmatpush1.msra.mxu0 0.0
    %8972 = vmatprep.subr.mxu0 0.0
    %8973 = vmatpush1.msra.mxu0 0.0
    %8974 = vmatprep.subr.mxu0 0.0
    %8975 = vmatpush1.msra.mxu0 0.0
    %8976 = vmatprep.subr.mxu0 0.0
    %8977 = vmatpush1.msra.mxu0 0.0
    %8978 = vmatprep.subr.mxu0 0.0
    %8979 = vmatpush1.msra.mxu0 0.0
    %8980 = vmatprep.subr.mxu0 0.0
    %8981 = vmatpush1.msra.mxu0 0.0
    %8982 = vmatprep.subr.mxu0 0.0
    %8983 = vmatpush1.msra.mxu0 0.0
    %8984 = vmatprep.subr.mxu0 0.0
    %8985 = vmatpush1.msra.mxu0 0.0
    %8986 = vmatprep.subr.mxu0 0.0
    %8987 = vmatpush1.msra.mxu0 0.0
    %8988 = vmatprep.subr.mxu0 0.0
    %8989 = vmatpush1.msra.mxu0 0.0
    %8990 = vmatprep.subr.mxu0 0.0
    %8991 = vmatpush1.msra.mxu0 0.0
    %8992 = vmatprep.subr.mxu0 0.0
    %8993 = vmatpush1.msra.mxu0 0.0
    %8994 = vmatprep.subr.mxu0 0.0
    %8995 = vmatpush1.msra.mxu0 0.0
    %8996 = vmatprep.subr.mxu0 0.0
    %8997 = vmatpush1.msra.mxu0 0.0
    %8998 = vmatprep.subr.mxu0 0.0
    %8999 = vmatpush1.msra.mxu0 0.0
    %9000 = vmatprep.subr.mxu0 0.0
    %9001 = vmatpush1.msra.mxu0 0.0
    %9002 = vmatprep.subr.mxu0 0.0
    %9003 = vmatpush1.msra.mxu0 0.0
    %9004 = vmatprep.subr.mxu0 0.0
    %9005 = vmatpush1.msra.mxu0 0.0
    %9006 = vmatprep.subr.mxu0 0.0
    %9007 = vmatpush1.msra.mxu0 0.0
    %9008 = vmatprep.subr.mxu0 0.0
    %9009 = vmatpush1.msra.mxu0 0.0
    %9010 = vmatprep.subr.mxu0 0.0
    %9011 = vmatpush1.msra.mxu0 0.0
    %9012 = vmatprep.mubr.f32.mxu0 0.0
    %9013 = vmatmul.mubr.f32.gmra.mrb[0].mxu0 %v8860
    %v9014 = vpop.f32.mrb[0].mxu0
    %v9015 = vadd.f32 0.0, %v9014
    %v9016 = vpop.f32.mrb[0].mxu0
    %v9017 = vadd.f32 0.0, %v9016
    %9018 = vdwg.mxu0
    %9019 = vmatprep.subr.mxu0 %v8873
    %9020 = vmatpush1.msra.mxu0 %v8871
    %9021 = vmatprep.subr.mxu0 0.0
    %9022 = vmatpush1.msra.mxu0 0.0
    %9023 = vmatprep.subr.mxu0 0.0
    %9024 = vmatpush1.msra.mxu0 0.0
    %9025 = vmatprep.subr.mxu0 0.0
    %9026 = vmatpush1.msra.mxu0 0.0
    %9027 = vmatprep.subr.mxu0 0.0
    %9028 = vmatpush1.msra.mxu0 0.0
    %9029 = vmatprep.subr.mxu0 0.0
    %9030 = vmatpush1.msra.mxu0 0.0
    %9031 = vmatprep.subr.mxu0 0.0
    %9032 = vmatpush1.msra.mxu0 0.0
    %9033 = vmatprep.subr.mxu0 0.0
    %9034 = vmatpush1.msra.mxu0 0.0
    %9035 = vmatprep.subr.mxu0 0.0
    %9036 = vmatpush1.msra.mxu0 0.0
    %9037 = vmatprep.subr.mxu0 0.0
    %9038 = vmatpush1.msra.mxu0 0.0
    %9039 = vmatprep.subr.mxu0 0.0
    %9040 = vmatpush1.msra.mxu0 0.0
    %9041 = vmatprep.subr.mxu0 0.0
    %9042 = vmatpush1.msra.mxu0 0.0
    %9043 = vmatprep.subr.mxu0 0.0
    %9044 = vmatpush1.msra.mxu0 0.0
    %9045 = vmatprep.subr.mxu0 0.0
    %9046 = vmatpush1.msra.mxu0 0.0
    %9047 = vmatprep.subr.mxu0 0.0
    %9048 = vmatpush1.msra.mxu0 0.0
    %9049 = vmatprep.subr.mxu0 0.0
    %9050 = vmatpush1.msra.mxu0 0.0
    %9051 = vmatprep.subr.mxu0 0.0
    %9052 = vmatpush1.msra.mxu0 0.0
    %9053 = vmatprep.subr.mxu0 0.0
    %9054 = vmatpush1.msra.mxu0 0.0
    %9055 = vmatprep.subr.mxu0 0.0
    %9056 = vmatpush1.msra.mxu0 0.0
    %9057 = vmatprep.subr.mxu0 0.0
    %9058 = vmatpush1.msra.mxu0 0.0
    %9059 = vmatprep.subr.mxu0 0.0
    %9060 = vmatpush1.msra.mxu0 0.0
    %9061 = vmatprep.subr.mxu0 0.0
    %9062 = vmatpush1.msra.mxu0 0.0
    %9063 = vmatprep.subr.mxu0 0.0
    %9064 = vmatpush1.msra.mxu0 0.0
    %9065 = vmatprep.subr.mxu0 0.0
    %9066 = vmatpush1.msra.mxu0 0.0
    %9067 = vmatprep.subr.mxu0 0.0
    %9068 = vmatpush1.msra.mxu0 0.0
    %9069 = vmatprep.subr.mxu0 0.0
    %9070 = vmatpush1.msra.mxu0 0.0
    %9071 = vmatprep.subr.mxu0 0.0
    %9072 = vmatpush1.msra.mxu0 0.0
    %9073 = vmatprep.subr.mxu0 0.0
    %9074 = vmatpush1.msra.mxu0 0.0
    %9075 = vmatprep.subr.mxu0 0.0
    %9076 = vmatpush1.msra.mxu0 0.0
    %9077 = vmatprep.subr.mxu0 0.0
    %9078 = vmatpush1.msra.mxu0 0.0
    %9079 = vmatprep.subr.mxu0 0.0
    %9080 = vmatpush1.msra.mxu0 0.0
    %9081 = vmatprep.subr.mxu0 0.0
    %9082 = vmatpush1.msra.mxu0 0.0
    %9083 = vmatprep.mubr.f32.mxu0 0.0
    %9084 = vmatmul.mubr.f32.gmra.mrb[0].mxu0 %v8860
    %v9085 = vpop.f32.mrb[0].mxu0
    %v9086 = vadd.f32 0.0, %v9085
    %v9087 = vpop.f32.mrb[0].mxu0
    %v9088 = vadd.f32 0.0, %v9087
    %9089 = vdwg.mxu0
    %9090 = vmatprep.subr.mxu0 0.0
    %9091 = vmatpush1.msra.mxu0 %v8875
    %9092 = vmatprep.subr.mxu0 0.0
    %9093 = vmatpush1.msra.mxu0 0.0
    %9094 = vmatprep.subr.mxu0 0.0
    %9095 = vmatpush1.msra.mxu0 0.0
    %9096 = vmatprep.subr.mxu0 0.0
    %9097 = vmatpush1.msra.mxu0 0.0
    %9098 = vmatprep.subr.mxu0 0.0
    %9099 = vmatpush1.msra.mxu0 0.0
    %9100 = vmatprep.subr.mxu0 0.0
    %9101 = vmatpush1.msra.mxu0 0.0
    %9102 = vmatprep.subr.mxu0 0.0
    %9103 = vmatpush1.msra.mxu0 0.0
    %9104 = vmatprep.subr.mxu0 0.0
    %9105 = vmatpush1.msra.mxu0 0.0
    %9106 = vmatprep.subr.mxu0 0.0
    %9107 = vmatpush1.msra.mxu0 0.0
    %9108 = vmatprep.subr.mxu0 0.0
    %9109 = vmatpush1.msra.mxu0 0.0
    %9110 = vmatprep.subr.mxu0 0.0
    %9111 = vmatpush1.msra.mxu0 0.0
    %9112 = vmatprep.subr.mxu0 0.0
    %9113 = vmatpush1.msra.mxu0 0.0
    %9114 = vmatprep.subr.mxu0 0.0
    %9115 = vmatpush1.msra.mxu0 0.0
    %9116 = vmatprep.subr.mxu0 0.0
    %9117 = vmatpush1.msra.mxu0 0.0
    %9118 = vmatprep.subr.mxu0 0.0
    %9119 = vmatpush1.msra.mxu0 0.0
    %9120 = vmatprep.subr.mxu0 0.0
    %9121 = vmatpush1.msra.mxu0 0.0
    %9122 = vmatprep.subr.mxu0 0.0
    %9123 = vmatpush1.msra.mxu0 0.0
    %9124 = vmatprep.subr.mxu0 0.0
    %9125 = vmatpush1.msra.mxu0 0.0
    %9126 = vmatprep.subr.mxu0 0.0
    %9127 = vmatpush1.msra.mxu0 0.0
    %9128 = vmatprep.subr.mxu0 0.0
    %9129 = vmatpush1.msra.mxu0 0.0
    %9130 = vmatprep.subr.mxu0 0.0
    %9131 = vmatpush1.msra.mxu0 0.0
    %9132 = vmatprep.subr.mxu0 0.0
    %9133 = vmatpush1.msra.mxu0 0.0
    %9134 = vmatprep.subr.mxu0 0.0
    %9135 = vmatpush1.msra.mxu0 0.0
    %9136 = vmatprep.subr.mxu0 0.0
    %9137 = vmatpush1.msra.mxu0 0.0
    %9138 = vmatprep.subr.mxu0 0.0
    %9139 = vmatpush1.msra.mxu0 0.0
    %9140 = vmatprep.subr.mxu0 0.0
    %9141 = vmatpush1.msra.mxu0 0.0
    %9142 = vmatprep.subr.mxu0 0.0
    %9143 = vmatpush1.msra.mxu0 0.0
    %9144 = vmatprep.subr.mxu0 0.0
    %9145 = vmatpush1.msra.mxu0 0.0
    %9146 = vmatprep.subr.mxu0 0.0
    %9147 = vmatpush1.msra.mxu0 0.0
    %9148 = vmatprep.subr.mxu0 0.0
    %9149 = vmatpush1.msra.mxu0 0.0
    %9150 = vmatprep.subr.mxu0 0.0
    %9151 = vmatpush1.msra.mxu0 0.0
    %9152 = vmatprep.subr.mxu0 0.0
    %9153 = vmatpush1.msra.mxu0 0.0
    %9154 = vmatprep.mubr.f32.mxu0 0.0
    %9155 = vmatmul.mubr.f32.gmra.mrb[0].mxu0 %v8860
    %v9156 = vpop.f32.mrb[0].mxu0
    %v9157 = vadd.f32 0.0, %v9156
    %v9158 = vpop.f32.mrb[0].mxu0
    %9159 = vdwg.mxu0
    %v9160 = vlaneseq
    %v9161 = vshrl.u32 %v9160, 7
    %v9162 = vsub.s32 0, %v9161
    %v9163 = vrot.slane %v8944, %v9162
    %v9164 = vlaneseq
    %v9165 = vshrl.u32 %v9164, 7
    %v9166 = vsub.s32 0, %v9165
    %v9167 = vrot.slane %v8946, %v9166
    %v9168 = vlaneseq
    %v9169 = vshrl.u32 %v9168, 7
    %v9170 = vsub.s32 0, %v9169
    %v9171 = vrot.slane %v9015, %v9170
    %v9172 = vlaneseq
    %v9173 = vshrl.u32 %v9172, 7
    %v9174 = vsub.s32 0, %v9173
    %v9175 = vrot.slane %v9017, %v9174
    %v9176 = vlaneseq
    %v9177 = vshrl.u32 %v9176, 7
    %v9178 = vsub.s32 0, %v9177
    %v9179 = vrot.slane %v9086, %v9178
    %v9180 = vlaneseq
    %v9181 = vshrl.u32 %v9180, 7
    %v9182 = vsub.s32 0, %v9181
    %v9183 = vrot.slane %v9088, %v9182
    %v9184 = vlaneseq
    %v9185 = vshrl.u32 %v9184, 7
    %v9186 = vsub.s32 0, %v9185
    %v9187 = vrot.slane %v9157, %v9186
    %v9188 = vmul.f32 %v7326, %v9163
    %v9189 = vmul.f32 %v7328, %v9167
    %v9190 = vmul.f32 %v7613, %v9171
    %v9191 = vmul.f32 %v7615, %v9175
    %v9192 = vmul.f32 %v7900, %v9179
    %v9193 = vmul.f32 %v7902, %v9183
    %v9194 = vmul.f32 %v8181, %v9187
    %v9195 = vlaneseq
    %v9196 = vshrl.u32 %v9195, 7
    %v9197 = vsub.s32 1, %v9196
    %v9198 = vrot.slane %v8944, %v9197
    %v9199 = vlaneseq
    %v9200 = vshrl.u32 %v9199, 7
    %v9201 = vsub.s32 1, %v9200
    %v9202 = vrot.slane %v8946, %v9201
    %v9203 = vlaneseq
    %v9204 = vshrl.u32 %v9203, 7
    %v9205 = vsub.s32 1, %v9204
    %v9206 = vrot.slane %v9015, %v9205
    %v9207 = vlaneseq
    %v9208 = vshrl.u32 %v9207, 7
    %v9209 = vsub.s32 1, %v9208
    %v9210 = vrot.slane %v9017, %v9209
    %v9211 = vlaneseq
    %v9212 = vshrl.u32 %v9211, 7
    %v9213 = vsub.s32 1, %v9212
    %v9214 = vrot.slane %v9086, %v9213
    %v9215 = vlaneseq
    %v9216 = vshrl.u32 %v9215, 7
    %v9217 = vsub.s32 1, %v9216
    %v9218 = vrot.slane %v9088, %v9217
    %v9219 = vlaneseq
    %v9220 = vshrl.u32 %v9219, 7
    %v9221 = vsub.s32 1, %v9220
    %v9222 = vrot.slane %v9157, %v9221
    %v9223 = vadd.f32 %v9188, %v9198
    %v9224 = vadd.f32 %v9189, %v9202
    %v9225 = vadd.f32 %v9190, %v9206
    %v9226 = vadd.f32 %v9191, %v9210
    %v9227 = vadd.f32 %v9192, %v9214
    %v9228 = vadd.f32 %v9193, %v9218
    %v9229 = vadd.f32 %v9194, %v9222
    %v9230 = vmax.f32 %v9223, 0.0
    %v9231 = vmax.f32 %v9224, 0.0
    %v9232 = vmax.f32 %v9225, 0.0
    %v9233 = vmax.f32 %v9226, 0.0
    %v9234 = vmax.f32 %v9227, 0.0
    %v9235 = vmax.f32 %v9228, 0.0
    %v9236 = vmax.f32 %v9229, 0.0
    %v9237 = vpack.c.bf16 %v9230, %v9230
    %v9238 = vpack.c.bf16 %v9231, %v9231
    %v9239 = vpack.c.bf16 %v9232, %v9232
    %v9240 = vpack.c.bf16 %v9233, %v9233
    %v9241 = vpack.c.bf16 %v9234, %v9234
    %v9242 = vpack.c.bf16 %v9235, %v9235
    %v9243 = vpack.c.bf16 %v9236, %v9236
    %v9244 = vld [vmem:[#allocation16] sm:$0xff]
    %v9245 = vld [vmem:[#allocation16 + $0x8] sm:$0xff]
    %v9246 = vld [vmem:[#allocation16 + $0x10] sm:$0xff]
    %v9247 = vld [vmem:[#allocation16 + $0x18] sm:$0xf]
    %v9248 = vld [vmem:[#allocation16 + $0x1c] sm:$0xff]
    %v9249 = vld [vmem:[#allocation16 + $0x24] sm:$0xff]
    %v9250 = vld [vmem:[#allocation16 + $0x2c] sm:$0xff]
    %v9251 = vld [vmem:[#allocation16 + $0x34] sm:$0xf]
    %v9252 = vld [vmem:[#allocation16 + $0x38] sm:$0xff]
    %v9253 = vld [vmem:[#allocation16 + $0x40] sm:$0xff]
    %v9254 = vld [vmem:[#allocation16 + $0x48] sm:$0xff]
    %v9255 = vld [vmem:[#allocation16 + $0x50] sm:$0xf]
    %v9256 = vld [vmem:[#allocation16 + $0x54] sm:$0xff]
    %v9257 = vld [vmem:[#allocation16 + $0x5c] sm:$0xff]
    %v9258 = vld [vmem:[#allocation16 + $0x64] sm:$0xff]
    %v9259 = vld [vmem:[#allocation16 + $0x6c] sm:$0xf]
    %v9260 = vld [vmem:[#allocation16 + $0x70] sm:$0xff]
    %v9261 = vld [vmem:[#allocation16 + $0x78] sm:$0xff]
    %v9262 = vld [vmem:[#allocation16 + $0x80] sm:$0xff]
    %v9263 = vld [vmem:[#allocation16 + $0x88] sm:$0xf]
    %v9264 = vld [vmem:[#allocation16 + $0x8c] sm:$0xff]
    %v9265 = vld [vmem:[#allocation16 + $0x94] sm:$0xff]
    %v9266 = vld [vmem:[#allocation16 + $0x9c] sm:$0xff]
    %v9267 = vld [vmem:[#allocation16 + $0xa4] sm:$0xf]
    %v9268 = vld [vmem:[#allocation16 + $0xa8] sm:$0xff]
    %v9269 = vld [vmem:[#allocation16 + $0xb0] sm:$0xff]
    %v9270 = vld [vmem:[#allocation16 + $0xb8] sm:$0xff]
    %v9271 = vld [vmem:[#allocation16 + $0xc0] sm:$0xf]
    %v9272 = vld [vmem:[#allocation16 + $0xc4] sm:$0xff]
    %v9273 = vld [vmem:[#allocation16 + $0xcc] sm:$0xff]
    %v9274 = vld [vmem:[#allocation16 + $0xd4] sm:$0xff]
    %v9275 = vld [vmem:[#allocation16 + $0xdc] sm:$0xf]
    %v9276 = vld [vmem:[#allocation16 + $0xe0] sm:$0xff]
    %v9277 = vld [vmem:[#allocation16 + $0xe8] sm:$0xff]
    %v9278 = vld [vmem:[#allocation16 + $0xf0] sm:$0xff]
    %v9279 = vld [vmem:[#allocation16 + $0xf8] sm:$0xf]
    %v9280 = vld [vmem:[#allocation16 + $0xfc] sm:$0xff]
    %v9281 = vld [vmem:[#allocation16 + $0x104] sm:$0xff]
    %v9282 = vld [vmem:[#allocation16 + $0x10c] sm:$0xff]
    %v9283 = vld [vmem:[#allocation16 + $0x114] sm:$0xf]
    %v9284 = vld [vmem:[#allocation16 + $0x118] sm:$0xff]
    %v9285 = vld [vmem:[#allocation16 + $0x120] sm:$0xff]
    %v9286 = vld [vmem:[#allocation16 + $0x128] sm:$0xff]
    %v9287 = vld [vmem:[#allocation16 + $0x130] sm:$0xf]
    %v9288 = vld [vmem:[#allocation16 + $0x134] sm:$0xff]
    %v9289 = vld [vmem:[#allocation16 + $0x13c] sm:$0xff]
    %v9290 = vld [vmem:[#allocation16 + $0x144] sm:$0xff]
    %v9291 = vld [vmem:[#allocation16 + $0x14c] sm:$0xf]
    %v9292 = vld [vmem:[#allocation16 + $0x150] sm:$0xff]
    %v9293 = vld [vmem:[#allocation16 + $0x158] sm:$0xff]
    %v9294 = vld [vmem:[#allocation16 + $0x160] sm:$0xff]
    %v9295 = vld [vmem:[#allocation16 + $0x168] sm:$0xf]
    %v9296 = vld [vmem:[#allocation16 + $0x16c] sm:$0xff]
    %v9297 = vld [vmem:[#allocation16 + $0x174] sm:$0xff]
    %v9298 = vld [vmem:[#allocation16 + $0x17c] sm:$0xff]
    %v9299 = vld [vmem:[#allocation16 + $0x184] sm:$0xf]
    %v9300 = vld [vmem:[#allocation16 + $0x188] sm:$0xff]
    %v9301 = vld [vmem:[#allocation16 + $0x190] sm:$0xff]
    %v9302 = vld [vmem:[#allocation16 + $0x198] sm:$0xff]
    %v9303 = vld [vmem:[#allocation16 + $0x1a0] sm:$0xf]
    %v9304 = vld [vmem:[#allocation16 + $0x1a4] sm:$0xff]
    %v9305 = vld [vmem:[#allocation16 + $0x1ac] sm:$0xff]
    %v9306 = vld [vmem:[#allocation16 + $0x1b4] sm:$0xff]
    %v9307 = vld [vmem:[#allocation16 + $0x1bc] sm:$0xf]
    %v9308 = vld [vmem:[#allocation16 + $0x1c0] sm:$0xff]
    %v9309 = vld [vmem:[#allocation16 + $0x1c8] sm:$0xff]
    %v9310 = vld [vmem:[#allocation16 + $0x1d0] sm:$0xff]
    %v9311 = vld [vmem:[#allocation16 + $0x1d8] sm:$0xf]
    %v9312 = vld [vmem:[#allocation16 + $0x1dc] sm:$0xff]
    %v9313 = vld [vmem:[#allocation16 + $0x1e4] sm:$0xff]
    %v9314 = vld [vmem:[#allocation16 + $0x1ec] sm:$0xff]
    %v9315 = vld [vmem:[#allocation16 + $0x1f4] sm:$0xf]
    %v9316 = vld [vmem:[#allocation16 + $0x1f8] sm:$0xff]
    %v9317 = vld [vmem:[#allocation16 + $0x200] sm:$0xff]
    %v9318 = vld [vmem:[#allocation16 + $0x208] sm:$0xff]
    %v9319 = vld [vmem:[#allocation16 + $0x210] sm:$0xf]
    %v9320 = vld [vmem:[#allocation16 + $0x214] sm:$0xff]
    %v9321 = vld [vmem:[#allocation16 + $0x21c] sm:$0xff]
    %v9322 = vld [vmem:[#allocation16 + $0x224] sm:$0xff]
    %v9323 = vld [vmem:[#allocation16 + $0x22c] sm:$0xf]
    %v9324 = vld [vmem:[#allocation16 + $0x230] sm:$0xff]
    %v9325 = vld [vmem:[#allocation16 + $0x238] sm:$0xff]
    %v9326 = vld [vmem:[#allocation16 + $0x240] sm:$0xff]
    %v9327 = vld [vmem:[#allocation16 + $0x248] sm:$0xf]
    %v9328 = vld [vmem:[#allocation16 + $0x24c] sm:$0xff]
    %v9329 = vld [vmem:[#allocation16 + $0x254] sm:$0xff]
    %v9330 = vld [vmem:[#allocation16 + $0x25c] sm:$0xff]
    %v9331 = vld [vmem:[#allocation16 + $0x264] sm:$0xf]
    %v9332 = vld [vmem:[#allocation16 + $0x268] sm:$0xff]
    %v9333 = vld [vmem:[#allocation16 + $0x270] sm:$0xff]
    %v9334 = vld [vmem:[#allocation16 + $0x278] sm:$0xff]
    %v9335 = vld [vmem:[#allocation16 + $0x280] sm:$0xf]
    %v9336 = vld [vmem:[#allocation16 + $0x284] sm:$0xff]
    %v9337 = vld [vmem:[#allocation16 + $0x28c] sm:$0xff]
    %v9338 = vld [vmem:[#allocation16 + $0x294] sm:$0xff]
    %v9339 = vld [vmem:[#allocation16 + $0x29c] sm:$0xf]
    %v9340 = vld [vmem:[#allocation16 + $0x2a0] sm:$0xff]
    %v9341 = vld [vmem:[#allocation16 + $0x2a8] sm:$0xff]
    %v9342 = vld [vmem:[#allocation16 + $0x2b0] sm:$0xff]
    %v9343 = vld [vmem:[#allocation16 + $0x2b8] sm:$0xf]
    %v9344 = vld [vmem:[#allocation16 + $0x2bc] sm:$0xff]
    %v9345 = vld [vmem:[#allocation16 + $0x2c4] sm:$0xff]
    %v9346 = vld [vmem:[#allocation16 + $0x2cc] sm:$0xff]
    %v9347 = vld [vmem:[#allocation16 + $0x2d4] sm:$0xf]
    %v9348 = vld [vmem:[#allocation16 + $0x2d8] sm:$0xff]
    %v9349 = vld [vmem:[#allocation16 + $0x2e0] sm:$0xff]
    %v9350 = vld [vmem:[#allocation16 + $0x2e8] sm:$0xff]
    %v9351 = vld [vmem:[#allocation16 + $0x2f0] sm:$0xf]
    %v9352 = vld [vmem:[#allocation16 + $0x2f4] sm:$0xff]
    %v9353 = vld [vmem:[#allocation16 + $0x2fc] sm:$0xff]
    %v9354 = vld [vmem:[#allocation16 + $0x304] sm:$0xff]
    %v9355 = vld [vmem:[#allocation16 + $0x30c] sm:$0xf]
    %v9356 = vld [vmem:[#allocation16 + $0x310] sm:$0xff]
    %v9357 = vld [vmem:[#allocation16 + $0x318] sm:$0xff]
    %v9358 = vld [vmem:[#allocation16 + $0x320] sm:$0xff]
    %v9359 = vld [vmem:[#allocation16 + $0x328] sm:$0xf]
    %v9360 = vld [vmem:[#allocation16 + $0x32c] sm:$0xff]
    %v9361 = vld [vmem:[#allocation16 + $0x334] sm:$0xff]
    %v9362 = vld [vmem:[#allocation16 + $0x33c] sm:$0xff]
    %v9363 = vld [vmem:[#allocation16 + $0x344] sm:$0xf]
    %v9364 = vld [vmem:[#allocation16 + $0x348] sm:$0xff]
    %v9365 = vld [vmem:[#allocation16 + $0x350] sm:$0xff]
    %v9366 = vld [vmem:[#allocation16 + $0x358] sm:$0xff]
    %v9367 = vld [vmem:[#allocation16 + $0x360] sm:$0xf]
    %v9368 = vld [vmem:[#allocation16 + $0x364] sm:$0xff]
    %v9369 = vld [vmem:[#allocation16 + $0x36c] sm:$0xff]
    %v9370 = vld [vmem:[#allocation16 + $0x374] sm:$0xff]
    %v9371 = vld [vmem:[#allocation16 + $0x37c] sm:$0xf]
    %v9372 = vld [vmem:[#allocation16 + $0x380] sm:$0xff]
    %v9373 = vld [vmem:[#allocation16 + $0x388] sm:$0xff]
    %v9374 = vld [vmem:[#allocation16 + $0x390] sm:$0xff]
    %v9375 = vld [vmem:[#allocation16 + $0x398] sm:$0xf]
    %v9376 = vld [vmem:[#allocation16 + $0x39c] sm:$0xff]
    %v9377 = vld [vmem:[#allocation16 + $0x3a4] sm:$0xff]
    %v9378 = vld [vmem:[#allocation16 + $0x3ac] sm:$0xff]
    %v9379 = vld [vmem:[#allocation16 + $0x3b4] sm:$0xf]
    %v9380 = vld [vmem:[#allocation16 + $0x3b8] sm:$0xff]
    %v9381 = vld [vmem:[#allocation16 + $0x3c0] sm:$0xff]
    %v9382 = vld [vmem:[#allocation16 + $0x3c8] sm:$0xff]
    %v9383 = vld [vmem:[#allocation16 + $0x3d0] sm:$0xf]
    %v9384 = vld [vmem:[#allocation16 + $0x3d4] sm:$0xff]
    %v9385 = vld [vmem:[#allocation16 + $0x3dc] sm:$0xff]
    %v9386 = vld [vmem:[#allocation16 + $0x3e4] sm:$0xff]
    %v9387 = vld [vmem:[#allocation16 + $0x3ec] sm:$0xf]
    %v9388 = vld [vmem:[#allocation16 + $0x3f0] sm:$0xff]
    %v9389 = vld [vmem:[#allocation16 + $0x3f8] sm:$0xff]
    %v9390 = vld [vmem:[#allocation16 + $0x400] sm:$0xff]
    %v9391 = vld [vmem:[#allocation16 + $0x408] sm:$0xf]
    %v9392 = vld [vmem:[#allocation16 + $0x40c] sm:$0xff]
    %v9393 = vld [vmem:[#allocation16 + $0x414] sm:$0xff]
    %v9394 = vld [vmem:[#allocation16 + $0x41c] sm:$0xff]
    %v9395 = vld [vmem:[#allocation16 + $0x424] sm:$0xf]
    %v9396 = vld [vmem:[#allocation16 + $0x428] sm:$0xff]
    %v9397 = vld [vmem:[#allocation16 + $0x430] sm:$0xff]
    %v9398 = vld [vmem:[#allocation16 + $0x438] sm:$0xff]
    %v9399 = vld [vmem:[#allocation16 + $0x440] sm:$0xf]
    %v9400 = vld [vmem:[#allocation16 + $0x444] sm:$0xff]
    %v9401 = vld [vmem:[#allocation16 + $0x44c] sm:$0xff]
    %v9402 = vld [vmem:[#allocation16 + $0x454] sm:$0xff]
    %v9403 = vld [vmem:[#allocation16 + $0x45c] sm:$0xf]
    %v9404 = vld [vmem:[#allocation16 + $0x460] sm:$0xff]
    %v9405 = vld [vmem:[#allocation16 + $0x468] sm:$0xff]
    %v9406 = vld [vmem:[#allocation16 + $0x470] sm:$0xff]
    %v9407 = vld [vmem:[#allocation16 + $0x478] sm:$0xf]
    %v9408 = vld [vmem:[#allocation16 + $0x47c] sm:$0xff]
    %v9409 = vld [vmem:[#allocation16 + $0x484] sm:$0xff]
    %v9410 = vld [vmem:[#allocation16 + $0x48c] sm:$0xff]
    %v9411 = vld [vmem:[#allocation16 + $0x494] sm:$0xf]
    %v9412 = vld [vmem:[#allocation16 + $0x498] sm:$0xff]
    %v9413 = vld [vmem:[#allocation16 + $0x4a0] sm:$0xff]
    %v9414 = vld [vmem:[#allocation16 + $0x4a8] sm:$0xff]
    %v9415 = vld [vmem:[#allocation16 + $0x4b0] sm:$0xf]
    %v9416 = vld [vmem:[#allocation16 + $0x4b4] sm:$0xff]
    %v9417 = vld [vmem:[#allocation16 + $0x4bc] sm:$0xff]
    %v9418 = vld [vmem:[#allocation16 + $0x4c4] sm:$0xff]
    %v9419 = vld [vmem:[#allocation16 + $0x4cc] sm:$0xf]
    %v9420 = vld [vmem:[#allocation16 + $0x4d0] sm:$0xff]
    %v9421 = vld [vmem:[#allocation16 + $0x4d8] sm:$0xff]
    %v9422 = vld [vmem:[#allocation16 + $0x4e0] sm:$0xff]
    %v9423 = vld [vmem:[#allocation16 + $0x4e8] sm:$0xf]
    %v9424 = vld [vmem:[#allocation16 + $0x4ec] sm:$0xff]
    %v9425 = vld [vmem:[#allocation16 + $0x4f4] sm:$0xff]
    %v9426 = vld [vmem:[#allocation16 + $0x4fc] sm:$0xff]
    %v9427 = vld [vmem:[#allocation16 + $0x504] sm:$0xf]
    %v9428 = vld [vmem:[#allocation16 + $0x508] sm:$0xff]
    %v9429 = vld [vmem:[#allocation16 + $0x510] sm:$0xff]
    %v9430 = vld [vmem:[#allocation16 + $0x518] sm:$0xff]
    %v9431 = vld [vmem:[#allocation16 + $0x520] sm:$0xf]
    %v9432 = vld [vmem:[#allocation16 + $0x524] sm:$0xff]
    %v9433 = vld [vmem:[#allocation16 + $0x52c] sm:$0xff]
    %v9434 = vld [vmem:[#allocation16 + $0x534] sm:$0xff]
    %v9435 = vld [vmem:[#allocation16 + $0x53c] sm:$0xf]
    %v9436 = vld [vmem:[#allocation16 + $0x540] sm:$0xff]
    %v9437 = vld [vmem:[#allocation16 + $0x548] sm:$0xff]
    %v9438 = vld [vmem:[#allocation16 + $0x550] sm:$0xff]
    %v9439 = vld [vmem:[#allocation16 + $0x558] sm:$0xf]
    %v9440 = vld [vmem:[#allocation16 + $0x55c] sm:$0xff]
    %v9441 = vld [vmem:[#allocation16 + $0x564] sm:$0xff]
    %v9442 = vld [vmem:[#allocation16 + $0x56c] sm:$0xff]
    %v9443 = vld [vmem:[#allocation16 + $0x574] sm:$0xf]
    %v9444 = vld [vmem:[#allocation16 + $0x578] sm:$0xff]
    %v9445 = vld [vmem:[#allocation16 + $0x580] sm:$0xff]
    %v9446 = vld [vmem:[#allocation16 + $0x588] sm:$0xff]
    %v9447 = vld [vmem:[#allocation16 + $0x590] sm:$0xf]
    %v9448 = vld [vmem:[#allocation16 + $0x594] sm:$0xff]
    %v9449 = vld [vmem:[#allocation16 + $0x59c] sm:$0xff]
    %v9450 = vld [vmem:[#allocation16 + $0x5a4] sm:$0xff]
    %v9451 = vld [vmem:[#allocation16 + $0x5ac] sm:$0xf]
    %v9452 = vld [vmem:[#allocation16 + $0x5b0] sm:$0xff]
    %v9453 = vld [vmem:[#allocation16 + $0x5b8] sm:$0xff]
    %v9454 = vld [vmem:[#allocation16 + $0x5c0] sm:$0xff]
    %v9455 = vld [vmem:[#allocation16 + $0x5c8] sm:$0xf]
    %v9456 = vld [vmem:[#allocation16 + $0x5cc] sm:$0xff]
    %v9457 = vld [vmem:[#allocation16 + $0x5d4] sm:$0xff]
    %v9458 = vld [vmem:[#allocation16 + $0x5dc] sm:$0xff]
    %v9459 = vld [vmem:[#allocation16 + $0x5e4] sm:$0xf]
    %v9460 = vld [vmem:[#allocation16 + $0x5e8] sm:$0xff]
    %v9461 = vld [vmem:[#allocation16 + $0x5f0] sm:$0xff]
    %v9462 = vld [vmem:[#allocation16 + $0x5f8] sm:$0xff]
    %v9463 = vld [vmem:[#allocation16 + $0x600] sm:$0xf]
    %v9464 = vld [vmem:[#allocation16 + $0x604] sm:$0xff]
    %v9465 = vld [vmem:[#allocation16 + $0x60c] sm:$0xff]
    %v9466 = vld [vmem:[#allocation16 + $0x614] sm:$0xff]
    %v9467 = vld [vmem:[#allocation16 + $0x61c] sm:$0xf]
    %v9468 = vld [vmem:[#allocation16 + $0x620] sm:$0xff]
    %v9469 = vld [vmem:[#allocation16 + $0x628] sm:$0xff]
    %v9470 = vld [vmem:[#allocation16 + $0x630] sm:$0xff]
    %v9471 = vld [vmem:[#allocation16 + $0x638] sm:$0xf]
    %v9472 = vld [vmem:[#allocation16 + $0x63c] sm:$0xff]
    %v9473 = vld [vmem:[#allocation16 + $0x644] sm:$0xff]
    %v9474 = vld [vmem:[#allocation16 + $0x64c] sm:$0xff]
    %v9475 = vld [vmem:[#allocation16 + $0x654] sm:$0xf]
    %v9476 = vld [vmem:[#allocation16 + $0x658] sm:$0xff]
    %v9477 = vld [vmem:[#allocation16 + $0x660] sm:$0xff]
    %v9478 = vld [vmem:[#allocation16 + $0x668] sm:$0xff]
    %v9479 = vld [vmem:[#allocation16 + $0x670] sm:$0xf]
    %v9480 = vld [vmem:[#allocation16 + $0x674] sm:$0xff]
    %v9481 = vld [vmem:[#allocation16 + $0x67c] sm:$0xff]
    %v9482 = vld [vmem:[#allocation16 + $0x684] sm:$0xff]
    %v9483 = vld [vmem:[#allocation16 + $0x68c] sm:$0xf]
    %v9484 = vld [vmem:[#allocation16 + $0x690] sm:$0xff]
    %v9485 = vld [vmem:[#allocation16 + $0x698] sm:$0xff]
    %v9486 = vld [vmem:[#allocation16 + $0x6a0] sm:$0xff]
    %v9487 = vld [vmem:[#allocation16 + $0x6a8] sm:$0xf]
    %v9488 = vld [vmem:[#allocation16 + $0x6ac] sm:$0xff]
    %v9489 = vld [vmem:[#allocation16 + $0x6b4] sm:$0xff]
    %v9490 = vld [vmem:[#allocation16 + $0x6bc] sm:$0xff]
    %v9491 = vld [vmem:[#allocation16 + $0x6c4] sm:$0xf]
    %v9492 = vld [vmem:[#allocation16 + $0x6c8] sm:$0xff]
    %v9493 = vld [vmem:[#allocation16 + $0x6d0] sm:$0xff]
    %v9494 = vld [vmem:[#allocation16 + $0x6d8] sm:$0xff]
    %v9495 = vld [vmem:[#allocation16 + $0x6e0] sm:$0xf]
    %v9496 = vld [vmem:[#allocation16 + $0x6e4] sm:$0xff]
    %v9497 = vld [vmem:[#allocation16 + $0x6ec] sm:$0xff]
    %v9498 = vld [vmem:[#allocation16 + $0x6f4] sm:$0xff]
    %v9499 = vld [vmem:[#allocation16 + $0x6fc] sm:$0xf]
    %v9500 = vld [vmem:[#allocation16 + $0x700] sm:$0xff]
    %v9501 = vld [vmem:[#allocation16 + $0x708] sm:$0xff]
    %v9502 = vld [vmem:[#allocation16 + $0x710] sm:$0xff]
    %v9503 = vld [vmem:[#allocation16 + $0x718] sm:$0xf]
    %v9504 = vld [vmem:[#allocation16 + $0x71c] sm:$0xff]
    %v9505 = vld [vmem:[#allocation16 + $0x724] sm:$0xff]
    %v9506 = vld [vmem:[#allocation16 + $0x72c] sm:$0xff]
    %v9507 = vld [vmem:[#allocation16 + $0x734] sm:$0xf]
    %v9508 = vld [vmem:[#allocation16 + $0x738] sm:$0xff]
    %v9509 = vld [vmem:[#allocation16 + $0x740] sm:$0xff]
    %v9510 = vld [vmem:[#allocation16 + $0x748] sm:$0xff]
    %v9511 = vld [vmem:[#allocation16 + $0x750] sm:$0xf]
    %v9512 = vld [vmem:[#allocation16 + $0x754] sm:$0xff]
    %v9513 = vld [vmem:[#allocation16 + $0x75c] sm:$0xff]
    %v9514 = vld [vmem:[#allocation16 + $0x764] sm:$0xff]
    %v9515 = vld [vmem:[#allocation16 + $0x76c] sm:$0xf]
    %v9516 = vld [vmem:[#allocation16 + $0x770] sm:$0xff]
    %v9517 = vld [vmem:[#allocation16 + $0x778] sm:$0xff]
    %v9518 = vld [vmem:[#allocation16 + $0x780] sm:$0xff]
    %v9519 = vld [vmem:[#allocation16 + $0x788] sm:$0xf]
    %v9520 = vld [vmem:[#allocation16 + $0x78c] sm:$0xff]
    %v9521 = vld [vmem:[#allocation16 + $0x794] sm:$0xff]
    %v9522 = vld [vmem:[#allocation16 + $0x79c] sm:$0xff]
    %v9523 = vld [vmem:[#allocation16 + $0x7a4] sm:$0xf]
    %v9524 = vld [vmem:[#allocation16 + $0x7a8] sm:$0xff]
    %v9525 = vld [vmem:[#allocation16 + $0x7b0] sm:$0xff]
    %v9526 = vld [vmem:[#allocation16 + $0x7b8] sm:$0xff]
    %v9527 = vld [vmem:[#allocation16 + $0x7c0] sm:$0xf]
    %v9528 = vld [vmem:[#allocation16 + $0x7c4] sm:$0xff]
    %v9529 = vld [vmem:[#allocation16 + $0x7cc] sm:$0xff]
    %v9530 = vld [vmem:[#allocation16 + $0x7d4] sm:$0xff]
    %v9531 = vld [vmem:[#allocation16 + $0x7dc] sm:$0xf]
    %v9532 = vld [vmem:[#allocation16 + $0x7e0] sm:$0xff]
    %v9533 = vld [vmem:[#allocation16 + $0x7e8] sm:$0xff]
    %v9534 = vld [vmem:[#allocation16 + $0x7f0] sm:$0xff]
    %v9535 = vld [vmem:[#allocation16 + $0x7f8] sm:$0xf]
    %v9536 = vld [vmem:[#allocation16 + $0x7fc] sm:$0xff]
    %v9537 = vld [vmem:[#allocation16 + $0x804] sm:$0xff]
    %v9538 = vld [vmem:[#allocation16 + $0x80c] sm:$0xff]
    %v9539 = vld [vmem:[#allocation16 + $0x814] sm:$0xf]
    %v9540 = vld [vmem:[#allocation16 + $0x818] sm:$0xff]
    %v9541 = vld [vmem:[#allocation16 + $0x820] sm:$0xff]
    %v9542 = vld [vmem:[#allocation16 + $0x828] sm:$0xff]
    %v9543 = vld [vmem:[#allocation16 + $0x830] sm:$0xf]
    %v9544 = vld [vmem:[#allocation16 + $0x834] sm:$0xff]
    %v9545 = vld [vmem:[#allocation16 + $0x83c] sm:$0xff]
    %v9546 = vld [vmem:[#allocation16 + $0x844] sm:$0xff]
    %v9547 = vld [vmem:[#allocation16 + $0x84c] sm:$0xf]
    %v9548 = vld [vmem:[#allocation16 + $0x850] sm:$0xff]
    %v9549 = vld [vmem:[#allocation16 + $0x858] sm:$0xff]
    %v9550 = vld [vmem:[#allocation16 + $0x860] sm:$0xff]
    %v9551 = vld [vmem:[#allocation16 + $0x868] sm:$0xf]
    %v9552 = vld [vmem:[#allocation16 + $0x86c] sm:$0xff]
    %v9553 = vld [vmem:[#allocation16 + $0x874] sm:$0xff]
    %v9554 = vld [vmem:[#allocation16 + $0x87c] sm:$0xff]
    %v9555 = vld [vmem:[#allocation16 + $0x884] sm:$0xf]
    %v9556 = vld [vmem:[#allocation16 + $0x888] sm:$0xff]
    %v9557 = vld [vmem:[#allocation16 + $0x890] sm:$0xff]
    %v9558 = vld [vmem:[#allocation16 + $0x898] sm:$0xff]
    %v9559 = vld [vmem:[#allocation16 + $0x8a0] sm:$0xf]
    %v9560 = vld [vmem:[#allocation16 + $0x8a4] sm:$0xff]
    %v9561 = vld [vmem:[#allocation16 + $0x8ac] sm:$0xff]
    %v9562 = vld [vmem:[#allocation16 + $0x8b4] sm:$0xff]
    %v9563 = vld [vmem:[#allocation16 + $0x8bc] sm:$0xf]
    %v9564 = vld [vmem:[#allocation16 + $0x8c0] sm:$0xff]
    %v9565 = vld [vmem:[#allocation16 + $0x8c8] sm:$0xff]
    %v9566 = vld [vmem:[#allocation16 + $0x8d0] sm:$0xff]
    %v9567 = vld [vmem:[#allocation16 + $0x8d8] sm:$0xf]
    %v9568 = vld [vmem:[#allocation16 + $0x8dc] sm:$0xff]
    %v9569 = vld [vmem:[#allocation16 + $0x8e4] sm:$0xff]
    %v9570 = vld [vmem:[#allocation16 + $0x8ec] sm:$0xff]
    %v9571 = vld [vmem:[#allocation16 + $0x8f4] sm:$0xf]
    %v9572 = vld [vmem:[#allocation16 + $0x8f8] sm:$0xff]
    %v9573 = vld [vmem:[#allocation16 + $0x900] sm:$0xff]
    %v9574 = vld [vmem:[#allocation16 + $0x908] sm:$0xff]
    %v9575 = vld [vmem:[#allocation16 + $0x910] sm:$0xf]
    %v9576 = vld [vmem:[#allocation16 + $0x914] sm:$0xff]
    %v9577 = vld [vmem:[#allocation16 + $0x91c] sm:$0xff]
    %v9578 = vld [vmem:[#allocation16 + $0x924] sm:$0xff]
    %v9579 = vld [vmem:[#allocation16 + $0x92c] sm:$0xf]
    %v9580 = vld [vmem:[#allocation16 + $0x930] sm:$0xff]
    %v9581 = vld [vmem:[#allocation16 + $0x938] sm:$0xff]
    %v9582 = vld [vmem:[#allocation16 + $0x940] sm:$0xff]
    %v9583 = vld [vmem:[#allocation16 + $0x948] sm:$0xf]
    %v9584 = vld [vmem:[#allocation16 + $0x94c] sm:$0xff]
    %v9585 = vld [vmem:[#allocation16 + $0x954] sm:$0xff]
    %v9586 = vld [vmem:[#allocation16 + $0x95c] sm:$0xff]
    %v9587 = vld [vmem:[#allocation16 + $0x964] sm:$0xf]
    %v9588 = vld [vmem:[#allocation16 + $0x968] sm:$0xff]
    %v9589 = vld [vmem:[#allocation16 + $0x970] sm:$0xff]
    %v9590 = vld [vmem:[#allocation16 + $0x978] sm:$0xff]
    %v9591 = vld [vmem:[#allocation16 + $0x980] sm:$0xf]
    %v9592 = vld [vmem:[#allocation16 + $0x984] sm:$0xff]
    %v9593 = vld [vmem:[#allocation16 + $0x98c] sm:$0xff]
    %v9594 = vld [vmem:[#allocation16 + $0x994] sm:$0xff]
    %v9595 = vld [vmem:[#allocation16 + $0x99c] sm:$0xf]
    %v9596 = vld [vmem:[#allocation16 + $0x9a0] sm:$0xff]
    %v9597 = vld [vmem:[#allocation16 + $0x9a8] sm:$0xff]
    %v9598 = vld [vmem:[#allocation16 + $0x9b0] sm:$0xff]
    %v9599 = vld [vmem:[#allocation16 + $0x9b8] sm:$0xf]
    %v9600 = vld [vmem:[#allocation16 + $0x9bc] sm:$0xff]
    %v9601 = vld [vmem:[#allocation16 + $0x9c4] sm:$0xff]
    %v9602 = vld [vmem:[#allocation16 + $0x9cc] sm:$0xff]
    %v9603 = vld [vmem:[#allocation16 + $0x9d4] sm:$0xf]
    %v9604 = vld [vmem:[#allocation16 + $0x9d8] sm:$0xff]
    %v9605 = vld [vmem:[#allocation16 + $0x9e0] sm:$0xff]
    %v9606 = vld [vmem:[#allocation16 + $0x9e8] sm:$0xff]
    %v9607 = vld [vmem:[#allocation16 + $0x9f0] sm:$0xf]
    %v9608 = vld [vmem:[#allocation16 + $0x9f4] sm:$0xff]
    %v9609 = vld [vmem:[#allocation16 + $0x9fc] sm:$0xff]
    %v9610 = vld [vmem:[#allocation16 + $0xa04] sm:$0xff]
    %v9611 = vld [vmem:[#allocation16 + $0xa0c] sm:$0xf]
    %v9612 = vld [vmem:[#allocation16 + $0xa10] sm:$0xff]
    %v9613 = vld [vmem:[#allocation16 + $0xa18] sm:$0xff]
    %v9614 = vld [vmem:[#allocation16 + $0xa20] sm:$0xff]
    %v9615 = vld [vmem:[#allocation16 + $0xa28] sm:$0xf]
    %v9616 = vld [vmem:[#allocation16 + $0xa2c] sm:$0xff]
    %v9617 = vld [vmem:[#allocation16 + $0xa34] sm:$0xff]
    %v9618 = vld [vmem:[#allocation16 + $0xa3c] sm:$0xff]
    %v9619 = vld [vmem:[#allocation16 + $0xa44] sm:$0xf]
    %v9620 = vld [vmem:[#allocation16 + $0xa48] sm:$0xff]
    %v9621 = vld [vmem:[#allocation16 + $0xa50] sm:$0xff]
    %v9622 = vld [vmem:[#allocation16 + $0xa58] sm:$0xff]
    %v9623 = vld [vmem:[#allocation16 + $0xa60] sm:$0xf]
    %v9624 = vld [vmem:[#allocation16 + $0xa64] sm:$0xff]
    %v9625 = vld [vmem:[#allocation16 + $0xa6c] sm:$0xff]
    %v9626 = vld [vmem:[#allocation16 + $0xa74] sm:$0xff]
    %v9627 = vld [vmem:[#allocation16 + $0xa7c] sm:$0xf]
    %v9628 = vld [vmem:[#allocation16 + $0xa80] sm:$0xff]
    %v9629 = vld [vmem:[#allocation16 + $0xa88] sm:$0xff]
    %v9630 = vld [vmem:[#allocation16 + $0xa90] sm:$0xff]
    %v9631 = vld [vmem:[#allocation16 + $0xa98] sm:$0xf]
    %v9632 = vld [vmem:[#allocation16 + $0xa9c] sm:$0xff]
    %v9633 = vld [vmem:[#allocation16 + $0xaa4] sm:$0xff]
    %v9634 = vld [vmem:[#allocation16 + $0xaac] sm:$0xff]
    %v9635 = vld [vmem:[#allocation16 + $0xab4] sm:$0xf]
    %v9636 = vld [vmem:[#allocation16 + $0xab8] sm:$0xff]
    %v9637 = vld [vmem:[#allocation16 + $0xac0] sm:$0xff]
    %v9638 = vld [vmem:[#allocation16 + $0xac8] sm:$0xff]
    %v9639 = vld [vmem:[#allocation16 + $0xad0] sm:$0xf]
    %v9640 = vld [vmem:[#allocation16 + $0xad4] sm:$0xff]
    %v9641 = vld [vmem:[#allocation16 + $0xadc] sm:$0xff]
    %v9642 = vld [vmem:[#allocation16 + $0xae4] sm:$0xff]
    %v9643 = vld [vmem:[#allocation16 + $0xaec] sm:$0xf]
    %v9644 = vld [vmem:[#allocation16 + $0xaf0] sm:$0xff]
    %v9645 = vld [vmem:[#allocation16 + $0xaf8] sm:$0xff]
    %v9646 = vld [vmem:[#allocation16 + $0xb00] sm:$0xff]
    %v9647 = vld [vmem:[#allocation16 + $0xb08] sm:$0xf]
    %v9648 = vld [vmem:[#allocation16 + $0xb0c] sm:$0xff]
    %v9649 = vld [vmem:[#allocation16 + $0xb14] sm:$0xff]
    %v9650 = vld [vmem:[#allocation16 + $0xb1c] sm:$0xff]
    %v9651 = vld [vmem:[#allocation16 + $0xb24] sm:$0xf]
    %v9652 = vld [vmem:[#allocation16 + $0xb28] sm:$0xff]
    %v9653 = vld [vmem:[#allocation16 + $0xb30] sm:$0xff]
    %v9654 = vld [vmem:[#allocation16 + $0xb38] sm:$0xff]
    %v9655 = vld [vmem:[#allocation16 + $0xb40] sm:$0xf]
    %v9656 = vld [vmem:[#allocation16 + $0xb44] sm:$0xff]
    %v9657 = vld [vmem:[#allocation16 + $0xb4c] sm:$0xff]
    %v9658 = vld [vmem:[#allocation16 + $0xb54] sm:$0xff]
    %v9659 = vld [vmem:[#allocation16 + $0xb5c] sm:$0xf]
    %v9660 = vld [vmem:[#allocation16 + $0xb60] sm:$0xff]
    %v9661 = vld [vmem:[#allocation16 + $0xb68] sm:$0xff]
    %v9662 = vld [vmem:[#allocation16 + $0xb70] sm:$0xff]
    %v9663 = vld [vmem:[#allocation16 + $0xb78] sm:$0xf]
    %v9664 = vld [vmem:[#allocation16 + $0xb7c] sm:$0xff]
    %v9665 = vld [vmem:[#allocation16 + $0xb84] sm:$0xff]
    %v9666 = vld [vmem:[#allocation16 + $0xb8c] sm:$0xff]
    %v9667 = vld [vmem:[#allocation16 + $0xb94] sm:$0xf]
    %v9668 = vld [vmem:[#allocation16 + $0xb98] sm:$0xff]
    %v9669 = vld [vmem:[#allocation16 + $0xba0] sm:$0xff]
    %v9670 = vld [vmem:[#allocation16 + $0xba8] sm:$0xff]
    %v9671 = vld [vmem:[#allocation16 + $0xbb0] sm:$0xf]
    %v9672 = vld [vmem:[#allocation16 + $0xbb4] sm:$0xff]
    %v9673 = vld [vmem:[#allocation16 + $0xbbc] sm:$0xff]
    %v9674 = vld [vmem:[#allocation16 + $0xbc4] sm:$0xff]
    %v9675 = vld [vmem:[#allocation16 + $0xbcc] sm:$0xf]
    %v9676 = vld [vmem:[#allocation16 + $0xbd0] sm:$0xff]
    %v9677 = vld [vmem:[#allocation16 + $0xbd8] sm:$0xff]
    %v9678 = vld [vmem:[#allocation16 + $0xbe0] sm:$0xff]
    %v9679 = vld [vmem:[#allocation16 + $0xbe8] sm:$0xf]
    %v9680 = vld [vmem:[#allocation16 + $0xbec] sm:$0xff]
    %v9681 = vld [vmem:[#allocation16 + $0xbf4] sm:$0xff]
    %v9682 = vld [vmem:[#allocation16 + $0xbfc] sm:$0xff]
    %v9683 = vld [vmem:[#allocation16 + $0xc04] sm:$0xf]
    %v9684 = vld [vmem:[#allocation16 + $0xc08] sm:$0xff]
    %v9685 = vld [vmem:[#allocation16 + $0xc10] sm:$0xff]
    %v9686 = vld [vmem:[#allocation16 + $0xc18] sm:$0xff]
    %v9687 = vld [vmem:[#allocation16 + $0xc20] sm:$0xf]
    %v9688 = vld [vmem:[#allocation16 + $0xc24] sm:$0xff]
    %v9689 = vld [vmem:[#allocation16 + $0xc2c] sm:$0xff]
    %v9690 = vld [vmem:[#allocation16 + $0xc34] sm:$0xff]
    %v9691 = vld [vmem:[#allocation16 + $0xc3c] sm:$0xf]
    %v9692 = vld [vmem:[#allocation18] sm:$0xff]
    %v9694 = vlaneseq
    %v9695 = vshrl.u32 %v9694, 7
    %v9696 = vsub.s32 0, %v9695
    %v9697 = vrot.slane %v9692, %v9696
    %v9698 = vlaneseq
    %v9699 = vshrl.u32 %v9698, 7
    %v9700 = vsub.s32 1, %v9699
    %v9701 = vrot.slane %v9692, %v9700
    %v9702 = vlaneseq
    %v9703 = vshrl.u32 %v9702, 7
    %v9704 = vsub.s32 2, %v9703
    %v9705 = vrot.slane %v9692, %v9704
    %v9706 = vlaneseq
    %v9707 = vshrl.u32 %v9706, 7
    %v9708 = vsub.s32 3, %v9707
    %v9709 = vrot.slane %v9692, %v9708
    %v9710 = vlaneseq
    %v9711 = vshrl.u32 %v9710, 7
    %v9712 = vsub.s32 4, %v9711
    %v9713 = vrot.slane %v9692, %v9712
    %v9714 = vlaneseq
    %v9715 = vshrl.u32 %v9714, 7
    %v9716 = vsub.s32 5, %v9715
    %v9717 = vrot.slane %v9692, %v9716
    %v9718 = vlaneseq
    %v9719 = vshrl.u32 %v9718, 7
    %v9720 = vsub.s32 6, %v9719
    %v9721 = vrot.slane %v9692, %v9720
    %v10177 = vunpack.c.l.b16 %v9244
    %v10178 = vunpack.c.h.b16 %v9244
    %v10179 = vunpack.c.l.b16 %v9245
    %v10180 = vunpack.c.h.b16 %v9245
    %v10181 = vunpack.c.l.b16 %v9246
    %v10182 = vunpack.c.h.b16 %v9246
    %v10183 = vunpack.c.l.b16 %v9247
    %v10184 = vunpack.c.l.b16 %v9248
    %v10185 = vunpack.c.h.b16 %v9248
    %v10186 = vunpack.c.l.b16 %v9249
    %v10187 = vunpack.c.h.b16 %v9249
    %v10188 = vunpack.c.l.b16 %v9250
    %v10189 = vunpack.c.h.b16 %v9250
    %v10190 = vunpack.c.l.b16 %v9251
    %v10191 = vunpack.c.l.b16 %v9252
    %v10192 = vunpack.c.h.b16 %v9252
    %v10193 = vunpack.c.l.b16 %v9253
    %v10194 = vunpack.c.h.b16 %v9253
    %v10195 = vunpack.c.l.b16 %v9254
    %v10196 = vunpack.c.h.b16 %v9254
    %v10197 = vunpack.c.l.b16 %v9255
    %v10198 = vunpack.c.l.b16 %v9256
    %v10199 = vunpack.c.h.b16 %v9256
    %v10200 = vunpack.c.l.b16 %v9257
    %v10201 = vunpack.c.h.b16 %v9257
    %v10202 = vunpack.c.l.b16 %v9258
    %v10203 = vunpack.c.h.b16 %v9258
    %v10204 = vunpack.c.l.b16 %v9259
    %v10205 = vunpack.c.l.b16 %v9260
    %v10206 = vunpack.c.h.b16 %v9260
    %v10207 = vunpack.c.l.b16 %v9261
    %v10208 = vunpack.c.h.b16 %v9261
    %v10209 = vunpack.c.l.b16 %v9262
    %v10210 = vunpack.c.h.b16 %v9262
    %v10211 = vunpack.c.l.b16 %v9263
    %v10212 = vunpack.c.l.b16 %v9264
    %v10213 = vunpack.c.h.b16 %v9264
    %v10214 = vunpack.c.l.b16 %v9265
    %v10215 = vunpack.c.h.b16 %v9265
    %v10216 = vunpack.c.l.b16 %v9266
    %v10217 = vunpack.c.h.b16 %v9266
    %v10218 = vunpack.c.l.b16 %v9267
    %v10219 = vunpack.c.l.b16 %v9268
    %v10220 = vunpack.c.h.b16 %v9268
    %v10221 = vunpack.c.l.b16 %v9269
    %v10222 = vunpack.c.h.b16 %v9269
    %v10223 = vunpack.c.l.b16 %v9270
    %v10224 = vunpack.c.h.b16 %v9270
    %v10225 = vunpack.c.l.b16 %v9271
    %v10226 = vunpack.c.l.b16 %v9272
    %v10227 = vunpack.c.h.b16 %v9272
    %v10228 = vunpack.c.l.b16 %v9273
    %v10229 = vunpack.c.h.b16 %v9273
    %v10230 = vunpack.c.l.b16 %v9274
    %v10231 = vunpack.c.h.b16 %v9274
    %v10232 = vunpack.c.l.b16 %v9275
    %v10233 = vunpack.c.l.b16 %v9276
    %v10234 = vunpack.c.h.b16 %v9276
    %v10235 = vunpack.c.l.b16 %v9277
    %v10236 = vunpack.c.h.b16 %v9277
    %v10237 = vunpack.c.l.b16 %v9278
    %v10238 = vunpack.c.h.b16 %v9278
    %v10239 = vunpack.c.l.b16 %v9279
    %v10240 = vunpack.c.l.b16 %v9280
    %v10241 = vunpack.c.h.b16 %v9280
    %v10242 = vunpack.c.l.b16 %v9281
    %v10243 = vunpack.c.h.b16 %v9281
    %v10244 = vunpack.c.l.b16 %v9282
    %v10245 = vunpack.c.h.b16 %v9282
    %v10246 = vunpack.c.l.b16 %v9283
    %v10247 = vunpack.c.l.b16 %v9284
    %v10248 = vunpack.c.h.b16 %v9284
    %v10249 = vunpack.c.l.b16 %v9285
    %v10250 = vunpack.c.h.b16 %v9285
    %v10251 = vunpack.c.l.b16 %v9286
    %v10252 = vunpack.c.h.b16 %v9286
    %v10253 = vunpack.c.l.b16 %v9287
    %v10254 = vunpack.c.l.b16 %v9288
    %v10255 = vunpack.c.h.b16 %v9288
    %v10256 = vunpack.c.l.b16 %v9289
    %v10257 = vunpack.c.h.b16 %v9289
    %v10258 = vunpack.c.l.b16 %v9290
    %v10259 = vunpack.c.h.b16 %v9290
    %v10260 = vunpack.c.l.b16 %v9291
    %v10261 = vunpack.c.l.b16 %v9292
    %v10262 = vunpack.c.h.b16 %v9292
    %v10263 = vunpack.c.l.b16 %v9293
    %v10264 = vunpack.c.h.b16 %v9293
    %v10265 = vunpack.c.l.b16 %v9294
    %v10266 = vunpack.c.h.b16 %v9294
    %v10267 = vunpack.c.l.b16 %v9295
    %v10268 = vunpack.c.l.b16 %v9296
    %v10269 = vunpack.c.h.b16 %v9296
    %v10270 = vunpack.c.l.b16 %v9297
    %v10271 = vunpack.c.h.b16 %v9297
    %v10272 = vunpack.c.l.b16 %v9298
    %v10273 = vunpack.c.h.b16 %v9298
    %v10274 = vunpack.c.l.b16 %v9299
    %v10275 = vunpack.c.l.b16 %v9300
    %v10276 = vunpack.c.h.b16 %v9300
    %v10277 = vunpack.c.l.b16 %v9301
    %v10278 = vunpack.c.h.b16 %v9301
    %v10279 = vunpack.c.l.b16 %v9302
    %v10280 = vunpack.c.h.b16 %v9302
    %v10281 = vunpack.c.l.b16 %v9303
    %v10282 = vunpack.c.l.b16 %v9304
    %v10283 = vunpack.c.h.b16 %v9304
    %v10284 = vunpack.c.l.b16 %v9305
    %v10285 = vunpack.c.h.b16 %v9305
    %v10286 = vunpack.c.l.b16 %v9306
    %v10287 = vunpack.c.h.b16 %v9306
    %v10288 = vunpack.c.l.b16 %v9307
    %v10289 = vunpack.c.l.b16 %v9308
    %v10290 = vunpack.c.h.b16 %v9308
    %v10291 = vunpack.c.l.b16 %v9309
    %v10292 = vunpack.c.h.b16 %v9309
    %v10293 = vunpack.c.l.b16 %v9310
    %v10294 = vunpack.c.h.b16 %v9310
    %v10295 = vunpack.c.l.b16 %v9311
    %v10296 = vunpack.c.l.b16 %v9312
    %v10297 = vunpack.c.h.b16 %v9312
    %v10298 = vunpack.c.l.b16 %v9313
    %v10299 = vunpack.c.h.b16 %v9313
    %v10300 = vunpack.c.l.b16 %v9314
    %v10301 = vunpack.c.h.b16 %v9314
    %v10302 = vunpack.c.l.b16 %v9315
    %v10303 = vunpack.c.l.b16 %v9316
    %v10304 = vunpack.c.h.b16 %v9316
    %v10305 = vunpack.c.l.b16 %v9317
    %v10306 = vunpack.c.h.b16 %v9317
    %v10307 = vunpack.c.l.b16 %v9318
    %v10308 = vunpack.c.h.b16 %v9318
    %v10309 = vunpack.c.l.b16 %v9319
    %v10310 = vunpack.c.l.b16 %v9320
    %v10311 = vunpack.c.h.b16 %v9320
    %v10312 = vunpack.c.l.b16 %v9321
    %v10313 = vunpack.c.h.b16 %v9321
    %v10314 = vunpack.c.l.b16 %v9322
    %v10315 = vunpack.c.h.b16 %v9322
    %v10316 = vunpack.c.l.b16 %v9323
    %v10317 = vunpack.c.l.b16 %v9324
    %v10318 = vunpack.c.h.b16 %v9324
    %v10319 = vunpack.c.l.b16 %v9325
    %v10320 = vunpack.c.h.b16 %v9325
    %v10321 = vunpack.c.l.b16 %v9326
    %v10322 = vunpack.c.h.b16 %v9326
    %v10323 = vunpack.c.l.b16 %v9327
    %v10324 = vunpack.c.l.b16 %v9328
    %v10325 = vunpack.c.h.b16 %v9328
    %v10326 = vunpack.c.l.b16 %v9329
    %v10327 = vunpack.c.h.b16 %v9329
    %v10328 = vunpack.c.l.b16 %v9330
    %v10329 = vunpack.c.h.b16 %v9330
    %v10330 = vunpack.c.l.b16 %v9331
    %v10331 = vunpack.c.l.b16 %v9332
    %v10332 = vunpack.c.h.b16 %v9332
    %v10333 = vunpack.c.l.b16 %v9333
    %v10334 = vunpack.c.h.b16 %v9333
    %v10335 = vunpack.c.l.b16 %v9334
    %v10336 = vunpack.c.h.b16 %v9334
    %v10337 = vunpack.c.l.b16 %v9335
    %v10338 = vunpack.c.l.b16 %v9336
    %v10339 = vunpack.c.h.b16 %v9336
    %v10340 = vunpack.c.l.b16 %v9337
    %v10341 = vunpack.c.h.b16 %v9337
    %v10342 = vunpack.c.l.b16 %v9338
    %v10343 = vunpack.c.h.b16 %v9338
    %v10344 = vunpack.c.l.b16 %v9339
    %v10345 = vunpack.c.l.b16 %v9340
    %v10346 = vunpack.c.h.b16 %v9340
    %v10347 = vunpack.c.l.b16 %v9341
    %v10348 = vunpack.c.h.b16 %v9341
    %v10349 = vunpack.c.l.b16 %v9342
    %v10350 = vunpack.c.h.b16 %v9342
    %v10351 = vunpack.c.l.b16 %v9343
    %v10352 = vunpack.c.l.b16 %v9344
    %v10353 = vunpack.c.h.b16 %v9344
    %v10354 = vunpack.c.l.b16 %v9345
    %v10355 = vunpack.c.h.b16 %v9345
    %v10356 = vunpack.c.l.b16 %v9346
    %v10357 = vunpack.c.h.b16 %v9346
    %v10358 = vunpack.c.l.b16 %v9347
    %v10359 = vunpack.c.l.b16 %v9348
    %v10360 = vunpack.c.h.b16 %v9348
    %v10361 = vunpack.c.l.b16 %v9349
    %v10362 = vunpack.c.h.b16 %v9349
    %v10363 = vunpack.c.l.b16 %v9350
    %v10364 = vunpack.c.h.b16 %v9350
    %v10365 = vunpack.c.l.b16 %v9351
    %v10366 = vunpack.c.l.b16 %v9352
    %v10367 = vunpack.c.h.b16 %v9352
    %v10368 = vunpack.c.l.b16 %v9353
    %v10369 = vunpack.c.h.b16 %v9353
    %v10370 = vunpack.c.l.b16 %v9354
    %v10371 = vunpack.c.h.b16 %v9354
    %v10372 = vunpack.c.l.b16 %v9355
    %v10373 = vunpack.c.l.b16 %v9356
    %v10374 = vunpack.c.h.b16 %v9356
    %v10375 = vunpack.c.l.b16 %v9357
    %v10376 = vunpack.c.h.b16 %v9357
    %v10377 = vunpack.c.l.b16 %v9358
    %v10378 = vunpack.c.h.b16 %v9358
    %v10379 = vunpack.c.l.b16 %v9359
    %v10380 = vunpack.c.l.b16 %v9360
    %v10381 = vunpack.c.h.b16 %v9360
    %v10382 = vunpack.c.l.b16 %v9361
    %v10383 = vunpack.c.h.b16 %v9361
    %v10384 = vunpack.c.l.b16 %v9362
    %v10385 = vunpack.c.h.b16 %v9362
    %v10386 = vunpack.c.l.b16 %v9363
    %v10387 = vunpack.c.l.b16 %v9364
    %v10388 = vunpack.c.h.b16 %v9364
    %v10389 = vunpack.c.l.b16 %v9365
    %v10390 = vunpack.c.h.b16 %v9365
    %v10391 = vunpack.c.l.b16 %v9366
    %v10392 = vunpack.c.h.b16 %v9366
    %v10393 = vunpack.c.l.b16 %v9367
    %v10394 = vunpack.c.l.b16 %v9368
    %v10395 = vunpack.c.h.b16 %v9368
    %v10396 = vunpack.c.l.b16 %v9369
    %v10397 = vunpack.c.h.b16 %v9369
    %v10398 = vunpack.c.l.b16 %v9370
    %v10399 = vunpack.c.h.b16 %v9370
    %v10400 = vunpack.c.l.b16 %v9371
    %v10401 = vunpack.c.l.b16 %v9372
    %v10402 = vunpack.c.h.b16 %v9372
    %v10403 = vunpack.c.l.b16 %v9373
    %v10404 = vunpack.c.h.b16 %v9373
    %v10405 = vunpack.c.l.b16 %v9374
    %v10406 = vunpack.c.h.b16 %v9374
    %v10407 = vunpack.c.l.b16 %v9375
    %v10408 = vunpack.c.l.b16 %v9376
    %v10409 = vunpack.c.h.b16 %v9376
    %v10410 = vunpack.c.l.b16 %v9377
    %v10411 = vunpack.c.h.b16 %v9377
    %v10412 = vunpack.c.l.b16 %v9378
    %v10413 = vunpack.c.h.b16 %v9378
    %v10414 = vunpack.c.l.b16 %v9379
    %v10415 = vunpack.c.l.b16 %v9380
    %v10416 = vunpack.c.h.b16 %v9380
    %v10417 = vunpack.c.l.b16 %v9381
    %v10418 = vunpack.c.h.b16 %v9381
    %v10419 = vunpack.c.l.b16 %v9382
    %v10420 = vunpack.c.h.b16 %v9382
    %v10421 = vunpack.c.l.b16 %v9383
    %v10422 = vunpack.c.l.b16 %v9384
    %v10423 = vunpack.c.h.b16 %v9384
    %v10424 = vunpack.c.l.b16 %v9385
    %v10425 = vunpack.c.h.b16 %v9385
    %v10426 = vunpack.c.l.b16 %v9386
    %v10427 = vunpack.c.h.b16 %v9386
    %v10428 = vunpack.c.l.b16 %v9387
    %v10429 = vunpack.c.l.b16 %v9388
    %v10430 = vunpack.c.h.b16 %v9388
    %v10431 = vunpack.c.l.b16 %v9389
    %v10432 = vunpack.c.h.b16 %v9389
    %v10433 = vunpack.c.l.b16 %v9390
    %v10434 = vunpack.c.h.b16 %v9390
    %v10435 = vunpack.c.l.b16 %v9391
    %v10436 = vunpack.c.l.b16 %v9392
    %v10437 = vunpack.c.h.b16 %v9392
    %v10438 = vunpack.c.l.b16 %v9393
    %v10439 = vunpack.c.h.b16 %v9393
    %v10440 = vunpack.c.l.b16 %v9394
    %v10441 = vunpack.c.h.b16 %v9394
    %v10442 = vunpack.c.l.b16 %v9395
    %v10443 = vunpack.c.l.b16 %v9396
    %v10444 = vunpack.c.h.b16 %v9396
    %v10445 = vunpack.c.l.b16 %v9397
    %v10446 = vunpack.c.h.b16 %v9397
    %v10447 = vunpack.c.l.b16 %v9398
    %v10448 = vunpack.c.h.b16 %v9398
    %v10449 = vunpack.c.l.b16 %v9399
    %v10450 = vunpack.c.l.b16 %v9400
    %v10451 = vunpack.c.h.b16 %v9400
    %v10452 = vunpack.c.l.b16 %v9401
    %v10453 = vunpack.c.h.b16 %v9401
    %v10454 = vunpack.c.l.b16 %v9402
    %v10455 = vunpack.c.h.b16 %v9402
    %v10456 = vunpack.c.l.b16 %v9403
    %v10457 = vunpack.c.l.b16 %v9404
    %v10458 = vunpack.c.h.b16 %v9404
    %v10459 = vunpack.c.l.b16 %v9405
    %v10460 = vunpack.c.h.b16 %v9405
    %v10461 = vunpack.c.l.b16 %v9406
    %v10462 = vunpack.c.h.b16 %v9406
    %v10463 = vunpack.c.l.b16 %v9407
    %v10464 = vunpack.c.l.b16 %v9408
    %v10465 = vunpack.c.h.b16 %v9408
    %v10466 = vunpack.c.l.b16 %v9409
    %v10467 = vunpack.c.h.b16 %v9409
    %v10468 = vunpack.c.l.b16 %v9410
    %v10469 = vunpack.c.h.b16 %v9410
    %v10470 = vunpack.c.l.b16 %v9411
    %v10471 = vunpack.c.l.b16 %v9412
    %v10472 = vunpack.c.h.b16 %v9412
    %v10473 = vunpack.c.l.b16 %v9413
    %v10474 = vunpack.c.h.b16 %v9413
    %v10475 = vunpack.c.l.b16 %v9414
    %v10476 = vunpack.c.h.b16 %v9414
    %v10477 = vunpack.c.l.b16 %v9415
    %v10478 = vunpack.c.l.b16 %v9416
    %v10479 = vunpack.c.h.b16 %v9416
    %v10480 = vunpack.c.l.b16 %v9417
    %v10481 = vunpack.c.h.b16 %v9417
    %v10482 = vunpack.c.l.b16 %v9418
    %v10483 = vunpack.c.h.b16 %v9418
    %v10484 = vunpack.c.l.b16 %v9419
    %v10485 = vunpack.c.l.b16 %v9420
    %v10486 = vunpack.c.h.b16 %v9420
    %v10487 = vunpack.c.l.b16 %v9421
    %v10488 = vunpack.c.h.b16 %v9421
    %v10489 = vunpack.c.l.b16 %v9422
    %v10490 = vunpack.c.h.b16 %v9422
    %v10491 = vunpack.c.l.b16 %v9423
    %v10492 = vunpack.c.l.b16 %v9424
    %v10493 = vunpack.c.h.b16 %v9424
    %v10494 = vunpack.c.l.b16 %v9425
    %v10495 = vunpack.c.h.b16 %v9425
    %v10496 = vunpack.c.l.b16 %v9426
    %v10497 = vunpack.c.h.b16 %v9426
    %v10498 = vunpack.c.l.b16 %v9427
    %v10499 = vunpack.c.l.b16 %v9428
    %v10500 = vunpack.c.h.b16 %v9428
    %v10501 = vunpack.c.l.b16 %v9429
    %v10502 = vunpack.c.h.b16 %v9429
    %v10503 = vunpack.c.l.b16 %v9430
    %v10504 = vunpack.c.h.b16 %v9430
    %v10505 = vunpack.c.l.b16 %v9431
    %v10506 = vunpack.c.l.b16 %v9432
    %v10507 = vunpack.c.h.b16 %v9432
    %v10508 = vunpack.c.l.b16 %v9433
    %v10509 = vunpack.c.h.b16 %v9433
    %v10510 = vunpack.c.l.b16 %v9434
    %v10511 = vunpack.c.h.b16 %v9434
    %v10512 = vunpack.c.l.b16 %v9435
    %v10513 = vunpack.c.l.b16 %v9436
    %v10514 = vunpack.c.h.b16 %v9436
    %v10515 = vunpack.c.l.b16 %v9437
    %v10516 = vunpack.c.h.b16 %v9437
    %v10517 = vunpack.c.l.b16 %v9438
    %v10518 = vunpack.c.h.b16 %v9438
    %v10519 = vunpack.c.l.b16 %v9439
    %v10520 = vunpack.c.l.b16 %v9440
    %v10521 = vunpack.c.h.b16 %v9440
    %v10522 = vunpack.c.l.b16 %v9441
    %v10523 = vunpack.c.h.b16 %v9441
    %v10524 = vunpack.c.l.b16 %v9442
    %v10525 = vunpack.c.h.b16 %v9442
    %v10526 = vunpack.c.l.b16 %v9443
    %v10527 = vunpack.c.l.b16 %v9444
    %v10528 = vunpack.c.h.b16 %v9444
    %v10529 = vunpack.c.l.b16 %v9445
    %v10530 = vunpack.c.h.b16 %v9445
    %v10531 = vunpack.c.l.b16 %v9446
    %v10532 = vunpack.c.h.b16 %v9446
    %v10533 = vunpack.c.l.b16 %v9447
    %v10534 = vunpack.c.l.b16 %v9448
    %v10535 = vunpack.c.h.b16 %v9448
    %v10536 = vunpack.c.l.b16 %v9449
    %v10537 = vunpack.c.h.b16 %v9449
    %v10538 = vunpack.c.l.b16 %v9450
    %v10539 = vunpack.c.h.b16 %v9450
    %v10540 = vunpack.c.l.b16 %v9451
    %v10541 = vunpack.c.l.b16 %v9452
    %v10542 = vunpack.c.h.b16 %v9452
    %v10543 = vunpack.c.l.b16 %v9453
    %v10544 = vunpack.c.h.b16 %v9453
    %v10545 = vunpack.c.l.b16 %v9454
    %v10546 = vunpack.c.h.b16 %v9454
    %v10547 = vunpack.c.l.b16 %v9455
    %v10548 = vunpack.c.l.b16 %v9456
    %v10549 = vunpack.c.h.b16 %v9456
    %v10550 = vunpack.c.l.b16 %v9457
    %v10551 = vunpack.c.h.b16 %v9457
    %v10552 = vunpack.c.l.b16 %v9458
    %v10553 = vunpack.c.h.b16 %v9458
    %v10554 = vunpack.c.l.b16 %v9459
    %v10555 = vunpack.c.l.b16 %v9460
    %v10556 = vunpack.c.h.b16 %v9460
    %v10557 = vunpack.c.l.b16 %v9461
    %v10558 = vunpack.c.h.b16 %v9461
    %v10559 = vunpack.c.l.b16 %v9462
    %v10560 = vunpack.c.h.b16 %v9462
    %v10561 = vunpack.c.l.b16 %v9463
    %v10562 = vunpack.c.l.b16 %v9464
    %v10563 = vunpack.c.h.b16 %v9464
    %v10564 = vunpack.c.l.b16 %v9465
    %v10565 = vunpack.c.h.b16 %v9465
    %v10566 = vunpack.c.l.b16 %v9466
    %v10567 = vunpack.c.h.b16 %v9466
    %v10568 = vunpack.c.l.b16 %v9467
    %v10569 = vunpack.c.l.b16 %v9468
    %v10570 = vunpack.c.h.b16 %v9468
    %v10571 = vunpack.c.l.b16 %v9469
    %v10572 = vunpack.c.h.b16 %v9469
    %v10573 = vunpack.c.l.b16 %v9470
    %v10574 = vunpack.c.h.b16 %v9470
    %v10575 = vunpack.c.l.b16 %v9471
    %v10576 = vunpack.c.l.b16 %v9472
    %v10577 = vunpack.c.h.b16 %v9472
    %v10578 = vunpack.c.l.b16 %v9473
    %v10579 = vunpack.c.h.b16 %v9473
    %v10580 = vunpack.c.l.b16 %v9474
    %v10581 = vunpack.c.h.b16 %v9474
    %v10582 = vunpack.c.l.b16 %v9475
    %v10583 = vunpack.c.l.b16 %v9476
    %v10584 = vunpack.c.h.b16 %v9476
    %v10585 = vunpack.c.l.b16 %v9477
    %v10586 = vunpack.c.h.b16 %v9477
    %v10587 = vunpack.c.l.b16 %v9478
    %v10588 = vunpack.c.h.b16 %v9478
    %v10589 = vunpack.c.l.b16 %v9479
    %v10590 = vunpack.c.l.b16 %v9480
    %v10591 = vunpack.c.h.b16 %v9480
    %v10592 = vunpack.c.l.b16 %v9481
    %v10593 = vunpack.c.h.b16 %v9481
    %v10594 = vunpack.c.l.b16 %v9482
    %v10595 = vunpack.c.h.b16 %v9482
    %v10596 = vunpack.c.l.b16 %v9483
    %v10597 = vunpack.c.l.b16 %v9484
    %v10598 = vunpack.c.h.b16 %v9484
    %v10599 = vunpack.c.l.b16 %v9485
    %v10600 = vunpack.c.h.b16 %v9485
    %v10601 = vunpack.c.l.b16 %v9486
    %v10602 = vunpack.c.h.b16 %v9486
    %v10603 = vunpack.c.l.b16 %v9487
    %v10604 = vunpack.c.l.b16 %v9488
    %v10605 = vunpack.c.h.b16 %v9488
    %v10606 = vunpack.c.l.b16 %v9489
    %v10607 = vunpack.c.h.b16 %v9489
    %v10608 = vunpack.c.l.b16 %v9490
    %v10609 = vunpack.c.h.b16 %v9490
    %v10610 = vunpack.c.l.b16 %v9491
    %v10611 = vunpack.c.l.b16 %v9492
    %v10612 = vunpack.c.h.b16 %v9492
    %v10613 = vunpack.c.l.b16 %v9493
    %v10614 = vunpack.c.h.b16 %v9493
    %v10615 = vunpack.c.l.b16 %v9494
    %v10616 = vunpack.c.h.b16 %v9494
    %v10617 = vunpack.c.l.b16 %v9495
    %v10618 = vunpack.c.l.b16 %v9496
    %v10619 = vunpack.c.h.b16 %v9496
    %v10620 = vunpack.c.l.b16 %v9497
    %v10621 = vunpack.c.h.b16 %v9497
    %v10622 = vunpack.c.l.b16 %v9498
    %v10623 = vunpack.c.h.b16 %v9498
    %v10624 = vunpack.c.l.b16 %v9499
    %v10625 = vunpack.c.l.b16 %v9500
    %v10626 = vunpack.c.h.b16 %v9500
    %v10627 = vunpack.c.l.b16 %v9501
    %v10628 = vunpack.c.h.b16 %v9501
    %v10629 = vunpack.c.l.b16 %v9502
    %v10630 = vunpack.c.h.b16 %v9502
    %v10631 = vunpack.c.l.b16 %v9503
    %v10632 = vunpack.c.l.b16 %v9504
    %v10633 = vunpack.c.h.b16 %v9504
    %v10634 = vunpack.c.l.b16 %v9505
    %v10635 = vunpack.c.h.b16 %v9505
    %v10636 = vunpack.c.l.b16 %v9506
    %v10637 = vunpack.c.h.b16 %v9506
    %v10638 = vunpack.c.l.b16 %v9507
    %v10639 = vunpack.c.l.b16 %v9508
    %v10640 = vunpack.c.h.b16 %v9508
    %v10641 = vunpack.c.l.b16 %v9509
    %v10642 = vunpack.c.h.b16 %v9509
    %v10643 = vunpack.c.l.b16 %v9510
    %v10644 = vunpack.c.h.b16 %v9510
    %v10645 = vunpack.c.l.b16 %v9511
    %v10646 = vunpack.c.l.b16 %v9512
    %v10647 = vunpack.c.h.b16 %v9512
    %v10648 = vunpack.c.l.b16 %v9513
    %v10649 = vunpack.c.h.b16 %v9513
    %v10650 = vunpack.c.l.b16 %v9514
    %v10651 = vunpack.c.h.b16 %v9514
    %v10652 = vunpack.c.l.b16 %v9515
    %v10653 = vunpack.c.l.b16 %v9516
    %v10654 = vunpack.c.h.b16 %v9516
    %v10655 = vunpack.c.l.b16 %v9517
    %v10656 = vunpack.c.h.b16 %v9517
    %v10657 = vunpack.c.l.b16 %v9518
    %v10658 = vunpack.c.h.b16 %v9518
    %v10659 = vunpack.c.l.b16 %v9519
    %v10660 = vunpack.c.l.b16 %v9520
    %v10661 = vunpack.c.h.b16 %v9520
    %v10662 = vunpack.c.l.b16 %v9521
    %v10663 = vunpack.c.h.b16 %v9521
    %v10664 = vunpack.c.l.b16 %v9522
    %v10665 = vunpack.c.h.b16 %v9522
    %v10666 = vunpack.c.l.b16 %v9523
    %v10667 = vunpack.c.l.b16 %v9524
    %v10668 = vunpack.c.h.b16 %v9524
    %v10669 = vunpack.c.l.b16 %v9525
    %v10670 = vunpack.c.h.b16 %v9525
    %v10671 = vunpack.c.l.b16 %v9526
    %v10672 = vunpack.c.h.b16 %v9526
    %v10673 = vunpack.c.l.b16 %v9527
    %v10674 = vunpack.c.l.b16 %v9528
    %v10675 = vunpack.c.h.b16 %v9528
    %v10676 = vunpack.c.l.b16 %v9529
    %v10677 = vunpack.c.h.b16 %v9529
    %v10678 = vunpack.c.l.b16 %v9530
    %v10679 = vunpack.c.h.b16 %v9530
    %v10680 = vunpack.c.l.b16 %v9531
    %v10681 = vunpack.c.l.b16 %v9532
    %v10682 = vunpack.c.h.b16 %v9532
    %v10683 = vunpack.c.l.b16 %v9533
    %v10684 = vunpack.c.h.b16 %v9533
    %v10685 = vunpack.c.l.b16 %v9534
    %v10686 = vunpack.c.h.b16 %v9534
    %v10687 = vunpack.c.l.b16 %v9535
    %v10688 = vunpack.c.l.b16 %v9536
    %v10689 = vunpack.c.h.b16 %v9536
    %v10690 = vunpack.c.l.b16 %v9537
    %v10691 = vunpack.c.h.b16 %v9537
    %v10692 = vunpack.c.l.b16 %v9538
    %v10693 = vunpack.c.h.b16 %v9538
    %v10694 = vunpack.c.l.b16 %v9539
    %v10695 = vunpack.c.l.b16 %v9540
    %v10696 = vunpack.c.h.b16 %v9540
    %v10697 = vunpack.c.l.b16 %v9541
    %v10698 = vunpack.c.h.b16 %v9541
    %v10699 = vunpack.c.l.b16 %v9542
    %v10700 = vunpack.c.h.b16 %v9542
    %v10701 = vunpack.c.l.b16 %v9543
    %v10702 = vunpack.c.l.b16 %v9544
    %v10703 = vunpack.c.h.b16 %v9544
    %v10704 = vunpack.c.l.b16 %v9545
    %v10705 = vunpack.c.h.b16 %v9545
    %v10706 = vunpack.c.l.b16 %v9546
    %v10707 = vunpack.c.h.b16 %v9546
    %v10708 = vunpack.c.l.b16 %v9547
    %v10709 = vunpack.c.l.b16 %v9548
    %v10710 = vunpack.c.h.b16 %v9548
    %v10711 = vunpack.c.l.b16 %v9549
    %v10712 = vunpack.c.h.b16 %v9549
    %v10713 = vunpack.c.l.b16 %v9550
    %v10714 = vunpack.c.h.b16 %v9550
    %v10715 = vunpack.c.l.b16 %v9551
    %v10716 = vunpack.c.l.b16 %v9552
    %v10717 = vunpack.c.h.b16 %v9552
    %v10718 = vunpack.c.l.b16 %v9553
    %v10719 = vunpack.c.h.b16 %v9553
    %v10720 = vunpack.c.l.b16 %v9554
    %v10721 = vunpack.c.h.b16 %v9554
    %v10722 = vunpack.c.l.b16 %v9555
    %v10723 = vunpack.c.l.b16 %v9556
    %v10724 = vunpack.c.h.b16 %v9556
    %v10725 = vunpack.c.l.b16 %v9557
    %v10726 = vunpack.c.h.b16 %v9557
    %v10727 = vunpack.c.l.b16 %v9558
    %v10728 = vunpack.c.h.b16 %v9558
    %v10729 = vunpack.c.l.b16 %v9559
    %v10730 = vunpack.c.l.b16 %v9560
    %v10731 = vunpack.c.h.b16 %v9560
    %v10732 = vunpack.c.l.b16 %v9561
    %v10733 = vunpack.c.h.b16 %v9561
    %v10734 = vunpack.c.l.b16 %v9562
    %v10735 = vunpack.c.h.b16 %v9562
    %v10736 = vunpack.c.l.b16 %v9563
    %v10737 = vunpack.c.l.b16 %v9564
    %v10738 = vunpack.c.h.b16 %v9564
    %v10739 = vunpack.c.l.b16 %v9565
    %v10740 = vunpack.c.h.b16 %v9565
    %v10741 = vunpack.c.l.b16 %v9566
    %v10742 = vunpack.c.h.b16 %v9566
    %v10743 = vunpack.c.l.b16 %v9567
    %v10744 = vunpack.c.l.b16 %v9568
    %v10745 = vunpack.c.h.b16 %v9568
    %v10746 = vunpack.c.l.b16 %v9569
    %v10747 = vunpack.c.h.b16 %v9569
    %v10748 = vunpack.c.l.b16 %v9570
    %v10749 = vunpack.c.h.b16 %v9570
    %v10750 = vunpack.c.l.b16 %v9571
    %v10751 = vunpack.c.l.b16 %v9572
    %v10752 = vunpack.c.h.b16 %v9572
    %v10753 = vunpack.c.l.b16 %v9573
    %v10754 = vunpack.c.h.b16 %v9573
    %v10755 = vunpack.c.l.b16 %v9574
    %v10756 = vunpack.c.h.b16 %v9574
    %v10757 = vunpack.c.l.b16 %v9575
    %v10758 = vunpack.c.l.b16 %v9576
    %v10759 = vunpack.c.h.b16 %v9576
    %v10760 = vunpack.c.l.b16 %v9577
    %v10761 = vunpack.c.h.b16 %v9577
    %v10762 = vunpack.c.l.b16 %v9578
    %v10763 = vunpack.c.h.b16 %v9578
    %v10764 = vunpack.c.l.b16 %v9579
    %v10765 = vunpack.c.l.b16 %v9580
    %v10766 = vunpack.c.h.b16 %v9580
    %v10767 = vunpack.c.l.b16 %v9581
    %v10768 = vunpack.c.h.b16 %v9581
    %v10769 = vunpack.c.l.b16 %v9582
    %v10770 = vunpack.c.h.b16 %v9582
    %v10771 = vunpack.c.l.b16 %v9583
    %v10772 = vunpack.c.l.b16 %v9584
    %v10773 = vunpack.c.h.b16 %v9584
    %v10774 = vunpack.c.l.b16 %v9585
    %v10775 = vunpack.c.h.b16 %v9585
    %v10776 = vunpack.c.l.b16 %v9586
    %v10777 = vunpack.c.h.b16 %v9586
    %v10778 = vunpack.c.l.b16 %v9587
    %v10779 = vunpack.c.l.b16 %v9588
    %v10780 = vunpack.c.h.b16 %v9588
    %v10781 = vunpack.c.l.b16 %v9589
    %v10782 = vunpack.c.h.b16 %v9589
    %v10783 = vunpack.c.l.b16 %v9590
    %v10784 = vunpack.c.h.b16 %v9590
    %v10785 = vunpack.c.l.b16 %v9591
    %v10786 = vunpack.c.l.b16 %v9592
    %v10787 = vunpack.c.h.b16 %v9592
    %v10788 = vunpack.c.l.b16 %v9593
    %v10789 = vunpack.c.h.b16 %v9593
    %v10790 = vunpack.c.l.b16 %v9594
    %v10791 = vunpack.c.h.b16 %v9594
    %v10792 = vunpack.c.l.b16 %v9595
    %v10793 = vunpack.c.l.b16 %v9596
    %v10794 = vunpack.c.h.b16 %v9596
    %v10795 = vunpack.c.l.b16 %v9597
    %v10796 = vunpack.c.h.b16 %v9597
    %v10797 = vunpack.c.l.b16 %v9598
    %v10798 = vunpack.c.h.b16 %v9598
    %v10799 = vunpack.c.l.b16 %v9599
    %v10800 = vunpack.c.l.b16 %v9600
    %v10801 = vunpack.c.h.b16 %v9600
    %v10802 = vunpack.c.l.b16 %v9601
    %v10803 = vunpack.c.h.b16 %v9601
    %v10804 = vunpack.c.l.b16 %v9602
    %v10805 = vunpack.c.h.b16 %v9602
    %v10806 = vunpack.c.l.b16 %v9603
    %v10807 = vunpack.c.l.b16 %v9604
    %v10808 = vunpack.c.h.b16 %v9604
    %v10809 = vunpack.c.l.b16 %v9605
    %v10810 = vunpack.c.h.b16 %v9605
    %v10811 = vunpack.c.l.b16 %v9606
    %v10812 = vunpack.c.h.b16 %v9606
    %v10813 = vunpack.c.l.b16 %v9607
    %v10814 = vunpack.c.l.b16 %v9608
    %v10815 = vunpack.c.h.b16 %v9608
    %v10816 = vunpack.c.l.b16 %v9609
    %v10817 = vunpack.c.h.b16 %v9609
    %v10818 = vunpack.c.l.b16 %v9610
    %v10819 = vunpack.c.h.b16 %v9610
    %v10820 = vunpack.c.l.b16 %v9611
    %v10821 = vunpack.c.l.b16 %v9612
    %v10822 = vunpack.c.h.b16 %v9612
    %v10823 = vunpack.c.l.b16 %v9613
    %v10824 = vunpack.c.h.b16 %v9613
    %v10825 = vunpack.c.l.b16 %v9614
    %v10826 = vunpack.c.h.b16 %v9614
    %v10827 = vunpack.c.l.b16 %v9615
    %v10828 = vunpack.c.l.b16 %v9616
    %v10829 = vunpack.c.h.b16 %v9616
    %v10830 = vunpack.c.l.b16 %v9617
    %v10831 = vunpack.c.h.b16 %v9617
    %v10832 = vunpack.c.l.b16 %v9618
    %v10833 = vunpack.c.h.b16 %v9618
    %v10834 = vunpack.c.l.b16 %v9619
    %v10835 = vunpack.c.l.b16 %v9620
    %v10836 = vunpack.c.h.b16 %v9620
    %v10837 = vunpack.c.l.b16 %v9621
    %v10838 = vunpack.c.h.b16 %v9621
    %v10839 = vunpack.c.l.b16 %v9622
    %v10840 = vunpack.c.h.b16 %v9622
    %v10841 = vunpack.c.l.b16 %v9623
    %v10842 = vunpack.c.l.b16 %v9624
    %v10843 = vunpack.c.h.b16 %v9624
    %v10844 = vunpack.c.l.b16 %v9625
    %v10845 = vunpack.c.h.b16 %v9625
    %v10846 = vunpack.c.l.b16 %v9626
    %v10847 = vunpack.c.h.b16 %v9626
    %v10848 = vunpack.c.l.b16 %v9627
    %v10849 = vunpack.c.l.b16 %v9628
    %v10850 = vunpack.c.h.b16 %v9628
    %v10851 = vunpack.c.l.b16 %v9629
    %v10852 = vunpack.c.h.b16 %v9629
    %v10853 = vunpack.c.l.b16 %v9630
    %v10854 = vunpack.c.h.b16 %v9630
    %v10855 = vunpack.c.l.b16 %v9631
    %v10856 = vunpack.c.l.b16 %v9632
    %v10857 = vunpack.c.h.b16 %v9632
    %v10858 = vunpack.c.l.b16 %v9633
    %v10859 = vunpack.c.h.b16 %v9633
    %v10860 = vunpack.c.l.b16 %v9634
    %v10861 = vunpack.c.h.b16 %v9634
    %v10862 = vunpack.c.l.b16 %v9635
    %v10863 = vunpack.c.l.b16 %v9636
    %v10864 = vunpack.c.h.b16 %v9636
    %v10865 = vunpack.c.l.b16 %v9637
    %v10866 = vunpack.c.h.b16 %v9637
    %v10867 = vunpack.c.l.b16 %v9638
    %v10868 = vunpack.c.h.b16 %v9638
    %v10869 = vunpack.c.l.b16 %v9639
    %v10870 = vunpack.c.l.b16 %v9640
    %v10871 = vunpack.c.h.b16 %v9640
    %v10872 = vunpack.c.l.b16 %v9641
    %v10873 = vunpack.c.h.b16 %v9641
    %v10874 = vunpack.c.l.b16 %v9642
    %v10875 = vunpack.c.h.b16 %v9642
    %v10876 = vunpack.c.l.b16 %v9643
    %v10877 = vunpack.c.l.b16 %v9644
    %v10878 = vunpack.c.h.b16 %v9644
    %v10879 = vunpack.c.l.b16 %v9645
    %v10880 = vunpack.c.h.b16 %v9645
    %v10881 = vunpack.c.l.b16 %v9646
    %v10882 = vunpack.c.h.b16 %v9646
    %v10883 = vunpack.c.l.b16 %v9647
    %v10884 = vunpack.c.l.b16 %v9648
    %v10885 = vunpack.c.h.b16 %v9648
    %v10886 = vunpack.c.l.b16 %v9649
    %v10887 = vunpack.c.h.b16 %v9649
    %v10888 = vunpack.c.l.b16 %v9650
    %v10889 = vunpack.c.h.b16 %v9650
    %v10890 = vunpack.c.l.b16 %v9651
    %v10891 = vunpack.c.l.b16 %v9652
    %v10892 = vunpack.c.h.b16 %v9652
    %v10893 = vunpack.c.l.b16 %v9653
    %v10894 = vunpack.c.h.b16 %v9653
    %v10895 = vunpack.c.l.b16 %v9654
    %v10896 = vunpack.c.h.b16 %v9654
    %v10897 = vunpack.c.l.b16 %v9655
    %v10898 = vunpack.c.l.b16 %v9656
    %v10899 = vunpack.c.h.b16 %v9656
    %v10900 = vunpack.c.l.b16 %v9657
    %v10901 = vunpack.c.h.b16 %v9657
    %v10902 = vunpack.c.l.b16 %v9658
    %v10903 = vunpack.c.h.b16 %v9658
    %v10904 = vunpack.c.l.b16 %v9659
    %v10905 = vunpack.c.l.b16 %v9660
    %v10906 = vunpack.c.h.b16 %v9660
    %v10907 = vunpack.c.l.b16 %v9661
    %v10908 = vunpack.c.h.b16 %v9661
    %v10909 = vunpack.c.l.b16 %v9662
    %v10910 = vunpack.c.h.b16 %v9662
    %v10911 = vunpack.c.l.b16 %v9663
    %v10912 = vunpack.c.l.b16 %v9664
    %v10913 = vunpack.c.h.b16 %v9664
    %v10914 = vunpack.c.l.b16 %v9665
    %v10915 = vunpack.c.h.b16 %v9665
    %v10916 = vunpack.c.l.b16 %v9666
    %v10917 = vunpack.c.h.b16 %v9666
    %v10918 = vunpack.c.l.b16 %v9667
    %v10919 = vunpack.c.l.b16 %v9668
    %v10920 = vunpack.c.h.b16 %v9668
    %v10921 = vunpack.c.l.b16 %v9669
    %v10922 = vunpack.c.h.b16 %v9669
    %v10923 = vunpack.c.l.b16 %v9670
    %v10924 = vunpack.c.h.b16 %v9670
    %v10925 = vunpack.c.l.b16 %v9671
    %v10926 = vunpack.c.l.b16 %v9672
    %v10927 = vunpack.c.h.b16 %v9672
    %v10928 = vunpack.c.l.b16 %v9673
    %v10929 = vunpack.c.h.b16 %v9673
    %v10930 = vunpack.c.l.b16 %v9674
    %v10931 = vunpack.c.h.b16 %v9674
    %v10932 = vunpack.c.l.b16 %v9675
    %v10933 = vunpack.c.l.b16 %v9676
    %v10934 = vunpack.c.h.b16 %v9676
    %v10935 = vunpack.c.l.b16 %v9677
    %v10936 = vunpack.c.h.b16 %v9677
    %v10937 = vunpack.c.l.b16 %v9678
    %v10938 = vunpack.c.h.b16 %v9678
    %v10939 = vunpack.c.l.b16 %v9679
    %v10940 = vunpack.c.l.b16 %v9680
    %v10941 = vunpack.c.h.b16 %v9680
    %v10942 = vunpack.c.l.b16 %v9681
    %v10943 = vunpack.c.h.b16 %v9681
    %v10944 = vunpack.c.l.b16 %v9682
    %v10945 = vunpack.c.h.b16 %v9682
    %v10946 = vunpack.c.l.b16 %v9683
    %v10947 = vunpack.c.l.b16 %v9684
    %v10948 = vunpack.c.h.b16 %v9684
    %v10949 = vunpack.c.l.b16 %v9685
    %v10950 = vunpack.c.h.b16 %v9685
    %v10951 = vunpack.c.l.b16 %v9686
    %v10952 = vunpack.c.h.b16 %v9686
    %v10953 = vunpack.c.l.b16 %v9687
    %v10954 = vunpack.c.l.b16 %v9688
    %v10955 = vunpack.c.h.b16 %v9688
    %v10956 = vunpack.c.l.b16 %v9689
    %v10957 = vunpack.c.h.b16 %v9689
    %v10958 = vunpack.c.l.b16 %v9690
    %v10959 = vunpack.c.h.b16 %v9690
    %v10960 = vunpack.c.l.b16 %v9691
    %v10961 = vpack.c.b16 %v10184, %v10177
    %v10962 = vpack.c.b16 %v10185, %v10178
    %v10963 = vpack.c.b16 %v10186, %v10179
    %v10964 = vpack.c.b16 %v10187, %v10180
    %v10965 = vpack.c.b16 %v10188, %v10181
    %v10966 = vpack.c.b16 %v10189, %v10182
    %v10967 = vpack.c.b16 %v10190, %v10183
    %v10968 = vpack.c.b16 %v10198, %v10191
    %v10969 = vpack.c.b16 %v10199, %v10192
    %v10970 = vpack.c.b16 %v10200, %v10193
    %v10971 = vpack.c.b16 %v10201, %v10194
    %v10972 = vpack.c.b16 %v10202, %v10195
    %v10973 = vpack.c.b16 %v10203, %v10196
    %v10974 = vpack.c.b16 %v10204, %v10197
    %v10975 = vpack.c.b16 %v10212, %v10205
    %v10976 = vpack.c.b16 %v10213, %v10206
    %v10977 = vpack.c.b16 %v10214, %v10207
    %v10978 = vpack.c.b16 %v10215, %v10208
    %v10979 = vpack.c.b16 %v10216, %v10209
    %v10980 = vpack.c.b16 %v10217, %v10210
    %v10981 = vpack.c.b16 %v10218, %v10211
    %v10982 = vpack.c.b16 %v10226, %v10219
    %v10983 = vpack.c.b16 %v10227, %v10220
    %v10984 = vpack.c.b16 %v10228, %v10221
    %v10985 = vpack.c.b16 %v10229, %v10222
    %v10986 = vpack.c.b16 %v10230, %v10223
    %v10987 = vpack.c.b16 %v10231, %v10224
    %v10988 = vpack.c.b16 %v10232, %v10225
    %v10989 = vpack.c.b16 %v10240, %v10233
    %v10990 = vpack.c.b16 %v10241, %v10234
    %v10991 = vpack.c.b16 %v10242, %v10235
    %v10992 = vpack.c.b16 %v10243, %v10236
    %v10993 = vpack.c.b16 %v10244, %v10237
    %v10994 = vpack.c.b16 %v10245, %v10238
    %v10995 = vpack.c.b16 %v10246, %v10239
    %v10996 = vpack.c.b16 %v10254, %v10247
    %v10997 = vpack.c.b16 %v10255, %v10248
    %v10998 = vpack.c.b16 %v10256, %v10249
    %v10999 = vpack.c.b16 %v10257, %v10250
    %v11000 = vpack.c.b16 %v10258, %v10251
    %v11001 = vpack.c.b16 %v10259, %v10252
    %v11002 = vpack.c.b16 %v10260, %v10253
    %v11003 = vpack.c.b16 %v10268, %v10261
    %v11004 = vpack.c.b16 %v10269, %v10262
    %v11005 = vpack.c.b16 %v10270, %v10263
    %v11006 = vpack.c.b16 %v10271, %v10264
    %v11007 = vpack.c.b16 %v10272, %v10265
    %v11008 = vpack.c.b16 %v10273, %v10266
    %v11009 = vpack.c.b16 %v10274, %v10267
    %v11010 = vpack.c.b16 %v10282, %v10275
    %v11011 = vpack.c.b16 %v10283, %v10276
    %v11012 = vpack.c.b16 %v10284, %v10277
    %v11013 = vpack.c.b16 %v10285, %v10278
    %v11014 = vpack.c.b16 %v10286, %v10279
    %v11015 = vpack.c.b16 %v10287, %v10280
    %v11016 = vpack.c.b16 %v10288, %v10281
    %v11017 = vpack.c.b16 %v10296, %v10289
    %v11018 = vpack.c.b16 %v10297, %v10290
    %v11019 = vpack.c.b16 %v10298, %v10291
    %v11020 = vpack.c.b16 %v10299, %v10292
    %v11021 = vpack.c.b16 %v10300, %v10293
    %v11022 = vpack.c.b16 %v10301, %v10294
    %v11023 = vpack.c.b16 %v10302, %v10295
    %v11024 = vpack.c.b16 %v10310, %v10303
    %v11025 = vpack.c.b16 %v10311, %v10304
    %v11026 = vpack.c.b16 %v10312, %v10305
    %v11027 = vpack.c.b16 %v10313, %v10306
    %v11028 = vpack.c.b16 %v10314, %v10307
    %v11029 = vpack.c.b16 %v10315, %v10308
    %v11030 = vpack.c.b16 %v10316, %v10309
    %v11031 = vpack.c.b16 %v10324, %v10317
    %v11032 = vpack.c.b16 %v10325, %v10318
    %v11033 = vpack.c.b16 %v10326, %v10319
    %v11034 = vpack.c.b16 %v10327, %v10320
    %v11035 = vpack.c.b16 %v10328, %v10321
    %v11036 = vpack.c.b16 %v10329, %v10322
    %v11037 = vpack.c.b16 %v10330, %v10323
    %v11038 = vpack.c.b16 %v10338, %v10331
    %v11039 = vpack.c.b16 %v10339, %v10332
    %v11040 = vpack.c.b16 %v10340, %v10333
    %v11041 = vpack.c.b16 %v10341, %v10334
    %v11042 = vpack.c.b16 %v10342, %v10335
    %v11043 = vpack.c.b16 %v10343, %v10336
    %v11044 = vpack.c.b16 %v10344, %v10337
    %v11045 = vpack.c.b16 %v10352, %v10345
    %v11046 = vpack.c.b16 %v10353, %v10346
    %v11047 = vpack.c.b16 %v10354, %v10347
    %v11048 = vpack.c.b16 %v10355, %v10348
    %v11049 = vpack.c.b16 %v10356, %v10349
    %v11050 = vpack.c.b16 %v10357, %v10350
    %v11051 = vpack.c.b16 %v10358, %v10351
    %v11052 = vpack.c.b16 %v10366, %v10359
    %v11053 = vpack.c.b16 %v10367, %v10360
    %v11054 = vpack.c.b16 %v10368, %v10361
    %v11055 = vpack.c.b16 %v10369, %v10362
    %v11056 = vpack.c.b16 %v10370, %v10363
    %v11057 = vpack.c.b16 %v10371, %v10364
    %v11058 = vpack.c.b16 %v10372, %v10365
    %v11059 = vpack.c.b16 %v10380, %v10373
    %v11060 = vpack.c.b16 %v10381, %v10374
    %v11061 = vpack.c.b16 %v10382, %v10375
    %v11062 = vpack.c.b16 %v10383, %v10376
    %v11063 = vpack.c.b16 %v10384, %v10377
    %v11064 = vpack.c.b16 %v10385, %v10378
    %v11065 = vpack.c.b16 %v10386, %v10379
    %v11066 = vpack.c.b16 %v10394, %v10387
    %v11067 = vpack.c.b16 %v10395, %v10388
    %v11068 = vpack.c.b16 %v10396, %v10389
    %v11069 = vpack.c.b16 %v10397, %v10390
    %v11070 = vpack.c.b16 %v10398, %v10391
    %v11071 = vpack.c.b16 %v10399, %v10392
    %v11072 = vpack.c.b16 %v10400, %v10393
    %v11073 = vpack.c.b16 %v10408, %v10401
    %v11074 = vpack.c.b16 %v10409, %v10402
    %v11075 = vpack.c.b16 %v10410, %v10403
    %v11076 = vpack.c.b16 %v10411, %v10404
    %v11077 = vpack.c.b16 %v10412, %v10405
    %v11078 = vpack.c.b16 %v10413, %v10406
    %v11079 = vpack.c.b16 %v10414, %v10407
    %v11080 = vpack.c.b16 %v10422, %v10415
    %v11081 = vpack.c.b16 %v10423, %v10416
    %v11082 = vpack.c.b16 %v10424, %v10417
    %v11083 = vpack.c.b16 %v10425, %v10418
    %v11084 = vpack.c.b16 %v10426, %v10419
    %v11085 = vpack.c.b16 %v10427, %v10420
    %v11086 = vpack.c.b16 %v10428, %v10421
    %v11087 = vpack.c.b16 %v10436, %v10429
    %v11088 = vpack.c.b16 %v10437, %v10430
    %v11089 = vpack.c.b16 %v10438, %v10431
    %v11090 = vpack.c.b16 %v10439, %v10432
    %v11091 = vpack.c.b16 %v10440, %v10433
    %v11092 = vpack.c.b16 %v10441, %v10434
    %v11093 = vpack.c.b16 %v10442, %v10435
    %v11094 = vpack.c.b16 %v10450, %v10443
    %v11095 = vpack.c.b16 %v10451, %v10444
    %v11096 = vpack.c.b16 %v10452, %v10445
    %v11097 = vpack.c.b16 %v10453, %v10446
    %v11098 = vpack.c.b16 %v10454, %v10447
    %v11099 = vpack.c.b16 %v10455, %v10448
    %v11100 = vpack.c.b16 %v10456, %v10449
    %v11101 = vpack.c.b16 %v10464, %v10457
    %v11102 = vpack.c.b16 %v10465, %v10458
    %v11103 = vpack.c.b16 %v10466, %v10459
    %v11104 = vpack.c.b16 %v10467, %v10460
    %v11105 = vpack.c.b16 %v10468, %v10461
    %v11106 = vpack.c.b16 %v10469, %v10462
    %v11107 = vpack.c.b16 %v10470, %v10463
    %v11108 = vpack.c.b16 %v10478, %v10471
    %v11109 = vpack.c.b16 %v10479, %v10472
    %v11110 = vpack.c.b16 %v10480, %v10473
    %v11111 = vpack.c.b16 %v10481, %v10474
    %v11112 = vpack.c.b16 %v10482, %v10475
    %v11113 = vpack.c.b16 %v10483, %v10476
    %v11114 = vpack.c.b16 %v10484, %v10477
    %v11115 = vpack.c.b16 %v10492, %v10485
    %v11116 = vpack.c.b16 %v10493, %v10486
    %v11117 = vpack.c.b16 %v10494, %v10487
    %v11118 = vpack.c.b16 %v10495, %v10488
    %v11119 = vpack.c.b16 %v10496, %v10489
    %v11120 = vpack.c.b16 %v10497, %v10490
    %v11121 = vpack.c.b16 %v10498, %v10491
    %v11122 = vpack.c.b16 %v10506, %v10499
    %v11123 = vpack.c.b16 %v10507, %v10500
    %v11124 = vpack.c.b16 %v10508, %v10501
    %v11125 = vpack.c.b16 %v10509, %v10502
    %v11126 = vpack.c.b16 %v10510, %v10503
    %v11127 = vpack.c.b16 %v10511, %v10504
    %v11128 = vpack.c.b16 %v10512, %v10505
    %v11129 = vpack.c.b16 %v10520, %v10513
    %v11130 = vpack.c.b16 %v10521, %v10514
    %v11131 = vpack.c.b16 %v10522, %v10515
    %v11132 = vpack.c.b16 %v10523, %v10516
    %v11133 = vpack.c.b16 %v10524, %v10517
    %v11134 = vpack.c.b16 %v10525, %v10518
    %v11135 = vpack.c.b16 %v10526, %v10519
    %v11136 = vpack.c.b16 %v10534, %v10527
    %v11137 = vpack.c.b16 %v10535, %v10528
    %v11138 = vpack.c.b16 %v10536, %v10529
    %v11139 = vpack.c.b16 %v10537, %v10530
    %v11140 = vpack.c.b16 %v10538, %v10531
    %v11141 = vpack.c.b16 %v10539, %v10532
    %v11142 = vpack.c.b16 %v10540, %v10533
    %v11143 = vpack.c.b16 %v10548, %v10541
    %v11144 = vpack.c.b16 %v10549, %v10542
    %v11145 = vpack.c.b16 %v10550, %v10543
    %v11146 = vpack.c.b16 %v10551, %v10544
    %v11147 = vpack.c.b16 %v10552, %v10545
    %v11148 = vpack.c.b16 %v10553, %v10546
    %v11149 = vpack.c.b16 %v10554, %v10547
    %v11150 = vpack.c.b16 %v10562, %v10555
    %v11151 = vpack.c.b16 %v10563, %v10556
    %v11152 = vpack.c.b16 %v10564, %v10557
    %v11153 = vpack.c.b16 %v10565, %v10558
    %v11154 = vpack.c.b16 %v10566, %v10559
    %v11155 = vpack.c.b16 %v10567, %v10560
    %v11156 = vpack.c.b16 %v10568, %v10561
    %v11157 = vpack.c.b16 %v10576, %v10569
    %v11158 = vpack.c.b16 %v10577, %v10570
    %v11159 = vpack.c.b16 %v10578, %v10571
    %v11160 = vpack.c.b16 %v10579, %v10572
    %v11161 = vpack.c.b16 %v10580, %v10573
    %v11162 = vpack.c.b16 %v10581, %v10574
    %v11163 = vpack.c.b16 %v10582, %v10575
    %v11164 = vpack.c.b16 %v10590, %v10583
    %v11165 = vpack.c.b16 %v10591, %v10584
    %v11166 = vpack.c.b16 %v10592, %v10585
    %v11167 = vpack.c.b16 %v10593, %v10586
    %v11168 = vpack.c.b16 %v10594, %v10587
    %v11169 = vpack.c.b16 %v10595, %v10588
    %v11170 = vpack.c.b16 %v10596, %v10589
    %v11171 = vpack.c.b16 %v10604, %v10597
    %v11172 = vpack.c.b16 %v10605, %v10598
    %v11173 = vpack.c.b16 %v10606, %v10599
    %v11174 = vpack.c.b16 %v10607, %v10600
    %v11175 = vpack.c.b16 %v10608, %v10601
    %v11176 = vpack.c.b16 %v10609, %v10602
    %v11177 = vpack.c.b16 %v10610, %v10603
    %v11178 = vpack.c.b16 %v10618, %v10611
    %v11179 = vpack.c.b16 %v10619, %v10612
    %v11180 = vpack.c.b16 %v10620, %v10613
    %v11181 = vpack.c.b16 %v10621, %v10614
    %v11182 = vpack.c.b16 %v10622, %v10615
    %v11183 = vpack.c.b16 %v10623, %v10616
    %v11184 = vpack.c.b16 %v10624, %v10617
    %v11185 = vpack.c.b16 %v10632, %v10625
    %v11186 = vpack.c.b16 %v10633, %v10626
    %v11187 = vpack.c.b16 %v10634, %v10627
    %v11188 = vpack.c.b16 %v10635, %v10628
    %v11189 = vpack.c.b16 %v10636, %v10629
    %v11190 = vpack.c.b16 %v10637, %v10630
    %v11191 = vpack.c.b16 %v10638, %v10631
    %v11192 = vpack.c.b16 %v10646, %v10639
    %v11193 = vpack.c.b16 %v10647, %v10640
    %v11194 = vpack.c.b16 %v10648, %v10641
    %v11195 = vpack.c.b16 %v10649, %v10642
    %v11196 = vpack.c.b16 %v10650, %v10643
    %v11197 = vpack.c.b16 %v10651, %v10644
    %v11198 = vpack.c.b16 %v10652, %v10645
    %v11199 = vpack.c.b16 %v10660, %v10653
    %v11200 = vpack.c.b16 %v10661, %v10654
    %v11201 = vpack.c.b16 %v10662, %v10655
    %v11202 = vpack.c.b16 %v10663, %v10656
    %v11203 = vpack.c.b16 %v10664, %v10657
    %v11204 = vpack.c.b16 %v10665, %v10658
    %v11205 = vpack.c.b16 %v10666, %v10659
    %v11206 = vpack.c.b16 %v10674, %v10667
    %v11207 = vpack.c.b16 %v10675, %v10668
    %v11208 = vpack.c.b16 %v10676, %v10669
    %v11209 = vpack.c.b16 %v10677, %v10670
    %v11210 = vpack.c.b16 %v10678, %v10671
    %v11211 = vpack.c.b16 %v10679, %v10672
    %v11212 = vpack.c.b16 %v10680, %v10673
    %v11213 = vpack.c.b16 %v10688, %v10681
    %v11214 = vpack.c.b16 %v10689, %v10682
    %v11215 = vpack.c.b16 %v10690, %v10683
    %v11216 = vpack.c.b16 %v10691, %v10684
    %v11217 = vpack.c.b16 %v10692, %v10685
    %v11218 = vpack.c.b16 %v10693, %v10686
    %v11219 = vpack.c.b16 %v10694, %v10687
    %v11220 = vpack.c.b16 %v10702, %v10695
    %v11221 = vpack.c.b16 %v10703, %v10696
    %v11222 = vpack.c.b16 %v10704, %v10697
    %v11223 = vpack.c.b16 %v10705, %v10698
    %v11224 = vpack.c.b16 %v10706, %v10699
    %v11225 = vpack.c.b16 %v10707, %v10700
    %v11226 = vpack.c.b16 %v10708, %v10701
    %v11227 = vpack.c.b16 %v10716, %v10709
    %v11228 = vpack.c.b16 %v10717, %v10710
    %v11229 = vpack.c.b16 %v10718, %v10711
    %v11230 = vpack.c.b16 %v10719, %v10712
    %v11231 = vpack.c.b16 %v10720, %v10713
    %v11232 = vpack.c.b16 %v10721, %v10714
    %v11233 = vpack.c.b16 %v10722, %v10715
    %v11234 = vpack.c.b16 %v10730, %v10723
    %v11235 = vpack.c.b16 %v10731, %v10724
    %v11236 = vpack.c.b16 %v10732, %v10725
    %v11237 = vpack.c.b16 %v10733, %v10726
    %v11238 = vpack.c.b16 %v10734, %v10727
    %v11239 = vpack.c.b16 %v10735, %v10728
    %v11240 = vpack.c.b16 %v10736, %v10729
    %v11241 = vpack.c.b16 %v10744, %v10737
    %v11242 = vpack.c.b16 %v10745, %v10738
    %v11243 = vpack.c.b16 %v10746, %v10739
    %v11244 = vpack.c.b16 %v10747, %v10740
    %v11245 = vpack.c.b16 %v10748, %v10741
    %v11246 = vpack.c.b16 %v10749, %v10742
    %v11247 = vpack.c.b16 %v10750, %v10743
    %v11248 = vpack.c.b16 %v10758, %v10751
    %v11249 = vpack.c.b16 %v10759, %v10752
    %v11250 = vpack.c.b16 %v10760, %v10753
    %v11251 = vpack.c.b16 %v10761, %v10754
    %v11252 = vpack.c.b16 %v10762, %v10755
    %v11253 = vpack.c.b16 %v10763, %v10756
    %v11254 = vpack.c.b16 %v10764, %v10757
    %v11255 = vpack.c.b16 %v10772, %v10765
    %v11256 = vpack.c.b16 %v10773, %v10766
    %v11257 = vpack.c.b16 %v10774, %v10767
    %v11258 = vpack.c.b16 %v10775, %v10768
    %v11259 = vpack.c.b16 %v10776, %v10769
    %v11260 = vpack.c.b16 %v10777, %v10770
    %v11261 = vpack.c.b16 %v10778, %v10771
    %v11262 = vpack.c.b16 %v10786, %v10779
    %v11263 = vpack.c.b16 %v10787, %v10780
    %v11264 = vpack.c.b16 %v10788, %v10781
    %v11265 = vpack.c.b16 %v10789, %v10782
    %v11266 = vpack.c.b16 %v10790, %v10783
    %v11267 = vpack.c.b16 %v10791, %v10784
    %v11268 = vpack.c.b16 %v10792, %v10785
    %v11269 = vpack.c.b16 %v10800, %v10793
    %v11270 = vpack.c.b16 %v10801, %v10794
    %v11271 = vpack.c.b16 %v10802, %v10795
    %v11272 = vpack.c.b16 %v10803, %v10796
    %v11273 = vpack.c.b16 %v10804, %v10797
    %v11274 = vpack.c.b16 %v10805, %v10798
    %v11275 = vpack.c.b16 %v10806, %v10799
    %v11276 = vpack.c.b16 %v10814, %v10807
    %v11277 = vpack.c.b16 %v10815, %v10808
    %v11278 = vpack.c.b16 %v10816, %v10809
    %v11279 = vpack.c.b16 %v10817, %v10810
    %v11280 = vpack.c.b16 %v10818, %v10811
    %v11281 = vpack.c.b16 %v10819, %v10812
    %v11282 = vpack.c.b16 %v10820, %v10813
    %v11283 = vpack.c.b16 %v10828, %v10821
    %v11284 = vpack.c.b16 %v10829, %v10822
    %v11285 = vpack.c.b16 %v10830, %v10823
    %v11286 = vpack.c.b16 %v10831, %v10824
    %v11287 = vpack.c.b16 %v10832, %v10825
    %v11288 = vpack.c.b16 %v10833, %v10826
    %v11289 = vpack.c.b16 %v10834, %v10827
    %v11290 = vpack.c.b16 %v10842, %v10835
    %v11291 = vpack.c.b16 %v10843, %v10836
    %v11292 = vpack.c.b16 %v10844, %v10837
    %v11293 = vpack.c.b16 %v10845, %v10838
    %v11294 = vpack.c.b16 %v10846, %v10839
    %v11295 = vpack.c.b16 %v10847, %v10840
    %v11296 = vpack.c.b16 %v10848, %v10841
    %v11297 = vpack.c.b16 %v10856, %v10849
    %v11298 = vpack.c.b16 %v10857, %v10850
    %v11299 = vpack.c.b16 %v10858, %v10851
    %v11300 = vpack.c.b16 %v10859, %v10852
    %v11301 = vpack.c.b16 %v10860, %v10853
    %v11302 = vpack.c.b16 %v10861, %v10854
    %v11303 = vpack.c.b16 %v10862, %v10855
    %v11304 = vpack.c.b16 %v10870, %v10863
    %v11305 = vpack.c.b16 %v10871, %v10864
    %v11306 = vpack.c.b16 %v10872, %v10865
    %v11307 = vpack.c.b16 %v10873, %v10866
    %v11308 = vpack.c.b16 %v10874, %v10867
    %v11309 = vpack.c.b16 %v10875, %v10868
    %v11310 = vpack.c.b16 %v10876, %v10869
    %v11311 = vpack.c.b16 %v10884, %v10877
    %v11312 = vpack.c.b16 %v10885, %v10878
    %v11313 = vpack.c.b16 %v10886, %v10879
    %v11314 = vpack.c.b16 %v10887, %v10880
    %v11315 = vpack.c.b16 %v10888, %v10881
    %v11316 = vpack.c.b16 %v10889, %v10882
    %v11317 = vpack.c.b16 %v10890, %v10883
    %v11318 = vpack.c.b16 %v10898, %v10891
    %v11319 = vpack.c.b16 %v10899, %v10892
    %v11320 = vpack.c.b16 %v10900, %v10893
    %v11321 = vpack.c.b16 %v10901, %v10894
    %v11322 = vpack.c.b16 %v10902, %v10895
    %v11323 = vpack.c.b16 %v10903, %v10896
    %v11324 = vpack.c.b16 %v10904, %v10897
    %v11325 = vpack.c.b16 %v10912, %v10905
    %v11326 = vpack.c.b16 %v10913, %v10906
    %v11327 = vpack.c.b16 %v10914, %v10907
    %v11328 = vpack.c.b16 %v10915, %v10908
    %v11329 = vpack.c.b16 %v10916, %v10909
    %v11330 = vpack.c.b16 %v10917, %v10910
    %v11331 = vpack.c.b16 %v10918, %v10911
    %v11332 = vpack.c.b16 %v10926, %v10919
    %v11333 = vpack.c.b16 %v10927, %v10920
    %v11334 = vpack.c.b16 %v10928, %v10921
    %v11335 = vpack.c.b16 %v10929, %v10922
    %v11336 = vpack.c.b16 %v10930, %v10923
    %v11337 = vpack.c.b16 %v10931, %v10924
    %v11338 = vpack.c.b16 %v10932, %v10925
    %v11339 = vpack.c.b16 %v10940, %v10933
    %v11340 = vpack.c.b16 %v10941, %v10934
    %v11341 = vpack.c.b16 %v10942, %v10935
    %v11342 = vpack.c.b16 %v10943, %v10936
    %v11343 = vpack.c.b16 %v10944, %v10937
    %v11344 = vpack.c.b16 %v10945, %v10938
    %v11345 = vpack.c.b16 %v10946, %v10939
    %v11346 = vpack.c.b16 %v10954, %v10947
    %v11347 = vpack.c.b16 %v10955, %v10948
    %v11348 = vpack.c.b16 %v10956, %v10949
    %v11349 = vpack.c.b16 %v10957, %v10950
    %v11350 = vpack.c.b16 %v10958, %v10951
    %v11351 = vpack.c.b16 %v10959, %v10952
    %v11352 = vpack.c.b16 %v10960, %v10953
    %11745 = vmatprep.subr.bf16.mxu0 %v10962
    %11746 = vmatpush1.bf16.msra.mxu0 %v10961
    %11747 = vmatprep.subr.bf16.mxu0 %v10969
    %11748 = vmatpush1.bf16.msra.mxu0 %v10968
    %11749 = vmatprep.subr.bf16.mxu0 %v10976
    %11750 = vmatpush1.bf16.msra.mxu0 %v10975
    %11751 = vmatprep.subr.bf16.mxu0 %v10983
    %11752 = vmatpush1.bf16.msra.mxu0 %v10982
    %11753 = vmatprep.subr.bf16.mxu0 %v10990
    %11754 = vmatpush1.bf16.msra.mxu0 %v10989
    %11755 = vmatprep.subr.bf16.mxu0 %v10997
    %11756 = vmatpush1.bf16.msra.mxu0 %v10996
    %11757 = vmatprep.subr.bf16.mxu0 %v11004
    %11758 = vmatpush1.bf16.msra.mxu0 %v11003
    %11759 = vmatprep.subr.bf16.mxu0 %v11011
    %11760 = vmatpush1.bf16.msra.mxu0 %v11010
    %11761 = vmatprep.subr.bf16.mxu0 %v11018
    %11762 = vmatpush1.bf16.msra.mxu0 %v11017
    %11763 = vmatprep.subr.bf16.mxu0 %v11025
    %11764 = vmatpush1.bf16.msra.mxu0 %v11024
    %11765 = vmatprep.subr.bf16.mxu0 %v11032
    %11766 = vmatpush1.bf16.msra.mxu0 %v11031
    %11767 = vmatprep.subr.bf16.mxu0 %v11039
    %11768 = vmatpush1.bf16.msra.mxu0 %v11038
    %11769 = vmatprep.subr.bf16.mxu0 %v11046
    %11770 = vmatpush1.bf16.msra.mxu0 %v11045
    %11771 = vmatprep.subr.bf16.mxu0 %v11053
    %11772 = vmatpush1.bf16.msra.mxu0 %v11052
    %11773 = vmatprep.subr.bf16.mxu0 %v11060
    %11774 = vmatpush1.bf16.msra.mxu0 %v11059
    %11775 = vmatprep.subr.bf16.mxu0 %v11067
    %11776 = vmatpush1.bf16.msra.mxu0 %v11066
    %11777 = vmatprep.mubr.bf16.mxu0 %v9238
    %11778 = vmatmul.mubr.bf16.gmra.mrb[0].mxu0 %v9237
    %v11779 = vpop.f32.mrb[0].mxu0
    %v11780 = vadd.f32 %v9697, %v11779
    %v11781 = vpop.f32.mrb[0].mxu0
    %v11782 = vadd.f32 %v9701, %v11781
    %v11783 = vpop.f32.mrb[0].mxu0
    %v11784 = vpop.f32.mrb[0].mxu0
    %11785 = vdwg.mxu0
    %11786 = vmatprep.subr.bf16.mxu0 %v11074
    %11787 = vmatpush1.bf16.msra.mxu0 %v11073
    %11788 = vmatprep.subr.bf16.mxu0 %v11081
    %11789 = vmatpush1.bf16.msra.mxu0 %v11080
    %11790 = vmatprep.subr.bf16.mxu0 %v11088
    %11791 = vmatpush1.bf16.msra.mxu0 %v11087
    %11792 = vmatprep.subr.bf16.mxu0 %v11095
    %11793 = vmatpush1.bf16.msra.mxu0 %v11094
    %11794 = vmatprep.subr.bf16.mxu0 %v11102
    %11795 = vmatpush1.bf16.msra.mxu0 %v11101
    %11796 = vmatprep.subr.bf16.mxu0 %v11109
    %11797 = vmatpush1.bf16.msra.mxu0 %v11108
    %11798 = vmatprep.subr.bf16.mxu0 %v11116
    %11799 = vmatpush1.bf16.msra.mxu0 %v11115
    %11800 = vmatprep.subr.bf16.mxu0 %v11123
    %11801 = vmatpush1.bf16.msra.mxu0 %v11122
    %11802 = vmatprep.subr.bf16.mxu0 %v11130
    %11803 = vmatpush1.bf16.msra.mxu0 %v11129
    %11804 = vmatprep.subr.bf16.mxu0 %v11137
    %11805 = vmatpush1.bf16.msra.mxu0 %v11136
    %11806 = vmatprep.subr.bf16.mxu0 %v11144
    %11807 = vmatpush1.bf16.msra.mxu0 %v11143
    %11808 = vmatprep.subr.bf16.mxu0 %v11151
    %11809 = vmatpush1.bf16.msra.mxu0 %v11150
    %11810 = vmatprep.subr.bf16.mxu0 %v11158
    %11811 = vmatpush1.bf16.msra.mxu0 %v11157
    %11812 = vmatprep.subr.bf16.mxu0 %v11165
    %11813 = vmatpush1.bf16.msra.mxu0 %v11164
    %11814 = vmatprep.subr.bf16.mxu0 %v11172
    %11815 = vmatpush1.bf16.msra.mxu0 %v11171
    %11816 = vmatprep.subr.bf16.mxu0 %v11179
    %11817 = vmatpush1.bf16.msra.mxu0 %v11178
    %11818 = vmatprep.mubr.bf16.mxu0 %v9240
    %11819 = vmatmul.mubr.bf16.gmra.mrb[0].mxu0 %v9239
    %v11820 = vpop.f32.mrb[0].mxu0
    %v11821 = vadd.f32 %v11780, %v11820
    %v11822 = vpop.f32.mrb[0].mxu0
    %v11823 = vadd.f32 %v11782, %v11822
    %v11824 = vpop.f32.mrb[0].mxu0
    %v11825 = vpop.f32.mrb[0].mxu0
    %11826 = vdwg.mxu0
    %11827 = vmatprep.subr.bf16.mxu0 %v11186
    %11828 = vmatpush1.bf16.msra.mxu0 %v11185
    %11829 = vmatprep.subr.bf16.mxu0 %v11193
    %11830 = vmatpush1.bf16.msra.mxu0 %v11192
    %11831 = vmatprep.subr.bf16.mxu0 %v11200
    %11832 = vmatpush1.bf16.msra.mxu0 %v11199
    %11833 = vmatprep.subr.bf16.mxu0 %v11207
    %11834 = vmatpush1.bf16.msra.mxu0 %v11206
    %11835 = vmatprep.subr.bf16.mxu0 %v11214
    %11836 = vmatpush1.bf16.msra.mxu0 %v11213
    %11837 = vmatprep.subr.bf16.mxu0 %v11221
    %11838 = vmatpush1.bf16.msra.mxu0 %v11220
    %11839 = vmatprep.subr.bf16.mxu0 %v11228
    %11840 = vmatpush1.bf16.msra.mxu0 %v11227
    %11841 = vmatprep.subr.bf16.mxu0 %v11235
    %11842 = vmatpush1.bf16.msra.mxu0 %v11234
    %11843 = vmatprep.subr.bf16.mxu0 %v11242
    %11844 = vmatpush1.bf16.msra.mxu0 %v11241
    %11845 = vmatprep.subr.bf16.mxu0 %v11249
    %11846 = vmatpush1.bf16.msra.mxu0 %v11248
    %11847 = vmatprep.subr.bf16.mxu0 %v11256
    %11848 = vmatpush1.bf16.msra.mxu0 %v11255
    %11849 = vmatprep.subr.bf16.mxu0 %v11263
    %11850 = vmatpush1.bf16.msra.mxu0 %v11262
    %11851 = vmatprep.subr.bf16.mxu0 %v11270
    %11852 = vmatpush1.bf16.msra.mxu0 %v11269
    %11853 = vmatprep.subr.bf16.mxu0 %v11277
    %11854 = vmatpush1.bf16.msra.mxu0 %v11276
    %11855 = vmatprep.subr.bf16.mxu0 %v11284
    %11856 = vmatpush1.bf16.msra.mxu0 %v11283
    %11857 = vmatprep.subr.bf16.mxu0 %v11291
    %11858 = vmatpush1.bf16.msra.mxu0 %v11290
    %11859 = vmatprep.mubr.bf16.mxu0 %v9242
    %11860 = vmatmul.mubr.bf16.gmra.mrb[0].mxu0 %v9241
    %v11861 = vpop.f32.mrb[0].mxu0
    %v11862 = vadd.f32 %v11821, %v11861
    %v11863 = vpop.f32.mrb[0].mxu0
    %v11864 = vadd.f32 %v11823, %v11863
    %v11865 = vpop.f32.mrb[0].mxu0
    %v11866 = vpop.f32.mrb[0].mxu0
    %11867 = vdwg.mxu0
    %11868 = vmatprep.subr.bf16.mxu0 %v11298
    %11869 = vmatpush1.bf16.msra.mxu0 %v11297
    %11870 = vmatprep.subr.bf16.mxu0 %v11305
    %11871 = vmatpush1.bf16.msra.mxu0 %v11304
    %11872 = vmatprep.subr.bf16.mxu0 %v11312
    %11873 = vmatpush1.bf16.msra.mxu0 %v11311
    %11874 = vmatprep.subr.bf16.mxu0 %v11319
    %11875 = vmatpush1.bf16.msra.mxu0 %v11318
    %11876 = vmatprep.subr.bf16.mxu0 %v11326
    %11877 = vmatpush1.bf16.msra.mxu0 %v11325
    %11878 = vmatprep.subr.bf16.mxu0 %v11333
    %11879 = vmatpush1.bf16.msra.mxu0 %v11332
    %11880 = vmatprep.subr.bf16.mxu0 %v11340
    %11881 = vmatpush1.bf16.msra.mxu0 %v11339
    %11882 = vmatprep.subr.bf16.mxu0 %v11347
    %11883 = vmatpush1.bf16.msra.mxu0 %v11346
    %11884 = vmatprep.subr.bf16.mxu0 0
    %11885 = vmatpush1.bf16.msra.mxu0 0
    %11886 = vmatprep.subr.bf16.mxu0 0
    %11887 = vmatpush1.bf16.msra.mxu0 0
    %11888 = vmatprep.subr.bf16.mxu0 0
    %11889 = vmatpush1.bf16.msra.mxu0 0
    %11890 = vmatprep.subr.bf16.mxu0 0
    %11891 = vmatpush1.bf16.msra.mxu0 0
    %11892 = vmatprep.subr.bf16.mxu0 0
    %11893 = vmatpush1.bf16.msra.mxu0 0
    %11894 = vmatprep.subr.bf16.mxu0 0
    %11895 = vmatpush1.bf16.msra.mxu0 0
    %11896 = vmatprep.subr.bf16.mxu0 0
    %11897 = vmatpush1.bf16.msra.mxu0 0
    %11898 = vmatprep.subr.bf16.mxu0 0
    %11899 = vmatpush1.bf16.msra.mxu0 0
    %11900 = vmatprep.mubr.bf16.mxu0 0
    %11901 = vmatmul.mubr.bf16.gmra.mrb[0].mxu0 %v9243
    %v11902 = vpop.f32.mrb[0].mxu0
    %v11903 = vadd.f32 %v11862, %v11902
    %v11904 = vpop.f32.mrb[0].mxu0
    %v11905 = vadd.f32 %v11864, %v11904
    %v11906 = vpop.f32.mrb[0].mxu0
    %v11907 = vpop.f32.mrb[0].mxu0
    %11908 = vdwg.mxu0
    %11909 = vmatprep.subr.bf16.mxu0 %v10964
    %11910 = vmatpush1.bf16.msra.mxu0 %v10963
    %11911 = vmatprep.subr.bf16.mxu0 %v10971
    %11912 = vmatpush1.bf16.msra.mxu0 %v10970
    %11913 = vmatprep.subr.bf16.mxu0 %v10978
    %11914 = vmatpush1.bf16.msra.mxu0 %v10977
    %11915 = vmatprep.subr.bf16.mxu0 %v10985
    %11916 = vmatpush1.bf16.msra.mxu0 %v10984
    %11917 = vmatprep.subr.bf16.mxu0 %v10992
    %11918 = vmatpush1.bf16.msra.mxu0 %v10991
    %11919 = vmatprep.subr.bf16.mxu0 %v10999
    %11920 = vmatpush1.bf16.msra.mxu0 %v10998
    %11921 = vmatprep.subr.bf16.mxu0 %v11006
    %11922 = vmatpush1.bf16.msra.mxu0 %v11005
    %11923 = vmatprep.subr.bf16.mxu0 %v11013
    %11924 = vmatpush1.bf16.msra.mxu0 %v11012
    %11925 = vmatprep.subr.bf16.mxu0 %v11020
    %11926 = vmatpush1.bf16.msra.mxu0 %v11019
    %11927 = vmatprep.subr.bf16.mxu0 %v11027
    %11928 = vmatpush1.bf16.msra.mxu0 %v11026
    %11929 = vmatprep.subr.bf16.mxu0 %v11034
    %11930 = vmatpush1.bf16.msra.mxu0 %v11033
    %11931 = vmatprep.subr.bf16.mxu0 %v11041
    %11932 = vmatpush1.bf16.msra.mxu0 %v11040
    %11933 = vmatprep.subr.bf16.mxu0 %v11048
    %11934 = vmatpush1.bf16.msra.mxu0 %v11047
    %11935 = vmatprep.subr.bf16.mxu0 %v11055
    %11936 = vmatpush1.bf16.msra.mxu0 %v11054
    %11937 = vmatprep.subr.bf16.mxu0 %v11062
    %11938 = vmatpush1.bf16.msra.mxu0 %v11061
    %11939 = vmatprep.subr.bf16.mxu0 %v11069
    %11940 = vmatpush1.bf16.msra.mxu0 %v11068
    %11941 = vmatprep.mubr.bf16.mxu0 %v9238
    %11942 = vmatmul.mubr.bf16.gmra.mrb[0].mxu0 %v9237
    %v11943 = vpop.f32.mrb[0].mxu0
    %v11944 = vadd.f32 %v9705, %v11943
    %v11945 = vpop.f32.mrb[0].mxu0
    %v11946 = vadd.f32 %v9709, %v11945
    %v11947 = vpop.f32.mrb[0].mxu0
    %v11948 = vpop.f32.mrb[0].mxu0
    %11949 = vdwg.mxu0
    %11950 = vmatprep.subr.bf16.mxu0 %v11076
    %11951 = vmatpush1.bf16.msra.mxu0 %v11075
    %11952 = vmatprep.subr.bf16.mxu0 %v11083
    %11953 = vmatpush1.bf16.msra.mxu0 %v11082
    %11954 = vmatprep.subr.bf16.mxu0 %v11090
    %11955 = vmatpush1.bf16.msra.mxu0 %v11089
    %11956 = vmatprep.subr.bf16.mxu0 %v11097
    %11957 = vmatpush1.bf16.msra.mxu0 %v11096
    %11958 = vmatprep.subr.bf16.mxu0 %v11104
    %11959 = vmatpush1.bf16.msra.mxu0 %v11103
    %11960 = vmatprep.subr.bf16.mxu0 %v11111
    %11961 = vmatpush1.bf16.msra.mxu0 %v11110
    %11962 = vmatprep.subr.bf16.mxu0 %v11118
    %11963 = vmatpush1.bf16.msra.mxu0 %v11117
    %11964 = vmatprep.subr.bf16.mxu0 %v11125
    %11965 = vmatpush1.bf16.msra.mxu0 %v11124
    %11966 = vmatprep.subr.bf16.mxu0 %v11132
    %11967 = vmatpush1.bf16.msra.mxu0 %v11131
    %11968 = vmatprep.subr.bf16.mxu0 %v11139
    %11969 = vmatpush1.bf16.msra.mxu0 %v11138
    %11970 = vmatprep.subr.bf16.mxu0 %v11146
    %11971 = vmatpush1.bf16.msra.mxu0 %v11145
    %11972 = vmatprep.subr.bf16.mxu0 %v11153
    %11973 = vmatpush1.bf16.msra.mxu0 %v11152
    %11974 = vmatprep.subr.bf16.mxu0 %v11160
    %11975 = vmatpush1.bf16.msra.mxu0 %v11159
    %11976 = vmatprep.subr.bf16.mxu0 %v11167
    %11977 = vmatpush1.bf16.msra.mxu0 %v11166
    %11978 = vmatprep.subr.bf16.mxu0 %v11174
    %11979 = vmatpush1.bf16.msra.mxu0 %v11173
    %11980 = vmatprep.subr.bf16.mxu0 %v11181
    %11981 = vmatpush1.bf16.msra.mxu0 %v11180
    %11982 = vmatprep.mubr.bf16.mxu0 %v9240
    %11983 = vmatmul.mubr.bf16.gmra.mrb[0].mxu0 %v9239
    %v11984 = vpop.f32.mrb[0].mxu0
    %v11985 = vadd.f32 %v11944, %v11984
    %v11986 = vpop.f32.mrb[0].mxu0
    %v11987 = vadd.f32 %v11946, %v11986
    %v11988 = vpop.f32.mrb[0].mxu0
    %v11989 = vpop.f32.mrb[0].mxu0
    %11990 = vdwg.mxu0
    %11991 = vmatprep.subr.bf16.mxu0 %v11188
    %11992 = vmatpush1.bf16.msra.mxu0 %v11187
    %11993 = vmatprep.subr.bf16.mxu0 %v11195
    %11994 = vmatpush1.bf16.msra.mxu0 %v11194
    %11995 = vmatprep.subr.bf16.mxu0 %v11202
    %11996 = vmatpush1.bf16.msra.mxu0 %v11201
    %11997 = vmatprep.subr.bf16.mxu0 %v11209
    %11998 = vmatpush1.bf16.msra.mxu0 %v11208
    %11999 = vmatprep.subr.bf16.mxu0 %v11216
    %12000 = vmatpush1.bf16.msra.mxu0 %v11215
    %12001 = vmatprep.subr.bf16.mxu0 %v11223
    %12002 = vmatpush1.bf16.msra.mxu0 %v11222
    %12003 = vmatprep.subr.bf16.mxu0 %v11230
    %12004 = vmatpush1.bf16.msra.mxu0 %v11229
    %12005 = vmatprep.subr.bf16.mxu0 %v11237
    %12006 = vmatpush1.bf16.msra.mxu0 %v11236
    %12007 = vmatprep.subr.bf16.mxu0 %v11244
    %12008 = vmatpush1.bf16.msra.mxu0 %v11243
    %12009 = vmatprep.subr.bf16.mxu0 %v11251
    %12010 = vmatpush1.bf16.msra.mxu0 %v11250
    %12011 = vmatprep.subr.bf16.mxu0 %v11258
    %12012 = vmatpush1.bf16.msra.mxu0 %v11257
    %12013 = vmatprep.subr.bf16.mxu0 %v11265
    %12014 = vmatpush1.bf16.msra.mxu0 %v11264
    %12015 = vmatprep.subr.bf16.mxu0 %v11272
    %12016 = vmatpush1.bf16.msra.mxu0 %v11271
    %12017 = vmatprep.subr.bf16.mxu0 %v11279
    %12018 = vmatpush1.bf16.msra.mxu0 %v11278
    %12019 = vmatprep.subr.bf16.mxu0 %v11286
    %12020 = vmatpush1.bf16.msra.mxu0 %v11285
    %12021 = vmatprep.subr.bf16.mxu0 %v11293
    %12022 = vmatpush1.bf16.msra.mxu0 %v11292
    %12023 = vmatprep.mubr.bf16.mxu0 %v9242
    %12024 = vmatmul.mubr.bf16.gmra.mrb[0].mxu0 %v9241
    %v12025 = vpop.f32.mrb[0].mxu0
    %v12026 = vadd.f32 %v11985, %v12025
    %v12027 = vpop.f32.mrb[0].mxu0
    %v12028 = vadd.f32 %v11987, %v12027
    %v12029 = vpop.f32.mrb[0].mxu0
    %v12030 = vpop.f32.mrb[0].mxu0
    %12031 = vdwg.mxu0
    %12032 = vmatprep.subr.bf16.mxu0 %v11300
    %12033 = vmatpush1.bf16.msra.mxu0 %v11299
    %12034 = vmatprep.subr.bf16.mxu0 %v11307
    %12035 = vmatpush1.bf16.msra.mxu0 %v11306
    %12036 = vmatprep.subr.bf16.mxu0 %v11314
    %12037 = vmatpush1.bf16.msra.mxu0 %v11313
    %12038 = vmatprep.subr.bf16.mxu0 %v11321
    %12039 = vmatpush1.bf16.msra.mxu0 %v11320
    %12040 = vmatprep.subr.bf16.mxu0 %v11328
    %12041 = vmatpush1.bf16.msra.mxu0 %v11327
    %12042 = vmatprep.subr.bf16.mxu0 %v11335
    %12043 = vmatpush1.bf16.msra.mxu0 %v11334
    %12044 = vmatprep.subr.bf16.mxu0 %v11342
    %12045 = vmatpush1.bf16.msra.mxu0 %v11341
    %12046 = vmatprep.subr.bf16.mxu0 %v11349
    %12047 = vmatpush1.bf16.msra.mxu0 %v11348
    %12048 = vmatprep.subr.bf16.mxu0 0
    %12049 = vmatpush1.bf16.msra.mxu0 0
    %12050 = vmatprep.subr.bf16.mxu0 0
    %12051 = vmatpush1.bf16.msra.mxu0 0
    %12052 = vmatprep.subr.bf16.mxu0 0
    %12053 = vmatpush1.bf16.msra.mxu0 0
    %12054 = vmatprep.subr.bf16.mxu0 0
    %12055 = vmatpush1.bf16.msra.mxu0 0
    %12056 = vmatprep.subr.bf16.mxu0 0
    %12057 = vmatpush1.bf16.msra.mxu0 0
    %12058 = vmatprep.subr.bf16.mxu0 0
    %12059 = vmatpush1.bf16.msra.mxu0 0
    %12060 = vmatprep.subr.bf16.mxu0 0
    %12061 = vmatpush1.bf16.msra.mxu0 0
    %12062 = vmatprep.subr.bf16.mxu0 0
    %12063 = vmatpush1.bf16.msra.mxu0 0
    %12064 = vmatprep.mubr.bf16.mxu0 0
    %12065 = vmatmul.mubr.bf16.gmra.mrb[0].mxu0 %v9243
    %v12066 = vpop.f32.mrb[0].mxu0
    %v12067 = vadd.f32 %v12026, %v12066
    %v12068 = vpop.f32.mrb[0].mxu0
    %v12069 = vadd.f32 %v12028, %v12068
    %v12070 = vpop.f32.mrb[0].mxu0
    %v12071 = vpop.f32.mrb[0].mxu0
    %12072 = vdwg.mxu0
    %12073 = vmatprep.subr.bf16.mxu0 %v10966
    %12074 = vmatpush1.bf16.msra.mxu0 %v10965
    %12075 = vmatprep.subr.bf16.mxu0 %v10973
    %12076 = vmatpush1.bf16.msra.mxu0 %v10972
    %12077 = vmatprep.subr.bf16.mxu0 %v10980
    %12078 = vmatpush1.bf16.msra.mxu0 %v10979
    %12079 = vmatprep.subr.bf16.mxu0 %v10987
    %12080 = vmatpush1.bf16.msra.mxu0 %v10986
    %12081 = vmatprep.subr.bf16.mxu0 %v10994
    %12082 = vmatpush1.bf16.msra.mxu0 %v10993
    %12083 = vmatprep.subr.bf16.mxu0 %v11001
    %12084 = vmatpush1.bf16.msra.mxu0 %v11000
    %12085 = vmatprep.subr.bf16.mxu0 %v11008
    %12086 = vmatpush1.bf16.msra.mxu0 %v11007
    %12087 = vmatprep.subr.bf16.mxu0 %v11015
    %12088 = vmatpush1.bf16.msra.mxu0 %v11014
    %12089 = vmatprep.subr.bf16.mxu0 %v11022
    %12090 = vmatpush1.bf16.msra.mxu0 %v11021
    %12091 = vmatprep.subr.bf16.mxu0 %v11029
    %12092 = vmatpush1.bf16.msra.mxu0 %v11028
    %12093 = vmatprep.subr.bf16.mxu0 %v11036
    %12094 = vmatpush1.bf16.msra.mxu0 %v11035
    %12095 = vmatprep.subr.bf16.mxu0 %v11043
    %12096 = vmatpush1.bf16.msra.mxu0 %v11042
    %12097 = vmatprep.subr.bf16.mxu0 %v11050
    %12098 = vmatpush1.bf16.msra.mxu0 %v11049
    %12099 = vmatprep.subr.bf16.mxu0 %v11057
    %12100 = vmatpush1.bf16.msra.mxu0 %v11056
    %12101 = vmatprep.subr.bf16.mxu0 %v11064
    %12102 = vmatpush1.bf16.msra.mxu0 %v11063
    %12103 = vmatprep.subr.bf16.mxu0 %v11071
    %12104 = vmatpush1.bf16.msra.mxu0 %v11070
    %12105 = vmatprep.mubr.bf16.mxu0 %v9238
    %12106 = vmatmul.mubr.bf16.gmra.mrb[0].mxu0 %v9237
    %v12107 = vpop.f32.mrb[0].mxu0
    %v12108 = vadd.f32 %v9713, %v12107
    %v12109 = vpop.f32.mrb[0].mxu0
    %v12110 = vadd.f32 %v9717, %v12109
    %v12111 = vpop.f32.mrb[0].mxu0
    %v12112 = vpop.f32.mrb[0].mxu0
    %12113 = vdwg.mxu0
    %12114 = vmatprep.subr.bf16.mxu0 %v11078
    %12115 = vmatpush1.bf16.msra.mxu0 %v11077
    %12116 = vmatprep.subr.bf16.mxu0 %v11085
    %12117 = vmatpush1.bf16.msra.mxu0 %v11084
    %12118 = vmatprep.subr.bf16.mxu0 %v11092
    %12119 = vmatpush1.bf16.msra.mxu0 %v11091
    %12120 = vmatprep.subr.bf16.mxu0 %v11099
    %12121 = vmatpush1.bf16.msra.mxu0 %v11098
    %12122 = vmatprep.subr.bf16.mxu0 %v11106
    %12123 = vmatpush1.bf16.msra.mxu0 %v11105
    %12124 = vmatprep.subr.bf16.mxu0 %v11113
    %12125 = vmatpush1.bf16.msra.mxu0 %v11112
    %12126 = vmatprep.subr.bf16.mxu0 %v11120
    %12127 = vmatpush1.bf16.msra.mxu0 %v11119
    %12128 = vmatprep.subr.bf16.mxu0 %v11127
    %12129 = vmatpush1.bf16.msra.mxu0 %v11126
    %12130 = vmatprep.subr.bf16.mxu0 %v11134
    %12131 = vmatpush1.bf16.msra.mxu0 %v11133
    %12132 = vmatprep.subr.bf16.mxu0 %v11141
    %12133 = vmatpush1.bf16.msra.mxu0 %v11140
    %12134 = vmatprep.subr.bf16.mxu0 %v11148
    %12135 = vmatpush1.bf16.msra.mxu0 %v11147
    %12136 = vmatprep.subr.bf16.mxu0 %v11155
    %12137 = vmatpush1.bf16.msra.mxu0 %v11154
    %12138 = vmatprep.subr.bf16.mxu0 %v11162
    %12139 = vmatpush1.bf16.msra.mxu0 %v11161
    %12140 = vmatprep.subr.bf16.mxu0 %v11169
    %12141 = vmatpush1.bf16.msra.mxu0 %v11168
    %12142 = vmatprep.subr.bf16.mxu0 %v11176
    %12143 = vmatpush1.bf16.msra.mxu0 %v11175
    %12144 = vmatprep.subr.bf16.mxu0 %v11183
    %12145 = vmatpush1.bf16.msra.mxu0 %v11182
    %12146 = vmatprep.mubr.bf16.mxu0 %v9240
    %12147 = vmatmul.mubr.bf16.gmra.mrb[0].mxu0 %v9239
    %v12148 = vpop.f32.mrb[0].mxu0
    %v12149 = vadd.f32 %v12108, %v12148
    %v12150 = vpop.f32.mrb[0].mxu0
    %v12151 = vadd.f32 %v12110, %v12150
    %v12152 = vpop.f32.mrb[0].mxu0
    %v12153 = vpop.f32.mrb[0].mxu0
    %12154 = vdwg.mxu0
    %12155 = vmatprep.subr.bf16.mxu0 %v11190
    %12156 = vmatpush1.bf16.msra.mxu0 %v11189
    %12157 = vmatprep.subr.bf16.mxu0 %v11197
    %12158 = vmatpush1.bf16.msra.mxu0 %v11196
    %12159 = vmatprep.subr.bf16.mxu0 %v11204
    %12160 = vmatpush1.bf16.msra.mxu0 %v11203
    %12161 = vmatprep.subr.bf16.mxu0 %v11211
    %12162 = vmatpush1.bf16.msra.mxu0 %v11210
    %12163 = vmatprep.subr.bf16.mxu0 %v11218
    %12164 = vmatpush1.bf16.msra.mxu0 %v11217
    %12165 = vmatprep.subr.bf16.mxu0 %v11225
    %12166 = vmatpush1.bf16.msra.mxu0 %v11224
    %12167 = vmatprep.subr.bf16.mxu0 %v11232
    %12168 = vmatpush1.bf16.msra.mxu0 %v11231
    %12169 = vmatprep.subr.bf16.mxu0 %v11239
    %12170 = vmatpush1.bf16.msra.mxu0 %v11238
    %12171 = vmatprep.subr.bf16.mxu0 %v11246
    %12172 = vmatpush1.bf16.msra.mxu0 %v11245
    %12173 = vmatprep.subr.bf16.mxu0 %v11253
    %12174 = vmatpush1.bf16.msra.mxu0 %v11252
    %12175 = vmatprep.subr.bf16.mxu0 %v11260
    %12176 = vmatpush1.bf16.msra.mxu0 %v11259
    %12177 = vmatprep.subr.bf16.mxu0 %v11267
    %12178 = vmatpush1.bf16.msra.mxu0 %v11266
    %12179 = vmatprep.subr.bf16.mxu0 %v11274
    %12180 = vmatpush1.bf16.msra.mxu0 %v11273
    %12181 = vmatprep.subr.bf16.mxu0 %v11281
    %12182 = vmatpush1.bf16.msra.mxu0 %v11280
    %12183 = vmatprep.subr.bf16.mxu0 %v11288
    %12184 = vmatpush1.bf16.msra.mxu0 %v11287
    %12185 = vmatprep.subr.bf16.mxu0 %v11295
    %12186 = vmatpush1.bf16.msra.mxu0 %v11294
    %12187 = vmatprep.mubr.bf16.mxu0 %v9242
    %12188 = vmatmul.mubr.bf16.gmra.mrb[0].mxu0 %v9241
    %v12189 = vpop.f32.mrb[0].mxu0
    %v12190 = vadd.f32 %v12149, %v12189
    %v12191 = vpop.f32.mrb[0].mxu0
    %v12192 = vadd.f32 %v12151, %v12191
    %v12193 = vpop.f32.mrb[0].mxu0
    %v12194 = vpop.f32.mrb[0].mxu0
    %12195 = vdwg.mxu0
    %12196 = vmatprep.subr.bf16.mxu0 %v11302
    %12197 = vmatpush1.bf16.msra.mxu0 %v11301
    %12198 = vmatprep.subr.bf16.mxu0 %v11309
    %12199 = vmatpush1.bf16.msra.mxu0 %v11308
    %12200 = vmatprep.subr.bf16.mxu0 %v11316
    %12201 = vmatpush1.bf16.msra.mxu0 %v11315
    %12202 = vmatprep.subr.bf16.mxu0 %v11323
    %12203 = vmatpush1.bf16.msra.mxu0 %v11322
    %12204 = vmatprep.subr.bf16.mxu0 %v11330
    %12205 = vmatpush1.bf16.msra.mxu0 %v11329
    %12206 = vmatprep.subr.bf16.mxu0 %v11337
    %12207 = vmatpush1.bf16.msra.mxu0 %v11336
    %12208 = vmatprep.subr.bf16.mxu0 %v11344
    %12209 = vmatpush1.bf16.msra.mxu0 %v11343
    %12210 = vmatprep.subr.bf16.mxu0 %v11351
    %12211 = vmatpush1.bf16.msra.mxu0 %v11350
    %12212 = vmatprep.subr.bf16.mxu0 0
    %12213 = vmatpush1.bf16.msra.mxu0 0
    %12214 = vmatprep.subr.bf16.mxu0 0
    %12215 = vmatpush1.bf16.msra.mxu0 0
    %12216 = vmatprep.subr.bf16.mxu0 0
    %12217 = vmatpush1.bf16.msra.mxu0 0
    %12218 = vmatprep.subr.bf16.mxu0 0
    %12219 = vmatpush1.bf16.msra.mxu0 0
    %12220 = vmatprep.subr.bf16.mxu0 0
    %12221 = vmatpush1.bf16.msra.mxu0 0
    %12222 = vmatprep.subr.bf16.mxu0 0
    %12223 = vmatpush1.bf16.msra.mxu0 0
    %12224 = vmatprep.subr.bf16.mxu0 0
    %12225 = vmatpush1.bf16.msra.mxu0 0
    %12226 = vmatprep.subr.bf16.mxu0 0
    %12227 = vmatpush1.bf16.msra.mxu0 0
    %12228 = vmatprep.mubr.bf16.mxu0 0
    %12229 = vmatmul.mubr.bf16.gmra.mrb[0].mxu0 %v9243
    %v12230 = vpop.f32.mrb[0].mxu0
    %v12231 = vadd.f32 %v12190, %v12230
    %v12232 = vpop.f32.mrb[0].mxu0
    %v12233 = vadd.f32 %v12192, %v12232
    %v12234 = vpop.f32.mrb[0].mxu0
    %v12235 = vpop.f32.mrb[0].mxu0
    %12236 = vdwg.mxu0
    %12237 = vmatprep.subr.bf16.mxu0 0
    %12238 = vmatpush1.bf16.msra.mxu0 %v10967
    %12239 = vmatprep.subr.bf16.mxu0 0
    %12240 = vmatpush1.bf16.msra.mxu0 %v10974
    %12241 = vmatprep.subr.bf16.mxu0 0
    %12242 = vmatpush1.bf16.msra.mxu0 %v10981
    %12243 = vmatprep.subr.bf16.mxu0 0
    %12244 = vmatpush1.bf16.msra.mxu0 %v10988
    %12245 = vmatprep.subr.bf16.mxu0 0
    %12246 = vmatpush1.bf16.msra.mxu0 %v10995
    %12247 = vmatprep.subr.bf16.mxu0 0
    %12248 = vmatpush1.bf16.msra.mxu0 %v11002
    %12249 = vmatprep.subr.bf16.mxu0 0
    %12250 = vmatpush1.bf16.msra.mxu0 %v11009
    %12251 = vmatprep.subr.bf16.mxu0 0
    %12252 = vmatpush1.bf16.msra.mxu0 %v11016
    %12253 = vmatprep.subr.bf16.mxu0 0
    %12254 = vmatpush1.bf16.msra.mxu0 %v11023
    %12255 = vmatprep.subr.bf16.mxu0 0
    %12256 = vmatpush1.bf16.msra.mxu0 %v11030
    %12257 = vmatprep.subr.bf16.mxu0 0
    %12258 = vmatpush1.bf16.msra.mxu0 %v11037
    %12259 = vmatprep.subr.bf16.mxu0 0
    %12260 = vmatpush1.bf16.msra.mxu0 %v11044
    %12261 = vmatprep.subr.bf16.mxu0 0
    %12262 = vmatpush1.bf16.msra.mxu0 %v11051
    %12263 = vmatprep.subr.bf16.mxu0 0
    %12264 = vmatpush1.bf16.msra.mxu0 %v11058
    %12265 = vmatprep.subr.bf16.mxu0 0
    %12266 = vmatpush1.bf16.msra.mxu0 %v11065
    %12267 = vmatprep.subr.bf16.mxu0 0
    %12268 = vmatpush1.bf16.msra.mxu0 %v11072
    %12269 = vmatprep.mubr.bf16.mxu0 %v9238
    %12270 = vmatmul.mubr.bf16.gmra.mrb[0].mxu0 %v9237
    %v12271 = vpop.f32.mrb[0].mxu0
    %v12272 = vadd.f32 %v9721, %v12271
    %v12273 = vpop.f32.mrb[0].mxu0
    %v12274 = vpop.f32.mrb[0].mxu0
    %v12275 = vpop.f32.mrb[0].mxu0
    %12276 = vdwg.mxu0
    %12277 = vmatprep.subr.bf16.mxu0 0
    %12278 = vmatpush1.bf16.msra.mxu0 %v11079
    %12279 = vmatprep.subr.bf16.mxu0 0
    %12280 = vmatpush1.bf16.msra.mxu0 %v11086
    %12281 = vmatprep.subr.bf16.mxu0 0
    %12282 = vmatpush1.bf16.msra.mxu0 %v11093
    %12283 = vmatprep.subr.bf16.mxu0 0
    %12284 = vmatpush1.bf16.msra.mxu0 %v11100
    %12285 = vmatprep.subr.bf16.mxu0 0
    %12286 = vmatpush1.bf16.msra.mxu0 %v11107
    %12287 = vmatprep.subr.bf16.mxu0 0
    %12288 = vmatpush1.bf16.msra.mxu0 %v11114
    %12289 = vmatprep.subr.bf16.mxu0 0
    %12290 = vmatpush1.bf16.msra.mxu0 %v11121
    %12291 = vmatprep.subr.bf16.mxu0 0
    %12292 = vmatpush1.bf16.msra.mxu0 %v11128
    %12293 = vmatprep.subr.bf16.mxu0 0
    %12294 = vmatpush1.bf16.msra.mxu0 %v11135
    %12295 = vmatprep.subr.bf16.mxu0 0
    %12296 = vmatpush1.bf16.msra.mxu0 %v11142
    %12297 = vmatprep.subr.bf16.mxu0 0
    %12298 = vmatpush1.bf16.msra.mxu0 %v11149
    %12299 = vmatprep.subr.bf16.mxu0 0
    %12300 = vmatpush1.bf16.msra.mxu0 %v11156
    %12301 = vmatprep.subr.bf16.mxu0 0
    %12302 = vmatpush1.bf16.msra.mxu0 %v11163
    %12303 = vmatprep.subr.bf16.mxu0 0
    %12304 = vmatpush1.bf16.msra.mxu0 %v11170
    %12305 = vmatprep.subr.bf16.mxu0 0
    %12306 = vmatpush1.bf16.msra.mxu0 %v11177
    %12307 = vmatprep.subr.bf16.mxu0 0
    %12308 = vmatpush1.bf16.msra.mxu0 %v11184
    %12309 = vmatprep.mubr.bf16.mxu0 %v9240
    %12310 = vmatmul.mubr.bf16.gmra.mrb[0].mxu0 %v9239
    %v12311 = vpop.f32.mrb[0].mxu0
    %v12312 = vadd.f32 %v12272, %v12311
    %v12313 = vpop.f32.mrb[0].mxu0
    %v12314 = vpop.f32.mrb[0].mxu0
    %v12315 = vpop.f32.mrb[0].mxu0
    %12316 = vdwg.mxu0
    %12317 = vmatprep.subr.bf16.mxu0 0
    %12318 = vmatpush1.bf16.msra.mxu0 %v11191
    %12319 = vmatprep.subr.bf16.mxu0 0
    %12320 = vmatpush1.bf16.msra.mxu0 %v11198
    %12321 = vmatprep.subr.bf16.mxu0 0
    %12322 = vmatpush1.bf16.msra.mxu0 %v11205
    %12323 = vmatprep.subr.bf16.mxu0 0
    %12324 = vmatpush1.bf16.msra.mxu0 %v11212
    %12325 = vmatprep.subr.bf16.mxu0 0
    %12326 = vmatpush1.bf16.msra.mxu0 %v11219
    %12327 = vmatprep.subr.bf16.mxu0 0
    %12328 = vmatpush1.bf16.msra.mxu0 %v11226
    %12329 = vmatprep.subr.bf16.mxu0 0
    %12330 = vmatpush1.bf16.msra.mxu0 %v11233
    %12331 = vmatprep.subr.bf16.mxu0 0
    %12332 = vmatpush1.bf16.msra.mxu0 %v11240
    %12333 = vmatprep.subr.bf16.mxu0 0
    %12334 = vmatpush1.bf16.msra.mxu0 %v11247
    %12335 = vmatprep.subr.bf16.mxu0 0
    %12336 = vmatpush1.bf16.msra.mxu0 %v11254
    %12337 = vmatprep.subr.bf16.mxu0 0
    %12338 = vmatpush1.bf16.msra.mxu0 %v11261
    %12339 = vmatprep.subr.bf16.mxu0 0
    %12340 = vmatpush1.bf16.msra.mxu0 %v11268
    %12341 = vmatprep.subr.bf16.mxu0 0
    %12342 = vmatpush1.bf16.msra.mxu0 %v11275
    %12343 = vmatprep.subr.bf16.mxu0 0
    %12344 = vmatpush1.bf16.msra.mxu0 %v11282
    %12345 = vmatprep.subr.bf16.mxu0 0
    %12346 = vmatpush1.bf16.msra.mxu0 %v11289
    %12347 = vmatprep.subr.bf16.mxu0 0
    %12348 = vmatpush1.bf16.msra.mxu0 %v11296
    %12349 = vmatprep.mubr.bf16.mxu0 %v9242
    %12350 = vmatmul.mubr.bf16.gmra.mrb[0].mxu0 %v9241
    %v12351 = vpop.f32.mrb[0].mxu0
    %v12352 = vadd.f32 %v12312, %v12351
    %v12353 = vpop.f32.mrb[0].mxu0
    %v12354 = vpop.f32.mrb[0].mxu0
    %v12355 = vpop.f32.mrb[0].mxu0
    %12356 = vdwg.mxu0
    %12357 = vmatprep.subr.bf16.mxu0 0
    %12358 = vmatpush1.bf16.msra.mxu0 %v11303
    %12359 = vmatprep.subr.bf16.mxu0 0
    %12360 = vmatpush1.bf16.msra.mxu0 %v11310
    %12361 = vmatprep.subr.bf16.mxu0 0
    %12362 = vmatpush1.bf16.msra.mxu0 %v11317
    %12363 = vmatprep.subr.bf16.mxu0 0
    %12364 = vmatpush1.bf16.msra.mxu0 %v11324
    %12365 = vmatprep.subr.bf16.mxu0 0
    %12366 = vmatpush1.bf16.msra.mxu0 %v11331
    %12367 = vmatprep.subr.bf16.mxu0 0
    %12368 = vmatpush1.bf16.msra.mxu0 %v11338
    %12369 = vmatprep.subr.bf16.mxu0 0
    %12370 = vmatpush1.bf16.msra.mxu0 %v11345
    %12371 = vmatprep.subr.bf16.mxu0 0
    %12372 = vmatpush1.bf16.msra.mxu0 %v11352
    %12373 = vmatprep.subr.bf16.mxu0 0
    %12374 = vmatpush1.bf16.msra.mxu0 0
    %12375 = vmatprep.subr.bf16.mxu0 0
    %12376 = vmatpush1.bf16.msra.mxu0 0
    %12377 = vmatprep.subr.bf16.mxu0 0
    %12378 = vmatpush1.bf16.msra.mxu0 0
    %12379 = vmatprep.subr.bf16.mxu0 0
    %12380 = vmatpush1.bf16.msra.mxu0 0
    %12381 = vmatprep.subr.bf16.mxu0 0
    %12382 = vmatpush1.bf16.msra.mxu0 0
    %12383 = vmatprep.subr.bf16.mxu0 0
    %12384 = vmatpush1.bf16.msra.mxu0 0
    %12385 = vmatprep.subr.bf16.mxu0 0
    %12386 = vmatpush1.bf16.msra.mxu0 0
    %12387 = vmatprep.subr.bf16.mxu0 0
    %12388 = vmatpush1.bf16.msra.mxu0 0
    %12389 = vmatprep.mubr.bf16.mxu0 0
    %12390 = vmatmul.mubr.bf16.gmra.mrb[0].mxu0 %v9243
    %v12391 = vpop.f32.mrb[0].mxu0
    %v12392 = vadd.f32 %v12352, %v12391
    %v12393 = vpop.f32.mrb[0].mxu0
    %v12394 = vpop.f32.mrb[0].mxu0
    %v12395 = vpop.f32.mrb[0].mxu0
    %12396 = vdwg.mxu0
    %v12397 = vtanh.pop %v11903
    %v12398 = vtanh.pop %v11905
    %v12399 = vtanh.pop %v12067
    %v12400 = vtanh.pop %v12069
    %v12401 = vtanh.pop %v12231
    %v12402 = vtanh.pop %v12233
    %v12403 = vtanh.pop %v12392
    %v12411 = vcombine.low %v12397, %v12398
    %v12412 = vcombine.low %v12399, %v12400
    %v12414 = vunpack.c.l.s4 1983009808
    %v12415 = vunpack.c.0.s8 %v12414
    %v12416 = vlaneseq
    %v12417 = vshrl.u32 %v12416, 7
    %v12418 = vsub.s32 %v12415, %v12417
    %v12419 = vrot.slane %v12411, %v12418
    %v12421 = vunpack.c.l.s4 1983009808
    %v12422 = vunpack.c.0.s8 %v12421
    %v12423 = vlaneseq
    %v12424 = vshrl.u32 %v12423, 7
    %v12425 = vsub.s32 %v12422, %v12424
    %v12426 = vrot.slane %v12412, %v12425
    %v12427 = vcombine.low %v12419, %v12426
    %v12428 = vcombine.low %v12401, %v12402
    %v12430 = vunpack.c.l.s4 1983009808
    %v12431 = vunpack.c.0.s8 %v12430
    %v12432 = vlaneseq
    %v12433 = vshrl.u32 %v12432, 7
    %v12434 = vsub.s32 %v12431, %v12433
    %v12435 = vrot.slane %v12428, %v12434
    %v12437 = vunpack.c.l.s4 1983009808
    %v12438 = vunpack.c.0.s8 %v12437
    %v12439 = vlaneseq
    %v12440 = vshrl.u32 %v12439, 7
    %v12441 = vsub.s32 %v12438, %v12440
    %v12442 = vrot.slane %v12403, %v12441
    %v12443 = vcombine.low %v12435, %v12442
    %12446 = vst [vmem:[%s13] sm:$0xff] %v12427
    %12447 = vst [vmem:[%s13 + $0x8] sm:$0x3f] %v12443
    // Predicated region
    $region98: #{_generator_pallas_forward.1} parent=1 // pred_check
      _
    $region99: #{_generator_pallas_forward.1} parent=1 // pred_check_branch
      %12449 = sbr.rel (0) target = $region101
    $region100: #{_generator_pallas_forward.1} parent=1 // pred_region
      _
    $region101: #{_generator_pallas_forward.1} parent=1 // pred_fallthru
      _
    // Predicated region
    $region102: #{_generator_pallas_forward.1} parent=1 // pred_check
      _
    $region103: #{_generator_pallas_forward.1} parent=1 // pred_check_branch
      %12451 = sbr.rel (0) target = $region105
    $region104: #{_generator_pallas_forward.1} parent=1 // pred_region
      _
    $region105: #{_generator_pallas_forward.1} parent=1 // pred_fallthru
      _
    %12452 = vsyncpa [#allocation3], 1
    %12453 = vsyncpa [#allocation5], 1
    %12454 = vsyncpa [#allocation8], 1
    %12455 = vsyncpa [#allocation11], 1
    %12456 = vsyncpa [#allocation14], 1
    %12457 = vsyncpa [#allocation17], 1

</llo_original>
